<compile_context>
chip_gen: v7x
topology: tpu7x:2x2x1
jax: 0.10.0
libtpu: 0.0.40
codegen_flags: <defaults>
</compile_context>

<pallas_src>
import math

import jax
import jax.numpy as jnp
from jax.experimental import pallas as pl
from jax.experimental.pallas import tpu as pltpu

E = 7            # embedding_len (object and platform)
HID = E // 2     # NoisyLinear MLP hidden = 3
FINAL = 3        # final_embedding
SMOL_D = 576     # lin_1 input features
N_LAYERS = 3
ALPHA = 0.5
TEMPERATURE = 0.1
LN_EPS = 1e-5
NEG = -1e9       # additive mask value for cross-batch attention entries


# ----------------------------- kernel helpers -----------------------------

def _layer_norm(x, gamma, beta):
    mu = jnp.mean(x, axis=-1, keepdims=True)
    var = jnp.mean(jnp.square(x - mu), axis=-1, keepdims=True)
    return (x - mu) * jax.lax.rsqrt(var + LN_EPS) * gamma + beta


def _mha(xq, xkv, w_ref, b_ref, kv_ref, layer, mask):
    """nn.MultiheadAttention (1 head, add_bias_kv=True), eval mode.

    w_ref: (4*L, E, E) stacked [WqT, WkT, WvT, WoT] per layer.
    b_ref: (4*L, 1, E) stacked [bq, bk, bv, bo] per layer.
    kv_ref: (2*L, 1, E) stacked [bias_k, bias_v] per layer.
    mask: additive (Nq, Nk) block-diagonal mask (0 in-batch, NEG cross-batch).
    """
    base = 4 * layer
    q = jnp.dot(xq, w_ref[base + 0], preferred_element_type=jnp.float32) + b_ref[base + 0]
    k = jnp.dot(xkv, w_ref[base + 1], preferred_element_type=jnp.float32) + b_ref[base + 1]
    v = jnp.dot(xkv, w_ref[base + 2], preferred_element_type=jnp.float32) + b_ref[base + 2]
    bias_k = kv_ref[2 * layer + 0]   # (1, E)
    bias_v = kv_ref[2 * layer + 1]   # (1, E)

    qs = q * (1.0 / math.sqrt(E))                                      # head_dim = E
    s_main = jax.lax.dot_general(qs, k, (((1,), (1,)), ((), ())),
                                 preferred_element_type=jnp.float32) + mask
    s_bias = jnp.sum(qs * bias_k, axis=-1, keepdims=True)              # extra key column

    m = jnp.maximum(jnp.max(s_main, axis=-1, keepdims=True), s_bias)
    e_main = jnp.exp(s_main - m)
    e_bias = jnp.exp(s_bias - m)
    denom = jnp.sum(e_main, axis=-1, keepdims=True) + e_bias
    ctx = (jnp.dot(e_main, v, preferred_element_type=jnp.float32)
           + e_bias * bias_v) / denom
    return jnp.dot(ctx, w_ref[base + 3], preferred_element_type=jnp.float32) + b_ref[base + 3]


def _mlp(x, w1_ref, b1_ref, w2_ref, b2_ref, layer):
    h = jnp.dot(x, w1_ref[layer], preferred_element_type=jnp.float32) + b1_ref[layer]
    h = jnp.maximum(h, 0.0)
    y = jnp.dot(h, w2_ref[layer], preferred_element_type=jnp.float32) + b2_ref[layer]
    return jnp.maximum(y, 0.0)


# ------------------------------ fused kernel ------------------------------

def _opt1_fused_kernel(plat_ref, obj_ref, smol_ref,
                       mask_pp_ref, mask_oo_ref, mask_op_ref, mask_os_ref,
                       lin1_w_ref, lin1_b_ref,
                       enc_sa_w_ref, enc_sa_b_ref, enc_sa_kv_ref,
                       enc_mlp_w1_ref, enc_mlp_b1_ref, enc_mlp_w2_ref, enc_mlp_b2_ref,
                       enc_ln_ref, enc_fin_w_ref, enc_fin_b_ref,
                       dec_sa_w_ref, dec_sa_b_ref, dec_sa_kv_ref,
                       dec_ca_w_ref, dec_ca_b_ref, dec_ca_kv_ref,
                       dec_mlp_w1_ref, dec_mlp_b1_ref, dec_mlp_w2_ref, dec_mlp_b2_ref,
                       dec_ln_ref, dec_fin_w_ref, dec_fin_b_ref,
                       out_ref):
    # ------------------------------ encoder (te) ------------------------------
    x = plat_ref[...]                 # (B*P, E)
    mpp = mask_pp_ref[...]
    for l in range(N_LAYERS):
        sa = _mha(x, x, enc_sa_w_ref, enc_sa_b_ref, enc_sa_kv_ref, l, mpp)
        x = _layer_norm(sa + x, enc_ln_ref[4 * l + 0], enc_ln_ref[4 * l + 1])
        h = _mlp(x, enc_mlp_w1_ref, enc_mlp_b1_ref, enc_mlp_w2_ref, enc_mlp_b2_ref, l)
        x = _layer_norm(h + x, enc_ln_ref[4 * l + 2], enc_ln_ref[4 * l + 3])
    platform_c = x
    platform_e = (jnp.dot(x, enc_fin_w_ref[...], preferred_element_type=jnp.float32)
                  + enc_fin_b_ref[...])                                   # (B*P, FINAL)

    # -------------- lin_1(smol_state) + bmm attention + alpha blend --------------
    kv = (jnp.dot(smol_ref[...], lin1_w_ref[...], preferred_element_type=jnp.float32)
          + lin1_b_ref[...])                                              # (B*S, E)
    q = obj_ref[...]                                                      # (B*CO, E)
    s = (jax.lax.dot_general(q, kv, (((1,), (1,)), ((), ())),
                             preferred_element_type=jnp.float32)
         * (1.0 / math.sqrt(E)) + mask_os_ref[...])
    m = jnp.max(s, axis=-1, keepdims=True)
    e = jnp.exp(s - m)
    attn = (jnp.dot(e, kv, preferred_element_type=jnp.float32)
            / jnp.sum(e, axis=-1, keepdims=True))
    x = ALPHA * q + (1.0 - ALPHA) * attn                                  # (B*CO, E)

    # ------------------------------ decoder ------------------------------
    moo = mask_oo_ref[...]
    mop = mask_op_ref[...]
    for l in range(N_LAYERS):
        sa = _mha(x, x, dec_sa_w_ref, dec_sa_b_ref, dec_sa_kv_ref, l, moo)
        x = _layer_norm(sa + x, dec_ln_ref[6 * l + 0], dec_ln_ref[6 * l + 1])
        ca = _mha(x, platform_c, dec_ca_w_ref, dec_ca_b_ref, dec_ca_kv_ref, l, mop)
        x = _layer_norm(ca + x, dec_ln_ref[6 * l + 2], dec_ln_ref[6 * l + 3])
        h = _mlp(x, dec_mlp_w1_ref, dec_mlp_b1_ref, dec_mlp_w2_ref, dec_mlp_b2_ref, l)
        x = _layer_norm(h + x, dec_ln_ref[6 * l + 4], dec_ln_ref[6 * l + 5])
    o_final = (jnp.dot(x, dec_fin_w_ref[...], preferred_element_type=jnp.float32)
               + dec_fin_b_ref[...])                                      # (B*CO, FINAL)

    # ---------------- dot-similarity + temperature softmax ----------------
    # (platform_e @ o_final^T)^T == o_final @ platform_e^T
    logits = jax.lax.dot_general(o_final, platform_e, (((1,), (1,)), ((), ())),
                                 preferred_element_type=jnp.float32)      # (B*CO, B*P)
    logits = logits * (1.0 / (math.sqrt(FINAL) * TEMPERATURE))
    m = jnp.max(logits, axis=-1, keepdims=True)
    e = jnp.exp(logits - m)
    out_ref[...] = e / jnp.sum(e, axis=-1, keepdims=True)


# ------------------------------- forward glue -------------------------------

def _block_mask(b, rows_per, cols_per):
    """Additive mask: 0 where row/col belong to the same batch element, NEG else."""
    ri = jnp.arange(b * rows_per) // rows_per
    ci = jnp.arange(b * cols_per) // cols_per
    return jnp.where(ri[:, None] == ci[None, :], 0.0, NEG).astype(jnp.float32)


def opt1_noisy_forward(packed, state_platform, state_object, smol_state):
    B, P, _ = state_platform.shape
    CO = state_object.shape[1]
    S = smol_state.shape[1]

    plat = state_platform.reshape(B * P, E).astype(jnp.float32)
    obj = state_object.reshape(B * CO, E).astype(jnp.float32)
    smol = smol_state.reshape(B * S, SMOL_D).astype(jnp.float32)

    mask_pp = _block_mask(B, P, P)     # encoder self-attn
    mask_oo = _block_mask(B, CO, CO)   # decoder self-attn
    mask_op = _block_mask(B, CO, P)    # decoder cross-attn
    mask_os = _block_mask(B, CO, S)    # bmm attention over lin_1(smol)

    return pl.pallas_call(
        _opt1_fused_kernel,
        out_shape=jax.ShapeDtypeStruct((B * CO, B * P), jnp.float32),
    )(plat, obj, smol, mask_pp, mask_oo, mask_op, mask_os,
      packed["lin1_w"], packed["lin1_b"],
      packed["enc_sa_w"], packed["enc_sa_b"], packed["enc_sa_kv"],
      packed["enc_mlp_w1"], packed["enc_mlp_b1"], packed["enc_mlp_w2"], packed["enc_mlp_b2"],
      packed["enc_ln"], packed["enc_fin_w"], packed["enc_fin_b"],
      packed["dec_sa_w"], packed["dec_sa_b"], packed["dec_sa_kv"],
      packed["dec_ca_w"], packed["dec_ca_b"], packed["dec_ca_kv"],
      packed["dec_mlp_w1"], packed["dec_mlp_b1"], packed["dec_mlp_w2"], packed["dec_mlp_b2"],
      packed["dec_ln"], packed["dec_fin_w"], packed["dec_fin_b"])


# ------------------------- deterministic parameters -------------------------

class KeyGen:
    def __init__(self, seed=0):
        self._key = jax.random.PRNGKey(seed)

    def __call__(self):
        self._key, sub = jax.random.split(self._key)
        return sub


def _uniform(kg, shape, scale):
    return jax.random.uniform(kg(), shape, jnp.float32, -scale, scale)


def make_mha_params(kg):
    s = 1.0 / math.sqrt(E)
    return dict(
        wq=_uniform(kg, (E, E), s), wk=_uniform(kg, (E, E), s), wv=_uniform(kg, (E, E), s),
        bq=_uniform(kg, (E,), s), bk=_uniform(kg, (E,), s), bv=_uniform(kg, (E,), s),
        bias_k=jax.random.normal(kg(), (E,), jnp.float32) * 0.1,
        bias_v=jax.random.normal(kg(), (E,), jnp.float32) * 0.1,
        wo=_uniform(kg, (E, E), s), bo=_uniform(kg, (E,), s),
    )


def _scale_noise(key, size):
    x = jax.random.normal(key, (size,), jnp.float32)
    return jnp.sign(x) * jnp.sqrt(jnp.abs(x))


def make_noisy_linear(kg, in_f, out_f, std_init=0.5):
    mu_range = 1.0 / math.sqrt(in_f)
    w_mu = _uniform(kg, (out_f, in_f), mu_range)
    w_sigma = jnp.full((out_f, in_f), std_init / math.sqrt(in_f), jnp.float32)
    b_mu = _uniform(kg, (out_f,), mu_range)
    b_sigma = jnp.full((out_f,), std_init / math.sqrt(out_f), jnp.float32)
    eps_in = _scale_noise(kg(), in_f)
    eps_out = _scale_noise(kg(), out_f)
    return dict(w=w_mu + w_sigma * jnp.outer(eps_out, eps_in),
                b=b_mu + b_sigma * eps_out)


def make_ln_params():
    return dict(gamma=jnp.ones((E,), jnp.float32), beta=jnp.zeros((E,), jnp.float32))


def make_mlp_params(kg):
    l1 = make_noisy_linear(kg, E, HID)
    l2 = make_noisy_linear(kg, HID, E)
    return dict(w1=l1["w"], b1=l1["b"], w2=l2["w"], b2=l2["b"])


def make_encoder_params(kg):
    layers = [dict(sa=make_mha_params(kg), ln1=make_ln_params(),
                   mlp=make_mlp_params(kg), ln2=make_ln_params())
              for _ in range(N_LAYERS)]
    return dict(layers=layers, fin=make_noisy_linear(kg, E, FINAL))


def make_decoder_params(kg):
    layers = [dict(sa=make_mha_params(kg), ln1=make_ln_params(),
                   ca=make_mha_params(kg), ln2=make_ln_params(),
                   mlp=make_mlp_params(kg), ln3=make_ln_params())
              for _ in range(N_LAYERS)]
    return dict(layers=layers, fin=make_noisy_linear(kg, E, FINAL))


def make_raw_params(seed=0):
    kg = KeyGen(seed)
    lin1_s = 1.0 / math.sqrt(SMOL_D)
    return dict(
        encoder=make_encoder_params(kg),
        decoder=make_decoder_params(kg),
        lin1=dict(w=_uniform(kg, (E, SMOL_D), lin1_s),
                  b=_uniform(kg, (E,), lin1_s)),
    )


# --------------------- pack weights for the fused kernel ---------------------
# Pre-transpose to (in, out), stack all layers, keep biases 2D. Done ONCE.

def _pack_attn(layers, key):
    w = jnp.concatenate(
        [jnp.stack([lp[key]["wq"].T, lp[key]["wk"].T, lp[key]["wv"].T, lp[key]["wo"].T])
         for lp in layers], axis=0)                               # (4L, E, E)
    b = jnp.concatenate(
        [jnp.stack([lp[key]["bq"], lp[key]["bk"], lp[key]["bv"], lp[key]["bo"]])
         for lp in layers], axis=0)[:, None, :]                   # (4L, 1, E)
    kv = jnp.concatenate(
        [jnp.stack([lp[key]["bias_k"], lp[key]["bias_v"]]) for lp in layers],
        axis=0)[:, None, :]                                       # (2L, 1, E)
    return w, b, kv


def _pack_mlp(layers):
    w1 = jnp.stack([lp["mlp"]["w1"].T for lp in layers])          # (L, E, HID)
    b1 = jnp.stack([lp["mlp"]["b1"] for lp in layers])[:, None, :]
    w2 = jnp.stack([lp["mlp"]["w2"].T for lp in layers])          # (L, HID, E)
    b2 = jnp.stack([lp["mlp"]["b2"] for lp in layers])[:, None, :]
    return w1, b1, w2, b2


def _pack_ln(layers, names):
    rows = []
    for lp in layers:
        for n in names:
            rows.append(lp[n]["gamma"])
            rows.append(lp[n]["beta"])
    return jnp.stack(rows)[:, None, :]                            # (2*len(names)*L, 1, E)


def pack_params(raw):
    enc_layers = raw["encoder"]["layers"]
    dec_layers = raw["decoder"]["layers"]

    enc_sa_w, enc_sa_b, enc_sa_kv = _pack_attn(enc_layers, "sa")
    enc_w1, enc_b1, enc_w2, enc_b2 = _pack_mlp(enc_layers)
    dec_sa_w, dec_sa_b, dec_sa_kv = _pack_attn(dec_layers, "sa")
    dec_ca_w, dec_ca_b, dec_ca_kv = _pack_attn(dec_layers, "ca")
    dec_w1, dec_b1, dec_w2, dec_b2 = _pack_mlp(dec_layers)

    return dict(
        lin1_w=raw["lin1"]["w"].T, lin1_b=raw["lin1"]["b"][None, :],
        enc_sa_w=enc_sa_w, enc_sa_b=enc_sa_b, enc_sa_kv=enc_sa_kv,
        enc_mlp_w1=enc_w1, enc_mlp_b1=enc_b1, enc_mlp_w2=enc_w2, enc_mlp_b2=enc_b2,
        enc_ln=_pack_ln(enc_layers, ("ln1", "ln2")),
        enc_fin_w=raw["encoder"]["fin"]["w"].T,
        enc_fin_b=raw["encoder"]["fin"]["b"][None, :],
        dec_sa_w=dec_sa_w, dec_sa_b=dec_sa_b, dec_sa_kv=dec_sa_kv,
        dec_ca_w=dec_ca_w, dec_ca_b=dec_ca_b, dec_ca_kv=dec_ca_kv,
        dec_mlp_w1=dec_w1, dec_mlp_b1=dec_b1, dec_mlp_w2=dec_w2, dec_mlp_b2=dec_b2,
        dec_ln=_pack_ln(dec_layers, ("ln1", "ln2", "ln3")),
        dec_fin_w=raw["decoder"]["fin"]["w"].T,
        dec_fin_b=raw["decoder"]["fin"]["b"][None, :],
    )


# ---------------------------------- main ----------------------------------

if __name__ == "__main__":
    raw = make_raw_params(seed=0)
    packed = pack_params(raw)

    key = jax.random.PRNGKey(0)
    k1, k2, k3 = jax.random.split(key, 3)
    B, P, CO, S = 2, 8, 6, 4
    state_platform = jax.random.normal(k1, (B, P, E), jnp.float32)
    state_object = jax.random.normal(k2, (B, CO, E), jnp.float32)
    smol_state = jax.random.normal(k3, (B, S, SMOL_D), jnp.float32)

    fwd = jax.jit(opt1_noisy_forward)
    prob_mat = fwd(packed, state_platform, state_object, smol_state)
    jax.block_until_ready(prob_mat)

    assert prob_mat.shape == (B * CO, B * P)
    assert bool(jnp.all(jnp.isfinite(prob_mat)))
    assert bool(jnp.allclose(jnp.sum(prob_mat, axis=-1), 1.0, atol=1e-4))
    print("KERNEL_OK")
</pallas_src>

<mosaic_0001>
module attributes {stable_mosaic.version = 11 : i64} {
  func.func @_opt1_fused_kernel(%arg0: memref<16x7xf32, #tpu.memory_space<vmem>>, %arg1: memref<12x7xf32, #tpu.memory_space<vmem>>, %arg2: memref<8x576xf32, #tpu.memory_space<vmem>>, %arg3: memref<16x16xf32, #tpu.memory_space<vmem>>, %arg4: memref<12x12xf32, #tpu.memory_space<vmem>>, %arg5: memref<12x16xf32, #tpu.memory_space<vmem>>, %arg6: memref<12x8xf32, #tpu.memory_space<vmem>>, %arg7: memref<576x7xf32, #tpu.memory_space<vmem>>, %arg8: memref<1x7xf32, #tpu.memory_space<vmem>>, %arg9: memref<12x7x7xf32, #tpu.memory_space<vmem>>, %arg10: memref<12x1x7xf32, #tpu.memory_space<vmem>>, %arg11: memref<6x1x7xf32, #tpu.memory_space<vmem>>, %arg12: memref<3x7x3xf32, #tpu.memory_space<vmem>>, %arg13: memref<3x1x3xf32, #tpu.memory_space<vmem>>, %arg14: memref<3x3x7xf32, #tpu.memory_space<vmem>>, %arg15: memref<3x1x7xf32, #tpu.memory_space<vmem>>, %arg16: memref<12x1x7xf32, #tpu.memory_space<vmem>>, %arg17: memref<7x3xf32, #tpu.memory_space<vmem>>, %arg18: memref<1x3xf32, #tpu.memory_space<vmem>>, %arg19: memref<12x7x7xf32, #tpu.memory_space<vmem>>, %arg20: memref<12x1x7xf32, #tpu.memory_space<vmem>>, %arg21: memref<6x1x7xf32, #tpu.memory_space<vmem>>, %arg22: memref<12x7x7xf32, #tpu.memory_space<vmem>>, %arg23: memref<12x1x7xf32, #tpu.memory_space<vmem>>, %arg24: memref<6x1x7xf32, #tpu.memory_space<vmem>>, %arg25: memref<3x7x3xf32, #tpu.memory_space<vmem>>, %arg26: memref<3x1x3xf32, #tpu.memory_space<vmem>>, %arg27: memref<3x3x7xf32, #tpu.memory_space<vmem>>, %arg28: memref<3x1x7xf32, #tpu.memory_space<vmem>>, %arg29: memref<18x1x7xf32, #tpu.memory_space<vmem>>, %arg30: memref<7x3xf32, #tpu.memory_space<vmem>>, %arg31: memref<1x3xf32, #tpu.memory_space<vmem>>, %arg32: memref<12x16xf32, #tpu.memory_space<vmem>>) attributes {dimension_semantics = [], scalar_prefetch = 0 : i64, scratch_operands = 0 : i64, tpu.core_type = #tpu.core_type<tc>} {
    %c0 = arith.constant 0 : index
    %c0_0 = arith.constant 0 : index
    %0 = vector.load %arg0[%c0, %c0_0] : memref<16x7xf32, #tpu.memory_space<vmem>>, vector<16x7xf32>
    %c0_1 = arith.constant 0 : index
    %c0_2 = arith.constant 0 : index
    %1 = vector.load %arg3[%c0_1, %c0_2] : memref<16x16xf32, #tpu.memory_space<vmem>>, vector<16x16xf32>
    %c0_3 = arith.constant 0 : index
    %c0_4 = arith.constant 0 : index
    %c0_5 = arith.constant 0 : index
    %2 = vector.load %arg9[%c0_3, %c0_4, %c0_5] : memref<12x7x7xf32, #tpu.memory_space<vmem>>, vector<1x7x7xf32>
    %3 = vector.shape_cast %2 : vector<1x7x7xf32> to vector<7x7xf32>
    %cst = arith.constant dense<0.000000e+00> : vector<16x7xf32>
    %4 = tpu.matmul %0, %3, %cst {dimension_numbers = #tpu.dot_dimension_numbers<[1], [0], [0], [1], [0, 0, 1, 1], [], []>} : vector<16x7xf32>, vector<7x7xf32>, vector<16x7xf32> -> vector<16x7xf32>
    %c0_6 = arith.constant 0 : index
    %c0_7 = arith.constant 0 : index
    %c0_8 = arith.constant 0 : index
    %5 = vector.load %arg10[%c0_6, %c0_7, %c0_8] : memref<12x1x7xf32, #tpu.memory_space<vmem>>, vector<1x1x7xf32>
    %6 = vector.shape_cast %5 : vector<1x1x7xf32> to vector<1x7xf32>
    %7 = vector.broadcast %6 : vector<1x7xf32> to vector<16x7xf32>
    %8 = arith.addf %4, %7 : vector<16x7xf32>
    %c1 = arith.constant 1 : index
    %c0_9 = arith.constant 0 : index
    %c0_10 = arith.constant 0 : index
    %9 = vector.load %arg9[%c1, %c0_9, %c0_10] : memref<12x7x7xf32, #tpu.memory_space<vmem>>, vector<1x7x7xf32>
    %10 = vector.shape_cast %9 : vector<1x7x7xf32> to vector<7x7xf32>
    %cst_11 = arith.constant dense<0.000000e+00> : vector<16x7xf32>
    %11 = tpu.matmul %0, %10, %cst_11 {dimension_numbers = #tpu.dot_dimension_numbers<[1], [0], [0], [1], [0, 0, 1, 1], [], []>} : vector<16x7xf32>, vector<7x7xf32>, vector<16x7xf32> -> vector<16x7xf32>
    %c1_12 = arith.constant 1 : index
    %c0_13 = arith.constant 0 : index
    %c0_14 = arith.constant 0 : index
    %12 = vector.load %arg10[%c1_12, %c0_13, %c0_14] : memref<12x1x7xf32, #tpu.memory_space<vmem>>, vector<1x1x7xf32>
    %13 = vector.shape_cast %12 : vector<1x1x7xf32> to vector<1x7xf32>
    %14 = vector.broadcast %13 : vector<1x7xf32> to vector<16x7xf32>
    %15 = arith.addf %11, %14 : vector<16x7xf32>
    %c2 = arith.constant 2 : index
    %c0_15 = arith.constant 0 : index
    %c0_16 = arith.constant 0 : index
    %16 = vector.load %arg9[%c2, %c0_15, %c0_16] : memref<12x7x7xf32, #tpu.memory_space<vmem>>, vector<1x7x7xf32>
    %17 = vector.shape_cast %16 : vector<1x7x7xf32> to vector<7x7xf32>
    %cst_17 = arith.constant dense<0.000000e+00> : vector<16x7xf32>
    %18 = tpu.matmul %0, %17, %cst_17 {dimension_numbers = #tpu.dot_dimension_numbers<[1], [0], [0], [1], [0, 0, 1, 1], [], []>} : vector<16x7xf32>, vector<7x7xf32>, vector<16x7xf32> -> vector<16x7xf32>
    %c2_18 = arith.constant 2 : index
    %c0_19 = arith.constant 0 : index
    %c0_20 = arith.constant 0 : index
    %19 = vector.load %arg10[%c2_18, %c0_19, %c0_20] : memref<12x1x7xf32, #tpu.memory_space<vmem>>, vector<1x1x7xf32>
    %20 = vector.shape_cast %19 : vector<1x1x7xf32> to vector<1x7xf32>
    %21 = vector.broadcast %20 : vector<1x7xf32> to vector<16x7xf32>
    %22 = arith.addf %18, %21 : vector<16x7xf32>
    %c0_21 = arith.constant 0 : index
    %c0_22 = arith.constant 0 : index
    %c0_23 = arith.constant 0 : index
    %23 = vector.load %arg11[%c0_21, %c0_22, %c0_23] : memref<6x1x7xf32, #tpu.memory_space<vmem>>, vector<1x1x7xf32>
    %24 = vector.shape_cast %23 : vector<1x1x7xf32> to vector<1x7xf32>
    %c1_24 = arith.constant 1 : index
    %c0_25 = arith.constant 0 : index
    %c0_26 = arith.constant 0 : index
    %25 = vector.load %arg11[%c1_24, %c0_25, %c0_26] : memref<6x1x7xf32, #tpu.memory_space<vmem>>, vector<1x1x7xf32>
    %26 = vector.shape_cast %25 : vector<1x1x7xf32> to vector<1x7xf32>
    %cst_27 = arith.constant 0.377964467 : f32
    %27 = vector.broadcast %cst_27 : f32 to vector<16x7xf32>
    %28 = arith.mulf %8, %27 : vector<16x7xf32>
    %cst_28 = arith.constant dense<0.000000e+00> : vector<16x16xf32>
    %29 = tpu.matmul %28, %15, %cst_28 {dimension_numbers = #tpu.dot_dimension_numbers<[1], [1], [0], [0], [0, 0, 1, 0], [], []>} : vector<16x7xf32>, vector<16x7xf32>, vector<16x16xf32> -> vector<16x16xf32>
    %30 = arith.addf %29, %1 : vector<16x16xf32>
    %31 = vector.broadcast %24 : vector<1x7xf32> to vector<16x7xf32>
    %32 = arith.mulf %28, %31 : vector<16x7xf32>
    %cst_29 = arith.constant dense<0.000000e+00> : vector<16xf32>
    %33 = vector.multi_reduction <add>, %32, %cst_29 [1] : vector<16x7xf32> to vector<16xf32>
    %34 = vector.shape_cast %33 : vector<16xf32> to vector<16x1xf32>
    %cst_30 = arith.constant dense<0xFF800000> : vector<16xf32>
    %35 = vector.multi_reduction <maximumf>, %30, %cst_30 [1] : vector<16x16xf32> to vector<16xf32>
    %36 = vector.shape_cast %35 : vector<16xf32> to vector<16x1xf32>
    %37 = arith.maximumf %36, %34 : vector<16x1xf32>
    %38 = vector.broadcast %37 : vector<16x1xf32> to vector<16x16xf32>
    %39 = arith.subf %30, %38 : vector<16x16xf32>
    %40 = math.exp %39 : vector<16x16xf32>
    %41 = arith.subf %34, %37 : vector<16x1xf32>
    %42 = math.exp %41 : vector<16x1xf32>
    %cst_31 = arith.constant dense<0.000000e+00> : vector<16xf32>
    %43 = vector.multi_reduction <add>, %40, %cst_31 [1] : vector<16x16xf32> to vector<16xf32>
    %44 = vector.shape_cast %43 : vector<16xf32> to vector<16x1xf32>
    %45 = arith.addf %44, %42 : vector<16x1xf32>
    %cst_32 = arith.constant dense<0.000000e+00> : vector<16x7xf32>
    %46 = tpu.matmul %40, %22, %cst_32 {dimension_numbers = #tpu.dot_dimension_numbers<[1], [0], [0], [1], [0, 0, 1, 1], [], []>} : vector<16x16xf32>, vector<16x7xf32>, vector<16x7xf32> -> vector<16x7xf32>
    %47 = vector.broadcast %42 : vector<16x1xf32> to vector<16x7xf32>
    %48 = vector.broadcast %26 : vector<1x7xf32> to vector<16x7xf32>
    %49 = arith.mulf %47, %48 : vector<16x7xf32>
    %50 = arith.addf %46, %49 : vector<16x7xf32>
    %51 = vector.broadcast %45 : vector<16x1xf32> to vector<16x7xf32>
    %52 = arith.divf %50, %51 : vector<16x7xf32>
    %c3 = arith.constant 3 : index
    %c0_33 = arith.constant 0 : index
    %c0_34 = arith.constant 0 : index
    %53 = vector.load %arg9[%c3, %c0_33, %c0_34] : memref<12x7x7xf32, #tpu.memory_space<vmem>>, vector<1x7x7xf32>
    %54 = vector.shape_cast %53 : vector<1x7x7xf32> to vector<7x7xf32>
    %cst_35 = arith.constant dense<0.000000e+00> : vector<16x7xf32>
    %55 = tpu.matmul %52, %54, %cst_35 {dimension_numbers = #tpu.dot_dimension_numbers<[1], [0], [0], [1], [0, 0, 1, 1], [], []>} : vector<16x7xf32>, vector<7x7xf32>, vector<16x7xf32> -> vector<16x7xf32>
    %c3_36 = arith.constant 3 : index
    %c0_37 = arith.constant 0 : index
    %c0_38 = arith.constant 0 : index
    %56 = vector.load %arg10[%c3_36, %c0_37, %c0_38] : memref<12x1x7xf32, #tpu.memory_space<vmem>>, vector<1x1x7xf32>
    %57 = vector.shape_cast %56 : vector<1x1x7xf32> to vector<1x7xf32>
    %58 = vector.broadcast %57 : vector<1x7xf32> to vector<16x7xf32>
    %59 = arith.addf %55, %58 : vector<16x7xf32>
    %60 = arith.addf %59, %0 : vector<16x7xf32>
    %c0_39 = arith.constant 0 : index
    %c0_40 = arith.constant 0 : index
    %c0_41 = arith.constant 0 : index
    %61 = vector.load %arg16[%c0_39, %c0_40, %c0_41] : memref<12x1x7xf32, #tpu.memory_space<vmem>>, vector<1x1x7xf32>
    %62 = vector.shape_cast %61 : vector<1x1x7xf32> to vector<1x7xf32>
    %c1_42 = arith.constant 1 : index
    %c0_43 = arith.constant 0 : index
    %c0_44 = arith.constant 0 : index
    %63 = vector.load %arg16[%c1_42, %c0_43, %c0_44] : memref<12x1x7xf32, #tpu.memory_space<vmem>>, vector<1x1x7xf32>
    %64 = vector.shape_cast %63 : vector<1x1x7xf32> to vector<1x7xf32>
    %cst_45 = arith.constant dense<0.000000e+00> : vector<16xf32>
    %65 = vector.multi_reduction <add>, %60, %cst_45 [1] : vector<16x7xf32> to vector<16xf32>
    %66 = vector.shape_cast %65 : vector<16xf32> to vector<16x1xf32>
    %cst_46 = arith.constant 7.000000e+00 : f32
    %67 = vector.broadcast %cst_46 : f32 to vector<16x1xf32>
    %68 = arith.divf %66, %67 : vector<16x1xf32>
    %69 = vector.broadcast %68 : vector<16x1xf32> to vector<16x7xf32>
    %70 = arith.subf %60, %69 : vector<16x7xf32>
    %71 = arith.mulf %70, %70 : vector<16x7xf32>
    %cst_47 = arith.constant dense<0.000000e+00> : vector<16xf32>
    %72 = vector.multi_reduction <add>, %71, %cst_47 [1] : vector<16x7xf32> to vector<16xf32>
    %73 = vector.shape_cast %72 : vector<16xf32> to vector<16x1xf32>
    %cst_48 = arith.constant 7.000000e+00 : f32
    %74 = vector.broadcast %cst_48 : f32 to vector<16x1xf32>
    %75 = arith.divf %73, %74 : vector<16x1xf32>
    %76 = vector.broadcast %68 : vector<16x1xf32> to vector<16x7xf32>
    %77 = arith.subf %60, %76 : vector<16x7xf32>
    %cst_49 = arith.constant 9.99999974E-6 : f32
    %78 = vector.broadcast %cst_49 : f32 to vector<16x1xf32>
    %79 = arith.addf %75, %78 : vector<16x1xf32>
    %80 = math.rsqrt %79 : vector<16x1xf32>
    %81 = vector.broadcast %80 : vector<16x1xf32> to vector<16x7xf32>
    %82 = arith.mulf %77, %81 : vector<16x7xf32>
    %83 = vector.broadcast %62 : vector<1x7xf32> to vector<16x7xf32>
    %84 = arith.mulf %82, %83 : vector<16x7xf32>
    %85 = vector.broadcast %64 : vector<1x7xf32> to vector<16x7xf32>
    %86 = arith.addf %84, %85 : vector<16x7xf32>
    %c0_50 = arith.constant 0 : index
    %c0_51 = arith.constant 0 : index
    %c0_52 = arith.constant 0 : index
    %87 = vector.load %arg12[%c0_50, %c0_51, %c0_52] : memref<3x7x3xf32, #tpu.memory_space<vmem>>, vector<1x7x3xf32>
    %88 = vector.shape_cast %87 : vector<1x7x3xf32> to vector<7x3xf32>
    %cst_53 = arith.constant dense<0.000000e+00> : vector<16x3xf32>
    %89 = tpu.matmul %86, %88, %cst_53 {dimension_numbers = #tpu.dot_dimension_numbers<[1], [0], [0], [1], [0, 0, 1, 1], [], []>} : vector<16x7xf32>, vector<7x3xf32>, vector<16x3xf32> -> vector<16x3xf32>
    %c0_54 = arith.constant 0 : index
    %c0_55 = arith.constant 0 : index
    %c0_56 = arith.constant 0 : index
    %90 = vector.load %arg13[%c0_54, %c0_55, %c0_56] : memref<3x1x3xf32, #tpu.memory_space<vmem>>, vector<1x1x3xf32>
    %91 = vector.shape_cast %90 : vector<1x1x3xf32> to vector<1x3xf32>
    %92 = vector.broadcast %91 : vector<1x3xf32> to vector<16x3xf32>
    %93 = arith.addf %89, %92 : vector<16x3xf32>
    %cst_57 = arith.constant 0.000000e+00 : f32
    %94 = vector.broadcast %cst_57 : f32 to vector<16x3xf32>
    %95 = arith.maximumf %93, %94 : vector<16x3xf32>
    %c0_58 = arith.constant 0 : index
    %c0_59 = arith.constant 0 : index
    %c0_60 = arith.constant 0 : index
    %96 = vector.load %arg14[%c0_58, %c0_59, %c0_60] : memref<3x3x7xf32, #tpu.memory_space<vmem>>, vector<1x3x7xf32>
    %97 = vector.shape_cast %96 : vector<1x3x7xf32> to vector<3x7xf32>
    %cst_61 = arith.constant dense<0.000000e+00> : vector<16x7xf32>
    %98 = tpu.matmul %95, %97, %cst_61 {dimension_numbers = #tpu.dot_dimension_numbers<[1], [0], [0], [1], [0, 0, 1, 1], [], []>} : vector<16x3xf32>, vector<3x7xf32>, vector<16x7xf32> -> vector<16x7xf32>
    %c0_62 = arith.constant 0 : index
    %c0_63 = arith.constant 0 : index
    %c0_64 = arith.constant 0 : index
    %99 = vector.load %arg15[%c0_62, %c0_63, %c0_64] : memref<3x1x7xf32, #tpu.memory_space<vmem>>, vector<1x1x7xf32>
    %100 = vector.shape_cast %99 : vector<1x1x7xf32> to vector<1x7xf32>
    %101 = vector.broadcast %100 : vector<1x7xf32> to vector<16x7xf32>
    %102 = arith.addf %98, %101 : vector<16x7xf32>
    %cst_65 = arith.constant 0.000000e+00 : f32
    %103 = vector.broadcast %cst_65 : f32 to vector<16x7xf32>
    %104 = arith.maximumf %102, %103 : vector<16x7xf32>
    %105 = arith.addf %104, %86 : vector<16x7xf32>
    %c2_66 = arith.constant 2 : index
    %c0_67 = arith.constant 0 : index
    %c0_68 = arith.constant 0 : index
    %106 = vector.load %arg16[%c2_66, %c0_67, %c0_68] : memref<12x1x7xf32, #tpu.memory_space<vmem>>, vector<1x1x7xf32>
    %107 = vector.shape_cast %106 : vector<1x1x7xf32> to vector<1x7xf32>
    %c3_69 = arith.constant 3 : index
    %c0_70 = arith.constant 0 : index
    %c0_71 = arith.constant 0 : index
    %108 = vector.load %arg16[%c3_69, %c0_70, %c0_71] : memref<12x1x7xf32, #tpu.memory_space<vmem>>, vector<1x1x7xf32>
    %109 = vector.shape_cast %108 : vector<1x1x7xf32> to vector<1x7xf32>
    %cst_72 = arith.constant dense<0.000000e+00> : vector<16xf32>
    %110 = vector.multi_reduction <add>, %105, %cst_72 [1] : vector<16x7xf32> to vector<16xf32>
    %111 = vector.shape_cast %110 : vector<16xf32> to vector<16x1xf32>
    %cst_73 = arith.constant 7.000000e+00 : f32
    %112 = vector.broadcast %cst_73 : f32 to vector<16x1xf32>
    %113 = arith.divf %111, %112 : vector<16x1xf32>
    %114 = vector.broadcast %113 : vector<16x1xf32> to vector<16x7xf32>
    %115 = arith.subf %105, %114 : vector<16x7xf32>
    %116 = arith.mulf %115, %115 : vector<16x7xf32>
    %cst_74 = arith.constant dense<0.000000e+00> : vector<16xf32>
    %117 = vector.multi_reduction <add>, %116, %cst_74 [1] : vector<16x7xf32> to vector<16xf32>
    %118 = vector.shape_cast %117 : vector<16xf32> to vector<16x1xf32>
    %cst_75 = arith.constant 7.000000e+00 : f32
    %119 = vector.broadcast %cst_75 : f32 to vector<16x1xf32>
    %120 = arith.divf %118, %119 : vector<16x1xf32>
    %121 = vector.broadcast %113 : vector<16x1xf32> to vector<16x7xf32>
    %122 = arith.subf %105, %121 : vector<16x7xf32>
    %cst_76 = arith.constant 9.99999974E-6 : f32
    %123 = vector.broadcast %cst_76 : f32 to vector<16x1xf32>
    %124 = arith.addf %120, %123 : vector<16x1xf32>
    %125 = math.rsqrt %124 : vector<16x1xf32>
    %126 = vector.broadcast %125 : vector<16x1xf32> to vector<16x7xf32>
    %127 = arith.mulf %122, %126 : vector<16x7xf32>
    %128 = vector.broadcast %107 : vector<1x7xf32> to vector<16x7xf32>
    %129 = arith.mulf %127, %128 : vector<16x7xf32>
    %130 = vector.broadcast %109 : vector<1x7xf32> to vector<16x7xf32>
    %131 = arith.addf %129, %130 : vector<16x7xf32>
    %c4 = arith.constant 4 : index
    %c0_77 = arith.constant 0 : index
    %c0_78 = arith.constant 0 : index
    %132 = vector.load %arg9[%c4, %c0_77, %c0_78] : memref<12x7x7xf32, #tpu.memory_space<vmem>>, vector<1x7x7xf32>
    %133 = vector.shape_cast %132 : vector<1x7x7xf32> to vector<7x7xf32>
    %cst_79 = arith.constant dense<0.000000e+00> : vector<16x7xf32>
    %134 = tpu.matmul %131, %133, %cst_79 {dimension_numbers = #tpu.dot_dimension_numbers<[1], [0], [0], [1], [0, 0, 1, 1], [], []>} : vector<16x7xf32>, vector<7x7xf32>, vector<16x7xf32> -> vector<16x7xf32>
    %c4_80 = arith.constant 4 : index
    %c0_81 = arith.constant 0 : index
    %c0_82 = arith.constant 0 : index
    %135 = vector.load %arg10[%c4_80, %c0_81, %c0_82] : memref<12x1x7xf32, #tpu.memory_space<vmem>>, vector<1x1x7xf32>
    %136 = vector.shape_cast %135 : vector<1x1x7xf32> to vector<1x7xf32>
    %137 = vector.broadcast %136 : vector<1x7xf32> to vector<16x7xf32>
    %138 = arith.addf %134, %137 : vector<16x7xf32>
    %c5 = arith.constant 5 : index
    %c0_83 = arith.constant 0 : index
    %c0_84 = arith.constant 0 : index
    %139 = vector.load %arg9[%c5, %c0_83, %c0_84] : memref<12x7x7xf32, #tpu.memory_space<vmem>>, vector<1x7x7xf32>
    %140 = vector.shape_cast %139 : vector<1x7x7xf32> to vector<7x7xf32>
    %cst_85 = arith.constant dense<0.000000e+00> : vector<16x7xf32>
    %141 = tpu.matmul %131, %140, %cst_85 {dimension_numbers = #tpu.dot_dimension_numbers<[1], [0], [0], [1], [0, 0, 1, 1], [], []>} : vector<16x7xf32>, vector<7x7xf32>, vector<16x7xf32> -> vector<16x7xf32>
    %c5_86 = arith.constant 5 : index
    %c0_87 = arith.constant 0 : index
    %c0_88 = arith.constant 0 : index
    %142 = vector.load %arg10[%c5_86, %c0_87, %c0_88] : memref<12x1x7xf32, #tpu.memory_space<vmem>>, vector<1x1x7xf32>
    %143 = vector.shape_cast %142 : vector<1x1x7xf32> to vector<1x7xf32>
    %144 = vector.broadcast %143 : vector<1x7xf32> to vector<16x7xf32>
    %145 = arith.addf %141, %144 : vector<16x7xf32>
    %c6 = arith.constant 6 : index
    %c0_89 = arith.constant 0 : index
    %c0_90 = arith.constant 0 : index
    %146 = vector.load %arg9[%c6, %c0_89, %c0_90] : memref<12x7x7xf32, #tpu.memory_space<vmem>>, vector<1x7x7xf32>
    %147 = vector.shape_cast %146 : vector<1x7x7xf32> to vector<7x7xf32>
    %cst_91 = arith.constant dense<0.000000e+00> : vector<16x7xf32>
    %148 = tpu.matmul %131, %147, %cst_91 {dimension_numbers = #tpu.dot_dimension_numbers<[1], [0], [0], [1], [0, 0, 1, 1], [], []>} : vector<16x7xf32>, vector<7x7xf32>, vector<16x7xf32> -> vector<16x7xf32>
    %c6_92 = arith.constant 6 : index
    %c0_93 = arith.constant 0 : index
    %c0_94 = arith.constant 0 : index
    %149 = vector.load %arg10[%c6_92, %c0_93, %c0_94] : memref<12x1x7xf32, #tpu.memory_space<vmem>>, vector<1x1x7xf32>
    %150 = vector.shape_cast %149 : vector<1x1x7xf32> to vector<1x7xf32>
    %151 = vector.broadcast %150 : vector<1x7xf32> to vector<16x7xf32>
    %152 = arith.addf %148, %151 : vector<16x7xf32>
    %c2_95 = arith.constant 2 : index
    %c0_96 = arith.constant 0 : index
    %c0_97 = arith.constant 0 : index
    %153 = vector.load %arg11[%c2_95, %c0_96, %c0_97] : memref<6x1x7xf32, #tpu.memory_space<vmem>>, vector<1x1x7xf32>
    %154 = vector.shape_cast %153 : vector<1x1x7xf32> to vector<1x7xf32>
    %c3_98 = arith.constant 3 : index
    %c0_99 = arith.constant 0 : index
    %c0_100 = arith.constant 0 : index
    %155 = vector.load %arg11[%c3_98, %c0_99, %c0_100] : memref<6x1x7xf32, #tpu.memory_space<vmem>>, vector<1x1x7xf32>
    %156 = vector.shape_cast %155 : vector<1x1x7xf32> to vector<1x7xf32>
    %cst_101 = arith.constant 0.377964467 : f32
    %157 = vector.broadcast %cst_101 : f32 to vector<16x7xf32>
    %158 = arith.mulf %138, %157 : vector<16x7xf32>
    %cst_102 = arith.constant dense<0.000000e+00> : vector<16x16xf32>
    %159 = tpu.matmul %158, %145, %cst_102 {dimension_numbers = #tpu.dot_dimension_numbers<[1], [1], [0], [0], [0, 0, 1, 0], [], []>} : vector<16x7xf32>, vector<16x7xf32>, vector<16x16xf32> -> vector<16x16xf32>
    %160 = arith.addf %159, %1 : vector<16x16xf32>
    %161 = vector.broadcast %154 : vector<1x7xf32> to vector<16x7xf32>
    %162 = arith.mulf %158, %161 : vector<16x7xf32>
    %cst_103 = arith.constant dense<0.000000e+00> : vector<16xf32>
    %163 = vector.multi_reduction <add>, %162, %cst_103 [1] : vector<16x7xf32> to vector<16xf32>
    %164 = vector.shape_cast %163 : vector<16xf32> to vector<16x1xf32>
    %cst_104 = arith.constant dense<0xFF800000> : vector<16xf32>
    %165 = vector.multi_reduction <maximumf>, %160, %cst_104 [1] : vector<16x16xf32> to vector<16xf32>
    %166 = vector.shape_cast %165 : vector<16xf32> to vector<16x1xf32>
    %167 = arith.maximumf %166, %164 : vector<16x1xf32>
    %168 = vector.broadcast %167 : vector<16x1xf32> to vector<16x16xf32>
    %169 = arith.subf %160, %168 : vector<16x16xf32>
    %170 = math.exp %169 : vector<16x16xf32>
    %171 = arith.subf %164, %167 : vector<16x1xf32>
    %172 = math.exp %171 : vector<16x1xf32>
    %cst_105 = arith.constant dense<0.000000e+00> : vector<16xf32>
    %173 = vector.multi_reduction <add>, %170, %cst_105 [1] : vector<16x16xf32> to vector<16xf32>
    %174 = vector.shape_cast %173 : vector<16xf32> to vector<16x1xf32>
    %175 = arith.addf %174, %172 : vector<16x1xf32>
    %cst_106 = arith.constant dense<0.000000e+00> : vector<16x7xf32>
    %176 = tpu.matmul %170, %152, %cst_106 {dimension_numbers = #tpu.dot_dimension_numbers<[1], [0], [0], [1], [0, 0, 1, 1], [], []>} : vector<16x16xf32>, vector<16x7xf32>, vector<16x7xf32> -> vector<16x7xf32>
    %177 = vector.broadcast %172 : vector<16x1xf32> to vector<16x7xf32>
    %178 = vector.broadcast %156 : vector<1x7xf32> to vector<16x7xf32>
    %179 = arith.mulf %177, %178 : vector<16x7xf32>
    %180 = arith.addf %176, %179 : vector<16x7xf32>
    %181 = vector.broadcast %175 : vector<16x1xf32> to vector<16x7xf32>
    %182 = arith.divf %180, %181 : vector<16x7xf32>
    %c7 = arith.constant 7 : index
    %c0_107 = arith.constant 0 : index
    %c0_108 = arith.constant 0 : index
    %183 = vector.load %arg9[%c7, %c0_107, %c0_108] : memref<12x7x7xf32, #tpu.memory_space<vmem>>, vector<1x7x7xf32>
    %184 = vector.shape_cast %183 : vector<1x7x7xf32> to vector<7x7xf32>
    %cst_109 = arith.constant dense<0.000000e+00> : vector<16x7xf32>
    %185 = tpu.matmul %182, %184, %cst_109 {dimension_numbers = #tpu.dot_dimension_numbers<[1], [0], [0], [1], [0, 0, 1, 1], [], []>} : vector<16x7xf32>, vector<7x7xf32>, vector<16x7xf32> -> vector<16x7xf32>
    %c7_110 = arith.constant 7 : index
    %c0_111 = arith.constant 0 : index
    %c0_112 = arith.constant 0 : index
    %186 = vector.load %arg10[%c7_110, %c0_111, %c0_112] : memref<12x1x7xf32, #tpu.memory_space<vmem>>, vector<1x1x7xf32>
    %187 = vector.shape_cast %186 : vector<1x1x7xf32> to vector<1x7xf32>
    %188 = vector.broadcast %187 : vector<1x7xf32> to vector<16x7xf32>
    %189 = arith.addf %185, %188 : vector<16x7xf32>
    %190 = arith.addf %189, %131 : vector<16x7xf32>
    %c4_113 = arith.constant 4 : index
    %c0_114 = arith.constant 0 : index
    %c0_115 = arith.constant 0 : index
    %191 = vector.load %arg16[%c4_113, %c0_114, %c0_115] : memref<12x1x7xf32, #tpu.memory_space<vmem>>, vector<1x1x7xf32>
    %192 = vector.shape_cast %191 : vector<1x1x7xf32> to vector<1x7xf32>
    %c5_116 = arith.constant 5 : index
    %c0_117 = arith.constant 0 : index
    %c0_118 = arith.constant 0 : index
    %193 = vector.load %arg16[%c5_116, %c0_117, %c0_118] : memref<12x1x7xf32, #tpu.memory_space<vmem>>, vector<1x1x7xf32>
    %194 = vector.shape_cast %193 : vector<1x1x7xf32> to vector<1x7xf32>
    %cst_119 = arith.constant dense<0.000000e+00> : vector<16xf32>
    %195 = vector.multi_reduction <add>, %190, %cst_119 [1] : vector<16x7xf32> to vector<16xf32>
    %196 = vector.shape_cast %195 : vector<16xf32> to vector<16x1xf32>
    %cst_120 = arith.constant 7.000000e+00 : f32
    %197 = vector.broadcast %cst_120 : f32 to vector<16x1xf32>
    %198 = arith.divf %196, %197 : vector<16x1xf32>
    %199 = vector.broadcast %198 : vector<16x1xf32> to vector<16x7xf32>
    %200 = arith.subf %190, %199 : vector<16x7xf32>
    %201 = arith.mulf %200, %200 : vector<16x7xf32>
    %cst_121 = arith.constant dense<0.000000e+00> : vector<16xf32>
    %202 = vector.multi_reduction <add>, %201, %cst_121 [1] : vector<16x7xf32> to vector<16xf32>
    %203 = vector.shape_cast %202 : vector<16xf32> to vector<16x1xf32>
    %cst_122 = arith.constant 7.000000e+00 : f32
    %204 = vector.broadcast %cst_122 : f32 to vector<16x1xf32>
    %205 = arith.divf %203, %204 : vector<16x1xf32>
    %206 = vector.broadcast %198 : vector<16x1xf32> to vector<16x7xf32>
    %207 = arith.subf %190, %206 : vector<16x7xf32>
    %cst_123 = arith.constant 9.99999974E-6 : f32
    %208 = vector.broadcast %cst_123 : f32 to vector<16x1xf32>
    %209 = arith.addf %205, %208 : vector<16x1xf32>
    %210 = math.rsqrt %209 : vector<16x1xf32>
    %211 = vector.broadcast %210 : vector<16x1xf32> to vector<16x7xf32>
    %212 = arith.mulf %207, %211 : vector<16x7xf32>
    %213 = vector.broadcast %192 : vector<1x7xf32> to vector<16x7xf32>
    %214 = arith.mulf %212, %213 : vector<16x7xf32>
    %215 = vector.broadcast %194 : vector<1x7xf32> to vector<16x7xf32>
    %216 = arith.addf %214, %215 : vector<16x7xf32>
    %c1_124 = arith.constant 1 : index
    %c0_125 = arith.constant 0 : index
    %c0_126 = arith.constant 0 : index
    %217 = vector.load %arg12[%c1_124, %c0_125, %c0_126] : memref<3x7x3xf32, #tpu.memory_space<vmem>>, vector<1x7x3xf32>
    %218 = vector.shape_cast %217 : vector<1x7x3xf32> to vector<7x3xf32>
    %cst_127 = arith.constant dense<0.000000e+00> : vector<16x3xf32>
    %219 = tpu.matmul %216, %218, %cst_127 {dimension_numbers = #tpu.dot_dimension_numbers<[1], [0], [0], [1], [0, 0, 1, 1], [], []>} : vector<16x7xf32>, vector<7x3xf32>, vector<16x3xf32> -> vector<16x3xf32>
    %c1_128 = arith.constant 1 : index
    %c0_129 = arith.constant 0 : index
    %c0_130 = arith.constant 0 : index
    %220 = vector.load %arg13[%c1_128, %c0_129, %c0_130] : memref<3x1x3xf32, #tpu.memory_space<vmem>>, vector<1x1x3xf32>
    %221 = vector.shape_cast %220 : vector<1x1x3xf32> to vector<1x3xf32>
    %222 = vector.broadcast %221 : vector<1x3xf32> to vector<16x3xf32>
    %223 = arith.addf %219, %222 : vector<16x3xf32>
    %cst_131 = arith.constant 0.000000e+00 : f32
    %224 = vector.broadcast %cst_131 : f32 to vector<16x3xf32>
    %225 = arith.maximumf %223, %224 : vector<16x3xf32>
    %c1_132 = arith.constant 1 : index
    %c0_133 = arith.constant 0 : index
    %c0_134 = arith.constant 0 : index
    %226 = vector.load %arg14[%c1_132, %c0_133, %c0_134] : memref<3x3x7xf32, #tpu.memory_space<vmem>>, vector<1x3x7xf32>
    %227 = vector.shape_cast %226 : vector<1x3x7xf32> to vector<3x7xf32>
    %cst_135 = arith.constant dense<0.000000e+00> : vector<16x7xf32>
    %228 = tpu.matmul %225, %227, %cst_135 {dimension_numbers = #tpu.dot_dimension_numbers<[1], [0], [0], [1], [0, 0, 1, 1], [], []>} : vector<16x3xf32>, vector<3x7xf32>, vector<16x7xf32> -> vector<16x7xf32>
    %c1_136 = arith.constant 1 : index
    %c0_137 = arith.constant 0 : index
    %c0_138 = arith.constant 0 : index
    %229 = vector.load %arg15[%c1_136, %c0_137, %c0_138] : memref<3x1x7xf32, #tpu.memory_space<vmem>>, vector<1x1x7xf32>
    %230 = vector.shape_cast %229 : vector<1x1x7xf32> to vector<1x7xf32>
    %231 = vector.broadcast %230 : vector<1x7xf32> to vector<16x7xf32>
    %232 = arith.addf %228, %231 : vector<16x7xf32>
    %cst_139 = arith.constant 0.000000e+00 : f32
    %233 = vector.broadcast %cst_139 : f32 to vector<16x7xf32>
    %234 = arith.maximumf %232, %233 : vector<16x7xf32>
    %235 = arith.addf %234, %216 : vector<16x7xf32>
    %c6_140 = arith.constant 6 : index
    %c0_141 = arith.constant 0 : index
    %c0_142 = arith.constant 0 : index
    %236 = vector.load %arg16[%c6_140, %c0_141, %c0_142] : memref<12x1x7xf32, #tpu.memory_space<vmem>>, vector<1x1x7xf32>
    %237 = vector.shape_cast %236 : vector<1x1x7xf32> to vector<1x7xf32>
    %c7_143 = arith.constant 7 : index
    %c0_144 = arith.constant 0 : index
    %c0_145 = arith.constant 0 : index
    %238 = vector.load %arg16[%c7_143, %c0_144, %c0_145] : memref<12x1x7xf32, #tpu.memory_space<vmem>>, vector<1x1x7xf32>
    %239 = vector.shape_cast %238 : vector<1x1x7xf32> to vector<1x7xf32>
    %cst_146 = arith.constant dense<0.000000e+00> : vector<16xf32>
    %240 = vector.multi_reduction <add>, %235, %cst_146 [1] : vector<16x7xf32> to vector<16xf32>
    %241 = vector.shape_cast %240 : vector<16xf32> to vector<16x1xf32>
    %cst_147 = arith.constant 7.000000e+00 : f32
    %242 = vector.broadcast %cst_147 : f32 to vector<16x1xf32>
    %243 = arith.divf %241, %242 : vector<16x1xf32>
    %244 = vector.broadcast %243 : vector<16x1xf32> to vector<16x7xf32>
    %245 = arith.subf %235, %244 : vector<16x7xf32>
    %246 = arith.mulf %245, %245 : vector<16x7xf32>
    %cst_148 = arith.constant dense<0.000000e+00> : vector<16xf32>
    %247 = vector.multi_reduction <add>, %246, %cst_148 [1] : vector<16x7xf32> to vector<16xf32>
    %248 = vector.shape_cast %247 : vector<16xf32> to vector<16x1xf32>
    %cst_149 = arith.constant 7.000000e+00 : f32
    %249 = vector.broadcast %cst_149 : f32 to vector<16x1xf32>
    %250 = arith.divf %248, %249 : vector<16x1xf32>
    %251 = vector.broadcast %243 : vector<16x1xf32> to vector<16x7xf32>
    %252 = arith.subf %235, %251 : vector<16x7xf32>
    %cst_150 = arith.constant 9.99999974E-6 : f32
    %253 = vector.broadcast %cst_150 : f32 to vector<16x1xf32>
    %254 = arith.addf %250, %253 : vector<16x1xf32>
    %255 = math.rsqrt %254 : vector<16x1xf32>
    %256 = vector.broadcast %255 : vector<16x1xf32> to vector<16x7xf32>
    %257 = arith.mulf %252, %256 : vector<16x7xf32>
    %258 = vector.broadcast %237 : vector<1x7xf32> to vector<16x7xf32>
    %259 = arith.mulf %257, %258 : vector<16x7xf32>
    %260 = vector.broadcast %239 : vector<1x7xf32> to vector<16x7xf32>
    %261 = arith.addf %259, %260 : vector<16x7xf32>
    %c8 = arith.constant 8 : index
    %c0_151 = arith.constant 0 : index
    %c0_152 = arith.constant 0 : index
    %262 = vector.load %arg9[%c8, %c0_151, %c0_152] : memref<12x7x7xf32, #tpu.memory_space<vmem>>, vector<1x7x7xf32>
    %263 = vector.shape_cast %262 : vector<1x7x7xf32> to vector<7x7xf32>
    %cst_153 = arith.constant dense<0.000000e+00> : vector<16x7xf32>
    %264 = tpu.matmul %261, %263, %cst_153 {dimension_numbers = #tpu.dot_dimension_numbers<[1], [0], [0], [1], [0, 0, 1, 1], [], []>} : vector<16x7xf32>, vector<7x7xf32>, vector<16x7xf32> -> vector<16x7xf32>
    %c8_154 = arith.constant 8 : index
    %c0_155 = arith.constant 0 : index
    %c0_156 = arith.constant 0 : index
    %265 = vector.load %arg10[%c8_154, %c0_155, %c0_156] : memref<12x1x7xf32, #tpu.memory_space<vmem>>, vector<1x1x7xf32>
    %266 = vector.shape_cast %265 : vector<1x1x7xf32> to vector<1x7xf32>
    %267 = vector.broadcast %266 : vector<1x7xf32> to vector<16x7xf32>
    %268 = arith.addf %264, %267 : vector<16x7xf32>
    %c9 = arith.constant 9 : index
    %c0_157 = arith.constant 0 : index
    %c0_158 = arith.constant 0 : index
    %269 = vector.load %arg9[%c9, %c0_157, %c0_158] : memref<12x7x7xf32, #tpu.memory_space<vmem>>, vector<1x7x7xf32>
    %270 = vector.shape_cast %269 : vector<1x7x7xf32> to vector<7x7xf32>
    %cst_159 = arith.constant dense<0.000000e+00> : vector<16x7xf32>
    %271 = tpu.matmul %261, %270, %cst_159 {dimension_numbers = #tpu.dot_dimension_numbers<[1], [0], [0], [1], [0, 0, 1, 1], [], []>} : vector<16x7xf32>, vector<7x7xf32>, vector<16x7xf32> -> vector<16x7xf32>
    %c9_160 = arith.constant 9 : index
    %c0_161 = arith.constant 0 : index
    %c0_162 = arith.constant 0 : index
    %272 = vector.load %arg10[%c9_160, %c0_161, %c0_162] : memref<12x1x7xf32, #tpu.memory_space<vmem>>, vector<1x1x7xf32>
    %273 = vector.shape_cast %272 : vector<1x1x7xf32> to vector<1x7xf32>
    %274 = vector.broadcast %273 : vector<1x7xf32> to vector<16x7xf32>
    %275 = arith.addf %271, %274 : vector<16x7xf32>
    %c10 = arith.constant 10 : index
    %c0_163 = arith.constant 0 : index
    %c0_164 = arith.constant 0 : index
    %276 = vector.load %arg9[%c10, %c0_163, %c0_164] : memref<12x7x7xf32, #tpu.memory_space<vmem>>, vector<1x7x7xf32>
    %277 = vector.shape_cast %276 : vector<1x7x7xf32> to vector<7x7xf32>
    %cst_165 = arith.constant dense<0.000000e+00> : vector<16x7xf32>
    %278 = tpu.matmul %261, %277, %cst_165 {dimension_numbers = #tpu.dot_dimension_numbers<[1], [0], [0], [1], [0, 0, 1, 1], [], []>} : vector<16x7xf32>, vector<7x7xf32>, vector<16x7xf32> -> vector<16x7xf32>
    %c10_166 = arith.constant 10 : index
    %c0_167 = arith.constant 0 : index
    %c0_168 = arith.constant 0 : index
    %279 = vector.load %arg10[%c10_166, %c0_167, %c0_168] : memref<12x1x7xf32, #tpu.memory_space<vmem>>, vector<1x1x7xf32>
    %280 = vector.shape_cast %279 : vector<1x1x7xf32> to vector<1x7xf32>
    %281 = vector.broadcast %280 : vector<1x7xf32> to vector<16x7xf32>
    %282 = arith.addf %278, %281 : vector<16x7xf32>
    %c4_169 = arith.constant 4 : index
    %c0_170 = arith.constant 0 : index
    %c0_171 = arith.constant 0 : index
    %283 = vector.load %arg11[%c4_169, %c0_170, %c0_171] : memref<6x1x7xf32, #tpu.memory_space<vmem>>, vector<1x1x7xf32>
    %284 = vector.shape_cast %283 : vector<1x1x7xf32> to vector<1x7xf32>
    %c5_172 = arith.constant 5 : index
    %c0_173 = arith.constant 0 : index
    %c0_174 = arith.constant 0 : index
    %285 = vector.load %arg11[%c5_172, %c0_173, %c0_174] : memref<6x1x7xf32, #tpu.memory_space<vmem>>, vector<1x1x7xf32>
    %286 = vector.shape_cast %285 : vector<1x1x7xf32> to vector<1x7xf32>
    %cst_175 = arith.constant 0.377964467 : f32
    %287 = vector.broadcast %cst_175 : f32 to vector<16x7xf32>
    %288 = arith.mulf %268, %287 : vector<16x7xf32>
    %cst_176 = arith.constant dense<0.000000e+00> : vector<16x16xf32>
    %289 = tpu.matmul %288, %275, %cst_176 {dimension_numbers = #tpu.dot_dimension_numbers<[1], [1], [0], [0], [0, 0, 1, 0], [], []>} : vector<16x7xf32>, vector<16x7xf32>, vector<16x16xf32> -> vector<16x16xf32>
    %290 = arith.addf %289, %1 : vector<16x16xf32>
    %291 = vector.broadcast %284 : vector<1x7xf32> to vector<16x7xf32>
    %292 = arith.mulf %288, %291 : vector<16x7xf32>
    %cst_177 = arith.constant dense<0.000000e+00> : vector<16xf32>
    %293 = vector.multi_reduction <add>, %292, %cst_177 [1] : vector<16x7xf32> to vector<16xf32>
    %294 = vector.shape_cast %293 : vector<16xf32> to vector<16x1xf32>
    %cst_178 = arith.constant dense<0xFF800000> : vector<16xf32>
    %295 = vector.multi_reduction <maximumf>, %290, %cst_178 [1] : vector<16x16xf32> to vector<16xf32>
    %296 = vector.shape_cast %295 : vector<16xf32> to vector<16x1xf32>
    %297 = arith.maximumf %296, %294 : vector<16x1xf32>
    %298 = vector.broadcast %297 : vector<16x1xf32> to vector<16x16xf32>
    %299 = arith.subf %290, %298 : vector<16x16xf32>
    %300 = math.exp %299 : vector<16x16xf32>
    %301 = arith.subf %294, %297 : vector<16x1xf32>
    %302 = math.exp %301 : vector<16x1xf32>
    %cst_179 = arith.constant dense<0.000000e+00> : vector<16xf32>
    %303 = vector.multi_reduction <add>, %300, %cst_179 [1] : vector<16x16xf32> to vector<16xf32>
    %304 = vector.shape_cast %303 : vector<16xf32> to vector<16x1xf32>
    %305 = arith.addf %304, %302 : vector<16x1xf32>
    %cst_180 = arith.constant dense<0.000000e+00> : vector<16x7xf32>
    %306 = tpu.matmul %300, %282, %cst_180 {dimension_numbers = #tpu.dot_dimension_numbers<[1], [0], [0], [1], [0, 0, 1, 1], [], []>} : vector<16x16xf32>, vector<16x7xf32>, vector<16x7xf32> -> vector<16x7xf32>
    %307 = vector.broadcast %302 : vector<16x1xf32> to vector<16x7xf32>
    %308 = vector.broadcast %286 : vector<1x7xf32> to vector<16x7xf32>
    %309 = arith.mulf %307, %308 : vector<16x7xf32>
    %310 = arith.addf %306, %309 : vector<16x7xf32>
    %311 = vector.broadcast %305 : vector<16x1xf32> to vector<16x7xf32>
    %312 = arith.divf %310, %311 : vector<16x7xf32>
    %c11 = arith.constant 11 : index
    %c0_181 = arith.constant 0 : index
    %c0_182 = arith.constant 0 : index
    %313 = vector.load %arg9[%c11, %c0_181, %c0_182] : memref<12x7x7xf32, #tpu.memory_space<vmem>>, vector<1x7x7xf32>
    %314 = vector.shape_cast %313 : vector<1x7x7xf32> to vector<7x7xf32>
    %cst_183 = arith.constant dense<0.000000e+00> : vector<16x7xf32>
    %315 = tpu.matmul %312, %314, %cst_183 {dimension_numbers = #tpu.dot_dimension_numbers<[1], [0], [0], [1], [0, 0, 1, 1], [], []>} : vector<16x7xf32>, vector<7x7xf32>, vector<16x7xf32> -> vector<16x7xf32>
    %c11_184 = arith.constant 11 : index
    %c0_185 = arith.constant 0 : index
    %c0_186 = arith.constant 0 : index
    %316 = vector.load %arg10[%c11_184, %c0_185, %c0_186] : memref<12x1x7xf32, #tpu.memory_space<vmem>>, vector<1x1x7xf32>
    %317 = vector.shape_cast %316 : vector<1x1x7xf32> to vector<1x7xf32>
    %318 = vector.broadcast %317 : vector<1x7xf32> to vector<16x7xf32>
    %319 = arith.addf %315, %318 : vector<16x7xf32>
    %320 = arith.addf %319, %261 : vector<16x7xf32>
    %c8_187 = arith.constant 8 : index
    %c0_188 = arith.constant 0 : index
    %c0_189 = arith.constant 0 : index
    %321 = vector.load %arg16[%c8_187, %c0_188, %c0_189] : memref<12x1x7xf32, #tpu.memory_space<vmem>>, vector<1x1x7xf32>
    %322 = vector.shape_cast %321 : vector<1x1x7xf32> to vector<1x7xf32>
    %c9_190 = arith.constant 9 : index
    %c0_191 = arith.constant 0 : index
    %c0_192 = arith.constant 0 : index
    %323 = vector.load %arg16[%c9_190, %c0_191, %c0_192] : memref<12x1x7xf32, #tpu.memory_space<vmem>>, vector<1x1x7xf32>
    %324 = vector.shape_cast %323 : vector<1x1x7xf32> to vector<1x7xf32>
    %cst_193 = arith.constant dense<0.000000e+00> : vector<16xf32>
    %325 = vector.multi_reduction <add>, %320, %cst_193 [1] : vector<16x7xf32> to vector<16xf32>
    %326 = vector.shape_cast %325 : vector<16xf32> to vector<16x1xf32>
    %cst_194 = arith.constant 7.000000e+00 : f32
    %327 = vector.broadcast %cst_194 : f32 to vector<16x1xf32>
    %328 = arith.divf %326, %327 : vector<16x1xf32>
    %329 = vector.broadcast %328 : vector<16x1xf32> to vector<16x7xf32>
    %330 = arith.subf %320, %329 : vector<16x7xf32>
    %331 = arith.mulf %330, %330 : vector<16x7xf32>
    %cst_195 = arith.constant dense<0.000000e+00> : vector<16xf32>
    %332 = vector.multi_reduction <add>, %331, %cst_195 [1] : vector<16x7xf32> to vector<16xf32>
    %333 = vector.shape_cast %332 : vector<16xf32> to vector<16x1xf32>
    %cst_196 = arith.constant 7.000000e+00 : f32
    %334 = vector.broadcast %cst_196 : f32 to vector<16x1xf32>
    %335 = arith.divf %333, %334 : vector<16x1xf32>
    %336 = vector.broadcast %328 : vector<16x1xf32> to vector<16x7xf32>
    %337 = arith.subf %320, %336 : vector<16x7xf32>
    %cst_197 = arith.constant 9.99999974E-6 : f32
    %338 = vector.broadcast %cst_197 : f32 to vector<16x1xf32>
    %339 = arith.addf %335, %338 : vector<16x1xf32>
    %340 = math.rsqrt %339 : vector<16x1xf32>
    %341 = vector.broadcast %340 : vector<16x1xf32> to vector<16x7xf32>
    %342 = arith.mulf %337, %341 : vector<16x7xf32>
    %343 = vector.broadcast %322 : vector<1x7xf32> to vector<16x7xf32>
    %344 = arith.mulf %342, %343 : vector<16x7xf32>
    %345 = vector.broadcast %324 : vector<1x7xf32> to vector<16x7xf32>
    %346 = arith.addf %344, %345 : vector<16x7xf32>
    %c2_198 = arith.constant 2 : index
    %c0_199 = arith.constant 0 : index
    %c0_200 = arith.constant 0 : index
    %347 = vector.load %arg12[%c2_198, %c0_199, %c0_200] : memref<3x7x3xf32, #tpu.memory_space<vmem>>, vector<1x7x3xf32>
    %348 = vector.shape_cast %347 : vector<1x7x3xf32> to vector<7x3xf32>
    %cst_201 = arith.constant dense<0.000000e+00> : vector<16x3xf32>
    %349 = tpu.matmul %346, %348, %cst_201 {dimension_numbers = #tpu.dot_dimension_numbers<[1], [0], [0], [1], [0, 0, 1, 1], [], []>} : vector<16x7xf32>, vector<7x3xf32>, vector<16x3xf32> -> vector<16x3xf32>
    %c2_202 = arith.constant 2 : index
    %c0_203 = arith.constant 0 : index
    %c0_204 = arith.constant 0 : index
    %350 = vector.load %arg13[%c2_202, %c0_203, %c0_204] : memref<3x1x3xf32, #tpu.memory_space<vmem>>, vector<1x1x3xf32>
    %351 = vector.shape_cast %350 : vector<1x1x3xf32> to vector<1x3xf32>
    %352 = vector.broadcast %351 : vector<1x3xf32> to vector<16x3xf32>
    %353 = arith.addf %349, %352 : vector<16x3xf32>
    %cst_205 = arith.constant 0.000000e+00 : f32
    %354 = vector.broadcast %cst_205 : f32 to vector<16x3xf32>
    %355 = arith.maximumf %353, %354 : vector<16x3xf32>
    %c2_206 = arith.constant 2 : index
    %c0_207 = arith.constant 0 : index
    %c0_208 = arith.constant 0 : index
    %356 = vector.load %arg14[%c2_206, %c0_207, %c0_208] : memref<3x3x7xf32, #tpu.memory_space<vmem>>, vector<1x3x7xf32>
    %357 = vector.shape_cast %356 : vector<1x3x7xf32> to vector<3x7xf32>
    %cst_209 = arith.constant dense<0.000000e+00> : vector<16x7xf32>
    %358 = tpu.matmul %355, %357, %cst_209 {dimension_numbers = #tpu.dot_dimension_numbers<[1], [0], [0], [1], [0, 0, 1, 1], [], []>} : vector<16x3xf32>, vector<3x7xf32>, vector<16x7xf32> -> vector<16x7xf32>
    %c2_210 = arith.constant 2 : index
    %c0_211 = arith.constant 0 : index
    %c0_212 = arith.constant 0 : index
    %359 = vector.load %arg15[%c2_210, %c0_211, %c0_212] : memref<3x1x7xf32, #tpu.memory_space<vmem>>, vector<1x1x7xf32>
    %360 = vector.shape_cast %359 : vector<1x1x7xf32> to vector<1x7xf32>
    %361 = vector.broadcast %360 : vector<1x7xf32> to vector<16x7xf32>
    %362 = arith.addf %358, %361 : vector<16x7xf32>
    %cst_213 = arith.constant 0.000000e+00 : f32
    %363 = vector.broadcast %cst_213 : f32 to vector<16x7xf32>
    %364 = arith.maximumf %362, %363 : vector<16x7xf32>
    %365 = arith.addf %364, %346 : vector<16x7xf32>
    %c10_214 = arith.constant 10 : index
    %c0_215 = arith.constant 0 : index
    %c0_216 = arith.constant 0 : index
    %366 = vector.load %arg16[%c10_214, %c0_215, %c0_216] : memref<12x1x7xf32, #tpu.memory_space<vmem>>, vector<1x1x7xf32>
    %367 = vector.shape_cast %366 : vector<1x1x7xf32> to vector<1x7xf32>
    %c11_217 = arith.constant 11 : index
    %c0_218 = arith.constant 0 : index
    %c0_219 = arith.constant 0 : index
    %368 = vector.load %arg16[%c11_217, %c0_218, %c0_219] : memref<12x1x7xf32, #tpu.memory_space<vmem>>, vector<1x1x7xf32>
    %369 = vector.shape_cast %368 : vector<1x1x7xf32> to vector<1x7xf32>
    %cst_220 = arith.constant dense<0.000000e+00> : vector<16xf32>
    %370 = vector.multi_reduction <add>, %365, %cst_220 [1] : vector<16x7xf32> to vector<16xf32>
    %371 = vector.shape_cast %370 : vector<16xf32> to vector<16x1xf32>
    %cst_221 = arith.constant 7.000000e+00 : f32
    %372 = vector.broadcast %cst_221 : f32 to vector<16x1xf32>
    %373 = arith.divf %371, %372 : vector<16x1xf32>
    %374 = vector.broadcast %373 : vector<16x1xf32> to vector<16x7xf32>
    %375 = arith.subf %365, %374 : vector<16x7xf32>
    %376 = arith.mulf %375, %375 : vector<16x7xf32>
    %cst_222 = arith.constant dense<0.000000e+00> : vector<16xf32>
    %377 = vector.multi_reduction <add>, %376, %cst_222 [1] : vector<16x7xf32> to vector<16xf32>
    %378 = vector.shape_cast %377 : vector<16xf32> to vector<16x1xf32>
    %cst_223 = arith.constant 7.000000e+00 : f32
    %379 = vector.broadcast %cst_223 : f32 to vector<16x1xf32>
    %380 = arith.divf %378, %379 : vector<16x1xf32>
    %381 = vector.broadcast %373 : vector<16x1xf32> to vector<16x7xf32>
    %382 = arith.subf %365, %381 : vector<16x7xf32>
    %cst_224 = arith.constant 9.99999974E-6 : f32
    %383 = vector.broadcast %cst_224 : f32 to vector<16x1xf32>
    %384 = arith.addf %380, %383 : vector<16x1xf32>
    %385 = math.rsqrt %384 : vector<16x1xf32>
    %386 = vector.broadcast %385 : vector<16x1xf32> to vector<16x7xf32>
    %387 = arith.mulf %382, %386 : vector<16x7xf32>
    %388 = vector.broadcast %367 : vector<1x7xf32> to vector<16x7xf32>
    %389 = arith.mulf %387, %388 : vector<16x7xf32>
    %390 = vector.broadcast %369 : vector<1x7xf32> to vector<16x7xf32>
    %391 = arith.addf %389, %390 : vector<16x7xf32>
    %c0_225 = arith.constant 0 : index
    %c0_226 = arith.constant 0 : index
    %392 = vector.load %arg17[%c0_225, %c0_226] : memref<7x3xf32, #tpu.memory_space<vmem>>, vector<7x3xf32>
    %cst_227 = arith.constant dense<0.000000e+00> : vector<16x3xf32>
    %393 = tpu.matmul %391, %392, %cst_227 {dimension_numbers = #tpu.dot_dimension_numbers<[1], [0], [0], [1], [0, 0, 1, 1], [], []>} : vector<16x7xf32>, vector<7x3xf32>, vector<16x3xf32> -> vector<16x3xf32>
    %c0_228 = arith.constant 0 : index
    %c0_229 = arith.constant 0 : index
    %394 = vector.load %arg18[%c0_228, %c0_229] : memref<1x3xf32, #tpu.memory_space<vmem>>, vector<1x3xf32>
    %395 = vector.broadcast %394 : vector<1x3xf32> to vector<16x3xf32>
    %396 = arith.addf %393, %395 : vector<16x3xf32>
    %c0_230 = arith.constant 0 : index
    %c0_231 = arith.constant 0 : index
    %397 = vector.load %arg2[%c0_230, %c0_231] : memref<8x576xf32, #tpu.memory_space<vmem>>, vector<8x576xf32>
    %c0_232 = arith.constant 0 : index
    %c0_233 = arith.constant 0 : index
    %398 = vector.load %arg7[%c0_232, %c0_233] : memref<576x7xf32, #tpu.memory_space<vmem>>, vector<576x7xf32>
    %cst_234 = arith.constant dense<0.000000e+00> : vector<8x7xf32>
    %399 = tpu.matmul %397, %398, %cst_234 {dimension_numbers = #tpu.dot_dimension_numbers<[1], [0], [0], [1], [0, 0, 1, 1], [], []>} : vector<8x576xf32>, vector<576x7xf32>, vector<8x7xf32> -> vector<8x7xf32>
    %c0_235 = arith.constant 0 : index
    %c0_236 = arith.constant 0 : index
    %400 = vector.load %arg8[%c0_235, %c0_236] : memref<1x7xf32, #tpu.memory_space<vmem>>, vector<1x7xf32>
    %401 = vector.broadcast %400 : vector<1x7xf32> to vector<8x7xf32>
    %402 = arith.addf %399, %401 : vector<8x7xf32>
    %c0_237 = arith.constant 0 : index
    %c0_238 = arith.constant 0 : index
    %403 = vector.load %arg1[%c0_237, %c0_238] : memref<12x7xf32, #tpu.memory_space<vmem>>, vector<12x7xf32>
    %cst_239 = arith.constant dense<0.000000e+00> : vector<12x8xf32>
    %404 = tpu.matmul %403, %402, %cst_239 {dimension_numbers = #tpu.dot_dimension_numbers<[1], [1], [0], [0], [0, 0, 1, 0], [], []>} : vector<12x7xf32>, vector<8x7xf32>, vector<12x8xf32> -> vector<12x8xf32>
    %cst_240 = arith.constant 0.377964467 : f32
    %405 = vector.broadcast %cst_240 : f32 to vector<12x8xf32>
    %406 = arith.mulf %404, %405 : vector<12x8xf32>
    %c0_241 = arith.constant 0 : index
    %c0_242 = arith.constant 0 : index
    %407 = vector.load %arg6[%c0_241, %c0_242] : memref<12x8xf32, #tpu.memory_space<vmem>>, vector<12x8xf32>
    %408 = arith.addf %406, %407 : vector<12x8xf32>
    %cst_243 = arith.constant dense<0xFF800000> : vector<12xf32>
    %409 = vector.multi_reduction <maximumf>, %408, %cst_243 [1] : vector<12x8xf32> to vector<12xf32>
    %410 = vector.shape_cast %409 : vector<12xf32> to vector<12x1xf32>
    %411 = vector.broadcast %410 : vector<12x1xf32> to vector<12x8xf32>
    %412 = arith.subf %408, %411 : vector<12x8xf32>
    %413 = math.exp %412 : vector<12x8xf32>
    %cst_244 = arith.constant dense<0.000000e+00> : vector<12x7xf32>
    %414 = tpu.matmul %413, %402, %cst_244 {dimension_numbers = #tpu.dot_dimension_numbers<[1], [0], [0], [1], [0, 0, 1, 1], [], []>} : vector<12x8xf32>, vector<8x7xf32>, vector<12x7xf32> -> vector<12x7xf32>
    %cst_245 = arith.constant dense<0.000000e+00> : vector<12xf32>
    %415 = vector.multi_reduction <add>, %413, %cst_245 [1] : vector<12x8xf32> to vector<12xf32>
    %416 = vector.shape_cast %415 : vector<12xf32> to vector<12x1xf32>
    %417 = vector.broadcast %416 : vector<12x1xf32> to vector<12x7xf32>
    %418 = arith.divf %414, %417 : vector<12x7xf32>
    %cst_246 = arith.constant 5.000000e-01 : f32
    %419 = vector.broadcast %cst_246 : f32 to vector<12x7xf32>
    %420 = arith.mulf %419, %403 : vector<12x7xf32>
    %cst_247 = arith.constant 5.000000e-01 : f32
    %421 = vector.broadcast %cst_247 : f32 to vector<12x7xf32>
    %422 = arith.mulf %421, %418 : vector<12x7xf32>
    %423 = arith.addf %420, %422 : vector<12x7xf32>
    %c0_248 = arith.constant 0 : index
    %c0_249 = arith.constant 0 : index
    %424 = vector.load %arg4[%c0_248, %c0_249] : memref<12x12xf32, #tpu.memory_space<vmem>>, vector<12x12xf32>
    %c0_250 = arith.constant 0 : index
    %c0_251 = arith.constant 0 : index
    %425 = vector.load %arg5[%c0_250, %c0_251] : memref<12x16xf32, #tpu.memory_space<vmem>>, vector<12x16xf32>
    %c0_252 = arith.constant 0 : index
    %c0_253 = arith.constant 0 : index
    %c0_254 = arith.constant 0 : index
    %426 = vector.load %arg19[%c0_252, %c0_253, %c0_254] : memref<12x7x7xf32, #tpu.memory_space<vmem>>, vector<1x7x7xf32>
    %427 = vector.shape_cast %426 : vector<1x7x7xf32> to vector<7x7xf32>
    %cst_255 = arith.constant dense<0.000000e+00> : vector<12x7xf32>
    %428 = tpu.matmul %423, %427, %cst_255 {dimension_numbers = #tpu.dot_dimension_numbers<[1], [0], [0], [1], [0, 0, 1, 1], [], []>} : vector<12x7xf32>, vector<7x7xf32>, vector<12x7xf32> -> vector<12x7xf32>
    %c0_256 = arith.constant 0 : index
    %c0_257 = arith.constant 0 : index
    %c0_258 = arith.constant 0 : index
    %429 = vector.load %arg20[%c0_256, %c0_257, %c0_258] : memref<12x1x7xf32, #tpu.memory_space<vmem>>, vector<1x1x7xf32>
    %430 = vector.shape_cast %429 : vector<1x1x7xf32> to vector<1x7xf32>
    %431 = vector.broadcast %430 : vector<1x7xf32> to vector<12x7xf32>
    %432 = arith.addf %428, %431 : vector<12x7xf32>
    %c1_259 = arith.constant 1 : index
    %c0_260 = arith.constant 0 : index
    %c0_261 = arith.constant 0 : index
    %433 = vector.load %arg19[%c1_259, %c0_260, %c0_261] : memref<12x7x7xf32, #tpu.memory_space<vmem>>, vector<1x7x7xf32>
    %434 = vector.shape_cast %433 : vector<1x7x7xf32> to vector<7x7xf32>
    %cst_262 = arith.constant dense<0.000000e+00> : vector<12x7xf32>
    %435 = tpu.matmul %423, %434, %cst_262 {dimension_numbers = #tpu.dot_dimension_numbers<[1], [0], [0], [1], [0, 0, 1, 1], [], []>} : vector<12x7xf32>, vector<7x7xf32>, vector<12x7xf32> -> vector<12x7xf32>
    %c1_263 = arith.constant 1 : index
    %c0_264 = arith.constant 0 : index
    %c0_265 = arith.constant 0 : index
    %436 = vector.load %arg20[%c1_263, %c0_264, %c0_265] : memref<12x1x7xf32, #tpu.memory_space<vmem>>, vector<1x1x7xf32>
    %437 = vector.shape_cast %436 : vector<1x1x7xf32> to vector<1x7xf32>
    %438 = vector.broadcast %437 : vector<1x7xf32> to vector<12x7xf32>
    %439 = arith.addf %435, %438 : vector<12x7xf32>
    %c2_266 = arith.constant 2 : index
    %c0_267 = arith.constant 0 : index
    %c0_268 = arith.constant 0 : index
    %440 = vector.load %arg19[%c2_266, %c0_267, %c0_268] : memref<12x7x7xf32, #tpu.memory_space<vmem>>, vector<1x7x7xf32>
    %441 = vector.shape_cast %440 : vector<1x7x7xf32> to vector<7x7xf32>
    %cst_269 = arith.constant dense<0.000000e+00> : vector<12x7xf32>
    %442 = tpu.matmul %423, %441, %cst_269 {dimension_numbers = #tpu.dot_dimension_numbers<[1], [0], [0], [1], [0, 0, 1, 1], [], []>} : vector<12x7xf32>, vector<7x7xf32>, vector<12x7xf32> -> vector<12x7xf32>
    %c2_270 = arith.constant 2 : index
    %c0_271 = arith.constant 0 : index
    %c0_272 = arith.constant 0 : index
    %443 = vector.load %arg20[%c2_270, %c0_271, %c0_272] : memref<12x1x7xf32, #tpu.memory_space<vmem>>, vector<1x1x7xf32>
    %444 = vector.shape_cast %443 : vector<1x1x7xf32> to vector<1x7xf32>
    %445 = vector.broadcast %444 : vector<1x7xf32> to vector<12x7xf32>
    %446 = arith.addf %442, %445 : vector<12x7xf32>
    %c0_273 = arith.constant 0 : index
    %c0_274 = arith.constant 0 : index
    %c0_275 = arith.constant 0 : index
    %447 = vector.load %arg21[%c0_273, %c0_274, %c0_275] : memref<6x1x7xf32, #tpu.memory_space<vmem>>, vector<1x1x7xf32>
    %448 = vector.shape_cast %447 : vector<1x1x7xf32> to vector<1x7xf32>
    %c1_276 = arith.constant 1 : index
    %c0_277 = arith.constant 0 : index
    %c0_278 = arith.constant 0 : index
    %449 = vector.load %arg21[%c1_276, %c0_277, %c0_278] : memref<6x1x7xf32, #tpu.memory_space<vmem>>, vector<1x1x7xf32>
    %450 = vector.shape_cast %449 : vector<1x1x7xf32> to vector<1x7xf32>
    %cst_279 = arith.constant 0.377964467 : f32
    %451 = vector.broadcast %cst_279 : f32 to vector<12x7xf32>
    %452 = arith.mulf %432, %451 : vector<12x7xf32>
    %cst_280 = arith.constant dense<0.000000e+00> : vector<12x12xf32>
    %453 = tpu.matmul %452, %439, %cst_280 {dimension_numbers = #tpu.dot_dimension_numbers<[1], [1], [0], [0], [0, 0, 1, 0], [], []>} : vector<12x7xf32>, vector<12x7xf32>, vector<12x12xf32> -> vector<12x12xf32>
    %454 = arith.addf %453, %424 : vector<12x12xf32>
    %455 = vector.broadcast %448 : vector<1x7xf32> to vector<12x7xf32>
    %456 = arith.mulf %452, %455 : vector<12x7xf32>
    %cst_281 = arith.constant dense<0.000000e+00> : vector<12xf32>
    %457 = vector.multi_reduction <add>, %456, %cst_281 [1] : vector<12x7xf32> to vector<12xf32>
    %458 = vector.shape_cast %457 : vector<12xf32> to vector<12x1xf32>
    %cst_282 = arith.constant dense<0xFF800000> : vector<12xf32>
    %459 = vector.multi_reduction <maximumf>, %454, %cst_282 [1] : vector<12x12xf32> to vector<12xf32>
    %460 = vector.shape_cast %459 : vector<12xf32> to vector<12x1xf32>
    %461 = arith.maximumf %460, %458 : vector<12x1xf32>
    %462 = vector.broadcast %461 : vector<12x1xf32> to vector<12x12xf32>
    %463 = arith.subf %454, %462 : vector<12x12xf32>
    %464 = math.exp %463 : vector<12x12xf32>
    %465 = arith.subf %458, %461 : vector<12x1xf32>
    %466 = math.exp %465 : vector<12x1xf32>
    %cst_283 = arith.constant dense<0.000000e+00> : vector<12xf32>
    %467 = vector.multi_reduction <add>, %464, %cst_283 [1] : vector<12x12xf32> to vector<12xf32>
    %468 = vector.shape_cast %467 : vector<12xf32> to vector<12x1xf32>
    %469 = arith.addf %468, %466 : vector<12x1xf32>
    %cst_284 = arith.constant dense<0.000000e+00> : vector<12x7xf32>
    %470 = tpu.matmul %464, %446, %cst_284 {dimension_numbers = #tpu.dot_dimension_numbers<[1], [0], [0], [1], [0, 0, 1, 1], [], []>} : vector<12x12xf32>, vector<12x7xf32>, vector<12x7xf32> -> vector<12x7xf32>
    %471 = vector.broadcast %466 : vector<12x1xf32> to vector<12x7xf32>
    %472 = vector.broadcast %450 : vector<1x7xf32> to vector<12x7xf32>
    %473 = arith.mulf %471, %472 : vector<12x7xf32>
    %474 = arith.addf %470, %473 : vector<12x7xf32>
    %475 = vector.broadcast %469 : vector<12x1xf32> to vector<12x7xf32>
    %476 = arith.divf %474, %475 : vector<12x7xf32>
    %c3_285 = arith.constant 3 : index
    %c0_286 = arith.constant 0 : index
    %c0_287 = arith.constant 0 : index
    %477 = vector.load %arg19[%c3_285, %c0_286, %c0_287] : memref<12x7x7xf32, #tpu.memory_space<vmem>>, vector<1x7x7xf32>
    %478 = vector.shape_cast %477 : vector<1x7x7xf32> to vector<7x7xf32>
    %cst_288 = arith.constant dense<0.000000e+00> : vector<12x7xf32>
    %479 = tpu.matmul %476, %478, %cst_288 {dimension_numbers = #tpu.dot_dimension_numbers<[1], [0], [0], [1], [0, 0, 1, 1], [], []>} : vector<12x7xf32>, vector<7x7xf32>, vector<12x7xf32> -> vector<12x7xf32>
    %c3_289 = arith.constant 3 : index
    %c0_290 = arith.constant 0 : index
    %c0_291 = arith.constant 0 : index
    %480 = vector.load %arg20[%c3_289, %c0_290, %c0_291] : memref<12x1x7xf32, #tpu.memory_space<vmem>>, vector<1x1x7xf32>
    %481 = vector.shape_cast %480 : vector<1x1x7xf32> to vector<1x7xf32>
    %482 = vector.broadcast %481 : vector<1x7xf32> to vector<12x7xf32>
    %483 = arith.addf %479, %482 : vector<12x7xf32>
    %484 = arith.addf %483, %423 : vector<12x7xf32>
    %c0_292 = arith.constant 0 : index
    %c0_293 = arith.constant 0 : index
    %c0_294 = arith.constant 0 : index
    %485 = vector.load %arg29[%c0_292, %c0_293, %c0_294] : memref<18x1x7xf32, #tpu.memory_space<vmem>>, vector<1x1x7xf32>
    %486 = vector.shape_cast %485 : vector<1x1x7xf32> to vector<1x7xf32>
    %c1_295 = arith.constant 1 : index
    %c0_296 = arith.constant 0 : index
    %c0_297 = arith.constant 0 : index
    %487 = vector.load %arg29[%c1_295, %c0_296, %c0_297] : memref<18x1x7xf32, #tpu.memory_space<vmem>>, vector<1x1x7xf32>
    %488 = vector.shape_cast %487 : vector<1x1x7xf32> to vector<1x7xf32>
    %cst_298 = arith.constant dense<0.000000e+00> : vector<12xf32>
    %489 = vector.multi_reduction <add>, %484, %cst_298 [1] : vector<12x7xf32> to vector<12xf32>
    %490 = vector.shape_cast %489 : vector<12xf32> to vector<12x1xf32>
    %cst_299 = arith.constant 7.000000e+00 : f32
    %491 = vector.broadcast %cst_299 : f32 to vector<12x1xf32>
    %492 = arith.divf %490, %491 : vector<12x1xf32>
    %493 = vector.broadcast %492 : vector<12x1xf32> to vector<12x7xf32>
    %494 = arith.subf %484, %493 : vector<12x7xf32>
    %495 = arith.mulf %494, %494 : vector<12x7xf32>
    %cst_300 = arith.constant dense<0.000000e+00> : vector<12xf32>
    %496 = vector.multi_reduction <add>, %495, %cst_300 [1] : vector<12x7xf32> to vector<12xf32>
    %497 = vector.shape_cast %496 : vector<12xf32> to vector<12x1xf32>
    %cst_301 = arith.constant 7.000000e+00 : f32
    %498 = vector.broadcast %cst_301 : f32 to vector<12x1xf32>
    %499 = arith.divf %497, %498 : vector<12x1xf32>
    %500 = vector.broadcast %492 : vector<12x1xf32> to vector<12x7xf32>
    %501 = arith.subf %484, %500 : vector<12x7xf32>
    %cst_302 = arith.constant 9.99999974E-6 : f32
    %502 = vector.broadcast %cst_302 : f32 to vector<12x1xf32>
    %503 = arith.addf %499, %502 : vector<12x1xf32>
    %504 = math.rsqrt %503 : vector<12x1xf32>
    %505 = vector.broadcast %504 : vector<12x1xf32> to vector<12x7xf32>
    %506 = arith.mulf %501, %505 : vector<12x7xf32>
    %507 = vector.broadcast %486 : vector<1x7xf32> to vector<12x7xf32>
    %508 = arith.mulf %506, %507 : vector<12x7xf32>
    %509 = vector.broadcast %488 : vector<1x7xf32> to vector<12x7xf32>
    %510 = arith.addf %508, %509 : vector<12x7xf32>
    %c0_303 = arith.constant 0 : index
    %c0_304 = arith.constant 0 : index
    %c0_305 = arith.constant 0 : index
    %511 = vector.load %arg22[%c0_303, %c0_304, %c0_305] : memref<12x7x7xf32, #tpu.memory_space<vmem>>, vector<1x7x7xf32>
    %512 = vector.shape_cast %511 : vector<1x7x7xf32> to vector<7x7xf32>
    %cst_306 = arith.constant dense<0.000000e+00> : vector<12x7xf32>
    %513 = tpu.matmul %510, %512, %cst_306 {dimension_numbers = #tpu.dot_dimension_numbers<[1], [0], [0], [1], [0, 0, 1, 1], [], []>} : vector<12x7xf32>, vector<7x7xf32>, vector<12x7xf32> -> vector<12x7xf32>
    %c0_307 = arith.constant 0 : index
    %c0_308 = arith.constant 0 : index
    %c0_309 = arith.constant 0 : index
    %514 = vector.load %arg23[%c0_307, %c0_308, %c0_309] : memref<12x1x7xf32, #tpu.memory_space<vmem>>, vector<1x1x7xf32>
    %515 = vector.shape_cast %514 : vector<1x1x7xf32> to vector<1x7xf32>
    %516 = vector.broadcast %515 : vector<1x7xf32> to vector<12x7xf32>
    %517 = arith.addf %513, %516 : vector<12x7xf32>
    %c1_310 = arith.constant 1 : index
    %c0_311 = arith.constant 0 : index
    %c0_312 = arith.constant 0 : index
    %518 = vector.load %arg22[%c1_310, %c0_311, %c0_312] : memref<12x7x7xf32, #tpu.memory_space<vmem>>, vector<1x7x7xf32>
    %519 = vector.shape_cast %518 : vector<1x7x7xf32> to vector<7x7xf32>
    %cst_313 = arith.constant dense<0.000000e+00> : vector<16x7xf32>
    %520 = tpu.matmul %391, %519, %cst_313 {dimension_numbers = #tpu.dot_dimension_numbers<[1], [0], [0], [1], [0, 0, 1, 1], [], []>} : vector<16x7xf32>, vector<7x7xf32>, vector<16x7xf32> -> vector<16x7xf32>
    %c1_314 = arith.constant 1 : index
    %c0_315 = arith.constant 0 : index
    %c0_316 = arith.constant 0 : index
    %521 = vector.load %arg23[%c1_314, %c0_315, %c0_316] : memref<12x1x7xf32, #tpu.memory_space<vmem>>, vector<1x1x7xf32>
    %522 = vector.shape_cast %521 : vector<1x1x7xf32> to vector<1x7xf32>
    %523 = vector.broadcast %522 : vector<1x7xf32> to vector<16x7xf32>
    %524 = arith.addf %520, %523 : vector<16x7xf32>
    %c2_317 = arith.constant 2 : index
    %c0_318 = arith.constant 0 : index
    %c0_319 = arith.constant 0 : index
    %525 = vector.load %arg22[%c2_317, %c0_318, %c0_319] : memref<12x7x7xf32, #tpu.memory_space<vmem>>, vector<1x7x7xf32>
    %526 = vector.shape_cast %525 : vector<1x7x7xf32> to vector<7x7xf32>
    %cst_320 = arith.constant dense<0.000000e+00> : vector<16x7xf32>
    %527 = tpu.matmul %391, %526, %cst_320 {dimension_numbers = #tpu.dot_dimension_numbers<[1], [0], [0], [1], [0, 0, 1, 1], [], []>} : vector<16x7xf32>, vector<7x7xf32>, vector<16x7xf32> -> vector<16x7xf32>
    %c2_321 = arith.constant 2 : index
    %c0_322 = arith.constant 0 : index
    %c0_323 = arith.constant 0 : index
    %528 = vector.load %arg23[%c2_321, %c0_322, %c0_323] : memref<12x1x7xf32, #tpu.memory_space<vmem>>, vector<1x1x7xf32>
    %529 = vector.shape_cast %528 : vector<1x1x7xf32> to vector<1x7xf32>
    %530 = vector.broadcast %529 : vector<1x7xf32> to vector<16x7xf32>
    %531 = arith.addf %527, %530 : vector<16x7xf32>
    %c0_324 = arith.constant 0 : index
    %c0_325 = arith.constant 0 : index
    %c0_326 = arith.constant 0 : index
    %532 = vector.load %arg24[%c0_324, %c0_325, %c0_326] : memref<6x1x7xf32, #tpu.memory_space<vmem>>, vector<1x1x7xf32>
    %533 = vector.shape_cast %532 : vector<1x1x7xf32> to vector<1x7xf32>
    %c1_327 = arith.constant 1 : index
    %c0_328 = arith.constant 0 : index
    %c0_329 = arith.constant 0 : index
    %534 = vector.load %arg24[%c1_327, %c0_328, %c0_329] : memref<6x1x7xf32, #tpu.memory_space<vmem>>, vector<1x1x7xf32>
    %535 = vector.shape_cast %534 : vector<1x1x7xf32> to vector<1x7xf32>
    %cst_330 = arith.constant 0.377964467 : f32
    %536 = vector.broadcast %cst_330 : f32 to vector<12x7xf32>
    %537 = arith.mulf %517, %536 : vector<12x7xf32>
    %cst_331 = arith.constant dense<0.000000e+00> : vector<12x16xf32>
    %538 = tpu.matmul %537, %524, %cst_331 {dimension_numbers = #tpu.dot_dimension_numbers<[1], [1], [0], [0], [0, 0, 1, 0], [], []>} : vector<12x7xf32>, vector<16x7xf32>, vector<12x16xf32> -> vector<12x16xf32>
    %539 = arith.addf %538, %425 : vector<12x16xf32>
    %540 = vector.broadcast %533 : vector<1x7xf32> to vector<12x7xf32>
    %541 = arith.mulf %537, %540 : vector<12x7xf32>
    %cst_332 = arith.constant dense<0.000000e+00> : vector<12xf32>
    %542 = vector.multi_reduction <add>, %541, %cst_332 [1] : vector<12x7xf32> to vector<12xf32>
    %543 = vector.shape_cast %542 : vector<12xf32> to vector<12x1xf32>
    %cst_333 = arith.constant dense<0xFF800000> : vector<12xf32>
    %544 = vector.multi_reduction <maximumf>, %539, %cst_333 [1] : vector<12x16xf32> to vector<12xf32>
    %545 = vector.shape_cast %544 : vector<12xf32> to vector<12x1xf32>
    %546 = arith.maximumf %545, %543 : vector<12x1xf32>
    %547 = vector.broadcast %546 : vector<12x1xf32> to vector<12x16xf32>
    %548 = arith.subf %539, %547 : vector<12x16xf32>
    %549 = math.exp %548 : vector<12x16xf32>
    %550 = arith.subf %543, %546 : vector<12x1xf32>
    %551 = math.exp %550 : vector<12x1xf32>
    %cst_334 = arith.constant dense<0.000000e+00> : vector<12xf32>
    %552 = vector.multi_reduction <add>, %549, %cst_334 [1] : vector<12x16xf32> to vector<12xf32>
    %553 = vector.shape_cast %552 : vector<12xf32> to vector<12x1xf32>
    %554 = arith.addf %553, %551 : vector<12x1xf32>
    %cst_335 = arith.constant dense<0.000000e+00> : vector<12x7xf32>
    %555 = tpu.matmul %549, %531, %cst_335 {dimension_numbers = #tpu.dot_dimension_numbers<[1], [0], [0], [1], [0, 0, 1, 1], [], []>} : vector<12x16xf32>, vector<16x7xf32>, vector<12x7xf32> -> vector<12x7xf32>
    %556 = vector.broadcast %551 : vector<12x1xf32> to vector<12x7xf32>
    %557 = vector.broadcast %535 : vector<1x7xf32> to vector<12x7xf32>
    %558 = arith.mulf %556, %557 : vector<12x7xf32>
    %559 = arith.addf %555, %558 : vector<12x7xf32>
    %560 = vector.broadcast %554 : vector<12x1xf32> to vector<12x7xf32>
    %561 = arith.divf %559, %560 : vector<12x7xf32>
    %c3_336 = arith.constant 3 : index
    %c0_337 = arith.constant 0 : index
    %c0_338 = arith.constant 0 : index
    %562 = vector.load %arg22[%c3_336, %c0_337, %c0_338] : memref<12x7x7xf32, #tpu.memory_space<vmem>>, vector<1x7x7xf32>
    %563 = vector.shape_cast %562 : vector<1x7x7xf32> to vector<7x7xf32>
    %cst_339 = arith.constant dense<0.000000e+00> : vector<12x7xf32>
    %564 = tpu.matmul %561, %563, %cst_339 {dimension_numbers = #tpu.dot_dimension_numbers<[1], [0], [0], [1], [0, 0, 1, 1], [], []>} : vector<12x7xf32>, vector<7x7xf32>, vector<12x7xf32> -> vector<12x7xf32>
    %c3_340 = arith.constant 3 : index
    %c0_341 = arith.constant 0 : index
    %c0_342 = arith.constant 0 : index
    %565 = vector.load %arg23[%c3_340, %c0_341, %c0_342] : memref<12x1x7xf32, #tpu.memory_space<vmem>>, vector<1x1x7xf32>
    %566 = vector.shape_cast %565 : vector<1x1x7xf32> to vector<1x7xf32>
    %567 = vector.broadcast %566 : vector<1x7xf32> to vector<12x7xf32>
    %568 = arith.addf %564, %567 : vector<12x7xf32>
    %569 = arith.addf %568, %510 : vector<12x7xf32>
    %c2_343 = arith.constant 2 : index
    %c0_344 = arith.constant 0 : index
    %c0_345 = arith.constant 0 : index
    %570 = vector.load %arg29[%c2_343, %c0_344, %c0_345] : memref<18x1x7xf32, #tpu.memory_space<vmem>>, vector<1x1x7xf32>
    %571 = vector.shape_cast %570 : vector<1x1x7xf32> to vector<1x7xf32>
    %c3_346 = arith.constant 3 : index
    %c0_347 = arith.constant 0 : index
    %c0_348 = arith.constant 0 : index
    %572 = vector.load %arg29[%c3_346, %c0_347, %c0_348] : memref<18x1x7xf32, #tpu.memory_space<vmem>>, vector<1x1x7xf32>
    %573 = vector.shape_cast %572 : vector<1x1x7xf32> to vector<1x7xf32>
    %cst_349 = arith.constant dense<0.000000e+00> : vector<12xf32>
    %574 = vector.multi_reduction <add>, %569, %cst_349 [1] : vector<12x7xf32> to vector<12xf32>
    %575 = vector.shape_cast %574 : vector<12xf32> to vector<12x1xf32>
    %cst_350 = arith.constant 7.000000e+00 : f32
    %576 = vector.broadcast %cst_350 : f32 to vector<12x1xf32>
    %577 = arith.divf %575, %576 : vector<12x1xf32>
    %578 = vector.broadcast %577 : vector<12x1xf32> to vector<12x7xf32>
    %579 = arith.subf %569, %578 : vector<12x7xf32>
    %580 = arith.mulf %579, %579 : vector<12x7xf32>
    %cst_351 = arith.constant dense<0.000000e+00> : vector<12xf32>
    %581 = vector.multi_reduction <add>, %580, %cst_351 [1] : vector<12x7xf32> to vector<12xf32>
    %582 = vector.shape_cast %581 : vector<12xf32> to vector<12x1xf32>
    %cst_352 = arith.constant 7.000000e+00 : f32
    %583 = vector.broadcast %cst_352 : f32 to vector<12x1xf32>
    %584 = arith.divf %582, %583 : vector<12x1xf32>
    %585 = vector.broadcast %577 : vector<12x1xf32> to vector<12x7xf32>
    %586 = arith.subf %569, %585 : vector<12x7xf32>
    %cst_353 = arith.constant 9.99999974E-6 : f32
    %587 = vector.broadcast %cst_353 : f32 to vector<12x1xf32>
    %588 = arith.addf %584, %587 : vector<12x1xf32>
    %589 = math.rsqrt %588 : vector<12x1xf32>
    %590 = vector.broadcast %589 : vector<12x1xf32> to vector<12x7xf32>
    %591 = arith.mulf %586, %590 : vector<12x7xf32>
    %592 = vector.broadcast %571 : vector<1x7xf32> to vector<12x7xf32>
    %593 = arith.mulf %591, %592 : vector<12x7xf32>
    %594 = vector.broadcast %573 : vector<1x7xf32> to vector<12x7xf32>
    %595 = arith.addf %593, %594 : vector<12x7xf32>
    %c0_354 = arith.constant 0 : index
    %c0_355 = arith.constant 0 : index
    %c0_356 = arith.constant 0 : index
    %596 = vector.load %arg25[%c0_354, %c0_355, %c0_356] : memref<3x7x3xf32, #tpu.memory_space<vmem>>, vector<1x7x3xf32>
    %597 = vector.shape_cast %596 : vector<1x7x3xf32> to vector<7x3xf32>
    %cst_357 = arith.constant dense<0.000000e+00> : vector<12x3xf32>
    %598 = tpu.matmul %595, %597, %cst_357 {dimension_numbers = #tpu.dot_dimension_numbers<[1], [0], [0], [1], [0, 0, 1, 1], [], []>} : vector<12x7xf32>, vector<7x3xf32>, vector<12x3xf32> -> vector<12x3xf32>
    %c0_358 = arith.constant 0 : index
    %c0_359 = arith.constant 0 : index
    %c0_360 = arith.constant 0 : index
    %599 = vector.load %arg26[%c0_358, %c0_359, %c0_360] : memref<3x1x3xf32, #tpu.memory_space<vmem>>, vector<1x1x3xf32>
    %600 = vector.shape_cast %599 : vector<1x1x3xf32> to vector<1x3xf32>
    %601 = vector.broadcast %600 : vector<1x3xf32> to vector<12x3xf32>
    %602 = arith.addf %598, %601 : vector<12x3xf32>
    %cst_361 = arith.constant 0.000000e+00 : f32
    %603 = vector.broadcast %cst_361 : f32 to vector<12x3xf32>
    %604 = arith.maximumf %602, %603 : vector<12x3xf32>
    %c0_362 = arith.constant 0 : index
    %c0_363 = arith.constant 0 : index
    %c0_364 = arith.constant 0 : index
    %605 = vector.load %arg27[%c0_362, %c0_363, %c0_364] : memref<3x3x7xf32, #tpu.memory_space<vmem>>, vector<1x3x7xf32>
    %606 = vector.shape_cast %605 : vector<1x3x7xf32> to vector<3x7xf32>
    %cst_365 = arith.constant dense<0.000000e+00> : vector<12x7xf32>
    %607 = tpu.matmul %604, %606, %cst_365 {dimension_numbers = #tpu.dot_dimension_numbers<[1], [0], [0], [1], [0, 0, 1, 1], [], []>} : vector<12x3xf32>, vector<3x7xf32>, vector<12x7xf32> -> vector<12x7xf32>
    %c0_366 = arith.constant 0 : index
    %c0_367 = arith.constant 0 : index
    %c0_368 = arith.constant 0 : index
    %608 = vector.load %arg28[%c0_366, %c0_367, %c0_368] : memref<3x1x7xf32, #tpu.memory_space<vmem>>, vector<1x1x7xf32>
    %609 = vector.shape_cast %608 : vector<1x1x7xf32> to vector<1x7xf32>
    %610 = vector.broadcast %609 : vector<1x7xf32> to vector<12x7xf32>
    %611 = arith.addf %607, %610 : vector<12x7xf32>
    %cst_369 = arith.constant 0.000000e+00 : f32
    %612 = vector.broadcast %cst_369 : f32 to vector<12x7xf32>
    %613 = arith.maximumf %611, %612 : vector<12x7xf32>
    %614 = arith.addf %613, %595 : vector<12x7xf32>
    %c4_370 = arith.constant 4 : index
    %c0_371 = arith.constant 0 : index
    %c0_372 = arith.constant 0 : index
    %615 = vector.load %arg29[%c4_370, %c0_371, %c0_372] : memref<18x1x7xf32, #tpu.memory_space<vmem>>, vector<1x1x7xf32>
    %616 = vector.shape_cast %615 : vector<1x1x7xf32> to vector<1x7xf32>
    %c5_373 = arith.constant 5 : index
    %c0_374 = arith.constant 0 : index
    %c0_375 = arith.constant 0 : index
    %617 = vector.load %arg29[%c5_373, %c0_374, %c0_375] : memref<18x1x7xf32, #tpu.memory_space<vmem>>, vector<1x1x7xf32>
    %618 = vector.shape_cast %617 : vector<1x1x7xf32> to vector<1x7xf32>
    %cst_376 = arith.constant dense<0.000000e+00> : vector<12xf32>
    %619 = vector.multi_reduction <add>, %614, %cst_376 [1] : vector<12x7xf32> to vector<12xf32>
    %620 = vector.shape_cast %619 : vector<12xf32> to vector<12x1xf32>
    %cst_377 = arith.constant 7.000000e+00 : f32
    %621 = vector.broadcast %cst_377 : f32 to vector<12x1xf32>
    %622 = arith.divf %620, %621 : vector<12x1xf32>
    %623 = vector.broadcast %622 : vector<12x1xf32> to vector<12x7xf32>
    %624 = arith.subf %614, %623 : vector<12x7xf32>
    %625 = arith.mulf %624, %624 : vector<12x7xf32>
    %cst_378 = arith.constant dense<0.000000e+00> : vector<12xf32>
    %626 = vector.multi_reduction <add>, %625, %cst_378 [1] : vector<12x7xf32> to vector<12xf32>
    %627 = vector.shape_cast %626 : vector<12xf32> to vector<12x1xf32>
    %cst_379 = arith.constant 7.000000e+00 : f32
    %628 = vector.broadcast %cst_379 : f32 to vector<12x1xf32>
    %629 = arith.divf %627, %628 : vector<12x1xf32>
    %630 = vector.broadcast %622 : vector<12x1xf32> to vector<12x7xf32>
    %631 = arith.subf %614, %630 : vector<12x7xf32>
    %cst_380 = arith.constant 9.99999974E-6 : f32
    %632 = vector.broadcast %cst_380 : f32 to vector<12x1xf32>
    %633 = arith.addf %629, %632 : vector<12x1xf32>
    %634 = math.rsqrt %633 : vector<12x1xf32>
    %635 = vector.broadcast %634 : vector<12x1xf32> to vector<12x7xf32>
    %636 = arith.mulf %631, %635 : vector<12x7xf32>
    %637 = vector.broadcast %616 : vector<1x7xf32> to vector<12x7xf32>
    %638 = arith.mulf %636, %637 : vector<12x7xf32>
    %639 = vector.broadcast %618 : vector<1x7xf32> to vector<12x7xf32>
    %640 = arith.addf %638, %639 : vector<12x7xf32>
    %c4_381 = arith.constant 4 : index
    %c0_382 = arith.constant 0 : index
    %c0_383 = arith.constant 0 : index
    %641 = vector.load %arg19[%c4_381, %c0_382, %c0_383] : memref<12x7x7xf32, #tpu.memory_space<vmem>>, vector<1x7x7xf32>
    %642 = vector.shape_cast %641 : vector<1x7x7xf32> to vector<7x7xf32>
    %cst_384 = arith.constant dense<0.000000e+00> : vector<12x7xf32>
    %643 = tpu.matmul %640, %642, %cst_384 {dimension_numbers = #tpu.dot_dimension_numbers<[1], [0], [0], [1], [0, 0, 1, 1], [], []>} : vector<12x7xf32>, vector<7x7xf32>, vector<12x7xf32> -> vector<12x7xf32>
    %c4_385 = arith.constant 4 : index
    %c0_386 = arith.constant 0 : index
    %c0_387 = arith.constant 0 : index
    %644 = vector.load %arg20[%c4_385, %c0_386, %c0_387] : memref<12x1x7xf32, #tpu.memory_space<vmem>>, vector<1x1x7xf32>
    %645 = vector.shape_cast %644 : vector<1x1x7xf32> to vector<1x7xf32>
    %646 = vector.broadcast %645 : vector<1x7xf32> to vector<12x7xf32>
    %647 = arith.addf %643, %646 : vector<12x7xf32>
    %c5_388 = arith.constant 5 : index
    %c0_389 = arith.constant 0 : index
    %c0_390 = arith.constant 0 : index
    %648 = vector.load %arg19[%c5_388, %c0_389, %c0_390] : memref<12x7x7xf32, #tpu.memory_space<vmem>>, vector<1x7x7xf32>
    %649 = vector.shape_cast %648 : vector<1x7x7xf32> to vector<7x7xf32>
    %cst_391 = arith.constant dense<0.000000e+00> : vector<12x7xf32>
    %650 = tpu.matmul %640, %649, %cst_391 {dimension_numbers = #tpu.dot_dimension_numbers<[1], [0], [0], [1], [0, 0, 1, 1], [], []>} : vector<12x7xf32>, vector<7x7xf32>, vector<12x7xf32> -> vector<12x7xf32>
    %c5_392 = arith.constant 5 : index
    %c0_393 = arith.constant 0 : index
    %c0_394 = arith.constant 0 : index
    %651 = vector.load %arg20[%c5_392, %c0_393, %c0_394] : memref<12x1x7xf32, #tpu.memory_space<vmem>>, vector<1x1x7xf32>
    %652 = vector.shape_cast %651 : vector<1x1x7xf32> to vector<1x7xf32>
    %653 = vector.broadcast %652 : vector<1x7xf32> to vector<12x7xf32>
    %654 = arith.addf %650, %653 : vector<12x7xf32>
    %c6_395 = arith.constant 6 : index
    %c0_396 = arith.constant 0 : index
    %c0_397 = arith.constant 0 : index
    %655 = vector.load %arg19[%c6_395, %c0_396, %c0_397] : memref<12x7x7xf32, #tpu.memory_space<vmem>>, vector<1x7x7xf32>
    %656 = vector.shape_cast %655 : vector<1x7x7xf32> to vector<7x7xf32>
    %cst_398 = arith.constant dense<0.000000e+00> : vector<12x7xf32>
    %657 = tpu.matmul %640, %656, %cst_398 {dimension_numbers = #tpu.dot_dimension_numbers<[1], [0], [0], [1], [0, 0, 1, 1], [], []>} : vector<12x7xf32>, vector<7x7xf32>, vector<12x7xf32> -> vector<12x7xf32>
    %c6_399 = arith.constant 6 : index
    %c0_400 = arith.constant 0 : index
    %c0_401 = arith.constant 0 : index
    %658 = vector.load %arg20[%c6_399, %c0_400, %c0_401] : memref<12x1x7xf32, #tpu.memory_space<vmem>>, vector<1x1x7xf32>
    %659 = vector.shape_cast %658 : vector<1x1x7xf32> to vector<1x7xf32>
    %660 = vector.broadcast %659 : vector<1x7xf32> to vector<12x7xf32>
    %661 = arith.addf %657, %660 : vector<12x7xf32>
    %c2_402 = arith.constant 2 : index
    %c0_403 = arith.constant 0 : index
    %c0_404 = arith.constant 0 : index
    %662 = vector.load %arg21[%c2_402, %c0_403, %c0_404] : memref<6x1x7xf32, #tpu.memory_space<vmem>>, vector<1x1x7xf32>
    %663 = vector.shape_cast %662 : vector<1x1x7xf32> to vector<1x7xf32>
    %c3_405 = arith.constant 3 : index
    %c0_406 = arith.constant 0 : index
    %c0_407 = arith.constant 0 : index
    %664 = vector.load %arg21[%c3_405, %c0_406, %c0_407] : memref<6x1x7xf32, #tpu.memory_space<vmem>>, vector<1x1x7xf32>
    %665 = vector.shape_cast %664 : vector<1x1x7xf32> to vector<1x7xf32>
    %cst_408 = arith.constant 0.377964467 : f32
    %666 = vector.broadcast %cst_408 : f32 to vector<12x7xf32>
    %667 = arith.mulf %647, %666 : vector<12x7xf32>
    %cst_409 = arith.constant dense<0.000000e+00> : vector<12x12xf32>
    %668 = tpu.matmul %667, %654, %cst_409 {dimension_numbers = #tpu.dot_dimension_numbers<[1], [1], [0], [0], [0, 0, 1, 0], [], []>} : vector<12x7xf32>, vector<12x7xf32>, vector<12x12xf32> -> vector<12x12xf32>
    %669 = arith.addf %668, %424 : vector<12x12xf32>
    %670 = vector.broadcast %663 : vector<1x7xf32> to vector<12x7xf32>
    %671 = arith.mulf %667, %670 : vector<12x7xf32>
    %cst_410 = arith.constant dense<0.000000e+00> : vector<12xf32>
    %672 = vector.multi_reduction <add>, %671, %cst_410 [1] : vector<12x7xf32> to vector<12xf32>
    %673 = vector.shape_cast %672 : vector<12xf32> to vector<12x1xf32>
    %cst_411 = arith.constant dense<0xFF800000> : vector<12xf32>
    %674 = vector.multi_reduction <maximumf>, %669, %cst_411 [1] : vector<12x12xf32> to vector<12xf32>
    %675 = vector.shape_cast %674 : vector<12xf32> to vector<12x1xf32>
    %676 = arith.maximumf %675, %673 : vector<12x1xf32>
    %677 = vector.broadcast %676 : vector<12x1xf32> to vector<12x12xf32>
    %678 = arith.subf %669, %677 : vector<12x12xf32>
    %679 = math.exp %678 : vector<12x12xf32>
    %680 = arith.subf %673, %676 : vector<12x1xf32>
    %681 = math.exp %680 : vector<12x1xf32>
    %cst_412 = arith.constant dense<0.000000e+00> : vector<12xf32>
    %682 = vector.multi_reduction <add>, %679, %cst_412 [1] : vector<12x12xf32> to vector<12xf32>
    %683 = vector.shape_cast %682 : vector<12xf32> to vector<12x1xf32>
    %684 = arith.addf %683, %681 : vector<12x1xf32>
    %cst_413 = arith.constant dense<0.000000e+00> : vector<12x7xf32>
    %685 = tpu.matmul %679, %661, %cst_413 {dimension_numbers = #tpu.dot_dimension_numbers<[1], [0], [0], [1], [0, 0, 1, 1], [], []>} : vector<12x12xf32>, vector<12x7xf32>, vector<12x7xf32> -> vector<12x7xf32>
    %686 = vector.broadcast %681 : vector<12x1xf32> to vector<12x7xf32>
    %687 = vector.broadcast %665 : vector<1x7xf32> to vector<12x7xf32>
    %688 = arith.mulf %686, %687 : vector<12x7xf32>
    %689 = arith.addf %685, %688 : vector<12x7xf32>
    %690 = vector.broadcast %684 : vector<12x1xf32> to vector<12x7xf32>
    %691 = arith.divf %689, %690 : vector<12x7xf32>
    %c7_414 = arith.constant 7 : index
    %c0_415 = arith.constant 0 : index
    %c0_416 = arith.constant 0 : index
    %692 = vector.load %arg19[%c7_414, %c0_415, %c0_416] : memref<12x7x7xf32, #tpu.memory_space<vmem>>, vector<1x7x7xf32>
    %693 = vector.shape_cast %692 : vector<1x7x7xf32> to vector<7x7xf32>
    %cst_417 = arith.constant dense<0.000000e+00> : vector<12x7xf32>
    %694 = tpu.matmul %691, %693, %cst_417 {dimension_numbers = #tpu.dot_dimension_numbers<[1], [0], [0], [1], [0, 0, 1, 1], [], []>} : vector<12x7xf32>, vector<7x7xf32>, vector<12x7xf32> -> vector<12x7xf32>
    %c7_418 = arith.constant 7 : index
    %c0_419 = arith.constant 0 : index
    %c0_420 = arith.constant 0 : index
    %695 = vector.load %arg20[%c7_418, %c0_419, %c0_420] : memref<12x1x7xf32, #tpu.memory_space<vmem>>, vector<1x1x7xf32>
    %696 = vector.shape_cast %695 : vector<1x1x7xf32> to vector<1x7xf32>
    %697 = vector.broadcast %696 : vector<1x7xf32> to vector<12x7xf32>
    %698 = arith.addf %694, %697 : vector<12x7xf32>
    %699 = arith.addf %698, %640 : vector<12x7xf32>
    %c6_421 = arith.constant 6 : index
    %c0_422 = arith.constant 0 : index
    %c0_423 = arith.constant 0 : index
    %700 = vector.load %arg29[%c6_421, %c0_422, %c0_423] : memref<18x1x7xf32, #tpu.memory_space<vmem>>, vector<1x1x7xf32>
    %701 = vector.shape_cast %700 : vector<1x1x7xf32> to vector<1x7xf32>
    %c7_424 = arith.constant 7 : index
    %c0_425 = arith.constant 0 : index
    %c0_426 = arith.constant 0 : index
    %702 = vector.load %arg29[%c7_424, %c0_425, %c0_426] : memref<18x1x7xf32, #tpu.memory_space<vmem>>, vector<1x1x7xf32>
    %703 = vector.shape_cast %702 : vector<1x1x7xf32> to vector<1x7xf32>
    %cst_427 = arith.constant dense<0.000000e+00> : vector<12xf32>
    %704 = vector.multi_reduction <add>, %699, %cst_427 [1] : vector<12x7xf32> to vector<12xf32>
    %705 = vector.shape_cast %704 : vector<12xf32> to vector<12x1xf32>
    %cst_428 = arith.constant 7.000000e+00 : f32
    %706 = vector.broadcast %cst_428 : f32 to vector<12x1xf32>
    %707 = arith.divf %705, %706 : vector<12x1xf32>
    %708 = vector.broadcast %707 : vector<12x1xf32> to vector<12x7xf32>
    %709 = arith.subf %699, %708 : vector<12x7xf32>
    %710 = arith.mulf %709, %709 : vector<12x7xf32>
    %cst_429 = arith.constant dense<0.000000e+00> : vector<12xf32>
    %711 = vector.multi_reduction <add>, %710, %cst_429 [1] : vector<12x7xf32> to vector<12xf32>
    %712 = vector.shape_cast %711 : vector<12xf32> to vector<12x1xf32>
    %cst_430 = arith.constant 7.000000e+00 : f32
    %713 = vector.broadcast %cst_430 : f32 to vector<12x1xf32>
    %714 = arith.divf %712, %713 : vector<12x1xf32>
    %715 = vector.broadcast %707 : vector<12x1xf32> to vector<12x7xf32>
    %716 = arith.subf %699, %715 : vector<12x7xf32>
    %cst_431 = arith.constant 9.99999974E-6 : f32
    %717 = vector.broadcast %cst_431 : f32 to vector<12x1xf32>
    %718 = arith.addf %714, %717 : vector<12x1xf32>
    %719 = math.rsqrt %718 : vector<12x1xf32>
    %720 = vector.broadcast %719 : vector<12x1xf32> to vector<12x7xf32>
    %721 = arith.mulf %716, %720 : vector<12x7xf32>
    %722 = vector.broadcast %701 : vector<1x7xf32> to vector<12x7xf32>
    %723 = arith.mulf %721, %722 : vector<12x7xf32>
    %724 = vector.broadcast %703 : vector<1x7xf32> to vector<12x7xf32>
    %725 = arith.addf %723, %724 : vector<12x7xf32>
    %c4_432 = arith.constant 4 : index
    %c0_433 = arith.constant 0 : index
    %c0_434 = arith.constant 0 : index
    %726 = vector.load %arg22[%c4_432, %c0_433, %c0_434] : memref<12x7x7xf32, #tpu.memory_space<vmem>>, vector<1x7x7xf32>
    %727 = vector.shape_cast %726 : vector<1x7x7xf32> to vector<7x7xf32>
    %cst_435 = arith.constant dense<0.000000e+00> : vector<12x7xf32>
    %728 = tpu.matmul %725, %727, %cst_435 {dimension_numbers = #tpu.dot_dimension_numbers<[1], [0], [0], [1], [0, 0, 1, 1], [], []>} : vector<12x7xf32>, vector<7x7xf32>, vector<12x7xf32> -> vector<12x7xf32>
    %c4_436 = arith.constant 4 : index
    %c0_437 = arith.constant 0 : index
    %c0_438 = arith.constant 0 : index
    %729 = vector.load %arg23[%c4_436, %c0_437, %c0_438] : memref<12x1x7xf32, #tpu.memory_space<vmem>>, vector<1x1x7xf32>
    %730 = vector.shape_cast %729 : vector<1x1x7xf32> to vector<1x7xf32>
    %731 = vector.broadcast %730 : vector<1x7xf32> to vector<12x7xf32>
    %732 = arith.addf %728, %731 : vector<12x7xf32>
    %c5_439 = arith.constant 5 : index
    %c0_440 = arith.constant 0 : index
    %c0_441 = arith.constant 0 : index
    %733 = vector.load %arg22[%c5_439, %c0_440, %c0_441] : memref<12x7x7xf32, #tpu.memory_space<vmem>>, vector<1x7x7xf32>
    %734 = vector.shape_cast %733 : vector<1x7x7xf32> to vector<7x7xf32>
    %cst_442 = arith.constant dense<0.000000e+00> : vector<16x7xf32>
    %735 = tpu.matmul %391, %734, %cst_442 {dimension_numbers = #tpu.dot_dimension_numbers<[1], [0], [0], [1], [0, 0, 1, 1], [], []>} : vector<16x7xf32>, vector<7x7xf32>, vector<16x7xf32> -> vector<16x7xf32>
    %c5_443 = arith.constant 5 : index
    %c0_444 = arith.constant 0 : index
    %c0_445 = arith.constant 0 : index
    %736 = vector.load %arg23[%c5_443, %c0_444, %c0_445] : memref<12x1x7xf32, #tpu.memory_space<vmem>>, vector<1x1x7xf32>
    %737 = vector.shape_cast %736 : vector<1x1x7xf32> to vector<1x7xf32>
    %738 = vector.broadcast %737 : vector<1x7xf32> to vector<16x7xf32>
    %739 = arith.addf %735, %738 : vector<16x7xf32>
    %c6_446 = arith.constant 6 : index
    %c0_447 = arith.constant 0 : index
    %c0_448 = arith.constant 0 : index
    %740 = vector.load %arg22[%c6_446, %c0_447, %c0_448] : memref<12x7x7xf32, #tpu.memory_space<vmem>>, vector<1x7x7xf32>
    %741 = vector.shape_cast %740 : vector<1x7x7xf32> to vector<7x7xf32>
    %cst_449 = arith.constant dense<0.000000e+00> : vector<16x7xf32>
    %742 = tpu.matmul %391, %741, %cst_449 {dimension_numbers = #tpu.dot_dimension_numbers<[1], [0], [0], [1], [0, 0, 1, 1], [], []>} : vector<16x7xf32>, vector<7x7xf32>, vector<16x7xf32> -> vector<16x7xf32>
    %c6_450 = arith.constant 6 : index
    %c0_451 = arith.constant 0 : index
    %c0_452 = arith.constant 0 : index
    %743 = vector.load %arg23[%c6_450, %c0_451, %c0_452] : memref<12x1x7xf32, #tpu.memory_space<vmem>>, vector<1x1x7xf32>
    %744 = vector.shape_cast %743 : vector<1x1x7xf32> to vector<1x7xf32>
    %745 = vector.broadcast %744 : vector<1x7xf32> to vector<16x7xf32>
    %746 = arith.addf %742, %745 : vector<16x7xf32>
    %c2_453 = arith.constant 2 : index
    %c0_454 = arith.constant 0 : index
    %c0_455 = arith.constant 0 : index
    %747 = vector.load %arg24[%c2_453, %c0_454, %c0_455] : memref<6x1x7xf32, #tpu.memory_space<vmem>>, vector<1x1x7xf32>
    %748 = vector.shape_cast %747 : vector<1x1x7xf32> to vector<1x7xf32>
    %c3_456 = arith.constant 3 : index
    %c0_457 = arith.constant 0 : index
    %c0_458 = arith.constant 0 : index
    %749 = vector.load %arg24[%c3_456, %c0_457, %c0_458] : memref<6x1x7xf32, #tpu.memory_space<vmem>>, vector<1x1x7xf32>
    %750 = vector.shape_cast %749 : vector<1x1x7xf32> to vector<1x7xf32>
    %cst_459 = arith.constant 0.377964467 : f32
    %751 = vector.broadcast %cst_459 : f32 to vector<12x7xf32>
    %752 = arith.mulf %732, %751 : vector<12x7xf32>
    %cst_460 = arith.constant dense<0.000000e+00> : vector<12x16xf32>
    %753 = tpu.matmul %752, %739, %cst_460 {dimension_numbers = #tpu.dot_dimension_numbers<[1], [1], [0], [0], [0, 0, 1, 0], [], []>} : vector<12x7xf32>, vector<16x7xf32>, vector<12x16xf32> -> vector<12x16xf32>
    %754 = arith.addf %753, %425 : vector<12x16xf32>
    %755 = vector.broadcast %748 : vector<1x7xf32> to vector<12x7xf32>
    %756 = arith.mulf %752, %755 : vector<12x7xf32>
    %cst_461 = arith.constant dense<0.000000e+00> : vector<12xf32>
    %757 = vector.multi_reduction <add>, %756, %cst_461 [1] : vector<12x7xf32> to vector<12xf32>
    %758 = vector.shape_cast %757 : vector<12xf32> to vector<12x1xf32>
    %cst_462 = arith.constant dense<0xFF800000> : vector<12xf32>
    %759 = vector.multi_reduction <maximumf>, %754, %cst_462 [1] : vector<12x16xf32> to vector<12xf32>
    %760 = vector.shape_cast %759 : vector<12xf32> to vector<12x1xf32>
    %761 = arith.maximumf %760, %758 : vector<12x1xf32>
    %762 = vector.broadcast %761 : vector<12x1xf32> to vector<12x16xf32>
    %763 = arith.subf %754, %762 : vector<12x16xf32>
    %764 = math.exp %763 : vector<12x16xf32>
    %765 = arith.subf %758, %761 : vector<12x1xf32>
    %766 = math.exp %765 : vector<12x1xf32>
    %cst_463 = arith.constant dense<0.000000e+00> : vector<12xf32>
    %767 = vector.multi_reduction <add>, %764, %cst_463 [1] : vector<12x16xf32> to vector<12xf32>
    %768 = vector.shape_cast %767 : vector<12xf32> to vector<12x1xf32>
    %769 = arith.addf %768, %766 : vector<12x1xf32>
    %cst_464 = arith.constant dense<0.000000e+00> : vector<12x7xf32>
    %770 = tpu.matmul %764, %746, %cst_464 {dimension_numbers = #tpu.dot_dimension_numbers<[1], [0], [0], [1], [0, 0, 1, 1], [], []>} : vector<12x16xf32>, vector<16x7xf32>, vector<12x7xf32> -> vector<12x7xf32>
    %771 = vector.broadcast %766 : vector<12x1xf32> to vector<12x7xf32>
    %772 = vector.broadcast %750 : vector<1x7xf32> to vector<12x7xf32>
    %773 = arith.mulf %771, %772 : vector<12x7xf32>
    %774 = arith.addf %770, %773 : vector<12x7xf32>
    %775 = vector.broadcast %769 : vector<12x1xf32> to vector<12x7xf32>
    %776 = arith.divf %774, %775 : vector<12x7xf32>
    %c7_465 = arith.constant 7 : index
    %c0_466 = arith.constant 0 : index
    %c0_467 = arith.constant 0 : index
    %777 = vector.load %arg22[%c7_465, %c0_466, %c0_467] : memref<12x7x7xf32, #tpu.memory_space<vmem>>, vector<1x7x7xf32>
    %778 = vector.shape_cast %777 : vector<1x7x7xf32> to vector<7x7xf32>
    %cst_468 = arith.constant dense<0.000000e+00> : vector<12x7xf32>
    %779 = tpu.matmul %776, %778, %cst_468 {dimension_numbers = #tpu.dot_dimension_numbers<[1], [0], [0], [1], [0, 0, 1, 1], [], []>} : vector<12x7xf32>, vector<7x7xf32>, vector<12x7xf32> -> vector<12x7xf32>
    %c7_469 = arith.constant 7 : index
    %c0_470 = arith.constant 0 : index
    %c0_471 = arith.constant 0 : index
    %780 = vector.load %arg23[%c7_469, %c0_470, %c0_471] : memref<12x1x7xf32, #tpu.memory_space<vmem>>, vector<1x1x7xf32>
    %781 = vector.shape_cast %780 : vector<1x1x7xf32> to vector<1x7xf32>
    %782 = vector.broadcast %781 : vector<1x7xf32> to vector<12x7xf32>
    %783 = arith.addf %779, %782 : vector<12x7xf32>
    %784 = arith.addf %783, %725 : vector<12x7xf32>
    %c8_472 = arith.constant 8 : index
    %c0_473 = arith.constant 0 : index
    %c0_474 = arith.constant 0 : index
    %785 = vector.load %arg29[%c8_472, %c0_473, %c0_474] : memref<18x1x7xf32, #tpu.memory_space<vmem>>, vector<1x1x7xf32>
    %786 = vector.shape_cast %785 : vector<1x1x7xf32> to vector<1x7xf32>
    %c9_475 = arith.constant 9 : index
    %c0_476 = arith.constant 0 : index
    %c0_477 = arith.constant 0 : index
    %787 = vector.load %arg29[%c9_475, %c0_476, %c0_477] : memref<18x1x7xf32, #tpu.memory_space<vmem>>, vector<1x1x7xf32>
    %788 = vector.shape_cast %787 : vector<1x1x7xf32> to vector<1x7xf32>
    %cst_478 = arith.constant dense<0.000000e+00> : vector<12xf32>
    %789 = vector.multi_reduction <add>, %784, %cst_478 [1] : vector<12x7xf32> to vector<12xf32>
    %790 = vector.shape_cast %789 : vector<12xf32> to vector<12x1xf32>
    %cst_479 = arith.constant 7.000000e+00 : f32
    %791 = vector.broadcast %cst_479 : f32 to vector<12x1xf32>
    %792 = arith.divf %790, %791 : vector<12x1xf32>
    %793 = vector.broadcast %792 : vector<12x1xf32> to vector<12x7xf32>
    %794 = arith.subf %784, %793 : vector<12x7xf32>
    %795 = arith.mulf %794, %794 : vector<12x7xf32>
    %cst_480 = arith.constant dense<0.000000e+00> : vector<12xf32>
    %796 = vector.multi_reduction <add>, %795, %cst_480 [1] : vector<12x7xf32> to vector<12xf32>
    %797 = vector.shape_cast %796 : vector<12xf32> to vector<12x1xf32>
    %cst_481 = arith.constant 7.000000e+00 : f32
    %798 = vector.broadcast %cst_481 : f32 to vector<12x1xf32>
    %799 = arith.divf %797, %798 : vector<12x1xf32>
    %800 = vector.broadcast %792 : vector<12x1xf32> to vector<12x7xf32>
    %801 = arith.subf %784, %800 : vector<12x7xf32>
    %cst_482 = arith.constant 9.99999974E-6 : f32
    %802 = vector.broadcast %cst_482 : f32 to vector<12x1xf32>
    %803 = arith.addf %799, %802 : vector<12x1xf32>
    %804 = math.rsqrt %803 : vector<12x1xf32>
    %805 = vector.broadcast %804 : vector<12x1xf32> to vector<12x7xf32>
    %806 = arith.mulf %801, %805 : vector<12x7xf32>
    %807 = vector.broadcast %786 : vector<1x7xf32> to vector<12x7xf32>
    %808 = arith.mulf %806, %807 : vector<12x7xf32>
    %809 = vector.broadcast %788 : vector<1x7xf32> to vector<12x7xf32>
    %810 = arith.addf %808, %809 : vector<12x7xf32>
    %c1_483 = arith.constant 1 : index
    %c0_484 = arith.constant 0 : index
    %c0_485 = arith.constant 0 : index
    %811 = vector.load %arg25[%c1_483, %c0_484, %c0_485] : memref<3x7x3xf32, #tpu.memory_space<vmem>>, vector<1x7x3xf32>
    %812 = vector.shape_cast %811 : vector<1x7x3xf32> to vector<7x3xf32>
    %cst_486 = arith.constant dense<0.000000e+00> : vector<12x3xf32>
    %813 = tpu.matmul %810, %812, %cst_486 {dimension_numbers = #tpu.dot_dimension_numbers<[1], [0], [0], [1], [0, 0, 1, 1], [], []>} : vector<12x7xf32>, vector<7x3xf32>, vector<12x3xf32> -> vector<12x3xf32>
    %c1_487 = arith.constant 1 : index
    %c0_488 = arith.constant 0 : index
    %c0_489 = arith.constant 0 : index
    %814 = vector.load %arg26[%c1_487, %c0_488, %c0_489] : memref<3x1x3xf32, #tpu.memory_space<vmem>>, vector<1x1x3xf32>
    %815 = vector.shape_cast %814 : vector<1x1x3xf32> to vector<1x3xf32>
    %816 = vector.broadcast %815 : vector<1x3xf32> to vector<12x3xf32>
    %817 = arith.addf %813, %816 : vector<12x3xf32>
    %cst_490 = arith.constant 0.000000e+00 : f32
    %818 = vector.broadcast %cst_490 : f32 to vector<12x3xf32>
    %819 = arith.maximumf %817, %818 : vector<12x3xf32>
    %c1_491 = arith.constant 1 : index
    %c0_492 = arith.constant 0 : index
    %c0_493 = arith.constant 0 : index
    %820 = vector.load %arg27[%c1_491, %c0_492, %c0_493] : memref<3x3x7xf32, #tpu.memory_space<vmem>>, vector<1x3x7xf32>
    %821 = vector.shape_cast %820 : vector<1x3x7xf32> to vector<3x7xf32>
    %cst_494 = arith.constant dense<0.000000e+00> : vector<12x7xf32>
    %822 = tpu.matmul %819, %821, %cst_494 {dimension_numbers = #tpu.dot_dimension_numbers<[1], [0], [0], [1], [0, 0, 1, 1], [], []>} : vector<12x3xf32>, vector<3x7xf32>, vector<12x7xf32> -> vector<12x7xf32>
    %c1_495 = arith.constant 1 : index
    %c0_496 = arith.constant 0 : index
    %c0_497 = arith.constant 0 : index
    %823 = vector.load %arg28[%c1_495, %c0_496, %c0_497] : memref<3x1x7xf32, #tpu.memory_space<vmem>>, vector<1x1x7xf32>
    %824 = vector.shape_cast %823 : vector<1x1x7xf32> to vector<1x7xf32>
    %825 = vector.broadcast %824 : vector<1x7xf32> to vector<12x7xf32>
    %826 = arith.addf %822, %825 : vector<12x7xf32>
    %cst_498 = arith.constant 0.000000e+00 : f32
    %827 = vector.broadcast %cst_498 : f32 to vector<12x7xf32>
    %828 = arith.maximumf %826, %827 : vector<12x7xf32>
    %829 = arith.addf %828, %810 : vector<12x7xf32>
    %c10_499 = arith.constant 10 : index
    %c0_500 = arith.constant 0 : index
    %c0_501 = arith.constant 0 : index
    %830 = vector.load %arg29[%c10_499, %c0_500, %c0_501] : memref<18x1x7xf32, #tpu.memory_space<vmem>>, vector<1x1x7xf32>
    %831 = vector.shape_cast %830 : vector<1x1x7xf32> to vector<1x7xf32>
    %c11_502 = arith.constant 11 : index
    %c0_503 = arith.constant 0 : index
    %c0_504 = arith.constant 0 : index
    %832 = vector.load %arg29[%c11_502, %c0_503, %c0_504] : memref<18x1x7xf32, #tpu.memory_space<vmem>>, vector<1x1x7xf32>
    %833 = vector.shape_cast %832 : vector<1x1x7xf32> to vector<1x7xf32>
    %cst_505 = arith.constant dense<0.000000e+00> : vector<12xf32>
    %834 = vector.multi_reduction <add>, %829, %cst_505 [1] : vector<12x7xf32> to vector<12xf32>
    %835 = vector.shape_cast %834 : vector<12xf32> to vector<12x1xf32>
    %cst_506 = arith.constant 7.000000e+00 : f32
    %836 = vector.broadcast %cst_506 : f32 to vector<12x1xf32>
    %837 = arith.divf %835, %836 : vector<12x1xf32>
    %838 = vector.broadcast %837 : vector<12x1xf32> to vector<12x7xf32>
    %839 = arith.subf %829, %838 : vector<12x7xf32>
    %840 = arith.mulf %839, %839 : vector<12x7xf32>
    %cst_507 = arith.constant dense<0.000000e+00> : vector<12xf32>
    %841 = vector.multi_reduction <add>, %840, %cst_507 [1] : vector<12x7xf32> to vector<12xf32>
    %842 = vector.shape_cast %841 : vector<12xf32> to vector<12x1xf32>
    %cst_508 = arith.constant 7.000000e+00 : f32
    %843 = vector.broadcast %cst_508 : f32 to vector<12x1xf32>
    %844 = arith.divf %842, %843 : vector<12x1xf32>
    %845 = vector.broadcast %837 : vector<12x1xf32> to vector<12x7xf32>
    %846 = arith.subf %829, %845 : vector<12x7xf32>
    %cst_509 = arith.constant 9.99999974E-6 : f32
    %847 = vector.broadcast %cst_509 : f32 to vector<12x1xf32>
    %848 = arith.addf %844, %847 : vector<12x1xf32>
    %849 = math.rsqrt %848 : vector<12x1xf32>
    %850 = vector.broadcast %849 : vector<12x1xf32> to vector<12x7xf32>
    %851 = arith.mulf %846, %850 : vector<12x7xf32>
    %852 = vector.broadcast %831 : vector<1x7xf32> to vector<12x7xf32>
    %853 = arith.mulf %851, %852 : vector<12x7xf32>
    %854 = vector.broadcast %833 : vector<1x7xf32> to vector<12x7xf32>
    %855 = arith.addf %853, %854 : vector<12x7xf32>
    %c8_510 = arith.constant 8 : index
    %c0_511 = arith.constant 0 : index
    %c0_512 = arith.constant 0 : index
    %856 = vector.load %arg19[%c8_510, %c0_511, %c0_512] : memref<12x7x7xf32, #tpu.memory_space<vmem>>, vector<1x7x7xf32>
    %857 = vector.shape_cast %856 : vector<1x7x7xf32> to vector<7x7xf32>
    %cst_513 = arith.constant dense<0.000000e+00> : vector<12x7xf32>
    %858 = tpu.matmul %855, %857, %cst_513 {dimension_numbers = #tpu.dot_dimension_numbers<[1], [0], [0], [1], [0, 0, 1, 1], [], []>} : vector<12x7xf32>, vector<7x7xf32>, vector<12x7xf32> -> vector<12x7xf32>
    %c8_514 = arith.constant 8 : index
    %c0_515 = arith.constant 0 : index
    %c0_516 = arith.constant 0 : index
    %859 = vector.load %arg20[%c8_514, %c0_515, %c0_516] : memref<12x1x7xf32, #tpu.memory_space<vmem>>, vector<1x1x7xf32>
    %860 = vector.shape_cast %859 : vector<1x1x7xf32> to vector<1x7xf32>
    %861 = vector.broadcast %860 : vector<1x7xf32> to vector<12x7xf32>
    %862 = arith.addf %858, %861 : vector<12x7xf32>
    %c9_517 = arith.constant 9 : index
    %c0_518 = arith.constant 0 : index
    %c0_519 = arith.constant 0 : index
    %863 = vector.load %arg19[%c9_517, %c0_518, %c0_519] : memref<12x7x7xf32, #tpu.memory_space<vmem>>, vector<1x7x7xf32>
    %864 = vector.shape_cast %863 : vector<1x7x7xf32> to vector<7x7xf32>
    %cst_520 = arith.constant dense<0.000000e+00> : vector<12x7xf32>
    %865 = tpu.matmul %855, %864, %cst_520 {dimension_numbers = #tpu.dot_dimension_numbers<[1], [0], [0], [1], [0, 0, 1, 1], [], []>} : vector<12x7xf32>, vector<7x7xf32>, vector<12x7xf32> -> vector<12x7xf32>
    %c9_521 = arith.constant 9 : index
    %c0_522 = arith.constant 0 : index
    %c0_523 = arith.constant 0 : index
    %866 = vector.load %arg20[%c9_521, %c0_522, %c0_523] : memref<12x1x7xf32, #tpu.memory_space<vmem>>, vector<1x1x7xf32>
    %867 = vector.shape_cast %866 : vector<1x1x7xf32> to vector<1x7xf32>
    %868 = vector.broadcast %867 : vector<1x7xf32> to vector<12x7xf32>
    %869 = arith.addf %865, %868 : vector<12x7xf32>
    %c10_524 = arith.constant 10 : index
    %c0_525 = arith.constant 0 : index
    %c0_526 = arith.constant 0 : index
    %870 = vector.load %arg19[%c10_524, %c0_525, %c0_526] : memref<12x7x7xf32, #tpu.memory_space<vmem>>, vector<1x7x7xf32>
    %871 = vector.shape_cast %870 : vector<1x7x7xf32> to vector<7x7xf32>
    %cst_527 = arith.constant dense<0.000000e+00> : vector<12x7xf32>
    %872 = tpu.matmul %855, %871, %cst_527 {dimension_numbers = #tpu.dot_dimension_numbers<[1], [0], [0], [1], [0, 0, 1, 1], [], []>} : vector<12x7xf32>, vector<7x7xf32>, vector<12x7xf32> -> vector<12x7xf32>
    %c10_528 = arith.constant 10 : index
    %c0_529 = arith.constant 0 : index
    %c0_530 = arith.constant 0 : index
    %873 = vector.load %arg20[%c10_528, %c0_529, %c0_530] : memref<12x1x7xf32, #tpu.memory_space<vmem>>, vector<1x1x7xf32>
    %874 = vector.shape_cast %873 : vector<1x1x7xf32> to vector<1x7xf32>
    %875 = vector.broadcast %874 : vector<1x7xf32> to vector<12x7xf32>
    %876 = arith.addf %872, %875 : vector<12x7xf32>
    %c4_531 = arith.constant 4 : index
    %c0_532 = arith.constant 0 : index
    %c0_533 = arith.constant 0 : index
    %877 = vector.load %arg21[%c4_531, %c0_532, %c0_533] : memref<6x1x7xf32, #tpu.memory_space<vmem>>, vector<1x1x7xf32>
    %878 = vector.shape_cast %877 : vector<1x1x7xf32> to vector<1x7xf32>
    %c5_534 = arith.constant 5 : index
    %c0_535 = arith.constant 0 : index
    %c0_536 = arith.constant 0 : index
    %879 = vector.load %arg21[%c5_534, %c0_535, %c0_536] : memref<6x1x7xf32, #tpu.memory_space<vmem>>, vector<1x1x7xf32>
    %880 = vector.shape_cast %879 : vector<1x1x7xf32> to vector<1x7xf32>
    %cst_537 = arith.constant 0.377964467 : f32
    %881 = vector.broadcast %cst_537 : f32 to vector<12x7xf32>
    %882 = arith.mulf %862, %881 : vector<12x7xf32>
    %cst_538 = arith.constant dense<0.000000e+00> : vector<12x12xf32>
    %883 = tpu.matmul %882, %869, %cst_538 {dimension_numbers = #tpu.dot_dimension_numbers<[1], [1], [0], [0], [0, 0, 1, 0], [], []>} : vector<12x7xf32>, vector<12x7xf32>, vector<12x12xf32> -> vector<12x12xf32>
    %884 = arith.addf %883, %424 : vector<12x12xf32>
    %885 = vector.broadcast %878 : vector<1x7xf32> to vector<12x7xf32>
    %886 = arith.mulf %882, %885 : vector<12x7xf32>
    %cst_539 = arith.constant dense<0.000000e+00> : vector<12xf32>
    %887 = vector.multi_reduction <add>, %886, %cst_539 [1] : vector<12x7xf32> to vector<12xf32>
    %888 = vector.shape_cast %887 : vector<12xf32> to vector<12x1xf32>
    %cst_540 = arith.constant dense<0xFF800000> : vector<12xf32>
    %889 = vector.multi_reduction <maximumf>, %884, %cst_540 [1] : vector<12x12xf32> to vector<12xf32>
    %890 = vector.shape_cast %889 : vector<12xf32> to vector<12x1xf32>
    %891 = arith.maximumf %890, %888 : vector<12x1xf32>
    %892 = vector.broadcast %891 : vector<12x1xf32> to vector<12x12xf32>
    %893 = arith.subf %884, %892 : vector<12x12xf32>
    %894 = math.exp %893 : vector<12x12xf32>
    %895 = arith.subf %888, %891 : vector<12x1xf32>
    %896 = math.exp %895 : vector<12x1xf32>
    %cst_541 = arith.constant dense<0.000000e+00> : vector<12xf32>
    %897 = vector.multi_reduction <add>, %894, %cst_541 [1] : vector<12x12xf32> to vector<12xf32>
    %898 = vector.shape_cast %897 : vector<12xf32> to vector<12x1xf32>
    %899 = arith.addf %898, %896 : vector<12x1xf32>
    %cst_542 = arith.constant dense<0.000000e+00> : vector<12x7xf32>
    %900 = tpu.matmul %894, %876, %cst_542 {dimension_numbers = #tpu.dot_dimension_numbers<[1], [0], [0], [1], [0, 0, 1, 1], [], []>} : vector<12x12xf32>, vector<12x7xf32>, vector<12x7xf32> -> vector<12x7xf32>
    %901 = vector.broadcast %896 : vector<12x1xf32> to vector<12x7xf32>
    %902 = vector.broadcast %880 : vector<1x7xf32> to vector<12x7xf32>
    %903 = arith.mulf %901, %902 : vector<12x7xf32>
    %904 = arith.addf %900, %903 : vector<12x7xf32>
    %905 = vector.broadcast %899 : vector<12x1xf32> to vector<12x7xf32>
    %906 = arith.divf %904, %905 : vector<12x7xf32>
    %c11_543 = arith.constant 11 : index
    %c0_544 = arith.constant 0 : index
    %c0_545 = arith.constant 0 : index
    %907 = vector.load %arg19[%c11_543, %c0_544, %c0_545] : memref<12x7x7xf32, #tpu.memory_space<vmem>>, vector<1x7x7xf32>
    %908 = vector.shape_cast %907 : vector<1x7x7xf32> to vector<7x7xf32>
    %cst_546 = arith.constant dense<0.000000e+00> : vector<12x7xf32>
    %909 = tpu.matmul %906, %908, %cst_546 {dimension_numbers = #tpu.dot_dimension_numbers<[1], [0], [0], [1], [0, 0, 1, 1], [], []>} : vector<12x7xf32>, vector<7x7xf32>, vector<12x7xf32> -> vector<12x7xf32>
    %c11_547 = arith.constant 11 : index
    %c0_548 = arith.constant 0 : index
    %c0_549 = arith.constant 0 : index
    %910 = vector.load %arg20[%c11_547, %c0_548, %c0_549] : memref<12x1x7xf32, #tpu.memory_space<vmem>>, vector<1x1x7xf32>
    %911 = vector.shape_cast %910 : vector<1x1x7xf32> to vector<1x7xf32>
    %912 = vector.broadcast %911 : vector<1x7xf32> to vector<12x7xf32>
    %913 = arith.addf %909, %912 : vector<12x7xf32>
    %914 = arith.addf %913, %855 : vector<12x7xf32>
    %c12 = arith.constant 12 : index
    %c0_550 = arith.constant 0 : index
    %c0_551 = arith.constant 0 : index
    %915 = vector.load %arg29[%c12, %c0_550, %c0_551] : memref<18x1x7xf32, #tpu.memory_space<vmem>>, vector<1x1x7xf32>
    %916 = vector.shape_cast %915 : vector<1x1x7xf32> to vector<1x7xf32>
    %c13 = arith.constant 13 : index
    %c0_552 = arith.constant 0 : index
    %c0_553 = arith.constant 0 : index
    %917 = vector.load %arg29[%c13, %c0_552, %c0_553] : memref<18x1x7xf32, #tpu.memory_space<vmem>>, vector<1x1x7xf32>
    %918 = vector.shape_cast %917 : vector<1x1x7xf32> to vector<1x7xf32>
    %cst_554 = arith.constant dense<0.000000e+00> : vector<12xf32>
    %919 = vector.multi_reduction <add>, %914, %cst_554 [1] : vector<12x7xf32> to vector<12xf32>
    %920 = vector.shape_cast %919 : vector<12xf32> to vector<12x1xf32>
    %cst_555 = arith.constant 7.000000e+00 : f32
    %921 = vector.broadcast %cst_555 : f32 to vector<12x1xf32>
    %922 = arith.divf %920, %921 : vector<12x1xf32>
    %923 = vector.broadcast %922 : vector<12x1xf32> to vector<12x7xf32>
    %924 = arith.subf %914, %923 : vector<12x7xf32>
    %925 = arith.mulf %924, %924 : vector<12x7xf32>
    %cst_556 = arith.constant dense<0.000000e+00> : vector<12xf32>
    %926 = vector.multi_reduction <add>, %925, %cst_556 [1] : vector<12x7xf32> to vector<12xf32>
    %927 = vector.shape_cast %926 : vector<12xf32> to vector<12x1xf32>
    %cst_557 = arith.constant 7.000000e+00 : f32
    %928 = vector.broadcast %cst_557 : f32 to vector<12x1xf32>
    %929 = arith.divf %927, %928 : vector<12x1xf32>
    %930 = vector.broadcast %922 : vector<12x1xf32> to vector<12x7xf32>
    %931 = arith.subf %914, %930 : vector<12x7xf32>
    %cst_558 = arith.constant 9.99999974E-6 : f32
    %932 = vector.broadcast %cst_558 : f32 to vector<12x1xf32>
    %933 = arith.addf %929, %932 : vector<12x1xf32>
    %934 = math.rsqrt %933 : vector<12x1xf32>
    %935 = vector.broadcast %934 : vector<12x1xf32> to vector<12x7xf32>
    %936 = arith.mulf %931, %935 : vector<12x7xf32>
    %937 = vector.broadcast %916 : vector<1x7xf32> to vector<12x7xf32>
    %938 = arith.mulf %936, %937 : vector<12x7xf32>
    %939 = vector.broadcast %918 : vector<1x7xf32> to vector<12x7xf32>
    %940 = arith.addf %938, %939 : vector<12x7xf32>
    %c8_559 = arith.constant 8 : index
    %c0_560 = arith.constant 0 : index
    %c0_561 = arith.constant 0 : index
    %941 = vector.load %arg22[%c8_559, %c0_560, %c0_561] : memref<12x7x7xf32, #tpu.memory_space<vmem>>, vector<1x7x7xf32>
    %942 = vector.shape_cast %941 : vector<1x7x7xf32> to vector<7x7xf32>
    %cst_562 = arith.constant dense<0.000000e+00> : vector<12x7xf32>
    %943 = tpu.matmul %940, %942, %cst_562 {dimension_numbers = #tpu.dot_dimension_numbers<[1], [0], [0], [1], [0, 0, 1, 1], [], []>} : vector<12x7xf32>, vector<7x7xf32>, vector<12x7xf32> -> vector<12x7xf32>
    %c8_563 = arith.constant 8 : index
    %c0_564 = arith.constant 0 : index
    %c0_565 = arith.constant 0 : index
    %944 = vector.load %arg23[%c8_563, %c0_564, %c0_565] : memref<12x1x7xf32, #tpu.memory_space<vmem>>, vector<1x1x7xf32>
    %945 = vector.shape_cast %944 : vector<1x1x7xf32> to vector<1x7xf32>
    %946 = vector.broadcast %945 : vector<1x7xf32> to vector<12x7xf32>
    %947 = arith.addf %943, %946 : vector<12x7xf32>
    %c9_566 = arith.constant 9 : index
    %c0_567 = arith.constant 0 : index
    %c0_568 = arith.constant 0 : index
    %948 = vector.load %arg22[%c9_566, %c0_567, %c0_568] : memref<12x7x7xf32, #tpu.memory_space<vmem>>, vector<1x7x7xf32>
    %949 = vector.shape_cast %948 : vector<1x7x7xf32> to vector<7x7xf32>
    %cst_569 = arith.constant dense<0.000000e+00> : vector<16x7xf32>
    %950 = tpu.matmul %391, %949, %cst_569 {dimension_numbers = #tpu.dot_dimension_numbers<[1], [0], [0], [1], [0, 0, 1, 1], [], []>} : vector<16x7xf32>, vector<7x7xf32>, vector<16x7xf32> -> vector<16x7xf32>
    %c9_570 = arith.constant 9 : index
    %c0_571 = arith.constant 0 : index
    %c0_572 = arith.constant 0 : index
    %951 = vector.load %arg23[%c9_570, %c0_571, %c0_572] : memref<12x1x7xf32, #tpu.memory_space<vmem>>, vector<1x1x7xf32>
    %952 = vector.shape_cast %951 : vector<1x1x7xf32> to vector<1x7xf32>
    %953 = vector.broadcast %952 : vector<1x7xf32> to vector<16x7xf32>
    %954 = arith.addf %950, %953 : vector<16x7xf32>
    %c10_573 = arith.constant 10 : index
    %c0_574 = arith.constant 0 : index
    %c0_575 = arith.constant 0 : index
    %955 = vector.load %arg22[%c10_573, %c0_574, %c0_575] : memref<12x7x7xf32, #tpu.memory_space<vmem>>, vector<1x7x7xf32>
    %956 = vector.shape_cast %955 : vector<1x7x7xf32> to vector<7x7xf32>
    %cst_576 = arith.constant dense<0.000000e+00> : vector<16x7xf32>
    %957 = tpu.matmul %391, %956, %cst_576 {dimension_numbers = #tpu.dot_dimension_numbers<[1], [0], [0], [1], [0, 0, 1, 1], [], []>} : vector<16x7xf32>, vector<7x7xf32>, vector<16x7xf32> -> vector<16x7xf32>
    %c10_577 = arith.constant 10 : index
    %c0_578 = arith.constant 0 : index
    %c0_579 = arith.constant 0 : index
    %958 = vector.load %arg23[%c10_577, %c0_578, %c0_579] : memref<12x1x7xf32, #tpu.memory_space<vmem>>, vector<1x1x7xf32>
    %959 = vector.shape_cast %958 : vector<1x1x7xf32> to vector<1x7xf32>
    %960 = vector.broadcast %959 : vector<1x7xf32> to vector<16x7xf32>
    %961 = arith.addf %957, %960 : vector<16x7xf32>
    %c4_580 = arith.constant 4 : index
    %c0_581 = arith.constant 0 : index
    %c0_582 = arith.constant 0 : index
    %962 = vector.load %arg24[%c4_580, %c0_581, %c0_582] : memref<6x1x7xf32, #tpu.memory_space<vmem>>, vector<1x1x7xf32>
    %963 = vector.shape_cast %962 : vector<1x1x7xf32> to vector<1x7xf32>
    %c5_583 = arith.constant 5 : index
    %c0_584 = arith.constant 0 : index
    %c0_585 = arith.constant 0 : index
    %964 = vector.load %arg24[%c5_583, %c0_584, %c0_585] : memref<6x1x7xf32, #tpu.memory_space<vmem>>, vector<1x1x7xf32>
    %965 = vector.shape_cast %964 : vector<1x1x7xf32> to vector<1x7xf32>
    %cst_586 = arith.constant 0.377964467 : f32
    %966 = vector.broadcast %cst_586 : f32 to vector<12x7xf32>
    %967 = arith.mulf %947, %966 : vector<12x7xf32>
    %cst_587 = arith.constant dense<0.000000e+00> : vector<12x16xf32>
    %968 = tpu.matmul %967, %954, %cst_587 {dimension_numbers = #tpu.dot_dimension_numbers<[1], [1], [0], [0], [0, 0, 1, 0], [], []>} : vector<12x7xf32>, vector<16x7xf32>, vector<12x16xf32> -> vector<12x16xf32>
    %969 = arith.addf %968, %425 : vector<12x16xf32>
    %970 = vector.broadcast %963 : vector<1x7xf32> to vector<12x7xf32>
    %971 = arith.mulf %967, %970 : vector<12x7xf32>
    %cst_588 = arith.constant dense<0.000000e+00> : vector<12xf32>
    %972 = vector.multi_reduction <add>, %971, %cst_588 [1] : vector<12x7xf32> to vector<12xf32>
    %973 = vector.shape_cast %972 : vector<12xf32> to vector<12x1xf32>
    %cst_589 = arith.constant dense<0xFF800000> : vector<12xf32>
    %974 = vector.multi_reduction <maximumf>, %969, %cst_589 [1] : vector<12x16xf32> to vector<12xf32>
    %975 = vector.shape_cast %974 : vector<12xf32> to vector<12x1xf32>
    %976 = arith.maximumf %975, %973 : vector<12x1xf32>
    %977 = vector.broadcast %976 : vector<12x1xf32> to vector<12x16xf32>
    %978 = arith.subf %969, %977 : vector<12x16xf32>
    %979 = math.exp %978 : vector<12x16xf32>
    %980 = arith.subf %973, %976 : vector<12x1xf32>
    %981 = math.exp %980 : vector<12x1xf32>
    %cst_590 = arith.constant dense<0.000000e+00> : vector<12xf32>
    %982 = vector.multi_reduction <add>, %979, %cst_590 [1] : vector<12x16xf32> to vector<12xf32>
    %983 = vector.shape_cast %982 : vector<12xf32> to vector<12x1xf32>
    %984 = arith.addf %983, %981 : vector<12x1xf32>
    %cst_591 = arith.constant dense<0.000000e+00> : vector<12x7xf32>
    %985 = tpu.matmul %979, %961, %cst_591 {dimension_numbers = #tpu.dot_dimension_numbers<[1], [0], [0], [1], [0, 0, 1, 1], [], []>} : vector<12x16xf32>, vector<16x7xf32>, vector<12x7xf32> -> vector<12x7xf32>
    %986 = vector.broadcast %981 : vector<12x1xf32> to vector<12x7xf32>
    %987 = vector.broadcast %965 : vector<1x7xf32> to vector<12x7xf32>
    %988 = arith.mulf %986, %987 : vector<12x7xf32>
    %989 = arith.addf %985, %988 : vector<12x7xf32>
    %990 = vector.broadcast %984 : vector<12x1xf32> to vector<12x7xf32>
    %991 = arith.divf %989, %990 : vector<12x7xf32>
    %c11_592 = arith.constant 11 : index
    %c0_593 = arith.constant 0 : index
    %c0_594 = arith.constant 0 : index
    %992 = vector.load %arg22[%c11_592, %c0_593, %c0_594] : memref<12x7x7xf32, #tpu.memory_space<vmem>>, vector<1x7x7xf32>
    %993 = vector.shape_cast %992 : vector<1x7x7xf32> to vector<7x7xf32>
    %cst_595 = arith.constant dense<0.000000e+00> : vector<12x7xf32>
    %994 = tpu.matmul %991, %993, %cst_595 {dimension_numbers = #tpu.dot_dimension_numbers<[1], [0], [0], [1], [0, 0, 1, 1], [], []>} : vector<12x7xf32>, vector<7x7xf32>, vector<12x7xf32> -> vector<12x7xf32>
    %c11_596 = arith.constant 11 : index
    %c0_597 = arith.constant 0 : index
    %c0_598 = arith.constant 0 : index
    %995 = vector.load %arg23[%c11_596, %c0_597, %c0_598] : memref<12x1x7xf32, #tpu.memory_space<vmem>>, vector<1x1x7xf32>
    %996 = vector.shape_cast %995 : vector<1x1x7xf32> to vector<1x7xf32>
    %997 = vector.broadcast %996 : vector<1x7xf32> to vector<12x7xf32>
    %998 = arith.addf %994, %997 : vector<12x7xf32>
    %999 = arith.addf %998, %940 : vector<12x7xf32>
    %c14 = arith.constant 14 : index
    %c0_599 = arith.constant 0 : index
    %c0_600 = arith.constant 0 : index
    %1000 = vector.load %arg29[%c14, %c0_599, %c0_600] : memref<18x1x7xf32, #tpu.memory_space<vmem>>, vector<1x1x7xf32>
    %1001 = vector.shape_cast %1000 : vector<1x1x7xf32> to vector<1x7xf32>
    %c15 = arith.constant 15 : index
    %c0_601 = arith.constant 0 : index
    %c0_602 = arith.constant 0 : index
    %1002 = vector.load %arg29[%c15, %c0_601, %c0_602] : memref<18x1x7xf32, #tpu.memory_space<vmem>>, vector<1x1x7xf32>
    %1003 = vector.shape_cast %1002 : vector<1x1x7xf32> to vector<1x7xf32>
    %cst_603 = arith.constant dense<0.000000e+00> : vector<12xf32>
    %1004 = vector.multi_reduction <add>, %999, %cst_603 [1] : vector<12x7xf32> to vector<12xf32>
    %1005 = vector.shape_cast %1004 : vector<12xf32> to vector<12x1xf32>
    %cst_604 = arith.constant 7.000000e+00 : f32
    %1006 = vector.broadcast %cst_604 : f32 to vector<12x1xf32>
    %1007 = arith.divf %1005, %1006 : vector<12x1xf32>
    %1008 = vector.broadcast %1007 : vector<12x1xf32> to vector<12x7xf32>
    %1009 = arith.subf %999, %1008 : vector<12x7xf32>
    %1010 = arith.mulf %1009, %1009 : vector<12x7xf32>
    %cst_605 = arith.constant dense<0.000000e+00> : vector<12xf32>
    %1011 = vector.multi_reduction <add>, %1010, %cst_605 [1] : vector<12x7xf32> to vector<12xf32>
    %1012 = vector.shape_cast %1011 : vector<12xf32> to vector<12x1xf32>
    %cst_606 = arith.constant 7.000000e+00 : f32
    %1013 = vector.broadcast %cst_606 : f32 to vector<12x1xf32>
    %1014 = arith.divf %1012, %1013 : vector<12x1xf32>
    %1015 = vector.broadcast %1007 : vector<12x1xf32> to vector<12x7xf32>
    %1016 = arith.subf %999, %1015 : vector<12x7xf32>
    %cst_607 = arith.constant 9.99999974E-6 : f32
    %1017 = vector.broadcast %cst_607 : f32 to vector<12x1xf32>
    %1018 = arith.addf %1014, %1017 : vector<12x1xf32>
    %1019 = math.rsqrt %1018 : vector<12x1xf32>
    %1020 = vector.broadcast %1019 : vector<12x1xf32> to vector<12x7xf32>
    %1021 = arith.mulf %1016, %1020 : vector<12x7xf32>
    %1022 = vector.broadcast %1001 : vector<1x7xf32> to vector<12x7xf32>
    %1023 = arith.mulf %1021, %1022 : vector<12x7xf32>
    %1024 = vector.broadcast %1003 : vector<1x7xf32> to vector<12x7xf32>
    %1025 = arith.addf %1023, %1024 : vector<12x7xf32>
    %c2_608 = arith.constant 2 : index
    %c0_609 = arith.constant 0 : index
    %c0_610 = arith.constant 0 : index
    %1026 = vector.load %arg25[%c2_608, %c0_609, %c0_610] : memref<3x7x3xf32, #tpu.memory_space<vmem>>, vector<1x7x3xf32>
    %1027 = vector.shape_cast %1026 : vector<1x7x3xf32> to vector<7x3xf32>
    %cst_611 = arith.constant dense<0.000000e+00> : vector<12x3xf32>
    %1028 = tpu.matmul %1025, %1027, %cst_611 {dimension_numbers = #tpu.dot_dimension_numbers<[1], [0], [0], [1], [0, 0, 1, 1], [], []>} : vector<12x7xf32>, vector<7x3xf32>, vector<12x3xf32> -> vector<12x3xf32>
    %c2_612 = arith.constant 2 : index
    %c0_613 = arith.constant 0 : index
    %c0_614 = arith.constant 0 : index
    %1029 = vector.load %arg26[%c2_612, %c0_613, %c0_614] : memref<3x1x3xf32, #tpu.memory_space<vmem>>, vector<1x1x3xf32>
    %1030 = vector.shape_cast %1029 : vector<1x1x3xf32> to vector<1x3xf32>
    %1031 = vector.broadcast %1030 : vector<1x3xf32> to vector<12x3xf32>
    %1032 = arith.addf %1028, %1031 : vector<12x3xf32>
    %cst_615 = arith.constant 0.000000e+00 : f32
    %1033 = vector.broadcast %cst_615 : f32 to vector<12x3xf32>
    %1034 = arith.maximumf %1032, %1033 : vector<12x3xf32>
    %c2_616 = arith.constant 2 : index
    %c0_617 = arith.constant 0 : index
    %c0_618 = arith.constant 0 : index
    %1035 = vector.load %arg27[%c2_616, %c0_617, %c0_618] : memref<3x3x7xf32, #tpu.memory_space<vmem>>, vector<1x3x7xf32>
    %1036 = vector.shape_cast %1035 : vector<1x3x7xf32> to vector<3x7xf32>
    %cst_619 = arith.constant dense<0.000000e+00> : vector<12x7xf32>
    %1037 = tpu.matmul %1034, %1036, %cst_619 {dimension_numbers = #tpu.dot_dimension_numbers<[1], [0], [0], [1], [0, 0, 1, 1], [], []>} : vector<12x3xf32>, vector<3x7xf32>, vector<12x7xf32> -> vector<12x7xf32>
    %c2_620 = arith.constant 2 : index
    %c0_621 = arith.constant 0 : index
    %c0_622 = arith.constant 0 : index
    %1038 = vector.load %arg28[%c2_620, %c0_621, %c0_622] : memref<3x1x7xf32, #tpu.memory_space<vmem>>, vector<1x1x7xf32>
    %1039 = vector.shape_cast %1038 : vector<1x1x7xf32> to vector<1x7xf32>
    %1040 = vector.broadcast %1039 : vector<1x7xf32> to vector<12x7xf32>
    %1041 = arith.addf %1037, %1040 : vector<12x7xf32>
    %cst_623 = arith.constant 0.000000e+00 : f32
    %1042 = vector.broadcast %cst_623 : f32 to vector<12x7xf32>
    %1043 = arith.maximumf %1041, %1042 : vector<12x7xf32>
    %1044 = arith.addf %1043, %1025 : vector<12x7xf32>
    %c16 = arith.constant 16 : index
    %c0_624 = arith.constant 0 : index
    %c0_625 = arith.constant 0 : index
    %1045 = vector.load %arg29[%c16, %c0_624, %c0_625] : memref<18x1x7xf32, #tpu.memory_space<vmem>>, vector<1x1x7xf32>
    %1046 = vector.shape_cast %1045 : vector<1x1x7xf32> to vector<1x7xf32>
    %c17 = arith.constant 17 : index
    %c0_626 = arith.constant 0 : index
    %c0_627 = arith.constant 0 : index
    %1047 = vector.load %arg29[%c17, %c0_626, %c0_627] : memref<18x1x7xf32, #tpu.memory_space<vmem>>, vector<1x1x7xf32>
    %1048 = vector.shape_cast %1047 : vector<1x1x7xf32> to vector<1x7xf32>
    %cst_628 = arith.constant dense<0.000000e+00> : vector<12xf32>
    %1049 = vector.multi_reduction <add>, %1044, %cst_628 [1] : vector<12x7xf32> to vector<12xf32>
    %1050 = vector.shape_cast %1049 : vector<12xf32> to vector<12x1xf32>
    %cst_629 = arith.constant 7.000000e+00 : f32
    %1051 = vector.broadcast %cst_629 : f32 to vector<12x1xf32>
    %1052 = arith.divf %1050, %1051 : vector<12x1xf32>
    %1053 = vector.broadcast %1052 : vector<12x1xf32> to vector<12x7xf32>
    %1054 = arith.subf %1044, %1053 : vector<12x7xf32>
    %1055 = arith.mulf %1054, %1054 : vector<12x7xf32>
    %cst_630 = arith.constant dense<0.000000e+00> : vector<12xf32>
    %1056 = vector.multi_reduction <add>, %1055, %cst_630 [1] : vector<12x7xf32> to vector<12xf32>
    %1057 = vector.shape_cast %1056 : vector<12xf32> to vector<12x1xf32>
    %cst_631 = arith.constant 7.000000e+00 : f32
    %1058 = vector.broadcast %cst_631 : f32 to vector<12x1xf32>
    %1059 = arith.divf %1057, %1058 : vector<12x1xf32>
    %1060 = vector.broadcast %1052 : vector<12x1xf32> to vector<12x7xf32>
    %1061 = arith.subf %1044, %1060 : vector<12x7xf32>
    %cst_632 = arith.constant 9.99999974E-6 : f32
    %1062 = vector.broadcast %cst_632 : f32 to vector<12x1xf32>
    %1063 = arith.addf %1059, %1062 : vector<12x1xf32>
    %1064 = math.rsqrt %1063 : vector<12x1xf32>
    %1065 = vector.broadcast %1064 : vector<12x1xf32> to vector<12x7xf32>
    %1066 = arith.mulf %1061, %1065 : vector<12x7xf32>
    %1067 = vector.broadcast %1046 : vector<1x7xf32> to vector<12x7xf32>
    %1068 = arith.mulf %1066, %1067 : vector<12x7xf32>
    %1069 = vector.broadcast %1048 : vector<1x7xf32> to vector<12x7xf32>
    %1070 = arith.addf %1068, %1069 : vector<12x7xf32>
    %c0_633 = arith.constant 0 : index
    %c0_634 = arith.constant 0 : index
    %1071 = vector.load %arg30[%c0_633, %c0_634] : memref<7x3xf32, #tpu.memory_space<vmem>>, vector<7x3xf32>
    %cst_635 = arith.constant dense<0.000000e+00> : vector<12x3xf32>
    %1072 = tpu.matmul %1070, %1071, %cst_635 {dimension_numbers = #tpu.dot_dimension_numbers<[1], [0], [0], [1], [0, 0, 1, 1], [], []>} : vector<12x7xf32>, vector<7x3xf32>, vector<12x3xf32> -> vector<12x3xf32>
    %c0_636 = arith.constant 0 : index
    %c0_637 = arith.constant 0 : index
    %1073 = vector.load %arg31[%c0_636, %c0_637] : memref<1x3xf32, #tpu.memory_space<vmem>>, vector<1x3xf32>
    %1074 = vector.broadcast %1073 : vector<1x3xf32> to vector<12x3xf32>
    %1075 = arith.addf %1072, %1074 : vector<12x3xf32>
    %cst_638 = arith.constant dense<0.000000e+00> : vector<12x16xf32>
    %1076 = tpu.matmul %1075, %396, %cst_638 {dimension_numbers = #tpu.dot_dimension_numbers<[1], [1], [0], [0], [0, 0, 1, 0], [], []>} : vector<12x3xf32>, vector<16x3xf32>, vector<12x16xf32> -> vector<12x16xf32>
    %cst_639 = arith.constant 5.77350283 : f32
    %1077 = vector.broadcast %cst_639 : f32 to vector<12x16xf32>
    %1078 = arith.mulf %1076, %1077 : vector<12x16xf32>
    %cst_640 = arith.constant dense<0xFF800000> : vector<12xf32>
    %1079 = vector.multi_reduction <maximumf>, %1078, %cst_640 [1] : vector<12x16xf32> to vector<12xf32>
    %1080 = vector.shape_cast %1079 : vector<12xf32> to vector<12x1xf32>
    %1081 = vector.broadcast %1080 : vector<12x1xf32> to vector<12x16xf32>
    %1082 = arith.subf %1078, %1081 : vector<12x16xf32>
    %1083 = math.exp %1082 : vector<12x16xf32>
    %cst_641 = arith.constant dense<0.000000e+00> : vector<12xf32>
    %1084 = vector.multi_reduction <add>, %1083, %cst_641 [1] : vector<12x16xf32> to vector<12xf32>
    %1085 = vector.shape_cast %1084 : vector<12xf32> to vector<12x1xf32>
    %1086 = vector.broadcast %1085 : vector<12x1xf32> to vector<12x16xf32>
    %1087 = arith.divf %1083, %1086 : vector<12x16xf32>
    %c0_642 = arith.constant 0 : index
    %c0_643 = arith.constant 0 : index
    %1088 = vector.load %arg32[%c0_642, %c0_643] : memref<12x16xf32, #tpu.memory_space<vmem>>, vector<12x16xf32>
    tpu.vector_store %arg32[%c0_642, %c0_643], %1087 {strides = array<i32>} : memref<12x16xf32, #tpu.memory_space<vmem>>, vector<12x16xf32>,
    return
  }
}

</mosaic_0001>

<llo_original>
// kernel: opt1_noisy_forward.1
$region0: #{opt1_noisy_forward.1}
  #allocation0 [shape = 'u32[]', space=smem, size = 0x4, offset = 0x4, fixed_abs, tag = 'smem constant byte address 0x4 - core index']
  #allocation1 [shape = 'u32[144,128]{1,0:T(1,128)}', space=vmem, size = 0x12000, scoped, tag = 'internal scratch']
  %s0 = inlined_call_operand.smem [shape: u32[33], index: -1, kind: input, shape index: {}]
  %s1 = sld [smem:[%s0]]
  %s2 = scalar_lea.smem %s0, 1
  %s3 = sld [smem:[%s2]]
  %s4 = scalar_lea.smem %s0, 2
  %s5 = sld [smem:[%s4]]
  %s6 = scalar_lea.smem %s0, 3
  %s7 = sld [smem:[%s6]]
  %s8 = scalar_lea.smem %s0, 4
  %s9 = sld [smem:[%s8]]
  %s10 = scalar_lea.smem %s0, 5
  %s11 = sld [smem:[%s10]]
  %s12 = scalar_lea.smem %s0, 6
  %s13 = sld [smem:[%s12]]
  %s14 = scalar_lea.smem %s0, 7
  %s15 = sld [smem:[%s14]]
  %s16 = scalar_lea.smem %s0, 8
  %s17 = sld [smem:[%s16]]
  %s18 = scalar_lea.smem %s0, 9
  %s19 = sld [smem:[%s18]]
  %s20 = scalar_lea.smem %s0, 10
  %s21 = sld [smem:[%s20]]
  %s22 = scalar_lea.smem %s0, 11
  %s23 = sld [smem:[%s22]]
  %s24 = scalar_lea.smem %s0, 12
  %s25 = sld [smem:[%s24]]
  %s26 = scalar_lea.smem %s0, 13
  %s27 = sld [smem:[%s26]]
  %s28 = scalar_lea.smem %s0, 14
  %s29 = sld [smem:[%s28]]
  %s30 = scalar_lea.smem %s0, 15
  %s31 = sld [smem:[%s30]]
  %s32 = scalar_lea.smem %s0, 16
  %s33 = sld [smem:[%s32]]
  %s34 = scalar_lea.smem %s0, 17
  %s35 = sld [smem:[%s34]]
  %s36 = scalar_lea.smem %s0, 18
  %s37 = sld [smem:[%s36]]
  %s38 = scalar_lea.smem %s0, 19
  %s39 = sld [smem:[%s38]]
  %s40 = scalar_lea.smem %s0, 20
  %s41 = sld [smem:[%s40]]
  %s42 = scalar_lea.smem %s0, 21
  %s43 = sld [smem:[%s42]]
  %s44 = scalar_lea.smem %s0, 22
  %s45 = sld [smem:[%s44]]
  %s46 = scalar_lea.smem %s0, 23
  %s47 = sld [smem:[%s46]]
  %s48 = scalar_lea.smem %s0, 24
  %s49 = sld [smem:[%s48]]
  %s50 = scalar_lea.smem %s0, 25
  %s51 = sld [smem:[%s50]]
  %s52 = scalar_lea.smem %s0, 26
  %s53 = sld [smem:[%s52]]
  %s54 = scalar_lea.smem %s0, 27
  %s55 = sld [smem:[%s54]]
  %s56 = scalar_lea.smem %s0, 28
  %s57 = sld [smem:[%s56]]
  %s58 = scalar_lea.smem %s0, 29
  %s59 = sld [smem:[%s58]]
  %s60 = scalar_lea.smem %s0, 30
  %s61 = sld [smem:[%s60]]
  %s62 = scalar_lea.smem %s0, 31
  %s63 = sld [smem:[%s62]]
  %s64 = scalar_lea.smem %s0, 32
  %s65 = sld [smem:[%s64]]
  %s66 = sld [smem:[#allocation0]]
  $region138: #{opt1_noisy_forward.1} parent=0
    _
  %s68 = ssub.s32 1, %s66
  %s69 = scalar_select 0, %s68, %s66
  $region1: #{opt1_noisy_forward.1} parent=0
    #allocation2 [shape = 'u8[8192]{0}', space=vmem, size = 0x2000, scoped, tag = 'output window, operand 0, single buffered']
    #allocation3 [shape = 's32[1]{0}', space=sflag, size = 0x4, scoped, tag = 'scoped memory for opt1_noisy_forward.1']
    %70 = vsyncpa [#allocation3], 0
    // Predicated region
    $region2: #{opt1_noisy_forward.1} parent=1 // pred_check
      _
    $region3: #{opt1_noisy_forward.1} parent=1 // pred_check_branch
      %72 = sbr.rel (0) target = $region5
    $region4: #{opt1_noisy_forward.1} parent=1 // pred_region
      _
    $region5: #{opt1_noisy_forward.1} parent=1 // pred_fallthru
      _
    // Predicated region
    $region6: #{opt1_noisy_forward.1} parent=1 // pred_check
      _
    $region7: #{opt1_noisy_forward.1} parent=1 // pred_check_branch
      %74 = sbr.rel (0) target = $region9
    $region8: #{opt1_noisy_forward.1} parent=1 // pred_region
      _
    $region9: #{opt1_noisy_forward.1} parent=1 // pred_fallthru
      _
    // Predicated region
    $region10: #{opt1_noisy_forward.1} parent=1 // pred_check
      _
    $region11: #{opt1_noisy_forward.1} parent=1 // pred_check_branch
      %76 = sbr.rel (0) target = $region13
    $region12: #{opt1_noisy_forward.1} parent=1 // pred_region
      _
    $region13: #{opt1_noisy_forward.1} parent=1 // pred_fallthru
      _
    // Predicated region
    $region14: #{opt1_noisy_forward.1} parent=1 // pred_check
      _
    $region15: #{opt1_noisy_forward.1} parent=1 // pred_check_branch
      %78 = sbr.rel (0) target = $region17
    $region16: #{opt1_noisy_forward.1} parent=1 // pred_region
      _
    $region17: #{opt1_noisy_forward.1} parent=1 // pred_fallthru
      _
    // Predicated region
    $region18: #{opt1_noisy_forward.1} parent=1 // pred_check
      _
    $region19: #{opt1_noisy_forward.1} parent=1 // pred_check_branch
      %80 = sbr.rel (0) target = $region21
    $region20: #{opt1_noisy_forward.1} parent=1 // pred_region
      _
    $region21: #{opt1_noisy_forward.1} parent=1 // pred_fallthru
      _
    // Predicated region
    $region22: #{opt1_noisy_forward.1} parent=1 // pred_check
      _
    $region23: #{opt1_noisy_forward.1} parent=1 // pred_check_branch
      %82 = sbr.rel (0) target = $region25
    $region24: #{opt1_noisy_forward.1} parent=1 // pred_region
      _
    $region25: #{opt1_noisy_forward.1} parent=1 // pred_fallthru
      _
    // Predicated region
    $region26: #{opt1_noisy_forward.1} parent=1 // pred_check
      _
    $region27: #{opt1_noisy_forward.1} parent=1 // pred_check_branch
      %84 = sbr.rel (0) target = $region29
    $region28: #{opt1_noisy_forward.1} parent=1 // pred_region
      _
    $region29: #{opt1_noisy_forward.1} parent=1 // pred_fallthru
      _
    // Predicated region
    $region30: #{opt1_noisy_forward.1} parent=1 // pred_check
      _
    $region31: #{opt1_noisy_forward.1} parent=1 // pred_check_branch
      %86 = sbr.rel (0) target = $region33
    $region32: #{opt1_noisy_forward.1} parent=1 // pred_region
      _
    $region33: #{opt1_noisy_forward.1} parent=1 // pred_fallthru
      _
    // Predicated region
    $region34: #{opt1_noisy_forward.1} parent=1 // pred_check
      _
    $region35: #{opt1_noisy_forward.1} parent=1 // pred_check_branch
      %88 = sbr.rel (0) target = $region37
    $region36: #{opt1_noisy_forward.1} parent=1 // pred_region
      _
    $region37: #{opt1_noisy_forward.1} parent=1 // pred_fallthru
      _
    // Predicated region
    $region38: #{opt1_noisy_forward.1} parent=1 // pred_check
      _
    $region39: #{opt1_noisy_forward.1} parent=1 // pred_check_branch
      %90 = sbr.rel (0) target = $region41
    $region40: #{opt1_noisy_forward.1} parent=1 // pred_region
      _
    $region41: #{opt1_noisy_forward.1} parent=1 // pred_fallthru
      _
    // Predicated region
    $region42: #{opt1_noisy_forward.1} parent=1 // pred_check
      _
    $region43: #{opt1_noisy_forward.1} parent=1 // pred_check_branch
      %92 = sbr.rel (0) target = $region45
    $region44: #{opt1_noisy_forward.1} parent=1 // pred_region
      _
    $region45: #{opt1_noisy_forward.1} parent=1 // pred_fallthru
      _
    // Predicated region
    $region46: #{opt1_noisy_forward.1} parent=1 // pred_check
      _
    $region47: #{opt1_noisy_forward.1} parent=1 // pred_check_branch
      %94 = sbr.rel (0) target = $region49
    $region48: #{opt1_noisy_forward.1} parent=1 // pred_region
      _
    $region49: #{opt1_noisy_forward.1} parent=1 // pred_fallthru
      _
    // Predicated region
    $region50: #{opt1_noisy_forward.1} parent=1 // pred_check
      _
    $region51: #{opt1_noisy_forward.1} parent=1 // pred_check_branch
      %96 = sbr.rel (0) target = $region53
    $region52: #{opt1_noisy_forward.1} parent=1 // pred_region
      _
    $region53: #{opt1_noisy_forward.1} parent=1 // pred_fallthru
      _
    // Predicated region
    $region54: #{opt1_noisy_forward.1} parent=1 // pred_check
      _
    $region55: #{opt1_noisy_forward.1} parent=1 // pred_check_branch
      %98 = sbr.rel (0) target = $region57
    $region56: #{opt1_noisy_forward.1} parent=1 // pred_region
      _
    $region57: #{opt1_noisy_forward.1} parent=1 // pred_fallthru
      _
    // Predicated region
    $region58: #{opt1_noisy_forward.1} parent=1 // pred_check
      _
    $region59: #{opt1_noisy_forward.1} parent=1 // pred_check_branch
      %100 = sbr.rel (0) target = $region61
    $region60: #{opt1_noisy_forward.1} parent=1 // pred_region
      _
    $region61: #{opt1_noisy_forward.1} parent=1 // pred_fallthru
      _
    // Predicated region
    $region62: #{opt1_noisy_forward.1} parent=1 // pred_check
      _
    $region63: #{opt1_noisy_forward.1} parent=1 // pred_check_branch
      %102 = sbr.rel (0) target = $region65
    $region64: #{opt1_noisy_forward.1} parent=1 // pred_region
      _
    $region65: #{opt1_noisy_forward.1} parent=1 // pred_fallthru
      _
    // Predicated region
    $region66: #{opt1_noisy_forward.1} parent=1 // pred_check
      _
    $region67: #{opt1_noisy_forward.1} parent=1 // pred_check_branch
      %104 = sbr.rel (0) target = $region69
    $region68: #{opt1_noisy_forward.1} parent=1 // pred_region
      _
    $region69: #{opt1_noisy_forward.1} parent=1 // pred_fallthru
      _
    // Predicated region
    $region70: #{opt1_noisy_forward.1} parent=1 // pred_check
      _
    $region71: #{opt1_noisy_forward.1} parent=1 // pred_check_branch
      %106 = sbr.rel (0) target = $region73
    $region72: #{opt1_noisy_forward.1} parent=1 // pred_region
      _
    $region73: #{opt1_noisy_forward.1} parent=1 // pred_fallthru
      _
    // Predicated region
    $region74: #{opt1_noisy_forward.1} parent=1 // pred_check
      _
    $region75: #{opt1_noisy_forward.1} parent=1 // pred_check_branch
      %108 = sbr.rel (0) target = $region77
    $region76: #{opt1_noisy_forward.1} parent=1 // pred_region
      _
    $region77: #{opt1_noisy_forward.1} parent=1 // pred_fallthru
      _
    // Predicated region
    $region78: #{opt1_noisy_forward.1} parent=1 // pred_check
      _
    $region79: #{opt1_noisy_forward.1} parent=1 // pred_check_branch
      %110 = sbr.rel (0) target = $region81
    $region80: #{opt1_noisy_forward.1} parent=1 // pred_region
      _
    $region81: #{opt1_noisy_forward.1} parent=1 // pred_fallthru
      _
    // Predicated region
    $region82: #{opt1_noisy_forward.1} parent=1 // pred_check
      _
    $region83: #{opt1_noisy_forward.1} parent=1 // pred_check_branch
      %112 = sbr.rel (0) target = $region85
    $region84: #{opt1_noisy_forward.1} parent=1 // pred_region
      _
    $region85: #{opt1_noisy_forward.1} parent=1 // pred_fallthru
      _
    // Predicated region
    $region86: #{opt1_noisy_forward.1} parent=1 // pred_check
      _
    $region87: #{opt1_noisy_forward.1} parent=1 // pred_check_branch
      %114 = sbr.rel (0) target = $region89
    $region88: #{opt1_noisy_forward.1} parent=1 // pred_region
      _
    $region89: #{opt1_noisy_forward.1} parent=1 // pred_fallthru
      _
    // Predicated region
    $region90: #{opt1_noisy_forward.1} parent=1 // pred_check
      _
    $region91: #{opt1_noisy_forward.1} parent=1 // pred_check_branch
      %116 = sbr.rel (0) target = $region93
    $region92: #{opt1_noisy_forward.1} parent=1 // pred_region
      _
    $region93: #{opt1_noisy_forward.1} parent=1 // pred_fallthru
      _
    // Predicated region
    $region94: #{opt1_noisy_forward.1} parent=1 // pred_check
      _
    $region95: #{opt1_noisy_forward.1} parent=1 // pred_check_branch
      %118 = sbr.rel (0) target = $region97
    $region96: #{opt1_noisy_forward.1} parent=1 // pred_region
      _
    $region97: #{opt1_noisy_forward.1} parent=1 // pred_fallthru
      _
    // Predicated region
    $region98: #{opt1_noisy_forward.1} parent=1 // pred_check
      _
    $region99: #{opt1_noisy_forward.1} parent=1 // pred_check_branch
      %120 = sbr.rel (0) target = $region101
    $region100: #{opt1_noisy_forward.1} parent=1 // pred_region
      _
    $region101: #{opt1_noisy_forward.1} parent=1 // pred_fallthru
      _
    // Predicated region
    $region102: #{opt1_noisy_forward.1} parent=1 // pred_check
      _
    $region103: #{opt1_noisy_forward.1} parent=1 // pred_check_branch
      %122 = sbr.rel (0) target = $region105
    $region104: #{opt1_noisy_forward.1} parent=1 // pred_region
      _
    $region105: #{opt1_noisy_forward.1} parent=1 // pred_fallthru
      _
    // Predicated region
    $region106: #{opt1_noisy_forward.1} parent=1 // pred_check
      _
    $region107: #{opt1_noisy_forward.1} parent=1 // pred_check_branch
      %124 = sbr.rel (0) target = $region109
    $region108: #{opt1_noisy_forward.1} parent=1 // pred_region
      _
    $region109: #{opt1_noisy_forward.1} parent=1 // pred_fallthru
      _
    // Predicated region
    $region110: #{opt1_noisy_forward.1} parent=1 // pred_check
      _
    $region111: #{opt1_noisy_forward.1} parent=1 // pred_check_branch
      %126 = sbr.rel (0) target = $region113
    $region112: #{opt1_noisy_forward.1} parent=1 // pred_region
      _
    $region113: #{opt1_noisy_forward.1} parent=1 // pred_fallthru
      _
    // Predicated region
    $region114: #{opt1_noisy_forward.1} parent=1 // pred_check
      _
    $region115: #{opt1_noisy_forward.1} parent=1 // pred_check_branch
      %128 = sbr.rel (0) target = $region117
    $region116: #{opt1_noisy_forward.1} parent=1 // pred_region
      _
    $region117: #{opt1_noisy_forward.1} parent=1 // pred_fallthru
      _
    // Predicated region
    $region118: #{opt1_noisy_forward.1} parent=1 // pred_check
      _
    $region119: #{opt1_noisy_forward.1} parent=1 // pred_check_branch
      %130 = sbr.rel (0) target = $region121
    $region120: #{opt1_noisy_forward.1} parent=1 // pred_region
      _
    $region121: #{opt1_noisy_forward.1} parent=1 // pred_fallthru
      _
    // Predicated region
    $region122: #{opt1_noisy_forward.1} parent=1 // pred_check
      _
    $region123: #{opt1_noisy_forward.1} parent=1 // pred_check_branch
      %132 = sbr.rel (0) target = $region125
    $region124: #{opt1_noisy_forward.1} parent=1 // pred_region
      _
    $region125: #{opt1_noisy_forward.1} parent=1 // pred_fallthru
      _
    // Predicated region
    $region126: #{opt1_noisy_forward.1} parent=1 // pred_check
      _
    $region127: #{opt1_noisy_forward.1} parent=1 // pred_check_branch
      %134 = sbr.rel (0) target = $region129
    $region128: #{opt1_noisy_forward.1} parent=1 // pred_region
      _
    $region129: #{opt1_noisy_forward.1} parent=1 // pred_fallthru
      _
    %v135 = vld [vmem:[%s1] sm:$0xff]
    %v136 = vld [vmem:[%s1 + $0x8] sm:$0xff]
    %v137 = vld [vmem:[%s7] sm:$0xff]
    %v138 = vld [vmem:[%s7 + $0x8] sm:$0xff]
    %v139 = vld [vmem:[%s19] sm:$0x7f]
    %v140 = vld [vmem:[%s21] sm:$0x1]
    %v142 = vlaneseq
    %v143 = vshrl.u32 %v142, 7
    %v144 = vsub.s32 0, %v143
    %v145 = vrot.slane %v140, %v144
    %vm147 = vcmask 56320
    %v149 = vsel %vm147, %v135, 0
    %v152 = vsel %vm147, %v136, 0
    %vm154 = vcmask 1046528
    %v156 = vsel %vm154, %v139, 0
    %158 = vmatprep.subr.mxu0 0.0
    %159 = vmatpush1.msra.mxu0 %v156
    %160 = vmatprep.subr.mxu0 0.0
    %161 = vmatpush1.msra.mxu0 0.0
    %162 = vmatprep.subr.mxu0 0.0
    %163 = vmatpush1.msra.mxu0 0.0
    %164 = vmatprep.subr.mxu0 0.0
    %165 = vmatpush1.msra.mxu0 0.0
    %166 = vmatprep.subr.mxu0 0.0
    %167 = vmatpush1.msra.mxu0 0.0
    %168 = vmatprep.subr.mxu0 0.0
    %169 = vmatpush1.msra.mxu0 0.0
    %170 = vmatprep.subr.mxu0 0.0
    %171 = vmatpush1.msra.mxu0 0.0
    %172 = vmatprep.subr.mxu0 0.0
    %173 = vmatpush1.msra.mxu0 0.0
    %174 = vmatprep.subr.mxu0 0.0
    %175 = vmatpush1.msra.mxu0 0.0
    %176 = vmatprep.subr.mxu0 0.0
    %177 = vmatpush1.msra.mxu0 0.0
    %178 = vmatprep.subr.mxu0 0.0
    %179 = vmatpush1.msra.mxu0 0.0
    %180 = vmatprep.subr.mxu0 0.0
    %181 = vmatpush1.msra.mxu0 0.0
    %182 = vmatprep.subr.mxu0 0.0
    %183 = vmatpush1.msra.mxu0 0.0
    %184 = vmatprep.subr.mxu0 0.0
    %185 = vmatpush1.msra.mxu0 0.0
    %186 = vmatprep.subr.mxu0 0.0
    %187 = vmatpush1.msra.mxu0 0.0
    %188 = vmatprep.subr.mxu0 0.0
    %189 = vmatpush1.msra.mxu0 0.0
    %190 = vmatprep.subr.mxu0 0.0
    %191 = vmatpush1.msra.mxu0 0.0
    %192 = vmatprep.subr.mxu0 0.0
    %193 = vmatpush1.msra.mxu0 0.0
    %194 = vmatprep.subr.mxu0 0.0
    %195 = vmatpush1.msra.mxu0 0.0
    %196 = vmatprep.subr.mxu0 0.0
    %197 = vmatpush1.msra.mxu0 0.0
    %198 = vmatprep.subr.mxu0 0.0
    %199 = vmatpush1.msra.mxu0 0.0
    %200 = vmatprep.subr.mxu0 0.0
    %201 = vmatpush1.msra.mxu0 0.0
    %202 = vmatprep.subr.mxu0 0.0
    %203 = vmatpush1.msra.mxu0 0.0
    %204 = vmatprep.subr.mxu0 0.0
    %205 = vmatpush1.msra.mxu0 0.0
    %206 = vmatprep.subr.mxu0 0.0
    %207 = vmatpush1.msra.mxu0 0.0
    %208 = vmatprep.subr.mxu0 0.0
    %209 = vmatpush1.msra.mxu0 0.0
    %210 = vmatprep.subr.mxu0 0.0
    %211 = vmatpush1.msra.mxu0 0.0
    %212 = vmatprep.subr.mxu0 0.0
    %213 = vmatpush1.msra.mxu0 0.0
    %214 = vmatprep.subr.mxu0 0.0
    %215 = vmatpush1.msra.mxu0 0.0
    %216 = vmatprep.subr.mxu0 0.0
    %217 = vmatpush1.msra.mxu0 0.0
    %218 = vmatprep.subr.mxu0 0.0
    %219 = vmatpush1.msra.mxu0 0.0
    %220 = vmatprep.subr.mxu0 0.0
    %221 = vmatpush1.msra.mxu0 0.0
    %222 = vmatprep.mubr.f32.mxu0 0.0
    %223 = vmatmul.mubr.f32.gmra.mrb[0].mxu0 %v149
    %v224 = vpop.f32.mrb[0].mxu0
    %v225 = vadd.f32 %v145, %v224
    %v226 = vpop.f32.mrb[0].mxu0
    %227 = vmatprep.mubr.f32.mxu0 0.0
    %228 = vmatmul.mubr.f32.gmra.mrb[0].mxu0 %v152
    %v229 = vpop.f32.mrb[0].mxu0
    %v230 = vadd.f32 %v145, %v229
    %v231 = vpop.f32.mrb[0].mxu0
    %232 = vdwg.mxu0
    %s233 = scalar_lea.vmem %s19, 8
    %v234 = vld [vmem:[%s233] sm:$0x7f]
    %s235 = scalar_lea.vmem %s21, 1
    %v236 = vld [vmem:[%s235] sm:$0x1]
    %v238 = vlaneseq
    %v239 = vshrl.u32 %v238, 7
    %v240 = vsub.s32 0, %v239
    %v241 = vrot.slane %v236, %v240
    %v244 = vsel %vm154, %v234, 0
    %246 = vmatprep.subr.mxu0 0.0
    %247 = vmatpush1.msra.mxu0 %v244
    %248 = vmatprep.subr.mxu0 0.0
    %249 = vmatpush1.msra.mxu0 0.0
    %250 = vmatprep.subr.mxu0 0.0
    %251 = vmatpush1.msra.mxu0 0.0
    %252 = vmatprep.subr.mxu0 0.0
    %253 = vmatpush1.msra.mxu0 0.0
    %254 = vmatprep.subr.mxu0 0.0
    %255 = vmatpush1.msra.mxu0 0.0
    %256 = vmatprep.subr.mxu0 0.0
    %257 = vmatpush1.msra.mxu0 0.0
    %258 = vmatprep.subr.mxu0 0.0
    %259 = vmatpush1.msra.mxu0 0.0
    %260 = vmatprep.subr.mxu0 0.0
    %261 = vmatpush1.msra.mxu0 0.0
    %262 = vmatprep.subr.mxu0 0.0
    %263 = vmatpush1.msra.mxu0 0.0
    %264 = vmatprep.subr.mxu0 0.0
    %265 = vmatpush1.msra.mxu0 0.0
    %266 = vmatprep.subr.mxu0 0.0
    %267 = vmatpush1.msra.mxu0 0.0
    %268 = vmatprep.subr.mxu0 0.0
    %269 = vmatpush1.msra.mxu0 0.0
    %270 = vmatprep.subr.mxu0 0.0
    %271 = vmatpush1.msra.mxu0 0.0
    %272 = vmatprep.subr.mxu0 0.0
    %273 = vmatpush1.msra.mxu0 0.0
    %274 = vmatprep.subr.mxu0 0.0
    %275 = vmatpush1.msra.mxu0 0.0
    %276 = vmatprep.subr.mxu0 0.0
    %277 = vmatpush1.msra.mxu0 0.0
    %278 = vmatprep.subr.mxu0 0.0
    %279 = vmatpush1.msra.mxu0 0.0
    %280 = vmatprep.subr.mxu0 0.0
    %281 = vmatpush1.msra.mxu0 0.0
    %282 = vmatprep.subr.mxu0 0.0
    %283 = vmatpush1.msra.mxu0 0.0
    %284 = vmatprep.subr.mxu0 0.0
    %285 = vmatpush1.msra.mxu0 0.0
    %286 = vmatprep.subr.mxu0 0.0
    %287 = vmatpush1.msra.mxu0 0.0
    %288 = vmatprep.subr.mxu0 0.0
    %289 = vmatpush1.msra.mxu0 0.0
    %290 = vmatprep.subr.mxu0 0.0
    %291 = vmatpush1.msra.mxu0 0.0
    %292 = vmatprep.subr.mxu0 0.0
    %293 = vmatpush1.msra.mxu0 0.0
    %294 = vmatprep.subr.mxu0 0.0
    %295 = vmatpush1.msra.mxu0 0.0
    %296 = vmatprep.subr.mxu0 0.0
    %297 = vmatpush1.msra.mxu0 0.0
    %298 = vmatprep.subr.mxu0 0.0
    %299 = vmatpush1.msra.mxu0 0.0
    %300 = vmatprep.subr.mxu0 0.0
    %301 = vmatpush1.msra.mxu0 0.0
    %302 = vmatprep.subr.mxu0 0.0
    %303 = vmatpush1.msra.mxu0 0.0
    %304 = vmatprep.subr.mxu0 0.0
    %305 = vmatpush1.msra.mxu0 0.0
    %306 = vmatprep.subr.mxu0 0.0
    %307 = vmatpush1.msra.mxu0 0.0
    %308 = vmatprep.subr.mxu0 0.0
    %309 = vmatpush1.msra.mxu0 0.0
    %310 = vmatprep.mubr.f32.mxu0 0.0
    %311 = vmatmul.mubr.f32.gmra.mrb[0].mxu0 %v149
    %v312 = vpop.f32.mrb[0].mxu0
    %v313 = vadd.f32 %v241, %v312
    %v314 = vpop.f32.mrb[0].mxu0
    %315 = vmatprep.mubr.f32.mxu0 0.0
    %316 = vmatmul.mubr.f32.gmra.mrb[0].mxu0 %v152
    %v317 = vpop.f32.mrb[0].mxu0
    %v318 = vadd.f32 %v241, %v317
    %v319 = vpop.f32.mrb[0].mxu0
    %320 = vdwg.mxu0
    %s321 = scalar_lea.vmem %s19, 16
    %v322 = vld [vmem:[%s321] sm:$0x7f]
    %s323 = scalar_lea.vmem %s21, 2
    %v324 = vld [vmem:[%s323] sm:$0x1]
    %v326 = vlaneseq
    %v327 = vshrl.u32 %v326, 7
    %v328 = vsub.s32 0, %v327
    %v329 = vrot.slane %v324, %v328
    %v332 = vsel %vm154, %v322, 0
    %334 = vmatprep.subr.mxu0 0.0
    %335 = vmatpush1.msra.mxu0 %v332
    %336 = vmatprep.subr.mxu0 0.0
    %337 = vmatpush1.msra.mxu0 0.0
    %338 = vmatprep.subr.mxu0 0.0
    %339 = vmatpush1.msra.mxu0 0.0
    %340 = vmatprep.subr.mxu0 0.0
    %341 = vmatpush1.msra.mxu0 0.0
    %342 = vmatprep.subr.mxu0 0.0
    %343 = vmatpush1.msra.mxu0 0.0
    %344 = vmatprep.subr.mxu0 0.0
    %345 = vmatpush1.msra.mxu0 0.0
    %346 = vmatprep.subr.mxu0 0.0
    %347 = vmatpush1.msra.mxu0 0.0
    %348 = vmatprep.subr.mxu0 0.0
    %349 = vmatpush1.msra.mxu0 0.0
    %350 = vmatprep.subr.mxu0 0.0
    %351 = vmatpush1.msra.mxu0 0.0
    %352 = vmatprep.subr.mxu0 0.0
    %353 = vmatpush1.msra.mxu0 0.0
    %354 = vmatprep.subr.mxu0 0.0
    %355 = vmatpush1.msra.mxu0 0.0
    %356 = vmatprep.subr.mxu0 0.0
    %357 = vmatpush1.msra.mxu0 0.0
    %358 = vmatprep.subr.mxu0 0.0
    %359 = vmatpush1.msra.mxu0 0.0
    %360 = vmatprep.subr.mxu0 0.0
    %361 = vmatpush1.msra.mxu0 0.0
    %362 = vmatprep.subr.mxu0 0.0
    %363 = vmatpush1.msra.mxu0 0.0
    %364 = vmatprep.subr.mxu0 0.0
    %365 = vmatpush1.msra.mxu0 0.0
    %366 = vmatprep.subr.mxu0 0.0
    %367 = vmatpush1.msra.mxu0 0.0
    %368 = vmatprep.subr.mxu0 0.0
    %369 = vmatpush1.msra.mxu0 0.0
    %370 = vmatprep.subr.mxu0 0.0
    %371 = vmatpush1.msra.mxu0 0.0
    %372 = vmatprep.subr.mxu0 0.0
    %373 = vmatpush1.msra.mxu0 0.0
    %374 = vmatprep.subr.mxu0 0.0
    %375 = vmatpush1.msra.mxu0 0.0
    %376 = vmatprep.subr.mxu0 0.0
    %377 = vmatpush1.msra.mxu0 0.0
    %378 = vmatprep.subr.mxu0 0.0
    %379 = vmatpush1.msra.mxu0 0.0
    %380 = vmatprep.subr.mxu0 0.0
    %381 = vmatpush1.msra.mxu0 0.0
    %382 = vmatprep.subr.mxu0 0.0
    %383 = vmatpush1.msra.mxu0 0.0
    %384 = vmatprep.subr.mxu0 0.0
    %385 = vmatpush1.msra.mxu0 0.0
    %386 = vmatprep.subr.mxu0 0.0
    %387 = vmatpush1.msra.mxu0 0.0
    %388 = vmatprep.subr.mxu0 0.0
    %389 = vmatpush1.msra.mxu0 0.0
    %390 = vmatprep.subr.mxu0 0.0
    %391 = vmatpush1.msra.mxu0 0.0
    %392 = vmatprep.subr.mxu0 0.0
    %393 = vmatpush1.msra.mxu0 0.0
    %394 = vmatprep.subr.mxu0 0.0
    %395 = vmatpush1.msra.mxu0 0.0
    %396 = vmatprep.subr.mxu0 0.0
    %397 = vmatpush1.msra.mxu0 0.0
    %398 = vmatprep.mubr.f32.mxu0 0.0
    %399 = vmatmul.mubr.f32.gmra.mrb[0].mxu0 %v149
    %v400 = vpop.f32.mrb[0].mxu0
    %v401 = vadd.f32 %v329, %v400
    %v402 = vpop.f32.mrb[0].mxu0
    %403 = vmatprep.mubr.f32.mxu0 0.0
    %404 = vmatmul.mubr.f32.gmra.mrb[0].mxu0 %v152
    %v405 = vpop.f32.mrb[0].mxu0
    %v406 = vadd.f32 %v329, %v405
    %v407 = vpop.f32.mrb[0].mxu0
    %408 = vdwg.mxu0
    %v409 = vld [vmem:[%s23] sm:$0x1]
    %s410 = scalar_lea.vmem %s23, 1
    %v411 = vld [vmem:[%s410] sm:$0x1]
    %v412 = vmul.f32 %v225, 0.37796447
    %v413 = vmul.f32 %v230, 0.37796447
    %v415 = vsel %vm147, %v412, 0
    %v418 = vsel %vm147, %v413, 0
    %v421 = vsel %vm147, %v313, 0
    %v424 = vsel %vm147, %v318, 0
    %426 = vmatprep.subr.mxu0 0.0
    %427 = vmatpush1.xpose.msra.mxu0 %v421
    %428 = vmatprep.subr.mxu0 0.0
    %429 = vmatpush1.xpose.msra.mxu0 %v424
    %430 = vmatprep.subr.mxu0 0.0
    %431 = vmatpush1.xpose.msra.mxu0 0.0
    %432 = vmatprep.subr.mxu0 0.0
    %433 = vmatpush1.xpose.msra.mxu0 0.0
    %434 = vmatprep.subr.mxu0 0.0
    %435 = vmatpush1.xpose.msra.mxu0 0.0
    %436 = vmatprep.subr.mxu0 0.0
    %437 = vmatpush1.xpose.msra.mxu0 0.0
    %438 = vmatprep.subr.mxu0 0.0
    %439 = vmatpush1.xpose.msra.mxu0 0.0
    %440 = vmatprep.subr.mxu0 0.0
    %441 = vmatpush1.xpose.msra.mxu0 0.0
    %442 = vmatprep.subr.mxu0 0.0
    %443 = vmatpush1.xpose.msra.mxu0 0.0
    %444 = vmatprep.subr.mxu0 0.0
    %445 = vmatpush1.xpose.msra.mxu0 0.0
    %446 = vmatprep.subr.mxu0 0.0
    %447 = vmatpush1.xpose.msra.mxu0 0.0
    %448 = vmatprep.subr.mxu0 0.0
    %449 = vmatpush1.xpose.msra.mxu0 0.0
    %450 = vmatprep.subr.mxu0 0.0
    %451 = vmatpush1.xpose.msra.mxu0 0.0
    %452 = vmatprep.subr.mxu0 0.0
    %453 = vmatpush1.xpose.msra.mxu0 0.0
    %454 = vmatprep.subr.mxu0 0.0
    %455 = vmatpush1.xpose.msra.mxu0 0.0
    %456 = vmatprep.subr.mxu0 0.0
    %457 = vmatpush1.xpose.msra.mxu0 0.0
    %458 = vmatprep.subr.mxu0 0.0
    %459 = vmatpush1.xpose.msra.mxu0 0.0
    %460 = vmatprep.subr.mxu0 0.0
    %461 = vmatpush1.xpose.msra.mxu0 0.0
    %462 = vmatprep.subr.mxu0 0.0
    %463 = vmatpush1.xpose.msra.mxu0 0.0
    %464 = vmatprep.subr.mxu0 0.0
    %465 = vmatpush1.xpose.msra.mxu0 0.0
    %466 = vmatprep.subr.mxu0 0.0
    %467 = vmatpush1.xpose.msra.mxu0 0.0
    %468 = vmatprep.subr.mxu0 0.0
    %469 = vmatpush1.xpose.msra.mxu0 0.0
    %470 = vmatprep.subr.mxu0 0.0
    %471 = vmatpush1.xpose.msra.mxu0 0.0
    %472 = vmatprep.subr.mxu0 0.0
    %473 = vmatpush1.xpose.msra.mxu0 0.0
    %474 = vmatprep.subr.mxu0 0.0
    %475 = vmatpush1.xpose.msra.mxu0 0.0
    %476 = vmatprep.subr.mxu0 0.0
    %477 = vmatpush1.xpose.msra.mxu0 0.0
    %478 = vmatprep.subr.mxu0 0.0
    %479 = vmatpush1.xpose.msra.mxu0 0.0
    %480 = vmatprep.subr.mxu0 0.0
    %481 = vmatpush1.xpose.msra.mxu0 0.0
    %482 = vmatprep.subr.mxu0 0.0
    %483 = vmatpush1.xpose.msra.mxu0 0.0
    %484 = vmatprep.subr.mxu0 0.0
    %485 = vmatpush1.xpose.msra.mxu0 0.0
    %486 = vmatprep.subr.mxu0 0.0
    %487 = vmatpush1.xpose.msra.mxu0 0.0
    %488 = vmatprep.subr.mxu0 0.0
    %489 = vmatpush1.xpose.msra.mxu0 0.0
    %490 = vmatprep.mubr.f32.mxu0 0.0
    %491 = vmatmul.mubr.f32.gmra.mrb[0].mxu0 %v415
    %v492 = vpop.f32.mrb[0].mxu0
    %v493 = vadd.f32 %v137, %v492
    %v494 = vpop.f32.mrb[0].mxu0
    %495 = vmatprep.mubr.f32.mxu0 0.0
    %496 = vmatmul.mubr.f32.gmra.mrb[0].mxu0 %v418
    %v497 = vpop.f32.mrb[0].mxu0
    %v498 = vadd.f32 %v138, %v497
    %v499 = vpop.f32.mrb[0].mxu0
    %500 = vdwg.mxu0
    %v502 = vlaneseq
    %v503 = vshrl.u32 %v502, 7
    %v504 = vsub.s32 0, %v503
    %v505 = vrot.slane %v409, %v504
    %v507 = vmul.f32 %v412, %v505
    %v508 = vmul.f32 %v413, %v505
    %v509 = vsel %vm147, %v507, 0.0
    %510 = vadd.xlane.f32.xlu0 %v509
    %v511 = vpop.xlane.xlu0 %510
    %v512 = vsel %vm147, %v508, 0.0
    %513 = vadd.xlane.f32.xlu0 %v512
    %v514 = vpop.xlane.xlu0 %513
    %vm515 = vcmask 130048
    %v516 = vsel %vm515, %v493, -inf
    %517 = vmax.xlane.f32.xlu0 %v516
    %v518 = vpop.xlane.xlu0 %517
    %v519 = vsel %vm515, %v498, -inf
    %520 = vmax.xlane.f32.xlu0 %v519
    %v521 = vpop.xlane.xlu0 %520
    %v522 = vmax.f32 %v518, %v511
    %v523 = vmax.f32 %v521, %v514
    %v524 = vsub.f32 %v493, %v522
    %v525 = vsub.f32 %v498, %v523
    %v526 = vmul.f32 %v524, 1.442695
    %v527 = vpow.pop %v526
    %v528 = vmul.f32 %v525, 1.442695
    %v529 = vpow.pop %v528
    %v530 = vsub.f32 %v511, %v522
    %v531 = vsub.f32 %v514, %v523
    %v532 = vmul.f32 %v530, 1.442695
    %v533 = vpow.pop %v532
    %v534 = vmul.f32 %v531, 1.442695
    %v535 = vpow.pop %v534
    %v536 = vsel %vm515, %v527, 0.0
    %537 = vadd.xlane.f32.xlu0 %v536
    %v538 = vpop.xlane.xlu0 %537
    %v539 = vsel %vm515, %v529, 0.0
    %540 = vadd.xlane.f32.xlu0 %v539
    %v541 = vpop.xlane.xlu0 %540
    %v542 = vadd.f32 %v538, %v533
    %v543 = vadd.f32 %v541, %v535
    %v545 = vlaneseq
    %v546 = vshrl.u32 %v545, 7
    %v547 = vsub.s32 0, %v546
    %v548 = vrot.slane %v411, %v547
    %v550 = vmul.f32 %v533, %v548
    %v551 = vmul.f32 %v535, %v548
    %v553 = vsel %vm515, %v527, 0
    %v556 = vsel %vm515, %v529, 0
    %558 = vmatprep.subr.mxu0 0.0
    %559 = vmatpush1.msra.mxu0 %v401
    %560 = vmatprep.subr.mxu0 0.0
    %561 = vmatpush1.msra.mxu0 %v406
    %562 = vmatprep.subr.mxu0 0.0
    %563 = vmatpush1.msra.mxu0 0.0
    %564 = vmatprep.subr.mxu0 0.0
    %565 = vmatpush1.msra.mxu0 0.0
    %566 = vmatprep.subr.mxu0 0.0
    %567 = vmatpush1.msra.mxu0 0.0
    %568 = vmatprep.subr.mxu0 0.0
    %569 = vmatpush1.msra.mxu0 0.0
    %570 = vmatprep.subr.mxu0 0.0
    %571 = vmatpush1.msra.mxu0 0.0
    %572 = vmatprep.subr.mxu0 0.0
    %573 = vmatpush1.msra.mxu0 0.0
    %574 = vmatprep.subr.mxu0 0.0
    %575 = vmatpush1.msra.mxu0 0.0
    %576 = vmatprep.subr.mxu0 0.0
    %577 = vmatpush1.msra.mxu0 0.0
    %578 = vmatprep.subr.mxu0 0.0
    %579 = vmatpush1.msra.mxu0 0.0
    %580 = vmatprep.subr.mxu0 0.0
    %581 = vmatpush1.msra.mxu0 0.0
    %582 = vmatprep.subr.mxu0 0.0
    %583 = vmatpush1.msra.mxu0 0.0
    %584 = vmatprep.subr.mxu0 0.0
    %585 = vmatpush1.msra.mxu0 0.0
    %586 = vmatprep.subr.mxu0 0.0
    %587 = vmatpush1.msra.mxu0 0.0
    %588 = vmatprep.subr.mxu0 0.0
    %589 = vmatpush1.msra.mxu0 0.0
    %590 = vmatprep.subr.mxu0 0.0
    %591 = vmatpush1.msra.mxu0 0.0
    %592 = vmatprep.subr.mxu0 0.0
    %593 = vmatpush1.msra.mxu0 0.0
    %594 = vmatprep.subr.mxu0 0.0
    %595 = vmatpush1.msra.mxu0 0.0
    %596 = vmatprep.subr.mxu0 0.0
    %597 = vmatpush1.msra.mxu0 0.0
    %598 = vmatprep.subr.mxu0 0.0
    %599 = vmatpush1.msra.mxu0 0.0
    %600 = vmatprep.subr.mxu0 0.0
    %601 = vmatpush1.msra.mxu0 0.0
    %602 = vmatprep.subr.mxu0 0.0
    %603 = vmatpush1.msra.mxu0 0.0
    %604 = vmatprep.subr.mxu0 0.0
    %605 = vmatpush1.msra.mxu0 0.0
    %606 = vmatprep.subr.mxu0 0.0
    %607 = vmatpush1.msra.mxu0 0.0
    %608 = vmatprep.subr.mxu0 0.0
    %609 = vmatpush1.msra.mxu0 0.0
    %610 = vmatprep.subr.mxu0 0.0
    %611 = vmatpush1.msra.mxu0 0.0
    %612 = vmatprep.subr.mxu0 0.0
    %613 = vmatpush1.msra.mxu0 0.0
    %614 = vmatprep.subr.mxu0 0.0
    %615 = vmatpush1.msra.mxu0 0.0
    %616 = vmatprep.subr.mxu0 0.0
    %617 = vmatpush1.msra.mxu0 0.0
    %618 = vmatprep.subr.mxu0 0.0
    %619 = vmatpush1.msra.mxu0 0.0
    %620 = vmatprep.subr.mxu0 0.0
    %621 = vmatpush1.msra.mxu0 0.0
    %622 = vmatprep.mubr.f32.mxu0 0.0
    %623 = vmatmul.mubr.f32.gmra.mrb[0].mxu0 %v553
    %v624 = vpop.f32.mrb[0].mxu0
    %v625 = vadd.f32 %v550, %v624
    %v626 = vpop.f32.mrb[0].mxu0
    %627 = vmatprep.mubr.f32.mxu0 0.0
    %628 = vmatmul.mubr.f32.gmra.mrb[0].mxu0 %v556
    %v629 = vpop.f32.mrb[0].mxu0
    %v630 = vadd.f32 %v551, %v629
    %v631 = vpop.f32.mrb[0].mxu0
    %632 = vdwg.mxu0
    %v633 = vrcp.pop %v542
    %v634 = vmul.f32 %v625, %v633
    %v635 = vrcp.pop %v543
    %v636 = vmul.f32 %v630, %v635
    %s637 = scalar_lea.vmem %s19, 24
    %v638 = vld [vmem:[%s637] sm:$0x7f]
    %s639 = scalar_lea.vmem %s21, 3
    %v640 = vld [vmem:[%s639] sm:$0x1]
    %v642 = vlaneseq
    %v643 = vshrl.u32 %v642, 7
    %v644 = vsub.s32 0, %v643
    %v645 = vrot.slane %v640, %v644
    %v648 = vsel %vm147, %v634, 0
    %v651 = vsel %vm147, %v636, 0
    %v654 = vsel %vm154, %v638, 0
    %656 = vmatprep.subr.mxu0 0.0
    %657 = vmatpush1.msra.mxu0 %v654
    %658 = vmatprep.subr.mxu0 0.0
    %659 = vmatpush1.msra.mxu0 0.0
    %660 = vmatprep.subr.mxu0 0.0
    %661 = vmatpush1.msra.mxu0 0.0
    %662 = vmatprep.subr.mxu0 0.0
    %663 = vmatpush1.msra.mxu0 0.0
    %664 = vmatprep.subr.mxu0 0.0
    %665 = vmatpush1.msra.mxu0 0.0
    %666 = vmatprep.subr.mxu0 0.0
    %667 = vmatpush1.msra.mxu0 0.0
    %668 = vmatprep.subr.mxu0 0.0
    %669 = vmatpush1.msra.mxu0 0.0
    %670 = vmatprep.subr.mxu0 0.0
    %671 = vmatpush1.msra.mxu0 0.0
    %672 = vmatprep.subr.mxu0 0.0
    %673 = vmatpush1.msra.mxu0 0.0
    %674 = vmatprep.subr.mxu0 0.0
    %675 = vmatpush1.msra.mxu0 0.0
    %676 = vmatprep.subr.mxu0 0.0
    %677 = vmatpush1.msra.mxu0 0.0
    %678 = vmatprep.subr.mxu0 0.0
    %679 = vmatpush1.msra.mxu0 0.0
    %680 = vmatprep.subr.mxu0 0.0
    %681 = vmatpush1.msra.mxu0 0.0
    %682 = vmatprep.subr.mxu0 0.0
    %683 = vmatpush1.msra.mxu0 0.0
    %684 = vmatprep.subr.mxu0 0.0
    %685 = vmatpush1.msra.mxu0 0.0
    %686 = vmatprep.subr.mxu0 0.0
    %687 = vmatpush1.msra.mxu0 0.0
    %688 = vmatprep.subr.mxu0 0.0
    %689 = vmatpush1.msra.mxu0 0.0
    %690 = vmatprep.subr.mxu0 0.0
    %691 = vmatpush1.msra.mxu0 0.0
    %692 = vmatprep.subr.mxu0 0.0
    %693 = vmatpush1.msra.mxu0 0.0
    %694 = vmatprep.subr.mxu0 0.0
    %695 = vmatpush1.msra.mxu0 0.0
    %696 = vmatprep.subr.mxu0 0.0
    %697 = vmatpush1.msra.mxu0 0.0
    %698 = vmatprep.subr.mxu0 0.0
    %699 = vmatpush1.msra.mxu0 0.0
    %700 = vmatprep.subr.mxu0 0.0
    %701 = vmatpush1.msra.mxu0 0.0
    %702 = vmatprep.subr.mxu0 0.0
    %703 = vmatpush1.msra.mxu0 0.0
    %704 = vmatprep.subr.mxu0 0.0
    %705 = vmatpush1.msra.mxu0 0.0
    %706 = vmatprep.subr.mxu0 0.0
    %707 = vmatpush1.msra.mxu0 0.0
    %708 = vmatprep.subr.mxu0 0.0
    %709 = vmatpush1.msra.mxu0 0.0
    %710 = vmatprep.subr.mxu0 0.0
    %711 = vmatpush1.msra.mxu0 0.0
    %712 = vmatprep.subr.mxu0 0.0
    %713 = vmatpush1.msra.mxu0 0.0
    %714 = vmatprep.subr.mxu0 0.0
    %715 = vmatpush1.msra.mxu0 0.0
    %716 = vmatprep.subr.mxu0 0.0
    %717 = vmatpush1.msra.mxu0 0.0
    %718 = vmatprep.subr.mxu0 0.0
    %719 = vmatpush1.msra.mxu0 0.0
    %720 = vmatprep.mubr.f32.mxu0 0.0
    %721 = vmatmul.mubr.f32.gmra.mrb[0].mxu0 %v648
    %v722 = vpop.f32.mrb[0].mxu0
    %v723 = vadd.f32 %v645, %v722
    %v724 = vpop.f32.mrb[0].mxu0
    %725 = vmatprep.mubr.f32.mxu0 0.0
    %726 = vmatmul.mubr.f32.gmra.mrb[0].mxu0 %v651
    %v727 = vpop.f32.mrb[0].mxu0
    %v728 = vadd.f32 %v645, %v727
    %v729 = vpop.f32.mrb[0].mxu0
    %730 = vdwg.mxu0
    %v731 = vadd.f32 %v723, %v135
    %v732 = vadd.f32 %v728, %v136
    %v733 = vld [vmem:[%s33] sm:$0x1]
    %s734 = scalar_lea.vmem %s33, 1
    %v735 = vld [vmem:[%s734] sm:$0x1]
    %v736 = vsel %vm147, %v731, 0.0
    %737 = vadd.xlane.f32.xlu0 %v736
    %v738 = vpop.xlane.xlu0 %737
    %v739 = vsel %vm147, %v732, 0.0
    %740 = vadd.xlane.f32.xlu0 %v739
    %v741 = vpop.xlane.xlu0 %740
    %v742 = vrcp.pop 7.0
    %v743 = vmul.f32 %v738, %v742
    %v744 = vmul.f32 %v741, %v742
    %v745 = vsub.f32 %v731, %v743
    %v746 = vsub.f32 %v732, %v744
    %v747 = vmul.f32 %v745, %v745
    %v748 = vmul.f32 %v746, %v746
    %v749 = vsel %vm147, %v747, 0.0
    %750 = vadd.xlane.f32.xlu0 %v749
    %v751 = vpop.xlane.xlu0 %750
    %v752 = vsel %vm147, %v748, 0.0
    %753 = vadd.xlane.f32.xlu0 %v752
    %v754 = vpop.xlane.xlu0 %753
    %v755 = vmul.f32 %v751, %v742
    %v756 = vmul.f32 %v754, %v742
    %v757 = vadd.f32 %v755, 1e-05
    %v758 = vadd.f32 %v756, 1e-05
    %v759 = vrsqrt.pop %v757
    %v760 = vrsqrt.pop %v758
    %v761 = vmul.f32 %v745, %v759
    %v762 = vmul.f32 %v746, %v760
    %v764 = vlaneseq
    %v765 = vshrl.u32 %v764, 7
    %v766 = vsub.s32 0, %v765
    %v767 = vrot.slane %v733, %v766
    %v769 = vmul.f32 %v761, %v767
    %v770 = vmul.f32 %v762, %v767
    %v772 = vlaneseq
    %v773 = vshrl.u32 %v772, 7
    %v774 = vsub.s32 0, %v773
    %v775 = vrot.slane %v735, %v774
    %v777 = vadd.f32 %v769, %v775
    %v778 = vadd.f32 %v770, %v775
    %v779 = vld [vmem:[%s25] sm:$0x7f]
    %v780 = vld [vmem:[%s27] sm:$0x1]
    %v782 = vlaneseq
    %v783 = vshrl.u32 %v782, 7
    %v784 = vsub.s32 0, %v783
    %v785 = vrot.slane %v780, %v784
    %v788 = vsel %vm147, %v777, 0
    %v791 = vsel %vm147, %v778, 0
    %v794 = vsel %vm154, %v779, 0
    %796 = vmatprep.subr.mxu0 0.0
    %797 = vmatpush1.msra.mxu0 %v794
    %798 = vmatprep.subr.mxu0 0.0
    %799 = vmatpush1.msra.mxu0 0.0
    %800 = vmatprep.subr.mxu0 0.0
    %801 = vmatpush1.msra.mxu0 0.0
    %802 = vmatprep.subr.mxu0 0.0
    %803 = vmatpush1.msra.mxu0 0.0
    %804 = vmatprep.subr.mxu0 0.0
    %805 = vmatpush1.msra.mxu0 0.0
    %806 = vmatprep.subr.mxu0 0.0
    %807 = vmatpush1.msra.mxu0 0.0
    %808 = vmatprep.subr.mxu0 0.0
    %809 = vmatpush1.msra.mxu0 0.0
    %810 = vmatprep.subr.mxu0 0.0
    %811 = vmatpush1.msra.mxu0 0.0
    %812 = vmatprep.subr.mxu0 0.0
    %813 = vmatpush1.msra.mxu0 0.0
    %814 = vmatprep.subr.mxu0 0.0
    %815 = vmatpush1.msra.mxu0 0.0
    %816 = vmatprep.subr.mxu0 0.0
    %817 = vmatpush1.msra.mxu0 0.0
    %818 = vmatprep.subr.mxu0 0.0
    %819 = vmatpush1.msra.mxu0 0.0
    %820 = vmatprep.subr.mxu0 0.0
    %821 = vmatpush1.msra.mxu0 0.0
    %822 = vmatprep.subr.mxu0 0.0
    %823 = vmatpush1.msra.mxu0 0.0
    %824 = vmatprep.subr.mxu0 0.0
    %825 = vmatpush1.msra.mxu0 0.0
    %826 = vmatprep.subr.mxu0 0.0
    %827 = vmatpush1.msra.mxu0 0.0
    %828 = vmatprep.subr.mxu0 0.0
    %829 = vmatpush1.msra.mxu0 0.0
    %830 = vmatprep.subr.mxu0 0.0
    %831 = vmatpush1.msra.mxu0 0.0
    %832 = vmatprep.subr.mxu0 0.0
    %833 = vmatpush1.msra.mxu0 0.0
    %834 = vmatprep.subr.mxu0 0.0
    %835 = vmatpush1.msra.mxu0 0.0
    %836 = vmatprep.subr.mxu0 0.0
    %837 = vmatpush1.msra.mxu0 0.0
    %838 = vmatprep.subr.mxu0 0.0
    %839 = vmatpush1.msra.mxu0 0.0
    %840 = vmatprep.subr.mxu0 0.0
    %841 = vmatpush1.msra.mxu0 0.0
    %842 = vmatprep.subr.mxu0 0.0
    %843 = vmatpush1.msra.mxu0 0.0
    %844 = vmatprep.subr.mxu0 0.0
    %845 = vmatpush1.msra.mxu0 0.0
    %846 = vmatprep.subr.mxu0 0.0
    %847 = vmatpush1.msra.mxu0 0.0
    %848 = vmatprep.subr.mxu0 0.0
    %849 = vmatpush1.msra.mxu0 0.0
    %850 = vmatprep.subr.mxu0 0.0
    %851 = vmatpush1.msra.mxu0 0.0
    %852 = vmatprep.subr.mxu0 0.0
    %853 = vmatpush1.msra.mxu0 0.0
    %854 = vmatprep.subr.mxu0 0.0
    %855 = vmatpush1.msra.mxu0 0.0
    %856 = vmatprep.subr.mxu0 0.0
    %857 = vmatpush1.msra.mxu0 0.0
    %858 = vmatprep.subr.mxu0 0.0
    %859 = vmatpush1.msra.mxu0 0.0
    %860 = vmatprep.mubr.f32.mxu0 0.0
    %861 = vmatmul.mubr.f32.gmra.mrb[0].mxu0 %v788
    %v862 = vpop.f32.mrb[0].mxu0
    %v863 = vadd.f32 %v785, %v862
    %v864 = vpop.f32.mrb[0].mxu0
    %865 = vmatprep.mubr.f32.mxu0 0.0
    %866 = vmatmul.mubr.f32.gmra.mrb[0].mxu0 %v791
    %v867 = vpop.f32.mrb[0].mxu0
    %v868 = vadd.f32 %v785, %v867
    %v869 = vpop.f32.mrb[0].mxu0
    %870 = vdwg.mxu0
    %v871 = vmax.f32 %v863, 0.0
    %v872 = vmax.f32 %v868, 0.0
    %v873 = vld [vmem:[%s29] sm:$0x7]
    %v874 = vld [vmem:[%s31] sm:$0x1]
    %v876 = vlaneseq
    %v877 = vshrl.u32 %v876, 7
    %v878 = vsub.s32 0, %v877
    %v879 = vrot.slane %v874, %v878
    %vm881 = vcmask 23552
    %v883 = vsel %vm881, %v871, 0
    %v886 = vsel %vm881, %v872, 0
    %vm888 = vcmask 1042432
    %v890 = vsel %vm888, %v873, 0
    %892 = vmatprep.subr.mxu0 0.0
    %893 = vmatpush1.msra.mxu0 %v890
    %894 = vmatprep.subr.mxu0 0.0
    %895 = vmatpush1.msra.mxu0 0.0
    %896 = vmatprep.subr.mxu0 0.0
    %897 = vmatpush1.msra.mxu0 0.0
    %898 = vmatprep.subr.mxu0 0.0
    %899 = vmatpush1.msra.mxu0 0.0
    %900 = vmatprep.subr.mxu0 0.0
    %901 = vmatpush1.msra.mxu0 0.0
    %902 = vmatprep.subr.mxu0 0.0
    %903 = vmatpush1.msra.mxu0 0.0
    %904 = vmatprep.subr.mxu0 0.0
    %905 = vmatpush1.msra.mxu0 0.0
    %906 = vmatprep.subr.mxu0 0.0
    %907 = vmatpush1.msra.mxu0 0.0
    %908 = vmatprep.subr.mxu0 0.0
    %909 = vmatpush1.msra.mxu0 0.0
    %910 = vmatprep.subr.mxu0 0.0
    %911 = vmatpush1.msra.mxu0 0.0
    %912 = vmatprep.subr.mxu0 0.0
    %913 = vmatpush1.msra.mxu0 0.0
    %914 = vmatprep.subr.mxu0 0.0
    %915 = vmatpush1.msra.mxu0 0.0
    %916 = vmatprep.subr.mxu0 0.0
    %917 = vmatpush1.msra.mxu0 0.0
    %918 = vmatprep.subr.mxu0 0.0
    %919 = vmatpush1.msra.mxu0 0.0
    %920 = vmatprep.subr.mxu0 0.0
    %921 = vmatpush1.msra.mxu0 0.0
    %922 = vmatprep.subr.mxu0 0.0
    %923 = vmatpush1.msra.mxu0 0.0
    %924 = vmatprep.subr.mxu0 0.0
    %925 = vmatpush1.msra.mxu0 0.0
    %926 = vmatprep.subr.mxu0 0.0
    %927 = vmatpush1.msra.mxu0 0.0
    %928 = vmatprep.subr.mxu0 0.0
    %929 = vmatpush1.msra.mxu0 0.0
    %930 = vmatprep.subr.mxu0 0.0
    %931 = vmatpush1.msra.mxu0 0.0
    %932 = vmatprep.subr.mxu0 0.0
    %933 = vmatpush1.msra.mxu0 0.0
    %934 = vmatprep.subr.mxu0 0.0
    %935 = vmatpush1.msra.mxu0 0.0
    %936 = vmatprep.subr.mxu0 0.0
    %937 = vmatpush1.msra.mxu0 0.0
    %938 = vmatprep.subr.mxu0 0.0
    %939 = vmatpush1.msra.mxu0 0.0
    %940 = vmatprep.subr.mxu0 0.0
    %941 = vmatpush1.msra.mxu0 0.0
    %942 = vmatprep.subr.mxu0 0.0
    %943 = vmatpush1.msra.mxu0 0.0
    %944 = vmatprep.subr.mxu0 0.0
    %945 = vmatpush1.msra.mxu0 0.0
    %946 = vmatprep.subr.mxu0 0.0
    %947 = vmatpush1.msra.mxu0 0.0
    %948 = vmatprep.subr.mxu0 0.0
    %949 = vmatpush1.msra.mxu0 0.0
    %950 = vmatprep.subr.mxu0 0.0
    %951 = vmatpush1.msra.mxu0 0.0
    %952 = vmatprep.subr.mxu0 0.0
    %953 = vmatpush1.msra.mxu0 0.0
    %954 = vmatprep.subr.mxu0 0.0
    %955 = vmatpush1.msra.mxu0 0.0
    %956 = vmatprep.mubr.f32.mxu0 0.0
    %957 = vmatmul.mubr.f32.gmra.mrb[0].mxu0 %v883
    %v958 = vpop.f32.mrb[0].mxu0
    %v959 = vadd.f32 %v879, %v958
    %v960 = vpop.f32.mrb[0].mxu0
    %961 = vmatprep.mubr.f32.mxu0 0.0
    %962 = vmatmul.mubr.f32.gmra.mrb[0].mxu0 %v886
    %v963 = vpop.f32.mrb[0].mxu0
    %v964 = vadd.f32 %v879, %v963
    %v965 = vpop.f32.mrb[0].mxu0
    %966 = vdwg.mxu0
    %v967 = vmax.f32 %v959, 0.0
    %v968 = vmax.f32 %v964, 0.0
    %v969 = vadd.f32 %v967, %v777
    %v970 = vadd.f32 %v968, %v778
    %s971 = scalar_lea.vmem %s33, 2
    %v972 = vld [vmem:[%s971] sm:$0x1]
    %s973 = scalar_lea.vmem %s33, 3
    %v974 = vld [vmem:[%s973] sm:$0x1]
    %v975 = vsel %vm147, %v969, 0.0
    %976 = vadd.xlane.f32.xlu0 %v975
    %v977 = vpop.xlane.xlu0 %976
    %v978 = vsel %vm147, %v970, 0.0
    %979 = vadd.xlane.f32.xlu0 %v978
    %v980 = vpop.xlane.xlu0 %979
    %v981 = vmul.f32 %v977, %v742
    %v982 = vmul.f32 %v980, %v742
    %v983 = vsub.f32 %v969, %v981
    %v984 = vsub.f32 %v970, %v982
    %v985 = vmul.f32 %v983, %v983
    %v986 = vmul.f32 %v984, %v984
    %v987 = vsel %vm147, %v985, 0.0
    %988 = vadd.xlane.f32.xlu0 %v987
    %v989 = vpop.xlane.xlu0 %988
    %v990 = vsel %vm147, %v986, 0.0
    %991 = vadd.xlane.f32.xlu0 %v990
    %v992 = vpop.xlane.xlu0 %991
    %v993 = vmul.f32 %v989, %v742
    %v994 = vmul.f32 %v992, %v742
    %v995 = vadd.f32 %v993, 1e-05
    %v996 = vadd.f32 %v994, 1e-05
    %v997 = vrsqrt.pop %v995
    %v998 = vrsqrt.pop %v996
    %v999 = vmul.f32 %v983, %v997
    %v1000 = vmul.f32 %v984, %v998
    %v1002 = vlaneseq
    %v1003 = vshrl.u32 %v1002, 7
    %v1004 = vsub.s32 0, %v1003
    %v1005 = vrot.slane %v972, %v1004
    %v1007 = vmul.f32 %v999, %v1005
    %v1008 = vmul.f32 %v1000, %v1005
    %v1010 = vlaneseq
    %v1011 = vshrl.u32 %v1010, 7
    %v1012 = vsub.s32 0, %v1011
    %v1013 = vrot.slane %v974, %v1012
    %v1015 = vadd.f32 %v1007, %v1013
    %v1016 = vadd.f32 %v1008, %v1013
    %s1017 = scalar_lea.vmem %s19, 32
    %v1018 = vld [vmem:[%s1017] sm:$0x7f]
    %s1019 = scalar_lea.vmem %s21, 4
    %v1020 = vld [vmem:[%s1019] sm:$0x1]
    %v1022 = vlaneseq
    %v1023 = vshrl.u32 %v1022, 7
    %v1024 = vsub.s32 0, %v1023
    %v1025 = vrot.slane %v1020, %v1024
    %v1028 = vsel %vm147, %v1015, 0
    %v1031 = vsel %vm147, %v1016, 0
    %v1034 = vsel %vm154, %v1018, 0
    %1036 = vmatprep.subr.mxu0 0.0
    %1037 = vmatpush1.msra.mxu0 %v1034
    %1038 = vmatprep.subr.mxu0 0.0
    %1039 = vmatpush1.msra.mxu0 0.0
    %1040 = vmatprep.subr.mxu0 0.0
    %1041 = vmatpush1.msra.mxu0 0.0
    %1042 = vmatprep.subr.mxu0 0.0
    %1043 = vmatpush1.msra.mxu0 0.0
    %1044 = vmatprep.subr.mxu0 0.0
    %1045 = vmatpush1.msra.mxu0 0.0
    %1046 = vmatprep.subr.mxu0 0.0
    %1047 = vmatpush1.msra.mxu0 0.0
    %1048 = vmatprep.subr.mxu0 0.0
    %1049 = vmatpush1.msra.mxu0 0.0
    %1050 = vmatprep.subr.mxu0 0.0
    %1051 = vmatpush1.msra.mxu0 0.0
    %1052 = vmatprep.subr.mxu0 0.0
    %1053 = vmatpush1.msra.mxu0 0.0
    %1054 = vmatprep.subr.mxu0 0.0
    %1055 = vmatpush1.msra.mxu0 0.0
    %1056 = vmatprep.subr.mxu0 0.0
    %1057 = vmatpush1.msra.mxu0 0.0
    %1058 = vmatprep.subr.mxu0 0.0
    %1059 = vmatpush1.msra.mxu0 0.0
    %1060 = vmatprep.subr.mxu0 0.0
    %1061 = vmatpush1.msra.mxu0 0.0
    %1062 = vmatprep.subr.mxu0 0.0
    %1063 = vmatpush1.msra.mxu0 0.0
    %1064 = vmatprep.subr.mxu0 0.0
    %1065 = vmatpush1.msra.mxu0 0.0
    %1066 = vmatprep.subr.mxu0 0.0
    %1067 = vmatpush1.msra.mxu0 0.0
    %1068 = vmatprep.subr.mxu0 0.0
    %1069 = vmatpush1.msra.mxu0 0.0
    %1070 = vmatprep.subr.mxu0 0.0
    %1071 = vmatpush1.msra.mxu0 0.0
    %1072 = vmatprep.subr.mxu0 0.0
    %1073 = vmatpush1.msra.mxu0 0.0
    %1074 = vmatprep.subr.mxu0 0.0
    %1075 = vmatpush1.msra.mxu0 0.0
    %1076 = vmatprep.subr.mxu0 0.0
    %1077 = vmatpush1.msra.mxu0 0.0
    %1078 = vmatprep.subr.mxu0 0.0
    %1079 = vmatpush1.msra.mxu0 0.0
    %1080 = vmatprep.subr.mxu0 0.0
    %1081 = vmatpush1.msra.mxu0 0.0
    %1082 = vmatprep.subr.mxu0 0.0
    %1083 = vmatpush1.msra.mxu0 0.0
    %1084 = vmatprep.subr.mxu0 0.0
    %1085 = vmatpush1.msra.mxu0 0.0
    %1086 = vmatprep.subr.mxu0 0.0
    %1087 = vmatpush1.msra.mxu0 0.0
    %1088 = vmatprep.subr.mxu0 0.0
    %1089 = vmatpush1.msra.mxu0 0.0
    %1090 = vmatprep.subr.mxu0 0.0
    %1091 = vmatpush1.msra.mxu0 0.0
    %1092 = vmatprep.subr.mxu0 0.0
    %1093 = vmatpush1.msra.mxu0 0.0
    %1094 = vmatprep.subr.mxu0 0.0
    %1095 = vmatpush1.msra.mxu0 0.0
    %1096 = vmatprep.subr.mxu0 0.0
    %1097 = vmatpush1.msra.mxu0 0.0
    %1098 = vmatprep.subr.mxu0 0.0
    %1099 = vmatpush1.msra.mxu0 0.0
    %1100 = vmatprep.mubr.f32.mxu0 0.0
    %1101 = vmatmul.mubr.f32.gmra.mrb[0].mxu0 %v1028
    %v1102 = vpop.f32.mrb[0].mxu0
    %v1103 = vadd.f32 %v1025, %v1102
    %v1104 = vpop.f32.mrb[0].mxu0
    %1105 = vmatprep.mubr.f32.mxu0 0.0
    %1106 = vmatmul.mubr.f32.gmra.mrb[0].mxu0 %v1031
    %v1107 = vpop.f32.mrb[0].mxu0
    %v1108 = vadd.f32 %v1025, %v1107
    %v1109 = vpop.f32.mrb[0].mxu0
    %1110 = vdwg.mxu0
    %s1111 = scalar_lea.vmem %s19, 40
    %v1112 = vld [vmem:[%s1111] sm:$0x7f]
    %s1113 = scalar_lea.vmem %s21, 5
    %v1114 = vld [vmem:[%s1113] sm:$0x1]
    %v1116 = vlaneseq
    %v1117 = vshrl.u32 %v1116, 7
    %v1118 = vsub.s32 0, %v1117
    %v1119 = vrot.slane %v1114, %v1118
    %v1122 = vsel %vm154, %v1112, 0
    %1124 = vmatprep.subr.mxu0 0.0
    %1125 = vmatpush1.msra.mxu0 %v1122
    %1126 = vmatprep.subr.mxu0 0.0
    %1127 = vmatpush1.msra.mxu0 0.0
    %1128 = vmatprep.subr.mxu0 0.0
    %1129 = vmatpush1.msra.mxu0 0.0
    %1130 = vmatprep.subr.mxu0 0.0
    %1131 = vmatpush1.msra.mxu0 0.0
    %1132 = vmatprep.subr.mxu0 0.0
    %1133 = vmatpush1.msra.mxu0 0.0
    %1134 = vmatprep.subr.mxu0 0.0
    %1135 = vmatpush1.msra.mxu0 0.0
    %1136 = vmatprep.subr.mxu0 0.0
    %1137 = vmatpush1.msra.mxu0 0.0
    %1138 = vmatprep.subr.mxu0 0.0
    %1139 = vmatpush1.msra.mxu0 0.0
    %1140 = vmatprep.subr.mxu0 0.0
    %1141 = vmatpush1.msra.mxu0 0.0
    %1142 = vmatprep.subr.mxu0 0.0
    %1143 = vmatpush1.msra.mxu0 0.0
    %1144 = vmatprep.subr.mxu0 0.0
    %1145 = vmatpush1.msra.mxu0 0.0
    %1146 = vmatprep.subr.mxu0 0.0
    %1147 = vmatpush1.msra.mxu0 0.0
    %1148 = vmatprep.subr.mxu0 0.0
    %1149 = vmatpush1.msra.mxu0 0.0
    %1150 = vmatprep.subr.mxu0 0.0
    %1151 = vmatpush1.msra.mxu0 0.0
    %1152 = vmatprep.subr.mxu0 0.0
    %1153 = vmatpush1.msra.mxu0 0.0
    %1154 = vmatprep.subr.mxu0 0.0
    %1155 = vmatpush1.msra.mxu0 0.0
    %1156 = vmatprep.subr.mxu0 0.0
    %1157 = vmatpush1.msra.mxu0 0.0
    %1158 = vmatprep.subr.mxu0 0.0
    %1159 = vmatpush1.msra.mxu0 0.0
    %1160 = vmatprep.subr.mxu0 0.0
    %1161 = vmatpush1.msra.mxu0 0.0
    %1162 = vmatprep.subr.mxu0 0.0
    %1163 = vmatpush1.msra.mxu0 0.0
    %1164 = vmatprep.subr.mxu0 0.0
    %1165 = vmatpush1.msra.mxu0 0.0
    %1166 = vmatprep.subr.mxu0 0.0
    %1167 = vmatpush1.msra.mxu0 0.0
    %1168 = vmatprep.subr.mxu0 0.0
    %1169 = vmatpush1.msra.mxu0 0.0
    %1170 = vmatprep.subr.mxu0 0.0
    %1171 = vmatpush1.msra.mxu0 0.0
    %1172 = vmatprep.subr.mxu0 0.0
    %1173 = vmatpush1.msra.mxu0 0.0
    %1174 = vmatprep.subr.mxu0 0.0
    %1175 = vmatpush1.msra.mxu0 0.0
    %1176 = vmatprep.subr.mxu0 0.0
    %1177 = vmatpush1.msra.mxu0 0.0
    %1178 = vmatprep.subr.mxu0 0.0
    %1179 = vmatpush1.msra.mxu0 0.0
    %1180 = vmatprep.subr.mxu0 0.0
    %1181 = vmatpush1.msra.mxu0 0.0
    %1182 = vmatprep.subr.mxu0 0.0
    %1183 = vmatpush1.msra.mxu0 0.0
    %1184 = vmatprep.subr.mxu0 0.0
    %1185 = vmatpush1.msra.mxu0 0.0
    %1186 = vmatprep.subr.mxu0 0.0
    %1187 = vmatpush1.msra.mxu0 0.0
    %1188 = vmatprep.mubr.f32.mxu0 0.0
    %1189 = vmatmul.mubr.f32.gmra.mrb[0].mxu0 %v1028
    %v1190 = vpop.f32.mrb[0].mxu0
    %v1191 = vadd.f32 %v1119, %v1190
    %v1192 = vpop.f32.mrb[0].mxu0
    %1193 = vmatprep.mubr.f32.mxu0 0.0
    %1194 = vmatmul.mubr.f32.gmra.mrb[0].mxu0 %v1031
    %v1195 = vpop.f32.mrb[0].mxu0
    %v1196 = vadd.f32 %v1119, %v1195
    %v1197 = vpop.f32.mrb[0].mxu0
    %1198 = vdwg.mxu0
    %s1199 = scalar_lea.vmem %s19, 48
    %v1200 = vld [vmem:[%s1199] sm:$0x7f]
    %s1201 = scalar_lea.vmem %s21, 6
    %v1202 = vld [vmem:[%s1201] sm:$0x1]
    %v1204 = vlaneseq
    %v1205 = vshrl.u32 %v1204, 7
    %v1206 = vsub.s32 0, %v1205
    %v1207 = vrot.slane %v1202, %v1206
    %v1210 = vsel %vm154, %v1200, 0
    %1212 = vmatprep.subr.mxu0 0.0
    %1213 = vmatpush1.msra.mxu0 %v1210
    %1214 = vmatprep.subr.mxu0 0.0
    %1215 = vmatpush1.msra.mxu0 0.0
    %1216 = vmatprep.subr.mxu0 0.0
    %1217 = vmatpush1.msra.mxu0 0.0
    %1218 = vmatprep.subr.mxu0 0.0
    %1219 = vmatpush1.msra.mxu0 0.0
    %1220 = vmatprep.subr.mxu0 0.0
    %1221 = vmatpush1.msra.mxu0 0.0
    %1222 = vmatprep.subr.mxu0 0.0
    %1223 = vmatpush1.msra.mxu0 0.0
    %1224 = vmatprep.subr.mxu0 0.0
    %1225 = vmatpush1.msra.mxu0 0.0
    %1226 = vmatprep.subr.mxu0 0.0
    %1227 = vmatpush1.msra.mxu0 0.0
    %1228 = vmatprep.subr.mxu0 0.0
    %1229 = vmatpush1.msra.mxu0 0.0
    %1230 = vmatprep.subr.mxu0 0.0
    %1231 = vmatpush1.msra.mxu0 0.0
    %1232 = vmatprep.subr.mxu0 0.0
    %1233 = vmatpush1.msra.mxu0 0.0
    %1234 = vmatprep.subr.mxu0 0.0
    %1235 = vmatpush1.msra.mxu0 0.0
    %1236 = vmatprep.subr.mxu0 0.0
    %1237 = vmatpush1.msra.mxu0 0.0
    %1238 = vmatprep.subr.mxu0 0.0
    %1239 = vmatpush1.msra.mxu0 0.0
    %1240 = vmatprep.subr.mxu0 0.0
    %1241 = vmatpush1.msra.mxu0 0.0
    %1242 = vmatprep.subr.mxu0 0.0
    %1243 = vmatpush1.msra.mxu0 0.0
    %1244 = vmatprep.subr.mxu0 0.0
    %1245 = vmatpush1.msra.mxu0 0.0
    %1246 = vmatprep.subr.mxu0 0.0
    %1247 = vmatpush1.msra.mxu0 0.0
    %1248 = vmatprep.subr.mxu0 0.0
    %1249 = vmatpush1.msra.mxu0 0.0
    %1250 = vmatprep.subr.mxu0 0.0
    %1251 = vmatpush1.msra.mxu0 0.0
    %1252 = vmatprep.subr.mxu0 0.0
    %1253 = vmatpush1.msra.mxu0 0.0
    %1254 = vmatprep.subr.mxu0 0.0
    %1255 = vmatpush1.msra.mxu0 0.0
    %1256 = vmatprep.subr.mxu0 0.0
    %1257 = vmatpush1.msra.mxu0 0.0
    %1258 = vmatprep.subr.mxu0 0.0
    %1259 = vmatpush1.msra.mxu0 0.0
    %1260 = vmatprep.subr.mxu0 0.0
    %1261 = vmatpush1.msra.mxu0 0.0
    %1262 = vmatprep.subr.mxu0 0.0
    %1263 = vmatpush1.msra.mxu0 0.0
    %1264 = vmatprep.subr.mxu0 0.0
    %1265 = vmatpush1.msra.mxu0 0.0
    %1266 = vmatprep.subr.mxu0 0.0
    %1267 = vmatpush1.msra.mxu0 0.0
    %1268 = vmatprep.subr.mxu0 0.0
    %1269 = vmatpush1.msra.mxu0 0.0
    %1270 = vmatprep.subr.mxu0 0.0
    %1271 = vmatpush1.msra.mxu0 0.0
    %1272 = vmatprep.subr.mxu0 0.0
    %1273 = vmatpush1.msra.mxu0 0.0
    %1274 = vmatprep.subr.mxu0 0.0
    %1275 = vmatpush1.msra.mxu0 0.0
    %1276 = vmatprep.mubr.f32.mxu0 0.0
    %1277 = vmatmul.mubr.f32.gmra.mrb[0].mxu0 %v1028
    %v1278 = vpop.f32.mrb[0].mxu0
    %v1279 = vadd.f32 %v1207, %v1278
    %v1280 = vpop.f32.mrb[0].mxu0
    %1281 = vmatprep.mubr.f32.mxu0 0.0
    %1282 = vmatmul.mubr.f32.gmra.mrb[0].mxu0 %v1031
    %v1283 = vpop.f32.mrb[0].mxu0
    %v1284 = vadd.f32 %v1207, %v1283
    %v1285 = vpop.f32.mrb[0].mxu0
    %1286 = vdwg.mxu0
    %s1287 = scalar_lea.vmem %s23, 2
    %v1288 = vld [vmem:[%s1287] sm:$0x1]
    %s1289 = scalar_lea.vmem %s23, 3
    %v1290 = vld [vmem:[%s1289] sm:$0x1]
    %v1291 = vmul.f32 %v1103, 0.37796447
    %v1292 = vmul.f32 %v1108, 0.37796447
    %v1294 = vsel %vm147, %v1291, 0
    %v1297 = vsel %vm147, %v1292, 0
    %v1300 = vsel %vm147, %v1191, 0
    %v1303 = vsel %vm147, %v1196, 0
    %1305 = vmatprep.subr.mxu0 0.0
    %1306 = vmatpush1.xpose.msra.mxu0 %v1300
    %1307 = vmatprep.subr.mxu0 0.0
    %1308 = vmatpush1.xpose.msra.mxu0 %v1303
    %1309 = vmatprep.subr.mxu0 0.0
    %1310 = vmatpush1.xpose.msra.mxu0 0.0
    %1311 = vmatprep.subr.mxu0 0.0
    %1312 = vmatpush1.xpose.msra.mxu0 0.0
    %1313 = vmatprep.subr.mxu0 0.0
    %1314 = vmatpush1.xpose.msra.mxu0 0.0
    %1315 = vmatprep.subr.mxu0 0.0
    %1316 = vmatpush1.xpose.msra.mxu0 0.0
    %1317 = vmatprep.subr.mxu0 0.0
    %1318 = vmatpush1.xpose.msra.mxu0 0.0
    %1319 = vmatprep.subr.mxu0 0.0
    %1320 = vmatpush1.xpose.msra.mxu0 0.0
    %1321 = vmatprep.subr.mxu0 0.0
    %1322 = vmatpush1.xpose.msra.mxu0 0.0
    %1323 = vmatprep.subr.mxu0 0.0
    %1324 = vmatpush1.xpose.msra.mxu0 0.0
    %1325 = vmatprep.subr.mxu0 0.0
    %1326 = vmatpush1.xpose.msra.mxu0 0.0
    %1327 = vmatprep.subr.mxu0 0.0
    %1328 = vmatpush1.xpose.msra.mxu0 0.0
    %1329 = vmatprep.subr.mxu0 0.0
    %1330 = vmatpush1.xpose.msra.mxu0 0.0
    %1331 = vmatprep.subr.mxu0 0.0
    %1332 = vmatpush1.xpose.msra.mxu0 0.0
    %1333 = vmatprep.subr.mxu0 0.0
    %1334 = vmatpush1.xpose.msra.mxu0 0.0
    %1335 = vmatprep.subr.mxu0 0.0
    %1336 = vmatpush1.xpose.msra.mxu0 0.0
    %1337 = vmatprep.subr.mxu0 0.0
    %1338 = vmatpush1.xpose.msra.mxu0 0.0
    %1339 = vmatprep.subr.mxu0 0.0
    %1340 = vmatpush1.xpose.msra.mxu0 0.0
    %1341 = vmatprep.subr.mxu0 0.0
    %1342 = vmatpush1.xpose.msra.mxu0 0.0
    %1343 = vmatprep.subr.mxu0 0.0
    %1344 = vmatpush1.xpose.msra.mxu0 0.0
    %1345 = vmatprep.subr.mxu0 0.0
    %1346 = vmatpush1.xpose.msra.mxu0 0.0
    %1347 = vmatprep.subr.mxu0 0.0
    %1348 = vmatpush1.xpose.msra.mxu0 0.0
    %1349 = vmatprep.subr.mxu0 0.0
    %1350 = vmatpush1.xpose.msra.mxu0 0.0
    %1351 = vmatprep.subr.mxu0 0.0
    %1352 = vmatpush1.xpose.msra.mxu0 0.0
    %1353 = vmatprep.subr.mxu0 0.0
    %1354 = vmatpush1.xpose.msra.mxu0 0.0
    %1355 = vmatprep.subr.mxu0 0.0
    %1356 = vmatpush1.xpose.msra.mxu0 0.0
    %1357 = vmatprep.subr.mxu0 0.0
    %1358 = vmatpush1.xpose.msra.mxu0 0.0
    %1359 = vmatprep.subr.mxu0 0.0
    %1360 = vmatpush1.xpose.msra.mxu0 0.0
    %1361 = vmatprep.subr.mxu0 0.0
    %1362 = vmatpush1.xpose.msra.mxu0 0.0
    %1363 = vmatprep.subr.mxu0 0.0
    %1364 = vmatpush1.xpose.msra.mxu0 0.0
    %1365 = vmatprep.subr.mxu0 0.0
    %1366 = vmatpush1.xpose.msra.mxu0 0.0
    %1367 = vmatprep.subr.mxu0 0.0
    %1368 = vmatpush1.xpose.msra.mxu0 0.0
    %1369 = vmatprep.mubr.f32.mxu0 0.0
    %1370 = vmatmul.mubr.f32.gmra.mrb[0].mxu0 %v1294
    %v1371 = vpop.f32.mrb[0].mxu0
    %v1372 = vadd.f32 %v137, %v1371
    %v1373 = vpop.f32.mrb[0].mxu0
    %1374 = vmatprep.mubr.f32.mxu0 0.0
    %1375 = vmatmul.mubr.f32.gmra.mrb[0].mxu0 %v1297
    %v1376 = vpop.f32.mrb[0].mxu0
    %v1377 = vadd.f32 %v138, %v1376
    %v1378 = vpop.f32.mrb[0].mxu0
    %1379 = vdwg.mxu0
    %v1381 = vlaneseq
    %v1382 = vshrl.u32 %v1381, 7
    %v1383 = vsub.s32 0, %v1382
    %v1384 = vrot.slane %v1288, %v1383
    %v1386 = vmul.f32 %v1291, %v1384
    %v1387 = vmul.f32 %v1292, %v1384
    %v1388 = vsel %vm147, %v1386, 0.0
    %1389 = vadd.xlane.f32.xlu0 %v1388
    %v1390 = vpop.xlane.xlu0 %1389
    %v1391 = vsel %vm147, %v1387, 0.0
    %1392 = vadd.xlane.f32.xlu0 %v1391
    %v1393 = vpop.xlane.xlu0 %1392
    %v1394 = vsel %vm515, %v1372, -inf
    %1395 = vmax.xlane.f32.xlu0 %v1394
    %v1396 = vpop.xlane.xlu0 %1395
    %v1397 = vsel %vm515, %v1377, -inf
    %1398 = vmax.xlane.f32.xlu0 %v1397
    %v1399 = vpop.xlane.xlu0 %1398
    %v1400 = vmax.f32 %v1396, %v1390
    %v1401 = vmax.f32 %v1399, %v1393
    %v1402 = vsub.f32 %v1372, %v1400
    %v1403 = vsub.f32 %v1377, %v1401
    %v1404 = vmul.f32 %v1402, 1.442695
    %v1405 = vpow.pop %v1404
    %v1406 = vmul.f32 %v1403, 1.442695
    %v1407 = vpow.pop %v1406
    %v1408 = vsub.f32 %v1390, %v1400
    %v1409 = vsub.f32 %v1393, %v1401
    %v1410 = vmul.f32 %v1408, 1.442695
    %v1411 = vpow.pop %v1410
    %v1412 = vmul.f32 %v1409, 1.442695
    %v1413 = vpow.pop %v1412
    %v1414 = vsel %vm515, %v1405, 0.0
    %1415 = vadd.xlane.f32.xlu0 %v1414
    %v1416 = vpop.xlane.xlu0 %1415
    %v1417 = vsel %vm515, %v1407, 0.0
    %1418 = vadd.xlane.f32.xlu0 %v1417
    %v1419 = vpop.xlane.xlu0 %1418
    %v1420 = vadd.f32 %v1416, %v1411
    %v1421 = vadd.f32 %v1419, %v1413
    %v1423 = vlaneseq
    %v1424 = vshrl.u32 %v1423, 7
    %v1425 = vsub.s32 0, %v1424
    %v1426 = vrot.slane %v1290, %v1425
    %v1428 = vmul.f32 %v1411, %v1426
    %v1429 = vmul.f32 %v1413, %v1426
    %v1431 = vsel %vm515, %v1405, 0
    %v1434 = vsel %vm515, %v1407, 0
    %1436 = vmatprep.subr.mxu0 0.0
    %1437 = vmatpush1.msra.mxu0 %v1279
    %1438 = vmatprep.subr.mxu0 0.0
    %1439 = vmatpush1.msra.mxu0 %v1284
    %1440 = vmatprep.subr.mxu0 0.0
    %1441 = vmatpush1.msra.mxu0 0.0
    %1442 = vmatprep.subr.mxu0 0.0
    %1443 = vmatpush1.msra.mxu0 0.0
    %1444 = vmatprep.subr.mxu0 0.0
    %1445 = vmatpush1.msra.mxu0 0.0
    %1446 = vmatprep.subr.mxu0 0.0
    %1447 = vmatpush1.msra.mxu0 0.0
    %1448 = vmatprep.subr.mxu0 0.0
    %1449 = vmatpush1.msra.mxu0 0.0
    %1450 = vmatprep.subr.mxu0 0.0
    %1451 = vmatpush1.msra.mxu0 0.0
    %1452 = vmatprep.subr.mxu0 0.0
    %1453 = vmatpush1.msra.mxu0 0.0
    %1454 = vmatprep.subr.mxu0 0.0
    %1455 = vmatpush1.msra.mxu0 0.0
    %1456 = vmatprep.subr.mxu0 0.0
    %1457 = vmatpush1.msra.mxu0 0.0
    %1458 = vmatprep.subr.mxu0 0.0
    %1459 = vmatpush1.msra.mxu0 0.0
    %1460 = vmatprep.subr.mxu0 0.0
    %1461 = vmatpush1.msra.mxu0 0.0
    %1462 = vmatprep.subr.mxu0 0.0
    %1463 = vmatpush1.msra.mxu0 0.0
    %1464 = vmatprep.subr.mxu0 0.0
    %1465 = vmatpush1.msra.mxu0 0.0
    %1466 = vmatprep.subr.mxu0 0.0
    %1467 = vmatpush1.msra.mxu0 0.0
    %1468 = vmatprep.subr.mxu0 0.0
    %1469 = vmatpush1.msra.mxu0 0.0
    %1470 = vmatprep.subr.mxu0 0.0
    %1471 = vmatpush1.msra.mxu0 0.0
    %1472 = vmatprep.subr.mxu0 0.0
    %1473 = vmatpush1.msra.mxu0 0.0
    %1474 = vmatprep.subr.mxu0 0.0
    %1475 = vmatpush1.msra.mxu0 0.0
    %1476 = vmatprep.subr.mxu0 0.0
    %1477 = vmatpush1.msra.mxu0 0.0
    %1478 = vmatprep.subr.mxu0 0.0
    %1479 = vmatpush1.msra.mxu0 0.0
    %1480 = vmatprep.subr.mxu0 0.0
    %1481 = vmatpush1.msra.mxu0 0.0
    %1482 = vmatprep.subr.mxu0 0.0
    %1483 = vmatpush1.msra.mxu0 0.0
    %1484 = vmatprep.subr.mxu0 0.0
    %1485 = vmatpush1.msra.mxu0 0.0
    %1486 = vmatprep.subr.mxu0 0.0
    %1487 = vmatpush1.msra.mxu0 0.0
    %1488 = vmatprep.subr.mxu0 0.0
    %1489 = vmatpush1.msra.mxu0 0.0
    %1490 = vmatprep.subr.mxu0 0.0
    %1491 = vmatpush1.msra.mxu0 0.0
    %1492 = vmatprep.subr.mxu0 0.0
    %1493 = vmatpush1.msra.mxu0 0.0
    %1494 = vmatprep.subr.mxu0 0.0
    %1495 = vmatpush1.msra.mxu0 0.0
    %1496 = vmatprep.subr.mxu0 0.0
    %1497 = vmatpush1.msra.mxu0 0.0
    %1498 = vmatprep.subr.mxu0 0.0
    %1499 = vmatpush1.msra.mxu0 0.0
    %1500 = vmatprep.mubr.f32.mxu0 0.0
    %1501 = vmatmul.mubr.f32.gmra.mrb[0].mxu0 %v1431
    %v1502 = vpop.f32.mrb[0].mxu0
    %v1503 = vadd.f32 %v1428, %v1502
    %v1504 = vpop.f32.mrb[0].mxu0
    %1505 = vmatprep.mubr.f32.mxu0 0.0
    %1506 = vmatmul.mubr.f32.gmra.mrb[0].mxu0 %v1434
    %v1507 = vpop.f32.mrb[0].mxu0
    %v1508 = vadd.f32 %v1429, %v1507
    %v1509 = vpop.f32.mrb[0].mxu0
    %1510 = vdwg.mxu0
    %v1511 = vrcp.pop %v1420
    %v1512 = vmul.f32 %v1503, %v1511
    %v1513 = vrcp.pop %v1421
    %v1514 = vmul.f32 %v1508, %v1513
    %s1515 = scalar_lea.vmem %s19, 56
    %v1516 = vld [vmem:[%s1515] sm:$0x7f]
    %s1517 = scalar_lea.vmem %s21, 7
    %v1518 = vld [vmem:[%s1517] sm:$0x1]
    %v1520 = vlaneseq
    %v1521 = vshrl.u32 %v1520, 7
    %v1522 = vsub.s32 0, %v1521
    %v1523 = vrot.slane %v1518, %v1522
    %v1526 = vsel %vm147, %v1512, 0
    %v1529 = vsel %vm147, %v1514, 0
    %v1532 = vsel %vm154, %v1516, 0
    %1534 = vmatprep.subr.mxu0 0.0
    %1535 = vmatpush1.msra.mxu0 %v1532
    %1536 = vmatprep.subr.mxu0 0.0
    %1537 = vmatpush1.msra.mxu0 0.0
    %1538 = vmatprep.subr.mxu0 0.0
    %1539 = vmatpush1.msra.mxu0 0.0
    %1540 = vmatprep.subr.mxu0 0.0
    %1541 = vmatpush1.msra.mxu0 0.0
    %1542 = vmatprep.subr.mxu0 0.0
    %1543 = vmatpush1.msra.mxu0 0.0
    %1544 = vmatprep.subr.mxu0 0.0
    %1545 = vmatpush1.msra.mxu0 0.0
    %1546 = vmatprep.subr.mxu0 0.0
    %1547 = vmatpush1.msra.mxu0 0.0
    %1548 = vmatprep.subr.mxu0 0.0
    %1549 = vmatpush1.msra.mxu0 0.0
    %1550 = vmatprep.subr.mxu0 0.0
    %1551 = vmatpush1.msra.mxu0 0.0
    %1552 = vmatprep.subr.mxu0 0.0
    %1553 = vmatpush1.msra.mxu0 0.0
    %1554 = vmatprep.subr.mxu0 0.0
    %1555 = vmatpush1.msra.mxu0 0.0
    %1556 = vmatprep.subr.mxu0 0.0
    %1557 = vmatpush1.msra.mxu0 0.0
    %1558 = vmatprep.subr.mxu0 0.0
    %1559 = vmatpush1.msra.mxu0 0.0
    %1560 = vmatprep.subr.mxu0 0.0
    %1561 = vmatpush1.msra.mxu0 0.0
    %1562 = vmatprep.subr.mxu0 0.0
    %1563 = vmatpush1.msra.mxu0 0.0
    %1564 = vmatprep.subr.mxu0 0.0
    %1565 = vmatpush1.msra.mxu0 0.0
    %1566 = vmatprep.subr.mxu0 0.0
    %1567 = vmatpush1.msra.mxu0 0.0
    %1568 = vmatprep.subr.mxu0 0.0
    %1569 = vmatpush1.msra.mxu0 0.0
    %1570 = vmatprep.subr.mxu0 0.0
    %1571 = vmatpush1.msra.mxu0 0.0
    %1572 = vmatprep.subr.mxu0 0.0
    %1573 = vmatpush1.msra.mxu0 0.0
    %1574 = vmatprep.subr.mxu0 0.0
    %1575 = vmatpush1.msra.mxu0 0.0
    %1576 = vmatprep.subr.mxu0 0.0
    %1577 = vmatpush1.msra.mxu0 0.0
    %1578 = vmatprep.subr.mxu0 0.0
    %1579 = vmatpush1.msra.mxu0 0.0
    %1580 = vmatprep.subr.mxu0 0.0
    %1581 = vmatpush1.msra.mxu0 0.0
    %1582 = vmatprep.subr.mxu0 0.0
    %1583 = vmatpush1.msra.mxu0 0.0
    %1584 = vmatprep.subr.mxu0 0.0
    %1585 = vmatpush1.msra.mxu0 0.0
    %1586 = vmatprep.subr.mxu0 0.0
    %1587 = vmatpush1.msra.mxu0 0.0
    %1588 = vmatprep.subr.mxu0 0.0
    %1589 = vmatpush1.msra.mxu0 0.0
    %1590 = vmatprep.subr.mxu0 0.0
    %1591 = vmatpush1.msra.mxu0 0.0
    %1592 = vmatprep.subr.mxu0 0.0
    %1593 = vmatpush1.msra.mxu0 0.0
    %1594 = vmatprep.subr.mxu0 0.0
    %1595 = vmatpush1.msra.mxu0 0.0
    %1596 = vmatprep.subr.mxu0 0.0
    %1597 = vmatpush1.msra.mxu0 0.0
    %1598 = vmatprep.mubr.f32.mxu0 0.0
    %1599 = vmatmul.mubr.f32.gmra.mrb[0].mxu0 %v1526
    %v1600 = vpop.f32.mrb[0].mxu0
    %v1601 = vadd.f32 %v1523, %v1600
    %v1602 = vpop.f32.mrb[0].mxu0
    %1603 = vmatprep.mubr.f32.mxu0 0.0
    %1604 = vmatmul.mubr.f32.gmra.mrb[0].mxu0 %v1529
    %v1605 = vpop.f32.mrb[0].mxu0
    %v1606 = vadd.f32 %v1523, %v1605
    %v1607 = vpop.f32.mrb[0].mxu0
    %1608 = vdwg.mxu0
    %v1609 = vadd.f32 %v1601, %v1015
    %v1610 = vadd.f32 %v1606, %v1016
    %s1611 = scalar_lea.vmem %s33, 4
    %v1612 = vld [vmem:[%s1611] sm:$0x1]
    %s1613 = scalar_lea.vmem %s33, 5
    %v1614 = vld [vmem:[%s1613] sm:$0x1]
    %v1615 = vsel %vm147, %v1609, 0.0
    %1616 = vadd.xlane.f32.xlu0 %v1615
    %v1617 = vpop.xlane.xlu0 %1616
    %v1618 = vsel %vm147, %v1610, 0.0
    %1619 = vadd.xlane.f32.xlu0 %v1618
    %v1620 = vpop.xlane.xlu0 %1619
    %v1621 = vmul.f32 %v1617, %v742
    %v1622 = vmul.f32 %v1620, %v742
    %v1623 = vsub.f32 %v1609, %v1621
    %v1624 = vsub.f32 %v1610, %v1622
    %v1625 = vmul.f32 %v1623, %v1623
    %v1626 = vmul.f32 %v1624, %v1624
    %v1627 = vsel %vm147, %v1625, 0.0
    %1628 = vadd.xlane.f32.xlu0 %v1627
    %v1629 = vpop.xlane.xlu0 %1628
    %v1630 = vsel %vm147, %v1626, 0.0
    %1631 = vadd.xlane.f32.xlu0 %v1630
    %v1632 = vpop.xlane.xlu0 %1631
    %v1633 = vmul.f32 %v1629, %v742
    %v1634 = vmul.f32 %v1632, %v742
    %v1635 = vadd.f32 %v1633, 1e-05
    %v1636 = vadd.f32 %v1634, 1e-05
    %v1637 = vrsqrt.pop %v1635
    %v1638 = vrsqrt.pop %v1636
    %v1639 = vmul.f32 %v1623, %v1637
    %v1640 = vmul.f32 %v1624, %v1638
    %v1642 = vlaneseq
    %v1643 = vshrl.u32 %v1642, 7
    %v1644 = vsub.s32 0, %v1643
    %v1645 = vrot.slane %v1612, %v1644
    %v1647 = vmul.f32 %v1639, %v1645
    %v1648 = vmul.f32 %v1640, %v1645
    %v1650 = vlaneseq
    %v1651 = vshrl.u32 %v1650, 7
    %v1652 = vsub.s32 0, %v1651
    %v1653 = vrot.slane %v1614, %v1652
    %v1655 = vadd.f32 %v1647, %v1653
    %v1656 = vadd.f32 %v1648, %v1653
    %s1657 = scalar_lea.vmem %s25, 8
    %v1658 = vld [vmem:[%s1657] sm:$0x7f]
    %s1659 = scalar_lea.vmem %s27, 1
    %v1660 = vld [vmem:[%s1659] sm:$0x1]
    %v1662 = vlaneseq
    %v1663 = vshrl.u32 %v1662, 7
    %v1664 = vsub.s32 0, %v1663
    %v1665 = vrot.slane %v1660, %v1664
    %v1668 = vsel %vm147, %v1655, 0
    %v1671 = vsel %vm147, %v1656, 0
    %v1674 = vsel %vm154, %v1658, 0
    %1676 = vmatprep.subr.mxu0 0.0
    %1677 = vmatpush1.msra.mxu0 %v1674
    %1678 = vmatprep.subr.mxu0 0.0
    %1679 = vmatpush1.msra.mxu0 0.0
    %1680 = vmatprep.subr.mxu0 0.0
    %1681 = vmatpush1.msra.mxu0 0.0
    %1682 = vmatprep.subr.mxu0 0.0
    %1683 = vmatpush1.msra.mxu0 0.0
    %1684 = vmatprep.subr.mxu0 0.0
    %1685 = vmatpush1.msra.mxu0 0.0
    %1686 = vmatprep.subr.mxu0 0.0
    %1687 = vmatpush1.msra.mxu0 0.0
    %1688 = vmatprep.subr.mxu0 0.0
    %1689 = vmatpush1.msra.mxu0 0.0
    %1690 = vmatprep.subr.mxu0 0.0
    %1691 = vmatpush1.msra.mxu0 0.0
    %1692 = vmatprep.subr.mxu0 0.0
    %1693 = vmatpush1.msra.mxu0 0.0
    %1694 = vmatprep.subr.mxu0 0.0
    %1695 = vmatpush1.msra.mxu0 0.0
    %1696 = vmatprep.subr.mxu0 0.0
    %1697 = vmatpush1.msra.mxu0 0.0
    %1698 = vmatprep.subr.mxu0 0.0
    %1699 = vmatpush1.msra.mxu0 0.0
    %1700 = vmatprep.subr.mxu0 0.0
    %1701 = vmatpush1.msra.mxu0 0.0
    %1702 = vmatprep.subr.mxu0 0.0
    %1703 = vmatpush1.msra.mxu0 0.0
    %1704 = vmatprep.subr.mxu0 0.0
    %1705 = vmatpush1.msra.mxu0 0.0
    %1706 = vmatprep.subr.mxu0 0.0
    %1707 = vmatpush1.msra.mxu0 0.0
    %1708 = vmatprep.subr.mxu0 0.0
    %1709 = vmatpush1.msra.mxu0 0.0
    %1710 = vmatprep.subr.mxu0 0.0
    %1711 = vmatpush1.msra.mxu0 0.0
    %1712 = vmatprep.subr.mxu0 0.0
    %1713 = vmatpush1.msra.mxu0 0.0
    %1714 = vmatprep.subr.mxu0 0.0
    %1715 = vmatpush1.msra.mxu0 0.0
    %1716 = vmatprep.subr.mxu0 0.0
    %1717 = vmatpush1.msra.mxu0 0.0
    %1718 = vmatprep.subr.mxu0 0.0
    %1719 = vmatpush1.msra.mxu0 0.0
    %1720 = vmatprep.subr.mxu0 0.0
    %1721 = vmatpush1.msra.mxu0 0.0
    %1722 = vmatprep.subr.mxu0 0.0
    %1723 = vmatpush1.msra.mxu0 0.0
    %1724 = vmatprep.subr.mxu0 0.0
    %1725 = vmatpush1.msra.mxu0 0.0
    %1726 = vmatprep.subr.mxu0 0.0
    %1727 = vmatpush1.msra.mxu0 0.0
    %1728 = vmatprep.subr.mxu0 0.0
    %1729 = vmatpush1.msra.mxu0 0.0
    %1730 = vmatprep.subr.mxu0 0.0
    %1731 = vmatpush1.msra.mxu0 0.0
    %1732 = vmatprep.subr.mxu0 0.0
    %1733 = vmatpush1.msra.mxu0 0.0
    %1734 = vmatprep.subr.mxu0 0.0
    %1735 = vmatpush1.msra.mxu0 0.0
    %1736 = vmatprep.subr.mxu0 0.0
    %1737 = vmatpush1.msra.mxu0 0.0
    %1738 = vmatprep.subr.mxu0 0.0
    %1739 = vmatpush1.msra.mxu0 0.0
    %1740 = vmatprep.mubr.f32.mxu0 0.0
    %1741 = vmatmul.mubr.f32.gmra.mrb[0].mxu0 %v1668
    %v1742 = vpop.f32.mrb[0].mxu0
    %v1743 = vadd.f32 %v1665, %v1742
    %v1744 = vpop.f32.mrb[0].mxu0
    %1745 = vmatprep.mubr.f32.mxu0 0.0
    %1746 = vmatmul.mubr.f32.gmra.mrb[0].mxu0 %v1671
    %v1747 = vpop.f32.mrb[0].mxu0
    %v1748 = vadd.f32 %v1665, %v1747
    %v1749 = vpop.f32.mrb[0].mxu0
    %1750 = vdwg.mxu0
    %v1751 = vmax.f32 %v1743, 0.0
    %v1752 = vmax.f32 %v1748, 0.0
    %s1753 = scalar_lea.vmem %s29, 4
    %v1754 = vld [vmem:[%s1753] sm:$0x7]
    %s1755 = scalar_lea.vmem %s31, 1
    %v1756 = vld [vmem:[%s1755] sm:$0x1]
    %v1758 = vlaneseq
    %v1759 = vshrl.u32 %v1758, 7
    %v1760 = vsub.s32 0, %v1759
    %v1761 = vrot.slane %v1756, %v1760
    %v1764 = vsel %vm881, %v1751, 0
    %v1767 = vsel %vm881, %v1752, 0
    %v1770 = vsel %vm888, %v1754, 0
    %1772 = vmatprep.subr.mxu0 0.0
    %1773 = vmatpush1.msra.mxu0 %v1770
    %1774 = vmatprep.subr.mxu0 0.0
    %1775 = vmatpush1.msra.mxu0 0.0
    %1776 = vmatprep.subr.mxu0 0.0
    %1777 = vmatpush1.msra.mxu0 0.0
    %1778 = vmatprep.subr.mxu0 0.0
    %1779 = vmatpush1.msra.mxu0 0.0
    %1780 = vmatprep.subr.mxu0 0.0
    %1781 = vmatpush1.msra.mxu0 0.0
    %1782 = vmatprep.subr.mxu0 0.0
    %1783 = vmatpush1.msra.mxu0 0.0
    %1784 = vmatprep.subr.mxu0 0.0
    %1785 = vmatpush1.msra.mxu0 0.0
    %1786 = vmatprep.subr.mxu0 0.0
    %1787 = vmatpush1.msra.mxu0 0.0
    %1788 = vmatprep.subr.mxu0 0.0
    %1789 = vmatpush1.msra.mxu0 0.0
    %1790 = vmatprep.subr.mxu0 0.0
    %1791 = vmatpush1.msra.mxu0 0.0
    %1792 = vmatprep.subr.mxu0 0.0
    %1793 = vmatpush1.msra.mxu0 0.0
    %1794 = vmatprep.subr.mxu0 0.0
    %1795 = vmatpush1.msra.mxu0 0.0
    %1796 = vmatprep.subr.mxu0 0.0
    %1797 = vmatpush1.msra.mxu0 0.0
    %1798 = vmatprep.subr.mxu0 0.0
    %1799 = vmatpush1.msra.mxu0 0.0
    %1800 = vmatprep.subr.mxu0 0.0
    %1801 = vmatpush1.msra.mxu0 0.0
    %1802 = vmatprep.subr.mxu0 0.0
    %1803 = vmatpush1.msra.mxu0 0.0
    %1804 = vmatprep.subr.mxu0 0.0
    %1805 = vmatpush1.msra.mxu0 0.0
    %1806 = vmatprep.subr.mxu0 0.0
    %1807 = vmatpush1.msra.mxu0 0.0
    %1808 = vmatprep.subr.mxu0 0.0
    %1809 = vmatpush1.msra.mxu0 0.0
    %1810 = vmatprep.subr.mxu0 0.0
    %1811 = vmatpush1.msra.mxu0 0.0
    %1812 = vmatprep.subr.mxu0 0.0
    %1813 = vmatpush1.msra.mxu0 0.0
    %1814 = vmatprep.subr.mxu0 0.0
    %1815 = vmatpush1.msra.mxu0 0.0
    %1816 = vmatprep.subr.mxu0 0.0
    %1817 = vmatpush1.msra.mxu0 0.0
    %1818 = vmatprep.subr.mxu0 0.0
    %1819 = vmatpush1.msra.mxu0 0.0
    %1820 = vmatprep.subr.mxu0 0.0
    %1821 = vmatpush1.msra.mxu0 0.0
    %1822 = vmatprep.subr.mxu0 0.0
    %1823 = vmatpush1.msra.mxu0 0.0
    %1824 = vmatprep.subr.mxu0 0.0
    %1825 = vmatpush1.msra.mxu0 0.0
    %1826 = vmatprep.subr.mxu0 0.0
    %1827 = vmatpush1.msra.mxu0 0.0
    %1828 = vmatprep.subr.mxu0 0.0
    %1829 = vmatpush1.msra.mxu0 0.0
    %1830 = vmatprep.subr.mxu0 0.0
    %1831 = vmatpush1.msra.mxu0 0.0
    %1832 = vmatprep.subr.mxu0 0.0
    %1833 = vmatpush1.msra.mxu0 0.0
    %1834 = vmatprep.subr.mxu0 0.0
    %1835 = vmatpush1.msra.mxu0 0.0
    %1836 = vmatprep.mubr.f32.mxu0 0.0
    %1837 = vmatmul.mubr.f32.gmra.mrb[0].mxu0 %v1764
    %v1838 = vpop.f32.mrb[0].mxu0
    %v1839 = vadd.f32 %v1761, %v1838
    %v1840 = vpop.f32.mrb[0].mxu0
    %1841 = vmatprep.mubr.f32.mxu0 0.0
    %1842 = vmatmul.mubr.f32.gmra.mrb[0].mxu0 %v1767
    %v1843 = vpop.f32.mrb[0].mxu0
    %v1844 = vadd.f32 %v1761, %v1843
    %v1845 = vpop.f32.mrb[0].mxu0
    %1846 = vdwg.mxu0
    %v1847 = vmax.f32 %v1839, 0.0
    %v1848 = vmax.f32 %v1844, 0.0
    %v1849 = vadd.f32 %v1847, %v1655
    %v1850 = vadd.f32 %v1848, %v1656
    %s1851 = scalar_lea.vmem %s33, 6
    %v1852 = vld [vmem:[%s1851] sm:$0x1]
    %s1853 = scalar_lea.vmem %s33, 7
    %v1854 = vld [vmem:[%s1853] sm:$0x1]
    %v1855 = vsel %vm147, %v1849, 0.0
    %1856 = vadd.xlane.f32.xlu0 %v1855
    %v1857 = vpop.xlane.xlu0 %1856
    %v1858 = vsel %vm147, %v1850, 0.0
    %1859 = vadd.xlane.f32.xlu0 %v1858
    %v1860 = vpop.xlane.xlu0 %1859
    %v1861 = vmul.f32 %v1857, %v742
    %v1862 = vmul.f32 %v1860, %v742
    %v1863 = vsub.f32 %v1849, %v1861
    %v1864 = vsub.f32 %v1850, %v1862
    %v1865 = vmul.f32 %v1863, %v1863
    %v1866 = vmul.f32 %v1864, %v1864
    %v1867 = vsel %vm147, %v1865, 0.0
    %1868 = vadd.xlane.f32.xlu0 %v1867
    %v1869 = vpop.xlane.xlu0 %1868
    %v1870 = vsel %vm147, %v1866, 0.0
    %1871 = vadd.xlane.f32.xlu0 %v1870
    %v1872 = vpop.xlane.xlu0 %1871
    %v1873 = vmul.f32 %v1869, %v742
    %v1874 = vmul.f32 %v1872, %v742
    %v1875 = vadd.f32 %v1873, 1e-05
    %v1876 = vadd.f32 %v1874, 1e-05
    %v1877 = vrsqrt.pop %v1875
    %v1878 = vrsqrt.pop %v1876
    %v1879 = vmul.f32 %v1863, %v1877
    %v1880 = vmul.f32 %v1864, %v1878
    %v1882 = vlaneseq
    %v1883 = vshrl.u32 %v1882, 7
    %v1884 = vsub.s32 0, %v1883
    %v1885 = vrot.slane %v1852, %v1884
    %v1887 = vmul.f32 %v1879, %v1885
    %v1888 = vmul.f32 %v1880, %v1885
    %v1890 = vlaneseq
    %v1891 = vshrl.u32 %v1890, 7
    %v1892 = vsub.s32 0, %v1891
    %v1893 = vrot.slane %v1854, %v1892
    %v1895 = vadd.f32 %v1887, %v1893
    %v1896 = vadd.f32 %v1888, %v1893
    %s1897 = scalar_lea.vmem %s19, 64
    %v1898 = vld [vmem:[%s1897] sm:$0x7f]
    %s1899 = scalar_lea.vmem %s21, 8
    %v1900 = vld [vmem:[%s1899] sm:$0x1]
    %v1902 = vlaneseq
    %v1903 = vshrl.u32 %v1902, 7
    %v1904 = vsub.s32 0, %v1903
    %v1905 = vrot.slane %v1900, %v1904
    %v1908 = vsel %vm147, %v1895, 0
    %v1911 = vsel %vm147, %v1896, 0
    %v1914 = vsel %vm154, %v1898, 0
    %1916 = vmatprep.subr.mxu0 0.0
    %1917 = vmatpush1.msra.mxu0 %v1914
    %1918 = vmatprep.subr.mxu0 0.0
    %1919 = vmatpush1.msra.mxu0 0.0
    %1920 = vmatprep.subr.mxu0 0.0
    %1921 = vmatpush1.msra.mxu0 0.0
    %1922 = vmatprep.subr.mxu0 0.0
    %1923 = vmatpush1.msra.mxu0 0.0
    %1924 = vmatprep.subr.mxu0 0.0
    %1925 = vmatpush1.msra.mxu0 0.0
    %1926 = vmatprep.subr.mxu0 0.0
    %1927 = vmatpush1.msra.mxu0 0.0
    %1928 = vmatprep.subr.mxu0 0.0
    %1929 = vmatpush1.msra.mxu0 0.0
    %1930 = vmatprep.subr.mxu0 0.0
    %1931 = vmatpush1.msra.mxu0 0.0
    %1932 = vmatprep.subr.mxu0 0.0
    %1933 = vmatpush1.msra.mxu0 0.0
    %1934 = vmatprep.subr.mxu0 0.0
    %1935 = vmatpush1.msra.mxu0 0.0
    %1936 = vmatprep.subr.mxu0 0.0
    %1937 = vmatpush1.msra.mxu0 0.0
    %1938 = vmatprep.subr.mxu0 0.0
    %1939 = vmatpush1.msra.mxu0 0.0
    %1940 = vmatprep.subr.mxu0 0.0
    %1941 = vmatpush1.msra.mxu0 0.0
    %1942 = vmatprep.subr.mxu0 0.0
    %1943 = vmatpush1.msra.mxu0 0.0
    %1944 = vmatprep.subr.mxu0 0.0
    %1945 = vmatpush1.msra.mxu0 0.0
    %1946 = vmatprep.subr.mxu0 0.0
    %1947 = vmatpush1.msra.mxu0 0.0
    %1948 = vmatprep.subr.mxu0 0.0
    %1949 = vmatpush1.msra.mxu0 0.0
    %1950 = vmatprep.subr.mxu0 0.0
    %1951 = vmatpush1.msra.mxu0 0.0
    %1952 = vmatprep.subr.mxu0 0.0
    %1953 = vmatpush1.msra.mxu0 0.0
    %1954 = vmatprep.subr.mxu0 0.0
    %1955 = vmatpush1.msra.mxu0 0.0
    %1956 = vmatprep.subr.mxu0 0.0
    %1957 = vmatpush1.msra.mxu0 0.0
    %1958 = vmatprep.subr.mxu0 0.0
    %1959 = vmatpush1.msra.mxu0 0.0
    %1960 = vmatprep.subr.mxu0 0.0
    %1961 = vmatpush1.msra.mxu0 0.0
    %1962 = vmatprep.subr.mxu0 0.0
    %1963 = vmatpush1.msra.mxu0 0.0
    %1964 = vmatprep.subr.mxu0 0.0
    %1965 = vmatpush1.msra.mxu0 0.0
    %1966 = vmatprep.subr.mxu0 0.0
    %1967 = vmatpush1.msra.mxu0 0.0
    %1968 = vmatprep.subr.mxu0 0.0
    %1969 = vmatpush1.msra.mxu0 0.0
    %1970 = vmatprep.subr.mxu0 0.0
    %1971 = vmatpush1.msra.mxu0 0.0
    %1972 = vmatprep.subr.mxu0 0.0
    %1973 = vmatpush1.msra.mxu0 0.0
    %1974 = vmatprep.subr.mxu0 0.0
    %1975 = vmatpush1.msra.mxu0 0.0
    %1976 = vmatprep.subr.mxu0 0.0
    %1977 = vmatpush1.msra.mxu0 0.0
    %1978 = vmatprep.subr.mxu0 0.0
    %1979 = vmatpush1.msra.mxu0 0.0
    %1980 = vmatprep.mubr.f32.mxu0 0.0
    %1981 = vmatmul.mubr.f32.gmra.mrb[0].mxu0 %v1908
    %v1982 = vpop.f32.mrb[0].mxu0
    %v1983 = vadd.f32 %v1905, %v1982
    %v1984 = vpop.f32.mrb[0].mxu0
    %1985 = vmatprep.mubr.f32.mxu0 0.0
    %1986 = vmatmul.mubr.f32.gmra.mrb[0].mxu0 %v1911
    %v1987 = vpop.f32.mrb[0].mxu0
    %v1988 = vadd.f32 %v1905, %v1987
    %v1989 = vpop.f32.mrb[0].mxu0
    %1990 = vdwg.mxu0
    %s1991 = scalar_lea.vmem %s19, 72
    %v1992 = vld [vmem:[%s1991] sm:$0x7f]
    %s1993 = scalar_lea.vmem %s21, 9
    %v1994 = vld [vmem:[%s1993] sm:$0x1]
    %v1996 = vlaneseq
    %v1997 = vshrl.u32 %v1996, 7
    %v1998 = vsub.s32 0, %v1997
    %v1999 = vrot.slane %v1994, %v1998
    %v2002 = vsel %vm154, %v1992, 0
    %2004 = vmatprep.subr.mxu0 0.0
    %2005 = vmatpush1.msra.mxu0 %v2002
    %2006 = vmatprep.subr.mxu0 0.0
    %2007 = vmatpush1.msra.mxu0 0.0
    %2008 = vmatprep.subr.mxu0 0.0
    %2009 = vmatpush1.msra.mxu0 0.0
    %2010 = vmatprep.subr.mxu0 0.0
    %2011 = vmatpush1.msra.mxu0 0.0
    %2012 = vmatprep.subr.mxu0 0.0
    %2013 = vmatpush1.msra.mxu0 0.0
    %2014 = vmatprep.subr.mxu0 0.0
    %2015 = vmatpush1.msra.mxu0 0.0
    %2016 = vmatprep.subr.mxu0 0.0
    %2017 = vmatpush1.msra.mxu0 0.0
    %2018 = vmatprep.subr.mxu0 0.0
    %2019 = vmatpush1.msra.mxu0 0.0
    %2020 = vmatprep.subr.mxu0 0.0
    %2021 = vmatpush1.msra.mxu0 0.0
    %2022 = vmatprep.subr.mxu0 0.0
    %2023 = vmatpush1.msra.mxu0 0.0
    %2024 = vmatprep.subr.mxu0 0.0
    %2025 = vmatpush1.msra.mxu0 0.0
    %2026 = vmatprep.subr.mxu0 0.0
    %2027 = vmatpush1.msra.mxu0 0.0
    %2028 = vmatprep.subr.mxu0 0.0
    %2029 = vmatpush1.msra.mxu0 0.0
    %2030 = vmatprep.subr.mxu0 0.0
    %2031 = vmatpush1.msra.mxu0 0.0
    %2032 = vmatprep.subr.mxu0 0.0
    %2033 = vmatpush1.msra.mxu0 0.0
    %2034 = vmatprep.subr.mxu0 0.0
    %2035 = vmatpush1.msra.mxu0 0.0
    %2036 = vmatprep.subr.mxu0 0.0
    %2037 = vmatpush1.msra.mxu0 0.0
    %2038 = vmatprep.subr.mxu0 0.0
    %2039 = vmatpush1.msra.mxu0 0.0
    %2040 = vmatprep.subr.mxu0 0.0
    %2041 = vmatpush1.msra.mxu0 0.0
    %2042 = vmatprep.subr.mxu0 0.0
    %2043 = vmatpush1.msra.mxu0 0.0
    %2044 = vmatprep.subr.mxu0 0.0
    %2045 = vmatpush1.msra.mxu0 0.0
    %2046 = vmatprep.subr.mxu0 0.0
    %2047 = vmatpush1.msra.mxu0 0.0
    %2048 = vmatprep.subr.mxu0 0.0
    %2049 = vmatpush1.msra.mxu0 0.0
    %2050 = vmatprep.subr.mxu0 0.0
    %2051 = vmatpush1.msra.mxu0 0.0
    %2052 = vmatprep.subr.mxu0 0.0
    %2053 = vmatpush1.msra.mxu0 0.0
    %2054 = vmatprep.subr.mxu0 0.0
    %2055 = vmatpush1.msra.mxu0 0.0
    %2056 = vmatprep.subr.mxu0 0.0
    %2057 = vmatpush1.msra.mxu0 0.0
    %2058 = vmatprep.subr.mxu0 0.0
    %2059 = vmatpush1.msra.mxu0 0.0
    %2060 = vmatprep.subr.mxu0 0.0
    %2061 = vmatpush1.msra.mxu0 0.0
    %2062 = vmatprep.subr.mxu0 0.0
    %2063 = vmatpush1.msra.mxu0 0.0
    %2064 = vmatprep.subr.mxu0 0.0
    %2065 = vmatpush1.msra.mxu0 0.0
    %2066 = vmatprep.subr.mxu0 0.0
    %2067 = vmatpush1.msra.mxu0 0.0
    %2068 = vmatprep.mubr.f32.mxu0 0.0
    %2069 = vmatmul.mubr.f32.gmra.mrb[0].mxu0 %v1908
    %v2070 = vpop.f32.mrb[0].mxu0
    %v2071 = vadd.f32 %v1999, %v2070
    %v2072 = vpop.f32.mrb[0].mxu0
    %2073 = vmatprep.mubr.f32.mxu0 0.0
    %2074 = vmatmul.mubr.f32.gmra.mrb[0].mxu0 %v1911
    %v2075 = vpop.f32.mrb[0].mxu0
    %v2076 = vadd.f32 %v1999, %v2075
    %v2077 = vpop.f32.mrb[0].mxu0
    %2078 = vdwg.mxu0
    %s2079 = scalar_lea.vmem %s19, 80
    %v2080 = vld [vmem:[%s2079] sm:$0x7f]
    %s2081 = scalar_lea.vmem %s21, 10
    %v2082 = vld [vmem:[%s2081] sm:$0x1]
    %v2084 = vlaneseq
    %v2085 = vshrl.u32 %v2084, 7
    %v2086 = vsub.s32 0, %v2085
    %v2087 = vrot.slane %v2082, %v2086
    %v2090 = vsel %vm154, %v2080, 0
    %2092 = vmatprep.subr.mxu0 0.0
    %2093 = vmatpush1.msra.mxu0 %v2090
    %2094 = vmatprep.subr.mxu0 0.0
    %2095 = vmatpush1.msra.mxu0 0.0
    %2096 = vmatprep.subr.mxu0 0.0
    %2097 = vmatpush1.msra.mxu0 0.0
    %2098 = vmatprep.subr.mxu0 0.0
    %2099 = vmatpush1.msra.mxu0 0.0
    %2100 = vmatprep.subr.mxu0 0.0
    %2101 = vmatpush1.msra.mxu0 0.0
    %2102 = vmatprep.subr.mxu0 0.0
    %2103 = vmatpush1.msra.mxu0 0.0
    %2104 = vmatprep.subr.mxu0 0.0
    %2105 = vmatpush1.msra.mxu0 0.0
    %2106 = vmatprep.subr.mxu0 0.0
    %2107 = vmatpush1.msra.mxu0 0.0
    %2108 = vmatprep.subr.mxu0 0.0
    %2109 = vmatpush1.msra.mxu0 0.0
    %2110 = vmatprep.subr.mxu0 0.0
    %2111 = vmatpush1.msra.mxu0 0.0
    %2112 = vmatprep.subr.mxu0 0.0
    %2113 = vmatpush1.msra.mxu0 0.0
    %2114 = vmatprep.subr.mxu0 0.0
    %2115 = vmatpush1.msra.mxu0 0.0
    %2116 = vmatprep.subr.mxu0 0.0
    %2117 = vmatpush1.msra.mxu0 0.0
    %2118 = vmatprep.subr.mxu0 0.0
    %2119 = vmatpush1.msra.mxu0 0.0
    %2120 = vmatprep.subr.mxu0 0.0
    %2121 = vmatpush1.msra.mxu0 0.0
    %2122 = vmatprep.subr.mxu0 0.0
    %2123 = vmatpush1.msra.mxu0 0.0
    %2124 = vmatprep.subr.mxu0 0.0
    %2125 = vmatpush1.msra.mxu0 0.0
    %2126 = vmatprep.subr.mxu0 0.0
    %2127 = vmatpush1.msra.mxu0 0.0
    %2128 = vmatprep.subr.mxu0 0.0
    %2129 = vmatpush1.msra.mxu0 0.0
    %2130 = vmatprep.subr.mxu0 0.0
    %2131 = vmatpush1.msra.mxu0 0.0
    %2132 = vmatprep.subr.mxu0 0.0
    %2133 = vmatpush1.msra.mxu0 0.0
    %2134 = vmatprep.subr.mxu0 0.0
    %2135 = vmatpush1.msra.mxu0 0.0
    %2136 = vmatprep.subr.mxu0 0.0
    %2137 = vmatpush1.msra.mxu0 0.0
    %2138 = vmatprep.subr.mxu0 0.0
    %2139 = vmatpush1.msra.mxu0 0.0
    %2140 = vmatprep.subr.mxu0 0.0
    %2141 = vmatpush1.msra.mxu0 0.0
    %2142 = vmatprep.subr.mxu0 0.0
    %2143 = vmatpush1.msra.mxu0 0.0
    %2144 = vmatprep.subr.mxu0 0.0
    %2145 = vmatpush1.msra.mxu0 0.0
    %2146 = vmatprep.subr.mxu0 0.0
    %2147 = vmatpush1.msra.mxu0 0.0
    %2148 = vmatprep.subr.mxu0 0.0
    %2149 = vmatpush1.msra.mxu0 0.0
    %2150 = vmatprep.subr.mxu0 0.0
    %2151 = vmatpush1.msra.mxu0 0.0
    %2152 = vmatprep.subr.mxu0 0.0
    %2153 = vmatpush1.msra.mxu0 0.0
    %2154 = vmatprep.subr.mxu0 0.0
    %2155 = vmatpush1.msra.mxu0 0.0
    %2156 = vmatprep.mubr.f32.mxu0 0.0
    %2157 = vmatmul.mubr.f32.gmra.mrb[0].mxu0 %v1908
    %v2158 = vpop.f32.mrb[0].mxu0
    %v2159 = vadd.f32 %v2087, %v2158
    %v2160 = vpop.f32.mrb[0].mxu0
    %2161 = vmatprep.mubr.f32.mxu0 0.0
    %2162 = vmatmul.mubr.f32.gmra.mrb[0].mxu0 %v1911
    %v2163 = vpop.f32.mrb[0].mxu0
    %v2164 = vadd.f32 %v2087, %v2163
    %v2165 = vpop.f32.mrb[0].mxu0
    %2166 = vdwg.mxu0
    %s2167 = scalar_lea.vmem %s23, 4
    %v2168 = vld [vmem:[%s2167] sm:$0x1]
    %s2169 = scalar_lea.vmem %s23, 5
    %v2170 = vld [vmem:[%s2169] sm:$0x1]
    %v2171 = vmul.f32 %v1983, 0.37796447
    %v2172 = vmul.f32 %v1988, 0.37796447
    %v2174 = vsel %vm147, %v2171, 0
    %v2177 = vsel %vm147, %v2172, 0
    %v2180 = vsel %vm147, %v2071, 0
    %v2183 = vsel %vm147, %v2076, 0
    %2185 = vmatprep.subr.mxu0 0.0
    %2186 = vmatpush1.xpose.msra.mxu0 %v2180
    %2187 = vmatprep.subr.mxu0 0.0
    %2188 = vmatpush1.xpose.msra.mxu0 %v2183
    %2189 = vmatprep.subr.mxu0 0.0
    %2190 = vmatpush1.xpose.msra.mxu0 0.0
    %2191 = vmatprep.subr.mxu0 0.0
    %2192 = vmatpush1.xpose.msra.mxu0 0.0
    %2193 = vmatprep.subr.mxu0 0.0
    %2194 = vmatpush1.xpose.msra.mxu0 0.0
    %2195 = vmatprep.subr.mxu0 0.0
    %2196 = vmatpush1.xpose.msra.mxu0 0.0
    %2197 = vmatprep.subr.mxu0 0.0
    %2198 = vmatpush1.xpose.msra.mxu0 0.0
    %2199 = vmatprep.subr.mxu0 0.0
    %2200 = vmatpush1.xpose.msra.mxu0 0.0
    %2201 = vmatprep.subr.mxu0 0.0
    %2202 = vmatpush1.xpose.msra.mxu0 0.0
    %2203 = vmatprep.subr.mxu0 0.0
    %2204 = vmatpush1.xpose.msra.mxu0 0.0
    %2205 = vmatprep.subr.mxu0 0.0
    %2206 = vmatpush1.xpose.msra.mxu0 0.0
    %2207 = vmatprep.subr.mxu0 0.0
    %2208 = vmatpush1.xpose.msra.mxu0 0.0
    %2209 = vmatprep.subr.mxu0 0.0
    %2210 = vmatpush1.xpose.msra.mxu0 0.0
    %2211 = vmatprep.subr.mxu0 0.0
    %2212 = vmatpush1.xpose.msra.mxu0 0.0
    %2213 = vmatprep.subr.mxu0 0.0
    %2214 = vmatpush1.xpose.msra.mxu0 0.0
    %2215 = vmatprep.subr.mxu0 0.0
    %2216 = vmatpush1.xpose.msra.mxu0 0.0
    %2217 = vmatprep.subr.mxu0 0.0
    %2218 = vmatpush1.xpose.msra.mxu0 0.0
    %2219 = vmatprep.subr.mxu0 0.0
    %2220 = vmatpush1.xpose.msra.mxu0 0.0
    %2221 = vmatprep.subr.mxu0 0.0
    %2222 = vmatpush1.xpose.msra.mxu0 0.0
    %2223 = vmatprep.subr.mxu0 0.0
    %2224 = vmatpush1.xpose.msra.mxu0 0.0
    %2225 = vmatprep.subr.mxu0 0.0
    %2226 = vmatpush1.xpose.msra.mxu0 0.0
    %2227 = vmatprep.subr.mxu0 0.0
    %2228 = vmatpush1.xpose.msra.mxu0 0.0
    %2229 = vmatprep.subr.mxu0 0.0
    %2230 = vmatpush1.xpose.msra.mxu0 0.0
    %2231 = vmatprep.subr.mxu0 0.0
    %2232 = vmatpush1.xpose.msra.mxu0 0.0
    %2233 = vmatprep.subr.mxu0 0.0
    %2234 = vmatpush1.xpose.msra.mxu0 0.0
    %2235 = vmatprep.subr.mxu0 0.0
    %2236 = vmatpush1.xpose.msra.mxu0 0.0
    %2237 = vmatprep.subr.mxu0 0.0
    %2238 = vmatpush1.xpose.msra.mxu0 0.0
    %2239 = vmatprep.subr.mxu0 0.0
    %2240 = vmatpush1.xpose.msra.mxu0 0.0
    %2241 = vmatprep.subr.mxu0 0.0
    %2242 = vmatpush1.xpose.msra.mxu0 0.0
    %2243 = vmatprep.subr.mxu0 0.0
    %2244 = vmatpush1.xpose.msra.mxu0 0.0
    %2245 = vmatprep.subr.mxu0 0.0
    %2246 = vmatpush1.xpose.msra.mxu0 0.0
    %2247 = vmatprep.subr.mxu0 0.0
    %2248 = vmatpush1.xpose.msra.mxu0 0.0
    %2249 = vmatprep.mubr.f32.mxu0 0.0
    %2250 = vmatmul.mubr.f32.gmra.mrb[0].mxu0 %v2174
    %v2251 = vpop.f32.mrb[0].mxu0
    %v2252 = vadd.f32 %v137, %v2251
    %v2253 = vpop.f32.mrb[0].mxu0
    %2254 = vmatprep.mubr.f32.mxu0 0.0
    %2255 = vmatmul.mubr.f32.gmra.mrb[0].mxu0 %v2177
    %v2256 = vpop.f32.mrb[0].mxu0
    %v2257 = vadd.f32 %v138, %v2256
    %v2258 = vpop.f32.mrb[0].mxu0
    %2259 = vdwg.mxu0
    %v2261 = vlaneseq
    %v2262 = vshrl.u32 %v2261, 7
    %v2263 = vsub.s32 0, %v2262
    %v2264 = vrot.slane %v2168, %v2263
    %v2266 = vmul.f32 %v2171, %v2264
    %v2267 = vmul.f32 %v2172, %v2264
    %v2268 = vsel %vm147, %v2266, 0.0
    %2269 = vadd.xlane.f32.xlu0 %v2268
    %v2270 = vpop.xlane.xlu0 %2269
    %v2271 = vsel %vm147, %v2267, 0.0
    %2272 = vadd.xlane.f32.xlu0 %v2271
    %v2273 = vpop.xlane.xlu0 %2272
    %v2274 = vsel %vm515, %v2252, -inf
    %2275 = vmax.xlane.f32.xlu0 %v2274
    %v2276 = vpop.xlane.xlu0 %2275
    %v2277 = vsel %vm515, %v2257, -inf
    %2278 = vmax.xlane.f32.xlu0 %v2277
    %v2279 = vpop.xlane.xlu0 %2278
    %v2280 = vmax.f32 %v2276, %v2270
    %v2281 = vmax.f32 %v2279, %v2273
    %v2282 = vsub.f32 %v2252, %v2280
    %v2283 = vsub.f32 %v2257, %v2281
    %v2284 = vmul.f32 %v2282, 1.442695
    %v2285 = vpow.pop %v2284
    %v2286 = vmul.f32 %v2283, 1.442695
    %v2287 = vpow.pop %v2286
    %v2288 = vsub.f32 %v2270, %v2280
    %v2289 = vsub.f32 %v2273, %v2281
    %v2290 = vmul.f32 %v2288, 1.442695
    %v2291 = vpow.pop %v2290
    %v2292 = vmul.f32 %v2289, 1.442695
    %v2293 = vpow.pop %v2292
    %v2294 = vsel %vm515, %v2285, 0.0
    %2295 = vadd.xlane.f32.xlu0 %v2294
    %v2296 = vpop.xlane.xlu0 %2295
    %v2297 = vsel %vm515, %v2287, 0.0
    %2298 = vadd.xlane.f32.xlu0 %v2297
    %v2299 = vpop.xlane.xlu0 %2298
    %v2300 = vadd.f32 %v2296, %v2291
    %v2301 = vadd.f32 %v2299, %v2293
    %v2303 = vlaneseq
    %v2304 = vshrl.u32 %v2303, 7
    %v2305 = vsub.s32 0, %v2304
    %v2306 = vrot.slane %v2170, %v2305
    %v2308 = vmul.f32 %v2291, %v2306
    %v2309 = vmul.f32 %v2293, %v2306
    %v2311 = vsel %vm515, %v2285, 0
    %v2314 = vsel %vm515, %v2287, 0
    %2316 = vmatprep.subr.mxu0 0.0
    %2317 = vmatpush1.msra.mxu0 %v2159
    %2318 = vmatprep.subr.mxu0 0.0
    %2319 = vmatpush1.msra.mxu0 %v2164
    %2320 = vmatprep.subr.mxu0 0.0
    %2321 = vmatpush1.msra.mxu0 0.0
    %2322 = vmatprep.subr.mxu0 0.0
    %2323 = vmatpush1.msra.mxu0 0.0
    %2324 = vmatprep.subr.mxu0 0.0
    %2325 = vmatpush1.msra.mxu0 0.0
    %2326 = vmatprep.subr.mxu0 0.0
    %2327 = vmatpush1.msra.mxu0 0.0
    %2328 = vmatprep.subr.mxu0 0.0
    %2329 = vmatpush1.msra.mxu0 0.0
    %2330 = vmatprep.subr.mxu0 0.0
    %2331 = vmatpush1.msra.mxu0 0.0
    %2332 = vmatprep.subr.mxu0 0.0
    %2333 = vmatpush1.msra.mxu0 0.0
    %2334 = vmatprep.subr.mxu0 0.0
    %2335 = vmatpush1.msra.mxu0 0.0
    %2336 = vmatprep.subr.mxu0 0.0
    %2337 = vmatpush1.msra.mxu0 0.0
    %2338 = vmatprep.subr.mxu0 0.0
    %2339 = vmatpush1.msra.mxu0 0.0
    %2340 = vmatprep.subr.mxu0 0.0
    %2341 = vmatpush1.msra.mxu0 0.0
    %2342 = vmatprep.subr.mxu0 0.0
    %2343 = vmatpush1.msra.mxu0 0.0
    %2344 = vmatprep.subr.mxu0 0.0
    %2345 = vmatpush1.msra.mxu0 0.0
    %2346 = vmatprep.subr.mxu0 0.0
    %2347 = vmatpush1.msra.mxu0 0.0
    %2348 = vmatprep.subr.mxu0 0.0
    %2349 = vmatpush1.msra.mxu0 0.0
    %2350 = vmatprep.subr.mxu0 0.0
    %2351 = vmatpush1.msra.mxu0 0.0
    %2352 = vmatprep.subr.mxu0 0.0
    %2353 = vmatpush1.msra.mxu0 0.0
    %2354 = vmatprep.subr.mxu0 0.0
    %2355 = vmatpush1.msra.mxu0 0.0
    %2356 = vmatprep.subr.mxu0 0.0
    %2357 = vmatpush1.msra.mxu0 0.0
    %2358 = vmatprep.subr.mxu0 0.0
    %2359 = vmatpush1.msra.mxu0 0.0
    %2360 = vmatprep.subr.mxu0 0.0
    %2361 = vmatpush1.msra.mxu0 0.0
    %2362 = vmatprep.subr.mxu0 0.0
    %2363 = vmatpush1.msra.mxu0 0.0
    %2364 = vmatprep.subr.mxu0 0.0
    %2365 = vmatpush1.msra.mxu0 0.0
    %2366 = vmatprep.subr.mxu0 0.0
    %2367 = vmatpush1.msra.mxu0 0.0
    %2368 = vmatprep.subr.mxu0 0.0
    %2369 = vmatpush1.msra.mxu0 0.0
    %2370 = vmatprep.subr.mxu0 0.0
    %2371 = vmatpush1.msra.mxu0 0.0
    %2372 = vmatprep.subr.mxu0 0.0
    %2373 = vmatpush1.msra.mxu0 0.0
    %2374 = vmatprep.subr.mxu0 0.0
    %2375 = vmatpush1.msra.mxu0 0.0
    %2376 = vmatprep.subr.mxu0 0.0
    %2377 = vmatpush1.msra.mxu0 0.0
    %2378 = vmatprep.subr.mxu0 0.0
    %2379 = vmatpush1.msra.mxu0 0.0
    %2380 = vmatprep.mubr.f32.mxu0 0.0
    %2381 = vmatmul.mubr.f32.gmra.mrb[0].mxu0 %v2311
    %v2382 = vpop.f32.mrb[0].mxu0
    %v2383 = vadd.f32 %v2308, %v2382
    %v2384 = vpop.f32.mrb[0].mxu0
    %2385 = vmatprep.mubr.f32.mxu0 0.0
    %2386 = vmatmul.mubr.f32.gmra.mrb[0].mxu0 %v2314
    %v2387 = vpop.f32.mrb[0].mxu0
    %v2388 = vadd.f32 %v2309, %v2387
    %v2389 = vpop.f32.mrb[0].mxu0
    %2390 = vdwg.mxu0
    %v2391 = vrcp.pop %v2300
    %v2392 = vmul.f32 %v2383, %v2391
    %v2393 = vrcp.pop %v2301
    %v2394 = vmul.f32 %v2388, %v2393
    %s2395 = scalar_lea.vmem %s19, 88
    %v2396 = vld [vmem:[%s2395] sm:$0x7f]
    %s2397 = scalar_lea.vmem %s21, 11
    %v2398 = vld [vmem:[%s2397] sm:$0x1]
    %v2400 = vlaneseq
    %v2401 = vshrl.u32 %v2400, 7
    %v2402 = vsub.s32 0, %v2401
    %v2403 = vrot.slane %v2398, %v2402
    %v2406 = vsel %vm147, %v2392, 0
    %v2409 = vsel %vm147, %v2394, 0
    %v2412 = vsel %vm154, %v2396, 0
    %2414 = vmatprep.subr.mxu0 0.0
    %2415 = vmatpush1.msra.mxu0 %v2412
    %2416 = vmatprep.subr.mxu0 0.0
    %2417 = vmatpush1.msra.mxu0 0.0
    %2418 = vmatprep.subr.mxu0 0.0
    %2419 = vmatpush1.msra.mxu0 0.0
    %2420 = vmatprep.subr.mxu0 0.0
    %2421 = vmatpush1.msra.mxu0 0.0
    %2422 = vmatprep.subr.mxu0 0.0
    %2423 = vmatpush1.msra.mxu0 0.0
    %2424 = vmatprep.subr.mxu0 0.0
    %2425 = vmatpush1.msra.mxu0 0.0
    %2426 = vmatprep.subr.mxu0 0.0
    %2427 = vmatpush1.msra.mxu0 0.0
    %2428 = vmatprep.subr.mxu0 0.0
    %2429 = vmatpush1.msra.mxu0 0.0
    %2430 = vmatprep.subr.mxu0 0.0
    %2431 = vmatpush1.msra.mxu0 0.0
    %2432 = vmatprep.subr.mxu0 0.0
    %2433 = vmatpush1.msra.mxu0 0.0
    %2434 = vmatprep.subr.mxu0 0.0
    %2435 = vmatpush1.msra.mxu0 0.0
    %2436 = vmatprep.subr.mxu0 0.0
    %2437 = vmatpush1.msra.mxu0 0.0
    %2438 = vmatprep.subr.mxu0 0.0
    %2439 = vmatpush1.msra.mxu0 0.0
    %2440 = vmatprep.subr.mxu0 0.0
    %2441 = vmatpush1.msra.mxu0 0.0
    %2442 = vmatprep.subr.mxu0 0.0
    %2443 = vmatpush1.msra.mxu0 0.0
    %2444 = vmatprep.subr.mxu0 0.0
    %2445 = vmatpush1.msra.mxu0 0.0
    %2446 = vmatprep.subr.mxu0 0.0
    %2447 = vmatpush1.msra.mxu0 0.0
    %2448 = vmatprep.subr.mxu0 0.0
    %2449 = vmatpush1.msra.mxu0 0.0
    %2450 = vmatprep.subr.mxu0 0.0
    %2451 = vmatpush1.msra.mxu0 0.0
    %2452 = vmatprep.subr.mxu0 0.0
    %2453 = vmatpush1.msra.mxu0 0.0
    %2454 = vmatprep.subr.mxu0 0.0
    %2455 = vmatpush1.msra.mxu0 0.0
    %2456 = vmatprep.subr.mxu0 0.0
    %2457 = vmatpush1.msra.mxu0 0.0
    %2458 = vmatprep.subr.mxu0 0.0
    %2459 = vmatpush1.msra.mxu0 0.0
    %2460 = vmatprep.subr.mxu0 0.0
    %2461 = vmatpush1.msra.mxu0 0.0
    %2462 = vmatprep.subr.mxu0 0.0
    %2463 = vmatpush1.msra.mxu0 0.0
    %2464 = vmatprep.subr.mxu0 0.0
    %2465 = vmatpush1.msra.mxu0 0.0
    %2466 = vmatprep.subr.mxu0 0.0
    %2467 = vmatpush1.msra.mxu0 0.0
    %2468 = vmatprep.subr.mxu0 0.0
    %2469 = vmatpush1.msra.mxu0 0.0
    %2470 = vmatprep.subr.mxu0 0.0
    %2471 = vmatpush1.msra.mxu0 0.0
    %2472 = vmatprep.subr.mxu0 0.0
    %2473 = vmatpush1.msra.mxu0 0.0
    %2474 = vmatprep.subr.mxu0 0.0
    %2475 = vmatpush1.msra.mxu0 0.0
    %2476 = vmatprep.subr.mxu0 0.0
    %2477 = vmatpush1.msra.mxu0 0.0
    %2478 = vmatprep.mubr.f32.mxu0 0.0
    %2479 = vmatmul.mubr.f32.gmra.mrb[0].mxu0 %v2406
    %v2480 = vpop.f32.mrb[0].mxu0
    %v2481 = vadd.f32 %v2403, %v2480
    %v2482 = vpop.f32.mrb[0].mxu0
    %2483 = vmatprep.mubr.f32.mxu0 0.0
    %2484 = vmatmul.mubr.f32.gmra.mrb[0].mxu0 %v2409
    %v2485 = vpop.f32.mrb[0].mxu0
    %v2486 = vadd.f32 %v2403, %v2485
    %v2487 = vpop.f32.mrb[0].mxu0
    %2488 = vdwg.mxu0
    %v2489 = vadd.f32 %v2481, %v1895
    %v2490 = vadd.f32 %v2486, %v1896
    %s2491 = scalar_lea.vmem %s33, 8
    %v2492 = vld [vmem:[%s2491] sm:$0x1]
    %s2493 = scalar_lea.vmem %s33, 9
    %v2494 = vld [vmem:[%s2493] sm:$0x1]
    %v2495 = vsel %vm147, %v2489, 0.0
    %2496 = vadd.xlane.f32.xlu0 %v2495
    %v2497 = vpop.xlane.xlu0 %2496
    %v2498 = vsel %vm147, %v2490, 0.0
    %2499 = vadd.xlane.f32.xlu0 %v2498
    %v2500 = vpop.xlane.xlu0 %2499
    %v2501 = vmul.f32 %v2497, %v742
    %v2502 = vmul.f32 %v2500, %v742
    %v2503 = vsub.f32 %v2489, %v2501
    %v2504 = vsub.f32 %v2490, %v2502
    %v2505 = vmul.f32 %v2503, %v2503
    %v2506 = vmul.f32 %v2504, %v2504
    %v2507 = vsel %vm147, %v2505, 0.0
    %2508 = vadd.xlane.f32.xlu0 %v2507
    %v2509 = vpop.xlane.xlu0 %2508
    %v2510 = vsel %vm147, %v2506, 0.0
    %2511 = vadd.xlane.f32.xlu0 %v2510
    %v2512 = vpop.xlane.xlu0 %2511
    %v2513 = vmul.f32 %v2509, %v742
    %v2514 = vmul.f32 %v2512, %v742
    %v2515 = vadd.f32 %v2513, 1e-05
    %v2516 = vadd.f32 %v2514, 1e-05
    %v2517 = vrsqrt.pop %v2515
    %v2518 = vrsqrt.pop %v2516
    %v2519 = vmul.f32 %v2503, %v2517
    %v2520 = vmul.f32 %v2504, %v2518
    %v2522 = vlaneseq
    %v2523 = vshrl.u32 %v2522, 7
    %v2524 = vsub.s32 0, %v2523
    %v2525 = vrot.slane %v2492, %v2524
    %v2527 = vmul.f32 %v2519, %v2525
    %v2528 = vmul.f32 %v2520, %v2525
    %v2530 = vlaneseq
    %v2531 = vshrl.u32 %v2530, 7
    %v2532 = vsub.s32 0, %v2531
    %v2533 = vrot.slane %v2494, %v2532
    %v2535 = vadd.f32 %v2527, %v2533
    %v2536 = vadd.f32 %v2528, %v2533
    %s2537 = scalar_lea.vmem %s25, 16
    %v2538 = vld [vmem:[%s2537] sm:$0x7f]
    %s2539 = scalar_lea.vmem %s27, 2
    %v2540 = vld [vmem:[%s2539] sm:$0x1]
    %v2542 = vlaneseq
    %v2543 = vshrl.u32 %v2542, 7
    %v2544 = vsub.s32 0, %v2543
    %v2545 = vrot.slane %v2540, %v2544
    %v2548 = vsel %vm147, %v2535, 0
    %v2551 = vsel %vm147, %v2536, 0
    %v2554 = vsel %vm154, %v2538, 0
    %2556 = vmatprep.subr.mxu0 0.0
    %2557 = vmatpush1.msra.mxu0 %v2554
    %2558 = vmatprep.subr.mxu0 0.0
    %2559 = vmatpush1.msra.mxu0 0.0
    %2560 = vmatprep.subr.mxu0 0.0
    %2561 = vmatpush1.msra.mxu0 0.0
    %2562 = vmatprep.subr.mxu0 0.0
    %2563 = vmatpush1.msra.mxu0 0.0
    %2564 = vmatprep.subr.mxu0 0.0
    %2565 = vmatpush1.msra.mxu0 0.0
    %2566 = vmatprep.subr.mxu0 0.0
    %2567 = vmatpush1.msra.mxu0 0.0
    %2568 = vmatprep.subr.mxu0 0.0
    %2569 = vmatpush1.msra.mxu0 0.0
    %2570 = vmatprep.subr.mxu0 0.0
    %2571 = vmatpush1.msra.mxu0 0.0
    %2572 = vmatprep.subr.mxu0 0.0
    %2573 = vmatpush1.msra.mxu0 0.0
    %2574 = vmatprep.subr.mxu0 0.0
    %2575 = vmatpush1.msra.mxu0 0.0
    %2576 = vmatprep.subr.mxu0 0.0
    %2577 = vmatpush1.msra.mxu0 0.0
    %2578 = vmatprep.subr.mxu0 0.0
    %2579 = vmatpush1.msra.mxu0 0.0
    %2580 = vmatprep.subr.mxu0 0.0
    %2581 = vmatpush1.msra.mxu0 0.0
    %2582 = vmatprep.subr.mxu0 0.0
    %2583 = vmatpush1.msra.mxu0 0.0
    %2584 = vmatprep.subr.mxu0 0.0
    %2585 = vmatpush1.msra.mxu0 0.0
    %2586 = vmatprep.subr.mxu0 0.0
    %2587 = vmatpush1.msra.mxu0 0.0
    %2588 = vmatprep.subr.mxu0 0.0
    %2589 = vmatpush1.msra.mxu0 0.0
    %2590 = vmatprep.subr.mxu0 0.0
    %2591 = vmatpush1.msra.mxu0 0.0
    %2592 = vmatprep.subr.mxu0 0.0
    %2593 = vmatpush1.msra.mxu0 0.0
    %2594 = vmatprep.subr.mxu0 0.0
    %2595 = vmatpush1.msra.mxu0 0.0
    %2596 = vmatprep.subr.mxu0 0.0
    %2597 = vmatpush1.msra.mxu0 0.0
    %2598 = vmatprep.subr.mxu0 0.0
    %2599 = vmatpush1.msra.mxu0 0.0
    %2600 = vmatprep.subr.mxu0 0.0
    %2601 = vmatpush1.msra.mxu0 0.0
    %2602 = vmatprep.subr.mxu0 0.0
    %2603 = vmatpush1.msra.mxu0 0.0
    %2604 = vmatprep.subr.mxu0 0.0
    %2605 = vmatpush1.msra.mxu0 0.0
    %2606 = vmatprep.subr.mxu0 0.0
    %2607 = vmatpush1.msra.mxu0 0.0
    %2608 = vmatprep.subr.mxu0 0.0
    %2609 = vmatpush1.msra.mxu0 0.0
    %2610 = vmatprep.subr.mxu0 0.0
    %2611 = vmatpush1.msra.mxu0 0.0
    %2612 = vmatprep.subr.mxu0 0.0
    %2613 = vmatpush1.msra.mxu0 0.0
    %2614 = vmatprep.subr.mxu0 0.0
    %2615 = vmatpush1.msra.mxu0 0.0
    %2616 = vmatprep.subr.mxu0 0.0
    %2617 = vmatpush1.msra.mxu0 0.0
    %2618 = vmatprep.subr.mxu0 0.0
    %2619 = vmatpush1.msra.mxu0 0.0
    %2620 = vmatprep.mubr.f32.mxu0 0.0
    %2621 = vmatmul.mubr.f32.gmra.mrb[0].mxu0 %v2548
    %v2622 = vpop.f32.mrb[0].mxu0
    %v2623 = vadd.f32 %v2545, %v2622
    %v2624 = vpop.f32.mrb[0].mxu0
    %2625 = vmatprep.mubr.f32.mxu0 0.0
    %2626 = vmatmul.mubr.f32.gmra.mrb[0].mxu0 %v2551
    %v2627 = vpop.f32.mrb[0].mxu0
    %v2628 = vadd.f32 %v2545, %v2627
    %v2629 = vpop.f32.mrb[0].mxu0
    %2630 = vdwg.mxu0
    %v2631 = vmax.f32 %v2623, 0.0
    %v2632 = vmax.f32 %v2628, 0.0
    %s2633 = scalar_lea.vmem %s29, 8
    %v2634 = vld [vmem:[%s2633] sm:$0x7]
    %s2635 = scalar_lea.vmem %s31, 2
    %v2636 = vld [vmem:[%s2635] sm:$0x1]
    %v2638 = vlaneseq
    %v2639 = vshrl.u32 %v2638, 7
    %v2640 = vsub.s32 0, %v2639
    %v2641 = vrot.slane %v2636, %v2640
    %v2644 = vsel %vm881, %v2631, 0
    %v2647 = vsel %vm881, %v2632, 0
    %v2650 = vsel %vm888, %v2634, 0
    %2652 = vmatprep.subr.mxu0 0.0
    %2653 = vmatpush1.msra.mxu0 %v2650
    %2654 = vmatprep.subr.mxu0 0.0
    %2655 = vmatpush1.msra.mxu0 0.0
    %2656 = vmatprep.subr.mxu0 0.0
    %2657 = vmatpush1.msra.mxu0 0.0
    %2658 = vmatprep.subr.mxu0 0.0
    %2659 = vmatpush1.msra.mxu0 0.0
    %2660 = vmatprep.subr.mxu0 0.0
    %2661 = vmatpush1.msra.mxu0 0.0
    %2662 = vmatprep.subr.mxu0 0.0
    %2663 = vmatpush1.msra.mxu0 0.0
    %2664 = vmatprep.subr.mxu0 0.0
    %2665 = vmatpush1.msra.mxu0 0.0
    %2666 = vmatprep.subr.mxu0 0.0
    %2667 = vmatpush1.msra.mxu0 0.0
    %2668 = vmatprep.subr.mxu0 0.0
    %2669 = vmatpush1.msra.mxu0 0.0
    %2670 = vmatprep.subr.mxu0 0.0
    %2671 = vmatpush1.msra.mxu0 0.0
    %2672 = vmatprep.subr.mxu0 0.0
    %2673 = vmatpush1.msra.mxu0 0.0
    %2674 = vmatprep.subr.mxu0 0.0
    %2675 = vmatpush1.msra.mxu0 0.0
    %2676 = vmatprep.subr.mxu0 0.0
    %2677 = vmatpush1.msra.mxu0 0.0
    %2678 = vmatprep.subr.mxu0 0.0
    %2679 = vmatpush1.msra.mxu0 0.0
    %2680 = vmatprep.subr.mxu0 0.0
    %2681 = vmatpush1.msra.mxu0 0.0
    %2682 = vmatprep.subr.mxu0 0.0
    %2683 = vmatpush1.msra.mxu0 0.0
    %2684 = vmatprep.subr.mxu0 0.0
    %2685 = vmatpush1.msra.mxu0 0.0
    %2686 = vmatprep.subr.mxu0 0.0
    %2687 = vmatpush1.msra.mxu0 0.0
    %2688 = vmatprep.subr.mxu0 0.0
    %2689 = vmatpush1.msra.mxu0 0.0
    %2690 = vmatprep.subr.mxu0 0.0
    %2691 = vmatpush1.msra.mxu0 0.0
    %2692 = vmatprep.subr.mxu0 0.0
    %2693 = vmatpush1.msra.mxu0 0.0
    %2694 = vmatprep.subr.mxu0 0.0
    %2695 = vmatpush1.msra.mxu0 0.0
    %2696 = vmatprep.subr.mxu0 0.0
    %2697 = vmatpush1.msra.mxu0 0.0
    %2698 = vmatprep.subr.mxu0 0.0
    %2699 = vmatpush1.msra.mxu0 0.0
    %2700 = vmatprep.subr.mxu0 0.0
    %2701 = vmatpush1.msra.mxu0 0.0
    %2702 = vmatprep.subr.mxu0 0.0
    %2703 = vmatpush1.msra.mxu0 0.0
    %2704 = vmatprep.subr.mxu0 0.0
    %2705 = vmatpush1.msra.mxu0 0.0
    %2706 = vmatprep.subr.mxu0 0.0
    %2707 = vmatpush1.msra.mxu0 0.0
    %2708 = vmatprep.subr.mxu0 0.0
    %2709 = vmatpush1.msra.mxu0 0.0
    %2710 = vmatprep.subr.mxu0 0.0
    %2711 = vmatpush1.msra.mxu0 0.0
    %2712 = vmatprep.subr.mxu0 0.0
    %2713 = vmatpush1.msra.mxu0 0.0
    %2714 = vmatprep.subr.mxu0 0.0
    %2715 = vmatpush1.msra.mxu0 0.0
    %2716 = vmatprep.mubr.f32.mxu0 0.0
    %2717 = vmatmul.mubr.f32.gmra.mrb[0].mxu0 %v2644
    %v2718 = vpop.f32.mrb[0].mxu0
    %v2719 = vadd.f32 %v2641, %v2718
    %v2720 = vpop.f32.mrb[0].mxu0
    %2721 = vmatprep.mubr.f32.mxu0 0.0
    %2722 = vmatmul.mubr.f32.gmra.mrb[0].mxu0 %v2647
    %v2723 = vpop.f32.mrb[0].mxu0
    %v2724 = vadd.f32 %v2641, %v2723
    %v2725 = vpop.f32.mrb[0].mxu0
    %2726 = vdwg.mxu0
    %v2727 = vmax.f32 %v2719, 0.0
    %v2728 = vmax.f32 %v2724, 0.0
    %v2729 = vadd.f32 %v2727, %v2535
    %v2730 = vadd.f32 %v2728, %v2536
    %s2731 = scalar_lea.vmem %s33, 10
    %v2732 = vld [vmem:[%s2731] sm:$0x1]
    %s2733 = scalar_lea.vmem %s33, 11
    %v2734 = vld [vmem:[%s2733] sm:$0x1]
    %v2735 = vsel %vm147, %v2729, 0.0
    %2736 = vadd.xlane.f32.xlu0 %v2735
    %v2737 = vpop.xlane.xlu0 %2736
    %v2738 = vsel %vm147, %v2730, 0.0
    %2739 = vadd.xlane.f32.xlu0 %v2738
    %v2740 = vpop.xlane.xlu0 %2739
    %v2741 = vmul.f32 %v2737, %v742
    %v2742 = vmul.f32 %v2740, %v742
    %v2743 = vsub.f32 %v2729, %v2741
    %v2744 = vsub.f32 %v2730, %v2742
    %v2745 = vmul.f32 %v2743, %v2743
    %v2746 = vmul.f32 %v2744, %v2744
    %v2747 = vsel %vm147, %v2745, 0.0
    %2748 = vadd.xlane.f32.xlu0 %v2747
    %v2749 = vpop.xlane.xlu0 %2748
    %v2750 = vsel %vm147, %v2746, 0.0
    %2751 = vadd.xlane.f32.xlu0 %v2750
    %v2752 = vpop.xlane.xlu0 %2751
    %v2753 = vmul.f32 %v2749, %v742
    %v2754 = vmul.f32 %v2752, %v742
    %v2755 = vadd.f32 %v2753, 1e-05
    %v2756 = vadd.f32 %v2754, 1e-05
    %v2757 = vrsqrt.pop %v2755
    %v2758 = vrsqrt.pop %v2756
    %v2759 = vmul.f32 %v2743, %v2757
    %v2760 = vmul.f32 %v2744, %v2758
    %v2762 = vlaneseq
    %v2763 = vshrl.u32 %v2762, 7
    %v2764 = vsub.s32 0, %v2763
    %v2765 = vrot.slane %v2732, %v2764
    %v2767 = vmul.f32 %v2759, %v2765
    %v2768 = vmul.f32 %v2760, %v2765
    %v2770 = vlaneseq
    %v2771 = vshrl.u32 %v2770, 7
    %v2772 = vsub.s32 0, %v2771
    %v2773 = vrot.slane %v2734, %v2772
    %v2775 = vadd.f32 %v2767, %v2773
    %v2776 = vadd.f32 %v2768, %v2773
    %v2777 = vld [vmem:[%s35] sm:$0x7f]
    %v2778 = vld [vmem:[%s37] sm:$0x1]
    %v2780 = vlaneseq
    %v2781 = vshrl.u32 %v2780, 7
    %v2782 = vsub.s32 0, %v2781
    %v2783 = vrot.slane %v2778, %v2782
    %v2786 = vsel %vm147, %v2775, 0
    %v2789 = vsel %vm147, %v2776, 0
    %v2792 = vsel %vm154, %v2777, 0
    %2794 = vmatprep.subr.mxu0 0.0
    %2795 = vmatpush1.msra.mxu0 %v2792
    %2796 = vmatprep.subr.mxu0 0.0
    %2797 = vmatpush1.msra.mxu0 0.0
    %2798 = vmatprep.subr.mxu0 0.0
    %2799 = vmatpush1.msra.mxu0 0.0
    %2800 = vmatprep.subr.mxu0 0.0
    %2801 = vmatpush1.msra.mxu0 0.0
    %2802 = vmatprep.subr.mxu0 0.0
    %2803 = vmatpush1.msra.mxu0 0.0
    %2804 = vmatprep.subr.mxu0 0.0
    %2805 = vmatpush1.msra.mxu0 0.0
    %2806 = vmatprep.subr.mxu0 0.0
    %2807 = vmatpush1.msra.mxu0 0.0
    %2808 = vmatprep.subr.mxu0 0.0
    %2809 = vmatpush1.msra.mxu0 0.0
    %2810 = vmatprep.subr.mxu0 0.0
    %2811 = vmatpush1.msra.mxu0 0.0
    %2812 = vmatprep.subr.mxu0 0.0
    %2813 = vmatpush1.msra.mxu0 0.0
    %2814 = vmatprep.subr.mxu0 0.0
    %2815 = vmatpush1.msra.mxu0 0.0
    %2816 = vmatprep.subr.mxu0 0.0
    %2817 = vmatpush1.msra.mxu0 0.0
    %2818 = vmatprep.subr.mxu0 0.0
    %2819 = vmatpush1.msra.mxu0 0.0
    %2820 = vmatprep.subr.mxu0 0.0
    %2821 = vmatpush1.msra.mxu0 0.0
    %2822 = vmatprep.subr.mxu0 0.0
    %2823 = vmatpush1.msra.mxu0 0.0
    %2824 = vmatprep.subr.mxu0 0.0
    %2825 = vmatpush1.msra.mxu0 0.0
    %2826 = vmatprep.subr.mxu0 0.0
    %2827 = vmatpush1.msra.mxu0 0.0
    %2828 = vmatprep.subr.mxu0 0.0
    %2829 = vmatpush1.msra.mxu0 0.0
    %2830 = vmatprep.subr.mxu0 0.0
    %2831 = vmatpush1.msra.mxu0 0.0
    %2832 = vmatprep.subr.mxu0 0.0
    %2833 = vmatpush1.msra.mxu0 0.0
    %2834 = vmatprep.subr.mxu0 0.0
    %2835 = vmatpush1.msra.mxu0 0.0
    %2836 = vmatprep.subr.mxu0 0.0
    %2837 = vmatpush1.msra.mxu0 0.0
    %2838 = vmatprep.subr.mxu0 0.0
    %2839 = vmatpush1.msra.mxu0 0.0
    %2840 = vmatprep.subr.mxu0 0.0
    %2841 = vmatpush1.msra.mxu0 0.0
    %2842 = vmatprep.subr.mxu0 0.0
    %2843 = vmatpush1.msra.mxu0 0.0
    %2844 = vmatprep.subr.mxu0 0.0
    %2845 = vmatpush1.msra.mxu0 0.0
    %2846 = vmatprep.subr.mxu0 0.0
    %2847 = vmatpush1.msra.mxu0 0.0
    %2848 = vmatprep.subr.mxu0 0.0
    %2849 = vmatpush1.msra.mxu0 0.0
    %2850 = vmatprep.subr.mxu0 0.0
    %2851 = vmatpush1.msra.mxu0 0.0
    %2852 = vmatprep.subr.mxu0 0.0
    %2853 = vmatpush1.msra.mxu0 0.0
    %2854 = vmatprep.subr.mxu0 0.0
    %2855 = vmatpush1.msra.mxu0 0.0
    %2856 = vmatprep.subr.mxu0 0.0
    %2857 = vmatpush1.msra.mxu0 0.0
    %2858 = vmatprep.mubr.f32.mxu0 0.0
    %2859 = vmatmul.mubr.f32.gmra.mrb[0].mxu0 %v2786
    %v2860 = vpop.f32.mrb[0].mxu0
    %v2861 = vadd.f32 %v2783, %v2860
    %v2862 = vpop.f32.mrb[0].mxu0
    %2863 = vmatprep.mubr.f32.mxu0 0.0
    %2864 = vmatmul.mubr.f32.gmra.mrb[0].mxu0 %v2789
    %v2865 = vpop.f32.mrb[0].mxu0
    %v2866 = vadd.f32 %v2783, %v2865
    %v2867 = vpop.f32.mrb[0].mxu0
    %2868 = vdwg.mxu0
    %v2869 = vld [vmem:[%s5] sm:$0xff]
    %v2870 = vld [vmem:[%s5 + $0x8] sm:$0xff]
    %v2871 = vld [vmem:[%s5 + $0x10] sm:$0xff]
    %v2872 = vld [vmem:[%s5 + $0x18] sm:$0xff]
    %v2873 = vld [vmem:[%s5 + $0x20] sm:$0xff]
    %v2874 = vld [vmem:[%s15] sm:$0xff]
    %v2875 = vld [vmem:[%s15 + $0x8] sm:$0xff]
    %v2876 = vld [vmem:[%s15 + $0x10] sm:$0xff]
    %v2877 = vld [vmem:[%s15 + $0x18] sm:$0xff]
    %v2878 = vld [vmem:[%s15 + $0x20] sm:$0xff]
    %v2879 = vld [vmem:[%s15 + $0x28] sm:$0xff]
    %v2880 = vld [vmem:[%s15 + $0x30] sm:$0xff]
    %v2881 = vld [vmem:[%s15 + $0x38] sm:$0xff]
    %v2882 = vld [vmem:[%s15 + $0x40] sm:$0xff]
    %v2883 = vld [vmem:[%s15 + $0x48] sm:$0xff]
    %v2884 = vld [vmem:[%s15 + $0x50] sm:$0xff]
    %v2885 = vld [vmem:[%s15 + $0x58] sm:$0xff]
    %v2886 = vld [vmem:[%s15 + $0x60] sm:$0xff]
    %v2887 = vld [vmem:[%s15 + $0x68] sm:$0xff]
    %v2888 = vld [vmem:[%s15 + $0x70] sm:$0xff]
    %v2889 = vld [vmem:[%s15 + $0x78] sm:$0xff]
    %v2890 = vld [vmem:[%s15 + $0x80] sm:$0xff]
    %v2891 = vld [vmem:[%s15 + $0x88] sm:$0xff]
    %v2892 = vld [vmem:[%s15 + $0x90] sm:$0xff]
    %v2893 = vld [vmem:[%s15 + $0x98] sm:$0xff]
    %v2894 = vld [vmem:[%s15 + $0xa0] sm:$0xff]
    %v2895 = vld [vmem:[%s15 + $0xa8] sm:$0xff]
    %v2896 = vld [vmem:[%s15 + $0xb0] sm:$0xff]
    %v2897 = vld [vmem:[%s15 + $0xb8] sm:$0xff]
    %v2898 = vld [vmem:[%s15 + $0xc0] sm:$0xff]
    %v2899 = vld [vmem:[%s15 + $0xc8] sm:$0xff]
    %v2900 = vld [vmem:[%s15 + $0xd0] sm:$0xff]
    %v2901 = vld [vmem:[%s15 + $0xd8] sm:$0xff]
    %v2902 = vld [vmem:[%s15 + $0xe0] sm:$0xff]
    %v2903 = vld [vmem:[%s15 + $0xe8] sm:$0xff]
    %v2904 = vld [vmem:[%s15 + $0xf0] sm:$0xff]
    %v2905 = vld [vmem:[%s15 + $0xf8] sm:$0xff]
    %v2906 = vld [vmem:[%s15 + $0x100] sm:$0xff]
    %v2907 = vld [vmem:[%s15 + $0x108] sm:$0xff]
    %v2908 = vld [vmem:[%s15 + $0x110] sm:$0xff]
    %v2909 = vld [vmem:[%s15 + $0x118] sm:$0xff]
    %v2910 = vld [vmem:[%s15 + $0x120] sm:$0xff]
    %v2911 = vld [vmem:[%s15 + $0x128] sm:$0xff]
    %v2912 = vld [vmem:[%s15 + $0x130] sm:$0xff]
    %v2913 = vld [vmem:[%s15 + $0x138] sm:$0xff]
    %v2914 = vld [vmem:[%s15 + $0x140] sm:$0xff]
    %v2915 = vld [vmem:[%s15 + $0x148] sm:$0xff]
    %v2916 = vld [vmem:[%s15 + $0x150] sm:$0xff]
    %v2917 = vld [vmem:[%s15 + $0x158] sm:$0xff]
    %v2918 = vld [vmem:[%s15 + $0x160] sm:$0xff]
    %v2919 = vld [vmem:[%s15 + $0x168] sm:$0xff]
    %v2920 = vld [vmem:[%s15 + $0x170] sm:$0xff]
    %v2921 = vld [vmem:[%s15 + $0x178] sm:$0xff]
    %v2922 = vld [vmem:[%s15 + $0x180] sm:$0xff]
    %v2923 = vld [vmem:[%s15 + $0x188] sm:$0xff]
    %v2924 = vld [vmem:[%s15 + $0x190] sm:$0xff]
    %v2925 = vld [vmem:[%s15 + $0x198] sm:$0xff]
    %v2926 = vld [vmem:[%s15 + $0x1a0] sm:$0xff]
    %v2927 = vld [vmem:[%s15 + $0x1a8] sm:$0xff]
    %v2928 = vld [vmem:[%s15 + $0x1b0] sm:$0xff]
    %v2929 = vld [vmem:[%s15 + $0x1b8] sm:$0xff]
    %v2930 = vld [vmem:[%s15 + $0x1c0] sm:$0xff]
    %v2931 = vld [vmem:[%s15 + $0x1c8] sm:$0xff]
    %v2932 = vld [vmem:[%s15 + $0x1d0] sm:$0xff]
    %v2933 = vld [vmem:[%s15 + $0x1d8] sm:$0xff]
    %v2934 = vld [vmem:[%s15 + $0x1e0] sm:$0xff]
    %v2935 = vld [vmem:[%s15 + $0x1e8] sm:$0xff]
    %v2936 = vld [vmem:[%s15 + $0x1f0] sm:$0xff]
    %v2937 = vld [vmem:[%s15 + $0x1f8] sm:$0xff]
    %v2938 = vld [vmem:[%s15 + $0x200] sm:$0xff]
    %v2939 = vld [vmem:[%s15 + $0x208] sm:$0xff]
    %v2940 = vld [vmem:[%s15 + $0x210] sm:$0xff]
    %v2941 = vld [vmem:[%s15 + $0x218] sm:$0xff]
    %v2942 = vld [vmem:[%s15 + $0x220] sm:$0xff]
    %v2943 = vld [vmem:[%s15 + $0x228] sm:$0xff]
    %v2944 = vld [vmem:[%s15 + $0x230] sm:$0xff]
    %v2945 = vld [vmem:[%s15 + $0x238] sm:$0xff]
    %v2946 = vld [vmem:[%s17] sm:$0x1]
    %v2948 = vlaneseq
    %v2949 = vshrl.u32 %v2948, 7
    %v2950 = vsub.s32 0, %v2949
    %v2951 = vrot.slane %v2946, %v2950
    %vm2953 = vcmask 523264
    %v2955 = vsel %vm2953, %v2873, 0
    %2957 = vmatprep.subr.mxu0 0.0
    %2958 = vmatpush1.msra.mxu0 %v2874
    %2959 = vmatprep.subr.mxu0 0.0
    %2960 = vmatpush1.msra.mxu0 %v2875
    %2961 = vmatprep.subr.mxu0 0.0
    %2962 = vmatpush1.msra.mxu0 %v2876
    %2963 = vmatprep.subr.mxu0 0.0
    %2964 = vmatpush1.msra.mxu0 %v2877
    %2965 = vmatprep.subr.mxu0 0.0
    %2966 = vmatpush1.msra.mxu0 %v2878
    %2967 = vmatprep.subr.mxu0 0.0
    %2968 = vmatpush1.msra.mxu0 %v2879
    %2969 = vmatprep.subr.mxu0 0.0
    %2970 = vmatpush1.msra.mxu0 %v2880
    %2971 = vmatprep.subr.mxu0 0.0
    %2972 = vmatpush1.msra.mxu0 %v2881
    %2973 = vmatprep.subr.mxu0 0.0
    %2974 = vmatpush1.msra.mxu0 %v2882
    %2975 = vmatprep.subr.mxu0 0.0
    %2976 = vmatpush1.msra.mxu0 %v2883
    %2977 = vmatprep.subr.mxu0 0.0
    %2978 = vmatpush1.msra.mxu0 %v2884
    %2979 = vmatprep.subr.mxu0 0.0
    %2980 = vmatpush1.msra.mxu0 %v2885
    %2981 = vmatprep.subr.mxu0 0.0
    %2982 = vmatpush1.msra.mxu0 %v2886
    %2983 = vmatprep.subr.mxu0 0.0
    %2984 = vmatpush1.msra.mxu0 %v2887
    %2985 = vmatprep.subr.mxu0 0.0
    %2986 = vmatpush1.msra.mxu0 %v2888
    %2987 = vmatprep.subr.mxu0 0.0
    %2988 = vmatpush1.msra.mxu0 %v2889
    %2989 = vmatprep.subr.mxu0 0.0
    %2990 = vmatpush1.msra.mxu0 %v2890
    %2991 = vmatprep.subr.mxu0 0.0
    %2992 = vmatpush1.msra.mxu0 %v2891
    %2993 = vmatprep.subr.mxu0 0.0
    %2994 = vmatpush1.msra.mxu0 %v2892
    %2995 = vmatprep.subr.mxu0 0.0
    %2996 = vmatpush1.msra.mxu0 %v2893
    %2997 = vmatprep.subr.mxu0 0.0
    %2998 = vmatpush1.msra.mxu0 %v2894
    %2999 = vmatprep.subr.mxu0 0.0
    %3000 = vmatpush1.msra.mxu0 %v2895
    %3001 = vmatprep.subr.mxu0 0.0
    %3002 = vmatpush1.msra.mxu0 %v2896
    %3003 = vmatprep.subr.mxu0 0.0
    %3004 = vmatpush1.msra.mxu0 %v2897
    %3005 = vmatprep.subr.mxu0 0.0
    %3006 = vmatpush1.msra.mxu0 %v2898
    %3007 = vmatprep.subr.mxu0 0.0
    %3008 = vmatpush1.msra.mxu0 %v2899
    %3009 = vmatprep.subr.mxu0 0.0
    %3010 = vmatpush1.msra.mxu0 %v2900
    %3011 = vmatprep.subr.mxu0 0.0
    %3012 = vmatpush1.msra.mxu0 %v2901
    %3013 = vmatprep.subr.mxu0 0.0
    %3014 = vmatpush1.msra.mxu0 %v2902
    %3015 = vmatprep.subr.mxu0 0.0
    %3016 = vmatpush1.msra.mxu0 %v2903
    %3017 = vmatprep.subr.mxu0 0.0
    %3018 = vmatpush1.msra.mxu0 %v2904
    %3019 = vmatprep.subr.mxu0 0.0
    %3020 = vmatpush1.msra.mxu0 %v2905
    %3021 = vmatprep.mubr.f32.mxu0 %v2870
    %3022 = vmatmul.mubr.f32.gmra.mrb[0].mxu0 %v2869
    %v3023 = vpop.f32.mrb[0].mxu0
    %v3024 = vadd.f32 %v2951, %v3023
    %v3025 = vpop.f32.mrb[0].mxu0
    %3026 = vdwg.mxu0
    %3027 = vmatprep.subr.mxu0 0.0
    %3028 = vmatpush1.msra.mxu0 %v2906
    %3029 = vmatprep.subr.mxu0 0.0
    %3030 = vmatpush1.msra.mxu0 %v2907
    %3031 = vmatprep.subr.mxu0 0.0
    %3032 = vmatpush1.msra.mxu0 %v2908
    %3033 = vmatprep.subr.mxu0 0.0
    %3034 = vmatpush1.msra.mxu0 %v2909
    %3035 = vmatprep.subr.mxu0 0.0
    %3036 = vmatpush1.msra.mxu0 %v2910
    %3037 = vmatprep.subr.mxu0 0.0
    %3038 = vmatpush1.msra.mxu0 %v2911
    %3039 = vmatprep.subr.mxu0 0.0
    %3040 = vmatpush1.msra.mxu0 %v2912
    %3041 = vmatprep.subr.mxu0 0.0
    %3042 = vmatpush1.msra.mxu0 %v2913
    %3043 = vmatprep.subr.mxu0 0.0
    %3044 = vmatpush1.msra.mxu0 %v2914
    %3045 = vmatprep.subr.mxu0 0.0
    %3046 = vmatpush1.msra.mxu0 %v2915
    %3047 = vmatprep.subr.mxu0 0.0
    %3048 = vmatpush1.msra.mxu0 %v2916
    %3049 = vmatprep.subr.mxu0 0.0
    %3050 = vmatpush1.msra.mxu0 %v2917
    %3051 = vmatprep.subr.mxu0 0.0
    %3052 = vmatpush1.msra.mxu0 %v2918
    %3053 = vmatprep.subr.mxu0 0.0
    %3054 = vmatpush1.msra.mxu0 %v2919
    %3055 = vmatprep.subr.mxu0 0.0
    %3056 = vmatpush1.msra.mxu0 %v2920
    %3057 = vmatprep.subr.mxu0 0.0
    %3058 = vmatpush1.msra.mxu0 %v2921
    %3059 = vmatprep.subr.mxu0 0.0
    %3060 = vmatpush1.msra.mxu0 %v2922
    %3061 = vmatprep.subr.mxu0 0.0
    %3062 = vmatpush1.msra.mxu0 %v2923
    %3063 = vmatprep.subr.mxu0 0.0
    %3064 = vmatpush1.msra.mxu0 %v2924
    %3065 = vmatprep.subr.mxu0 0.0
    %3066 = vmatpush1.msra.mxu0 %v2925
    %3067 = vmatprep.subr.mxu0 0.0
    %3068 = vmatpush1.msra.mxu0 %v2926
    %3069 = vmatprep.subr.mxu0 0.0
    %3070 = vmatpush1.msra.mxu0 %v2927
    %3071 = vmatprep.subr.mxu0 0.0
    %3072 = vmatpush1.msra.mxu0 %v2928
    %3073 = vmatprep.subr.mxu0 0.0
    %3074 = vmatpush1.msra.mxu0 %v2929
    %3075 = vmatprep.subr.mxu0 0.0
    %3076 = vmatpush1.msra.mxu0 %v2930
    %3077 = vmatprep.subr.mxu0 0.0
    %3078 = vmatpush1.msra.mxu0 %v2931
    %3079 = vmatprep.subr.mxu0 0.0
    %3080 = vmatpush1.msra.mxu0 %v2932
    %3081 = vmatprep.subr.mxu0 0.0
    %3082 = vmatpush1.msra.mxu0 %v2933
    %3083 = vmatprep.subr.mxu0 0.0
    %3084 = vmatpush1.msra.mxu0 %v2934
    %3085 = vmatprep.subr.mxu0 0.0
    %3086 = vmatpush1.msra.mxu0 %v2935
    %3087 = vmatprep.subr.mxu0 0.0
    %3088 = vmatpush1.msra.mxu0 %v2936
    %3089 = vmatprep.subr.mxu0 0.0
    %3090 = vmatpush1.msra.mxu0 %v2937
    %3091 = vmatprep.mubr.f32.mxu0 %v2872
    %3092 = vmatmul.mubr.f32.gmra.mrb[0].mxu0 %v2871
    %v3093 = vpop.f32.mrb[0].mxu0
    %v3094 = vadd.f32 %v3024, %v3093
    %v3095 = vpop.f32.mrb[0].mxu0
    %3096 = vdwg.mxu0
    %3097 = vmatprep.subr.mxu0 0.0
    %3098 = vmatpush1.msra.mxu0 %v2938
    %3099 = vmatprep.subr.mxu0 0.0
    %3100 = vmatpush1.msra.mxu0 %v2939
    %3101 = vmatprep.subr.mxu0 0.0
    %3102 = vmatpush1.msra.mxu0 %v2940
    %3103 = vmatprep.subr.mxu0 0.0
    %3104 = vmatpush1.msra.mxu0 %v2941
    %3105 = vmatprep.subr.mxu0 0.0
    %3106 = vmatpush1.msra.mxu0 %v2942
    %3107 = vmatprep.subr.mxu0 0.0
    %3108 = vmatpush1.msra.mxu0 %v2943
    %3109 = vmatprep.subr.mxu0 0.0
    %3110 = vmatpush1.msra.mxu0 %v2944
    %3111 = vmatprep.subr.mxu0 0.0
    %3112 = vmatpush1.msra.mxu0 %v2945
    %3113 = vmatprep.subr.mxu0 0.0
    %3114 = vmatpush1.msra.mxu0 0.0
    %3115 = vmatprep.subr.mxu0 0.0
    %3116 = vmatpush1.msra.mxu0 0.0
    %3117 = vmatprep.subr.mxu0 0.0
    %3118 = vmatpush1.msra.mxu0 0.0
    %3119 = vmatprep.subr.mxu0 0.0
    %3120 = vmatpush1.msra.mxu0 0.0
    %3121 = vmatprep.subr.mxu0 0.0
    %3122 = vmatpush1.msra.mxu0 0.0
    %3123 = vmatprep.subr.mxu0 0.0
    %3124 = vmatpush1.msra.mxu0 0.0
    %3125 = vmatprep.subr.mxu0 0.0
    %3126 = vmatpush1.msra.mxu0 0.0
    %3127 = vmatprep.subr.mxu0 0.0
    %3128 = vmatpush1.msra.mxu0 0.0
    %3129 = vmatprep.subr.mxu0 0.0
    %3130 = vmatpush1.msra.mxu0 0.0
    %3131 = vmatprep.subr.mxu0 0.0
    %3132 = vmatpush1.msra.mxu0 0.0
    %3133 = vmatprep.subr.mxu0 0.0
    %3134 = vmatpush1.msra.mxu0 0.0
    %3135 = vmatprep.subr.mxu0 0.0
    %3136 = vmatpush1.msra.mxu0 0.0
    %3137 = vmatprep.subr.mxu0 0.0
    %3138 = vmatpush1.msra.mxu0 0.0
    %3139 = vmatprep.subr.mxu0 0.0
    %3140 = vmatpush1.msra.mxu0 0.0
    %3141 = vmatprep.subr.mxu0 0.0
    %3142 = vmatpush1.msra.mxu0 0.0
    %3143 = vmatprep.subr.mxu0 0.0
    %3144 = vmatpush1.msra.mxu0 0.0
    %3145 = vmatprep.subr.mxu0 0.0
    %3146 = vmatpush1.msra.mxu0 0.0
    %3147 = vmatprep.subr.mxu0 0.0
    %3148 = vmatpush1.msra.mxu0 0.0
    %3149 = vmatprep.subr.mxu0 0.0
    %3150 = vmatpush1.msra.mxu0 0.0
    %3151 = vmatprep.subr.mxu0 0.0
    %3152 = vmatpush1.msra.mxu0 0.0
    %3153 = vmatprep.subr.mxu0 0.0
    %3154 = vmatpush1.msra.mxu0 0.0
    %3155 = vmatprep.subr.mxu0 0.0
    %3156 = vmatpush1.msra.mxu0 0.0
    %3157 = vmatprep.subr.mxu0 0.0
    %3158 = vmatpush1.msra.mxu0 0.0
    %3159 = vmatprep.subr.mxu0 0.0
    %3160 = vmatpush1.msra.mxu0 0.0
    %3161 = vmatprep.mubr.f32.mxu0 0.0
    %3162 = vmatmul.mubr.f32.gmra.mrb[0].mxu0 %v2955
    %v3163 = vpop.f32.mrb[0].mxu0
    %v3164 = vadd.f32 %v3094, %v3163
    %v3165 = vpop.f32.mrb[0].mxu0
    %3166 = vdwg.mxu0
    %v3167 = vld [vmem:[%s3] sm:$0xff]
    %v3168 = vld [vmem:[%s3 + $0x8] sm:$0xf]
    %v3170 = vsel %vm147, %v3167, 0
    %v3173 = vsel %vm147, %v3168, 0
    %v3176 = vsel %vm147, %v3164, 0
    %3178 = vmatprep.subr.mxu0 0.0
    %3179 = vmatpush1.xpose.msra.mxu0 %v3176
    %3180 = vmatprep.subr.mxu0 0.0
    %3181 = vmatpush1.xpose.msra.mxu0 0.0
    %3182 = vmatprep.subr.mxu0 0.0
    %3183 = vmatpush1.xpose.msra.mxu0 0.0
    %3184 = vmatprep.subr.mxu0 0.0
    %3185 = vmatpush1.xpose.msra.mxu0 0.0
    %3186 = vmatprep.subr.mxu0 0.0
    %3187 = vmatpush1.xpose.msra.mxu0 0.0
    %3188 = vmatprep.subr.mxu0 0.0
    %3189 = vmatpush1.xpose.msra.mxu0 0.0
    %3190 = vmatprep.subr.mxu0 0.0
    %3191 = vmatpush1.xpose.msra.mxu0 0.0
    %3192 = vmatprep.subr.mxu0 0.0
    %3193 = vmatpush1.xpose.msra.mxu0 0.0
    %3194 = vmatprep.subr.mxu0 0.0
    %3195 = vmatpush1.xpose.msra.mxu0 0.0
    %3196 = vmatprep.subr.mxu0 0.0
    %3197 = vmatpush1.xpose.msra.mxu0 0.0
    %3198 = vmatprep.subr.mxu0 0.0
    %3199 = vmatpush1.xpose.msra.mxu0 0.0
    %3200 = vmatprep.subr.mxu0 0.0
    %3201 = vmatpush1.xpose.msra.mxu0 0.0
    %3202 = vmatprep.subr.mxu0 0.0
    %3203 = vmatpush1.xpose.msra.mxu0 0.0
    %3204 = vmatprep.subr.mxu0 0.0
    %3205 = vmatpush1.xpose.msra.mxu0 0.0
    %3206 = vmatprep.subr.mxu0 0.0
    %3207 = vmatpush1.xpose.msra.mxu0 0.0
    %3208 = vmatprep.subr.mxu0 0.0
    %3209 = vmatpush1.xpose.msra.mxu0 0.0
    %3210 = vmatprep.subr.mxu0 0.0
    %3211 = vmatpush1.xpose.msra.mxu0 0.0
    %3212 = vmatprep.subr.mxu0 0.0
    %3213 = vmatpush1.xpose.msra.mxu0 0.0
    %3214 = vmatprep.subr.mxu0 0.0
    %3215 = vmatpush1.xpose.msra.mxu0 0.0
    %3216 = vmatprep.subr.mxu0 0.0
    %3217 = vmatpush1.xpose.msra.mxu0 0.0
    %3218 = vmatprep.subr.mxu0 0.0
    %3219 = vmatpush1.xpose.msra.mxu0 0.0
    %3220 = vmatprep.subr.mxu0 0.0
    %3221 = vmatpush1.xpose.msra.mxu0 0.0
    %3222 = vmatprep.subr.mxu0 0.0
    %3223 = vmatpush1.xpose.msra.mxu0 0.0
    %3224 = vmatprep.subr.mxu0 0.0
    %3225 = vmatpush1.xpose.msra.mxu0 0.0
    %3226 = vmatprep.subr.mxu0 0.0
    %3227 = vmatpush1.xpose.msra.mxu0 0.0
    %3228 = vmatprep.subr.mxu0 0.0
    %3229 = vmatpush1.xpose.msra.mxu0 0.0
    %3230 = vmatprep.subr.mxu0 0.0
    %3231 = vmatpush1.xpose.msra.mxu0 0.0
    %3232 = vmatprep.subr.mxu0 0.0
    %3233 = vmatpush1.xpose.msra.mxu0 0.0
    %3234 = vmatprep.subr.mxu0 0.0
    %3235 = vmatpush1.xpose.msra.mxu0 0.0
    %3236 = vmatprep.subr.mxu0 0.0
    %3237 = vmatpush1.xpose.msra.mxu0 0.0
    %3238 = vmatprep.subr.mxu0 0.0
    %3239 = vmatpush1.xpose.msra.mxu0 0.0
    %3240 = vmatprep.subr.mxu0 0.0
    %3241 = vmatpush1.xpose.msra.mxu0 0.0
    %3242 = vmatprep.mubr.f32.mxu0 0.0
    %3243 = vmatmul.mubr.f32.gmra.mrb[0].mxu0 %v3170
    %v3244 = vpop.f32.mrb[0].mxu0
    %v3245 = vadd.f32 0.0, %v3244
    %v3246 = vpop.f32.mrb[0].mxu0
    %3247 = vmatprep.mubr.f32.mxu0 0.0
    %3248 = vmatmul.mubr.f32.gmra.mrb[0].mxu0 %v3173
    %v3249 = vpop.f32.mrb[0].mxu0
    %v3250 = vadd.f32 0.0, %v3249
    %v3251 = vpop.f32.mrb[0].mxu0
    %3252 = vdwg.mxu0
    %v3253 = vmul.f32 %v3245, 0.37796447
    %v3254 = vmul.f32 %v3250, 0.37796447
    %v3255 = vld [vmem:[%s13] sm:$0xff]
    %v3256 = vld [vmem:[%s13 + $0x8] sm:$0xf]
    %v3257 = vadd.f32 %v3253, %v3255
    %v3258 = vadd.f32 %v3254, %v3256
    %vm3259 = vcmask 64512
    %v3260 = vsel %vm3259, %v3257, -inf
    %3261 = vmax.xlane.f32.xlu0 %v3260
    %v3262 = vpop.xlane.xlu0 %3261
    %vm3263 = vcmask 60416
    %v3264 = vsel %vm3263, %v3258, -inf
    %3265 = vmax.xlane.f32.xlu0 %v3264
    %v3266 = vpop.xlane.xlu0 %3265
    %v3267 = vsub.f32 %v3257, %v3262
    %v3268 = vsub.f32 %v3258, %v3266
    %v3269 = vmul.f32 %v3267, 1.442695
    %v3270 = vpow.pop %v3269
    %v3271 = vmul.f32 %v3268, 1.442695
    %v3272 = vpow.pop %v3271
    %v3274 = vsel %vm3259, %v3270, 0
    %v3277 = vsel %vm3259, %v3272, 0
    %3279 = vmatprep.subr.mxu0 0.0
    %3280 = vmatpush1.msra.mxu0 %v3164
    %3281 = vmatprep.subr.mxu0 0.0
    %3282 = vmatpush1.msra.mxu0 0.0
    %3283 = vmatprep.subr.mxu0 0.0
    %3284 = vmatpush1.msra.mxu0 0.0
    %3285 = vmatprep.subr.mxu0 0.0
    %3286 = vmatpush1.msra.mxu0 0.0
    %3287 = vmatprep.subr.mxu0 0.0
    %3288 = vmatpush1.msra.mxu0 0.0
    %3289 = vmatprep.subr.mxu0 0.0
    %3290 = vmatpush1.msra.mxu0 0.0
    %3291 = vmatprep.subr.mxu0 0.0
    %3292 = vmatpush1.msra.mxu0 0.0
    %3293 = vmatprep.subr.mxu0 0.0
    %3294 = vmatpush1.msra.mxu0 0.0
    %3295 = vmatprep.subr.mxu0 0.0
    %3296 = vmatpush1.msra.mxu0 0.0
    %3297 = vmatprep.subr.mxu0 0.0
    %3298 = vmatpush1.msra.mxu0 0.0
    %3299 = vmatprep.subr.mxu0 0.0
    %3300 = vmatpush1.msra.mxu0 0.0
    %3301 = vmatprep.subr.mxu0 0.0
    %3302 = vmatpush1.msra.mxu0 0.0
    %3303 = vmatprep.subr.mxu0 0.0
    %3304 = vmatpush1.msra.mxu0 0.0
    %3305 = vmatprep.subr.mxu0 0.0
    %3306 = vmatpush1.msra.mxu0 0.0
    %3307 = vmatprep.subr.mxu0 0.0
    %3308 = vmatpush1.msra.mxu0 0.0
    %3309 = vmatprep.subr.mxu0 0.0
    %3310 = vmatpush1.msra.mxu0 0.0
    %3311 = vmatprep.subr.mxu0 0.0
    %3312 = vmatpush1.msra.mxu0 0.0
    %3313 = vmatprep.subr.mxu0 0.0
    %3314 = vmatpush1.msra.mxu0 0.0
    %3315 = vmatprep.subr.mxu0 0.0
    %3316 = vmatpush1.msra.mxu0 0.0
    %3317 = vmatprep.subr.mxu0 0.0
    %3318 = vmatpush1.msra.mxu0 0.0
    %3319 = vmatprep.subr.mxu0 0.0
    %3320 = vmatpush1.msra.mxu0 0.0
    %3321 = vmatprep.subr.mxu0 0.0
    %3322 = vmatpush1.msra.mxu0 0.0
    %3323 = vmatprep.subr.mxu0 0.0
    %3324 = vmatpush1.msra.mxu0 0.0
    %3325 = vmatprep.subr.mxu0 0.0
    %3326 = vmatpush1.msra.mxu0 0.0
    %3327 = vmatprep.subr.mxu0 0.0
    %3328 = vmatpush1.msra.mxu0 0.0
    %3329 = vmatprep.subr.mxu0 0.0
    %3330 = vmatpush1.msra.mxu0 0.0
    %3331 = vmatprep.subr.mxu0 0.0
    %3332 = vmatpush1.msra.mxu0 0.0
    %3333 = vmatprep.subr.mxu0 0.0
    %3334 = vmatpush1.msra.mxu0 0.0
    %3335 = vmatprep.subr.mxu0 0.0
    %3336 = vmatpush1.msra.mxu0 0.0
    %3337 = vmatprep.subr.mxu0 0.0
    %3338 = vmatpush1.msra.mxu0 0.0
    %3339 = vmatprep.subr.mxu0 0.0
    %3340 = vmatpush1.msra.mxu0 0.0
    %3341 = vmatprep.subr.mxu0 0.0
    %3342 = vmatpush1.msra.mxu0 0.0
    %3343 = vmatprep.mubr.f32.mxu0 0.0
    %3344 = vmatmul.mubr.f32.gmra.mrb[0].mxu0 %v3274
    %v3345 = vpop.f32.mrb[0].mxu0
    %v3346 = vadd.f32 0.0, %v3345
    %v3347 = vpop.f32.mrb[0].mxu0
    %3348 = vmatprep.mubr.f32.mxu0 0.0
    %3349 = vmatmul.mubr.f32.gmra.mrb[0].mxu0 %v3277
    %v3350 = vpop.f32.mrb[0].mxu0
    %v3351 = vadd.f32 0.0, %v3350
    %v3352 = vpop.f32.mrb[0].mxu0
    %3353 = vdwg.mxu0
    %v3354 = vsel %vm3259, %v3270, 0.0
    %3355 = vadd.xlane.f32.xlu0 %v3354
    %v3356 = vpop.xlane.xlu0 %3355
    %v3357 = vsel %vm3263, %v3272, 0.0
    %3358 = vadd.xlane.f32.xlu0 %v3357
    %v3359 = vpop.xlane.xlu0 %3358
    %v3360 = vrcp.pop %v3356
    %v3361 = vmul.f32 %v3346, %v3360
    %v3362 = vrcp.pop %v3359
    %v3363 = vmul.f32 %v3351, %v3362
    %v3364 = vmul.f32 %v3167, 0.5
    %v3365 = vmul.f32 %v3168, 0.5
    %v3366 = vmul.f32 %v3361, 0.5
    %v3367 = vmul.f32 %v3363, 0.5
    %v3368 = vadd.f32 %v3364, %v3366
    %v3369 = vadd.f32 %v3365, %v3367
    %v3370 = vld [vmem:[%s9] sm:$0xff]
    %v3371 = vld [vmem:[%s9 + $0x8] sm:$0xf]
    %v3372 = vld [vmem:[%s11] sm:$0xff]
    %v3373 = vld [vmem:[%s11 + $0x8] sm:$0xf]
    %v3374 = vld [vmem:[%s39] sm:$0x7f]
    %v3375 = vld [vmem:[%s41] sm:$0x1]
    %v3377 = vlaneseq
    %v3378 = vshrl.u32 %v3377, 7
    %v3379 = vsub.s32 0, %v3378
    %v3380 = vrot.slane %v3375, %v3379
    %v3383 = vsel %vm147, %v3368, 0
    %v3386 = vsel %vm147, %v3369, 0
    %v3389 = vsel %vm154, %v3374, 0
    %3391 = vmatprep.subr.mxu0 0.0
    %3392 = vmatpush1.msra.mxu0 %v3389
    %3393 = vmatprep.subr.mxu0 0.0
    %3394 = vmatpush1.msra.mxu0 0.0
    %3395 = vmatprep.subr.mxu0 0.0
    %3396 = vmatpush1.msra.mxu0 0.0
    %3397 = vmatprep.subr.mxu0 0.0
    %3398 = vmatpush1.msra.mxu0 0.0
    %3399 = vmatprep.subr.mxu0 0.0
    %3400 = vmatpush1.msra.mxu0 0.0
    %3401 = vmatprep.subr.mxu0 0.0
    %3402 = vmatpush1.msra.mxu0 0.0
    %3403 = vmatprep.subr.mxu0 0.0
    %3404 = vmatpush1.msra.mxu0 0.0
    %3405 = vmatprep.subr.mxu0 0.0
    %3406 = vmatpush1.msra.mxu0 0.0
    %3407 = vmatprep.subr.mxu0 0.0
    %3408 = vmatpush1.msra.mxu0 0.0
    %3409 = vmatprep.subr.mxu0 0.0
    %3410 = vmatpush1.msra.mxu0 0.0
    %3411 = vmatprep.subr.mxu0 0.0
    %3412 = vmatpush1.msra.mxu0 0.0
    %3413 = vmatprep.subr.mxu0 0.0
    %3414 = vmatpush1.msra.mxu0 0.0
    %3415 = vmatprep.subr.mxu0 0.0
    %3416 = vmatpush1.msra.mxu0 0.0
    %3417 = vmatprep.subr.mxu0 0.0
    %3418 = vmatpush1.msra.mxu0 0.0
    %3419 = vmatprep.subr.mxu0 0.0
    %3420 = vmatpush1.msra.mxu0 0.0
    %3421 = vmatprep.subr.mxu0 0.0
    %3422 = vmatpush1.msra.mxu0 0.0
    %3423 = vmatprep.subr.mxu0 0.0
    %3424 = vmatpush1.msra.mxu0 0.0
    %3425 = vmatprep.subr.mxu0 0.0
    %3426 = vmatpush1.msra.mxu0 0.0
    %3427 = vmatprep.subr.mxu0 0.0
    %3428 = vmatpush1.msra.mxu0 0.0
    %3429 = vmatprep.subr.mxu0 0.0
    %3430 = vmatpush1.msra.mxu0 0.0
    %3431 = vmatprep.subr.mxu0 0.0
    %3432 = vmatpush1.msra.mxu0 0.0
    %3433 = vmatprep.subr.mxu0 0.0
    %3434 = vmatpush1.msra.mxu0 0.0
    %3435 = vmatprep.subr.mxu0 0.0
    %3436 = vmatpush1.msra.mxu0 0.0
    %3437 = vmatprep.subr.mxu0 0.0
    %3438 = vmatpush1.msra.mxu0 0.0
    %3439 = vmatprep.subr.mxu0 0.0
    %3440 = vmatpush1.msra.mxu0 0.0
    %3441 = vmatprep.subr.mxu0 0.0
    %3442 = vmatpush1.msra.mxu0 0.0
    %3443 = vmatprep.subr.mxu0 0.0
    %3444 = vmatpush1.msra.mxu0 0.0
    %3445 = vmatprep.subr.mxu0 0.0
    %3446 = vmatpush1.msra.mxu0 0.0
    %3447 = vmatprep.subr.mxu0 0.0
    %3448 = vmatpush1.msra.mxu0 0.0
    %3449 = vmatprep.subr.mxu0 0.0
    %3450 = vmatpush1.msra.mxu0 0.0
    %3451 = vmatprep.subr.mxu0 0.0
    %3452 = vmatpush1.msra.mxu0 0.0
    %3453 = vmatprep.subr.mxu0 0.0
    %3454 = vmatpush1.msra.mxu0 0.0
    %3455 = vmatprep.mubr.f32.mxu0 0.0
    %3456 = vmatmul.mubr.f32.gmra.mrb[0].mxu0 %v3383
    %v3457 = vpop.f32.mrb[0].mxu0
    %v3458 = vadd.f32 %v3380, %v3457
    %v3459 = vpop.f32.mrb[0].mxu0
    %3460 = vmatprep.mubr.f32.mxu0 0.0
    %3461 = vmatmul.mubr.f32.gmra.mrb[0].mxu0 %v3386
    %v3462 = vpop.f32.mrb[0].mxu0
    %v3463 = vadd.f32 %v3380, %v3462
    %v3464 = vpop.f32.mrb[0].mxu0
    %3465 = vdwg.mxu0
    %s3466 = scalar_lea.vmem %s39, 8
    %v3467 = vld [vmem:[%s3466] sm:$0x7f]
    %s3468 = scalar_lea.vmem %s41, 1
    %v3469 = vld [vmem:[%s3468] sm:$0x1]
    %v3471 = vlaneseq
    %v3472 = vshrl.u32 %v3471, 7
    %v3473 = vsub.s32 0, %v3472
    %v3474 = vrot.slane %v3469, %v3473
    %v3477 = vsel %vm154, %v3467, 0
    %3479 = vmatprep.subr.mxu0 0.0
    %3480 = vmatpush1.msra.mxu0 %v3477
    %3481 = vmatprep.subr.mxu0 0.0
    %3482 = vmatpush1.msra.mxu0 0.0
    %3483 = vmatprep.subr.mxu0 0.0
    %3484 = vmatpush1.msra.mxu0 0.0
    %3485 = vmatprep.subr.mxu0 0.0
    %3486 = vmatpush1.msra.mxu0 0.0
    %3487 = vmatprep.subr.mxu0 0.0
    %3488 = vmatpush1.msra.mxu0 0.0
    %3489 = vmatprep.subr.mxu0 0.0
    %3490 = vmatpush1.msra.mxu0 0.0
    %3491 = vmatprep.subr.mxu0 0.0
    %3492 = vmatpush1.msra.mxu0 0.0
    %3493 = vmatprep.subr.mxu0 0.0
    %3494 = vmatpush1.msra.mxu0 0.0
    %3495 = vmatprep.subr.mxu0 0.0
    %3496 = vmatpush1.msra.mxu0 0.0
    %3497 = vmatprep.subr.mxu0 0.0
    %3498 = vmatpush1.msra.mxu0 0.0
    %3499 = vmatprep.subr.mxu0 0.0
    %3500 = vmatpush1.msra.mxu0 0.0
    %3501 = vmatprep.subr.mxu0 0.0
    %3502 = vmatpush1.msra.mxu0 0.0
    %3503 = vmatprep.subr.mxu0 0.0
    %3504 = vmatpush1.msra.mxu0 0.0
    %3505 = vmatprep.subr.mxu0 0.0
    %3506 = vmatpush1.msra.mxu0 0.0
    %3507 = vmatprep.subr.mxu0 0.0
    %3508 = vmatpush1.msra.mxu0 0.0
    %3509 = vmatprep.subr.mxu0 0.0
    %3510 = vmatpush1.msra.mxu0 0.0
    %3511 = vmatprep.subr.mxu0 0.0
    %3512 = vmatpush1.msra.mxu0 0.0
    %3513 = vmatprep.subr.mxu0 0.0
    %3514 = vmatpush1.msra.mxu0 0.0
    %3515 = vmatprep.subr.mxu0 0.0
    %3516 = vmatpush1.msra.mxu0 0.0
    %3517 = vmatprep.subr.mxu0 0.0
    %3518 = vmatpush1.msra.mxu0 0.0
    %3519 = vmatprep.subr.mxu0 0.0
    %3520 = vmatpush1.msra.mxu0 0.0
    %3521 = vmatprep.subr.mxu0 0.0
    %3522 = vmatpush1.msra.mxu0 0.0
    %3523 = vmatprep.subr.mxu0 0.0
    %3524 = vmatpush1.msra.mxu0 0.0
    %3525 = vmatprep.subr.mxu0 0.0
    %3526 = vmatpush1.msra.mxu0 0.0
    %3527 = vmatprep.subr.mxu0 0.0
    %3528 = vmatpush1.msra.mxu0 0.0
    %3529 = vmatprep.subr.mxu0 0.0
    %3530 = vmatpush1.msra.mxu0 0.0
    %3531 = vmatprep.subr.mxu0 0.0
    %3532 = vmatpush1.msra.mxu0 0.0
    %3533 = vmatprep.subr.mxu0 0.0
    %3534 = vmatpush1.msra.mxu0 0.0
    %3535 = vmatprep.subr.mxu0 0.0
    %3536 = vmatpush1.msra.mxu0 0.0
    %3537 = vmatprep.subr.mxu0 0.0
    %3538 = vmatpush1.msra.mxu0 0.0
    %3539 = vmatprep.subr.mxu0 0.0
    %3540 = vmatpush1.msra.mxu0 0.0
    %3541 = vmatprep.subr.mxu0 0.0
    %3542 = vmatpush1.msra.mxu0 0.0
    %3543 = vmatprep.mubr.f32.mxu0 0.0
    %3544 = vmatmul.mubr.f32.gmra.mrb[0].mxu0 %v3383
    %v3545 = vpop.f32.mrb[0].mxu0
    %v3546 = vadd.f32 %v3474, %v3545
    %v3547 = vpop.f32.mrb[0].mxu0
    %3548 = vmatprep.mubr.f32.mxu0 0.0
    %3549 = vmatmul.mubr.f32.gmra.mrb[0].mxu0 %v3386
    %v3550 = vpop.f32.mrb[0].mxu0
    %v3551 = vadd.f32 %v3474, %v3550
    %v3552 = vpop.f32.mrb[0].mxu0
    %3553 = vdwg.mxu0
    %s3554 = scalar_lea.vmem %s39, 16
    %v3555 = vld [vmem:[%s3554] sm:$0x7f]
    %s3556 = scalar_lea.vmem %s41, 2
    %v3557 = vld [vmem:[%s3556] sm:$0x1]
    %v3559 = vlaneseq
    %v3560 = vshrl.u32 %v3559, 7
    %v3561 = vsub.s32 0, %v3560
    %v3562 = vrot.slane %v3557, %v3561
    %v3565 = vsel %vm154, %v3555, 0
    %3567 = vmatprep.subr.mxu0 0.0
    %3568 = vmatpush1.msra.mxu0 %v3565
    %3569 = vmatprep.subr.mxu0 0.0
    %3570 = vmatpush1.msra.mxu0 0.0
    %3571 = vmatprep.subr.mxu0 0.0
    %3572 = vmatpush1.msra.mxu0 0.0
    %3573 = vmatprep.subr.mxu0 0.0
    %3574 = vmatpush1.msra.mxu0 0.0
    %3575 = vmatprep.subr.mxu0 0.0
    %3576 = vmatpush1.msra.mxu0 0.0
    %3577 = vmatprep.subr.mxu0 0.0
    %3578 = vmatpush1.msra.mxu0 0.0
    %3579 = vmatprep.subr.mxu0 0.0
    %3580 = vmatpush1.msra.mxu0 0.0
    %3581 = vmatprep.subr.mxu0 0.0
    %3582 = vmatpush1.msra.mxu0 0.0
    %3583 = vmatprep.subr.mxu0 0.0
    %3584 = vmatpush1.msra.mxu0 0.0
    %3585 = vmatprep.subr.mxu0 0.0
    %3586 = vmatpush1.msra.mxu0 0.0
    %3587 = vmatprep.subr.mxu0 0.0
    %3588 = vmatpush1.msra.mxu0 0.0
    %3589 = vmatprep.subr.mxu0 0.0
    %3590 = vmatpush1.msra.mxu0 0.0
    %3591 = vmatprep.subr.mxu0 0.0
    %3592 = vmatpush1.msra.mxu0 0.0
    %3593 = vmatprep.subr.mxu0 0.0
    %3594 = vmatpush1.msra.mxu0 0.0
    %3595 = vmatprep.subr.mxu0 0.0
    %3596 = vmatpush1.msra.mxu0 0.0
    %3597 = vmatprep.subr.mxu0 0.0
    %3598 = vmatpush1.msra.mxu0 0.0
    %3599 = vmatprep.subr.mxu0 0.0
    %3600 = vmatpush1.msra.mxu0 0.0
    %3601 = vmatprep.subr.mxu0 0.0
    %3602 = vmatpush1.msra.mxu0 0.0
    %3603 = vmatprep.subr.mxu0 0.0
    %3604 = vmatpush1.msra.mxu0 0.0
    %3605 = vmatprep.subr.mxu0 0.0
    %3606 = vmatpush1.msra.mxu0 0.0
    %3607 = vmatprep.subr.mxu0 0.0
    %3608 = vmatpush1.msra.mxu0 0.0
    %3609 = vmatprep.subr.mxu0 0.0
    %3610 = vmatpush1.msra.mxu0 0.0
    %3611 = vmatprep.subr.mxu0 0.0
    %3612 = vmatpush1.msra.mxu0 0.0
    %3613 = vmatprep.subr.mxu0 0.0
    %3614 = vmatpush1.msra.mxu0 0.0
    %3615 = vmatprep.subr.mxu0 0.0
    %3616 = vmatpush1.msra.mxu0 0.0
    %3617 = vmatprep.subr.mxu0 0.0
    %3618 = vmatpush1.msra.mxu0 0.0
    %3619 = vmatprep.subr.mxu0 0.0
    %3620 = vmatpush1.msra.mxu0 0.0
    %3621 = vmatprep.subr.mxu0 0.0
    %3622 = vmatpush1.msra.mxu0 0.0
    %3623 = vmatprep.subr.mxu0 0.0
    %3624 = vmatpush1.msra.mxu0 0.0
    %3625 = vmatprep.subr.mxu0 0.0
    %3626 = vmatpush1.msra.mxu0 0.0
    %3627 = vmatprep.subr.mxu0 0.0
    %3628 = vmatpush1.msra.mxu0 0.0
    %3629 = vmatprep.subr.mxu0 0.0
    %3630 = vmatpush1.msra.mxu0 0.0
    %3631 = vmatprep.mubr.f32.mxu0 0.0
    %3632 = vmatmul.mubr.f32.gmra.mrb[0].mxu0 %v3383
    %v3633 = vpop.f32.mrb[0].mxu0
    %v3634 = vadd.f32 %v3562, %v3633
    %v3635 = vpop.f32.mrb[0].mxu0
    %3636 = vmatprep.mubr.f32.mxu0 0.0
    %3637 = vmatmul.mubr.f32.gmra.mrb[0].mxu0 %v3386
    %v3638 = vpop.f32.mrb[0].mxu0
    %v3639 = vadd.f32 %v3562, %v3638
    %v3640 = vpop.f32.mrb[0].mxu0
    %3641 = vdwg.mxu0
    %v3642 = vld [vmem:[%s43] sm:$0x1]
    %s3643 = scalar_lea.vmem %s43, 1
    %v3644 = vld [vmem:[%s3643] sm:$0x1]
    %v3645 = vmul.f32 %v3458, 0.37796447
    %v3646 = vmul.f32 %v3463, 0.37796447
    %v3648 = vsel %vm147, %v3645, 0
    %v3651 = vsel %vm147, %v3646, 0
    %v3654 = vsel %vm147, %v3546, 0
    %v3657 = vsel %vm147, %v3551, 0
    %3659 = vmatprep.subr.mxu0 0.0
    %3660 = vmatpush1.xpose.msra.mxu0 %v3654
    %3661 = vmatprep.subr.mxu0 0.0
    %3662 = vmatpush1.xpose.msra.mxu0 %v3657
    %3663 = vmatprep.subr.mxu0 0.0
    %3664 = vmatpush1.xpose.msra.mxu0 0.0
    %3665 = vmatprep.subr.mxu0 0.0
    %3666 = vmatpush1.xpose.msra.mxu0 0.0
    %3667 = vmatprep.subr.mxu0 0.0
    %3668 = vmatpush1.xpose.msra.mxu0 0.0
    %3669 = vmatprep.subr.mxu0 0.0
    %3670 = vmatpush1.xpose.msra.mxu0 0.0
    %3671 = vmatprep.subr.mxu0 0.0
    %3672 = vmatpush1.xpose.msra.mxu0 0.0
    %3673 = vmatprep.subr.mxu0 0.0
    %3674 = vmatpush1.xpose.msra.mxu0 0.0
    %3675 = vmatprep.subr.mxu0 0.0
    %3676 = vmatpush1.xpose.msra.mxu0 0.0
    %3677 = vmatprep.subr.mxu0 0.0
    %3678 = vmatpush1.xpose.msra.mxu0 0.0
    %3679 = vmatprep.subr.mxu0 0.0
    %3680 = vmatpush1.xpose.msra.mxu0 0.0
    %3681 = vmatprep.subr.mxu0 0.0
    %3682 = vmatpush1.xpose.msra.mxu0 0.0
    %3683 = vmatprep.subr.mxu0 0.0
    %3684 = vmatpush1.xpose.msra.mxu0 0.0
    %3685 = vmatprep.subr.mxu0 0.0
    %3686 = vmatpush1.xpose.msra.mxu0 0.0
    %3687 = vmatprep.subr.mxu0 0.0
    %3688 = vmatpush1.xpose.msra.mxu0 0.0
    %3689 = vmatprep.subr.mxu0 0.0
    %3690 = vmatpush1.xpose.msra.mxu0 0.0
    %3691 = vmatprep.subr.mxu0 0.0
    %3692 = vmatpush1.xpose.msra.mxu0 0.0
    %3693 = vmatprep.subr.mxu0 0.0
    %3694 = vmatpush1.xpose.msra.mxu0 0.0
    %3695 = vmatprep.subr.mxu0 0.0
    %3696 = vmatpush1.xpose.msra.mxu0 0.0
    %3697 = vmatprep.subr.mxu0 0.0
    %3698 = vmatpush1.xpose.msra.mxu0 0.0
    %3699 = vmatprep.subr.mxu0 0.0
    %3700 = vmatpush1.xpose.msra.mxu0 0.0
    %3701 = vmatprep.subr.mxu0 0.0
    %3702 = vmatpush1.xpose.msra.mxu0 0.0
    %3703 = vmatprep.subr.mxu0 0.0
    %3704 = vmatpush1.xpose.msra.mxu0 0.0
    %3705 = vmatprep.subr.mxu0 0.0
    %3706 = vmatpush1.xpose.msra.mxu0 0.0
    %3707 = vmatprep.subr.mxu0 0.0
    %3708 = vmatpush1.xpose.msra.mxu0 0.0
    %3709 = vmatprep.subr.mxu0 0.0
    %3710 = vmatpush1.xpose.msra.mxu0 0.0
    %3711 = vmatprep.subr.mxu0 0.0
    %3712 = vmatpush1.xpose.msra.mxu0 0.0
    %3713 = vmatprep.subr.mxu0 0.0
    %3714 = vmatpush1.xpose.msra.mxu0 0.0
    %3715 = vmatprep.subr.mxu0 0.0
    %3716 = vmatpush1.xpose.msra.mxu0 0.0
    %3717 = vmatprep.subr.mxu0 0.0
    %3718 = vmatpush1.xpose.msra.mxu0 0.0
    %3719 = vmatprep.subr.mxu0 0.0
    %3720 = vmatpush1.xpose.msra.mxu0 0.0
    %3721 = vmatprep.subr.mxu0 0.0
    %3722 = vmatpush1.xpose.msra.mxu0 0.0
    %3723 = vmatprep.mubr.f32.mxu0 0.0
    %3724 = vmatmul.mubr.f32.gmra.mrb[0].mxu0 %v3648
    %v3725 = vpop.f32.mrb[0].mxu0
    %v3726 = vadd.f32 %v3370, %v3725
    %v3727 = vpop.f32.mrb[0].mxu0
    %3728 = vmatprep.mubr.f32.mxu0 0.0
    %3729 = vmatmul.mubr.f32.gmra.mrb[0].mxu0 %v3651
    %v3730 = vpop.f32.mrb[0].mxu0
    %v3731 = vadd.f32 %v3371, %v3730
    %v3732 = vpop.f32.mrb[0].mxu0
    %3733 = vdwg.mxu0
    %v3735 = vlaneseq
    %v3736 = vshrl.u32 %v3735, 7
    %v3737 = vsub.s32 0, %v3736
    %v3738 = vrot.slane %v3642, %v3737
    %v3740 = vmul.f32 %v3645, %v3738
    %v3741 = vmul.f32 %v3646, %v3738
    %v3742 = vsel %vm147, %v3740, 0.0
    %3743 = vadd.xlane.f32.xlu0 %v3742
    %v3744 = vpop.xlane.xlu0 %3743
    %vm3745 = vcmask 52224
    %v3746 = vsel %vm3745, %v3741, 0.0
    %3747 = vadd.xlane.f32.xlu0 %v3746
    %v3748 = vpop.xlane.xlu0 %3747
    %vm3749 = vcmask 97280
    %v3750 = vsel %vm3749, %v3726, -inf
    %3751 = vmax.xlane.f32.xlu0 %v3750
    %v3752 = vpop.xlane.xlu0 %3751
    %vm3753 = vcmask 93184
    %v3754 = vsel %vm3753, %v3731, -inf
    %3755 = vmax.xlane.f32.xlu0 %v3754
    %v3756 = vpop.xlane.xlu0 %3755
    %v3757 = vmax.f32 %v3752, %v3744
    %v3758 = vmax.f32 %v3756, %v3748
    %v3759 = vsub.f32 %v3726, %v3757
    %v3760 = vsub.f32 %v3731, %v3758
    %v3761 = vmul.f32 %v3759, 1.442695
    %v3762 = vpow.pop %v3761
    %v3763 = vmul.f32 %v3760, 1.442695
    %v3764 = vpow.pop %v3763
    %v3765 = vsub.f32 %v3744, %v3757
    %v3766 = vsub.f32 %v3748, %v3758
    %v3767 = vmul.f32 %v3765, 1.442695
    %v3768 = vpow.pop %v3767
    %v3769 = vmul.f32 %v3766, 1.442695
    %v3770 = vpow.pop %v3769
    %v3771 = vsel %vm3749, %v3762, 0.0
    %3772 = vadd.xlane.f32.xlu0 %v3771
    %v3773 = vpop.xlane.xlu0 %3772
    %v3774 = vsel %vm3753, %v3764, 0.0
    %3775 = vadd.xlane.f32.xlu0 %v3774
    %v3776 = vpop.xlane.xlu0 %3775
    %v3777 = vadd.f32 %v3773, %v3768
    %v3778 = vadd.f32 %v3776, %v3770
    %v3780 = vlaneseq
    %v3781 = vshrl.u32 %v3780, 7
    %v3782 = vsub.s32 0, %v3781
    %v3783 = vrot.slane %v3644, %v3782
    %v3785 = vmul.f32 %v3768, %v3783
    %v3786 = vmul.f32 %v3770, %v3783
    %v3788 = vsel %vm3749, %v3762, 0
    %v3791 = vsel %vm3749, %v3764, 0
    %vm3793 = vcmask 1043456
    %v3795 = vsel %vm3793, %v3639, 0
    %3797 = vmatprep.subr.mxu0 0.0
    %3798 = vmatpush1.msra.mxu0 %v3634
    %3799 = vmatprep.subr.mxu0 0.0
    %3800 = vmatpush1.msra.mxu0 %v3795
    %3801 = vmatprep.subr.mxu0 0.0
    %3802 = vmatpush1.msra.mxu0 0.0
    %3803 = vmatprep.subr.mxu0 0.0
    %3804 = vmatpush1.msra.mxu0 0.0
    %3805 = vmatprep.subr.mxu0 0.0
    %3806 = vmatpush1.msra.mxu0 0.0
    %3807 = vmatprep.subr.mxu0 0.0
    %3808 = vmatpush1.msra.mxu0 0.0
    %3809 = vmatprep.subr.mxu0 0.0
    %3810 = vmatpush1.msra.mxu0 0.0
    %3811 = vmatprep.subr.mxu0 0.0
    %3812 = vmatpush1.msra.mxu0 0.0
    %3813 = vmatprep.subr.mxu0 0.0
    %3814 = vmatpush1.msra.mxu0 0.0
    %3815 = vmatprep.subr.mxu0 0.0
    %3816 = vmatpush1.msra.mxu0 0.0
    %3817 = vmatprep.subr.mxu0 0.0
    %3818 = vmatpush1.msra.mxu0 0.0
    %3819 = vmatprep.subr.mxu0 0.0
    %3820 = vmatpush1.msra.mxu0 0.0
    %3821 = vmatprep.subr.mxu0 0.0
    %3822 = vmatpush1.msra.mxu0 0.0
    %3823 = vmatprep.subr.mxu0 0.0
    %3824 = vmatpush1.msra.mxu0 0.0
    %3825 = vmatprep.subr.mxu0 0.0
    %3826 = vmatpush1.msra.mxu0 0.0
    %3827 = vmatprep.subr.mxu0 0.0
    %3828 = vmatpush1.msra.mxu0 0.0
    %3829 = vmatprep.subr.mxu0 0.0
    %3830 = vmatpush1.msra.mxu0 0.0
    %3831 = vmatprep.subr.mxu0 0.0
    %3832 = vmatpush1.msra.mxu0 0.0
    %3833 = vmatprep.subr.mxu0 0.0
    %3834 = vmatpush1.msra.mxu0 0.0
    %3835 = vmatprep.subr.mxu0 0.0
    %3836 = vmatpush1.msra.mxu0 0.0
    %3837 = vmatprep.subr.mxu0 0.0
    %3838 = vmatpush1.msra.mxu0 0.0
    %3839 = vmatprep.subr.mxu0 0.0
    %3840 = vmatpush1.msra.mxu0 0.0
    %3841 = vmatprep.subr.mxu0 0.0
    %3842 = vmatpush1.msra.mxu0 0.0
    %3843 = vmatprep.subr.mxu0 0.0
    %3844 = vmatpush1.msra.mxu0 0.0
    %3845 = vmatprep.subr.mxu0 0.0
    %3846 = vmatpush1.msra.mxu0 0.0
    %3847 = vmatprep.subr.mxu0 0.0
    %3848 = vmatpush1.msra.mxu0 0.0
    %3849 = vmatprep.subr.mxu0 0.0
    %3850 = vmatpush1.msra.mxu0 0.0
    %3851 = vmatprep.subr.mxu0 0.0
    %3852 = vmatpush1.msra.mxu0 0.0
    %3853 = vmatprep.subr.mxu0 0.0
    %3854 = vmatpush1.msra.mxu0 0.0
    %3855 = vmatprep.subr.mxu0 0.0
    %3856 = vmatpush1.msra.mxu0 0.0
    %3857 = vmatprep.subr.mxu0 0.0
    %3858 = vmatpush1.msra.mxu0 0.0
    %3859 = vmatprep.subr.mxu0 0.0
    %3860 = vmatpush1.msra.mxu0 0.0
    %3861 = vmatprep.mubr.f32.mxu0 0.0
    %3862 = vmatmul.mubr.f32.gmra.mrb[0].mxu0 %v3788
    %v3863 = vpop.f32.mrb[0].mxu0
    %v3864 = vadd.f32 %v3785, %v3863
    %v3865 = vpop.f32.mrb[0].mxu0
    %3866 = vmatprep.mubr.f32.mxu0 0.0
    %3867 = vmatmul.mubr.f32.gmra.mrb[0].mxu0 %v3791
    %v3868 = vpop.f32.mrb[0].mxu0
    %v3869 = vadd.f32 %v3786, %v3868
    %v3870 = vpop.f32.mrb[0].mxu0
    %3871 = vdwg.mxu0
    %v3872 = vrcp.pop %v3777
    %v3873 = vmul.f32 %v3864, %v3872
    %v3874 = vrcp.pop %v3778
    %v3875 = vmul.f32 %v3869, %v3874
    %s3876 = scalar_lea.vmem %s39, 24
    %v3877 = vld [vmem:[%s3876] sm:$0x7f]
    %s3878 = scalar_lea.vmem %s41, 3
    %v3879 = vld [vmem:[%s3878] sm:$0x1]
    %v3881 = vlaneseq
    %v3882 = vshrl.u32 %v3881, 7
    %v3883 = vsub.s32 0, %v3882
    %v3884 = vrot.slane %v3879, %v3883
    %v3887 = vsel %vm147, %v3873, 0
    %v3890 = vsel %vm147, %v3875, 0
    %v3893 = vsel %vm154, %v3877, 0
    %3895 = vmatprep.subr.mxu0 0.0
    %3896 = vmatpush1.msra.mxu0 %v3893
    %3897 = vmatprep.subr.mxu0 0.0
    %3898 = vmatpush1.msra.mxu0 0.0
    %3899 = vmatprep.subr.mxu0 0.0
    %3900 = vmatpush1.msra.mxu0 0.0
    %3901 = vmatprep.subr.mxu0 0.0
    %3902 = vmatpush1.msra.mxu0 0.0
    %3903 = vmatprep.subr.mxu0 0.0
    %3904 = vmatpush1.msra.mxu0 0.0
    %3905 = vmatprep.subr.mxu0 0.0
    %3906 = vmatpush1.msra.mxu0 0.0
    %3907 = vmatprep.subr.mxu0 0.0
    %3908 = vmatpush1.msra.mxu0 0.0
    %3909 = vmatprep.subr.mxu0 0.0
    %3910 = vmatpush1.msra.mxu0 0.0
    %3911 = vmatprep.subr.mxu0 0.0
    %3912 = vmatpush1.msra.mxu0 0.0
    %3913 = vmatprep.subr.mxu0 0.0
    %3914 = vmatpush1.msra.mxu0 0.0
    %3915 = vmatprep.subr.mxu0 0.0
    %3916 = vmatpush1.msra.mxu0 0.0
    %3917 = vmatprep.subr.mxu0 0.0
    %3918 = vmatpush1.msra.mxu0 0.0
    %3919 = vmatprep.subr.mxu0 0.0
    %3920 = vmatpush1.msra.mxu0 0.0
    %3921 = vmatprep.subr.mxu0 0.0
    %3922 = vmatpush1.msra.mxu0 0.0
    %3923 = vmatprep.subr.mxu0 0.0
    %3924 = vmatpush1.msra.mxu0 0.0
    %3925 = vmatprep.subr.mxu0 0.0
    %3926 = vmatpush1.msra.mxu0 0.0
    %3927 = vmatprep.subr.mxu0 0.0
    %3928 = vmatpush1.msra.mxu0 0.0
    %3929 = vmatprep.subr.mxu0 0.0
    %3930 = vmatpush1.msra.mxu0 0.0
    %3931 = vmatprep.subr.mxu0 0.0
    %3932 = vmatpush1.msra.mxu0 0.0
    %3933 = vmatprep.subr.mxu0 0.0
    %3934 = vmatpush1.msra.mxu0 0.0
    %3935 = vmatprep.subr.mxu0 0.0
    %3936 = vmatpush1.msra.mxu0 0.0
    %3937 = vmatprep.subr.mxu0 0.0
    %3938 = vmatpush1.msra.mxu0 0.0
    %3939 = vmatprep.subr.mxu0 0.0
    %3940 = vmatpush1.msra.mxu0 0.0
    %3941 = vmatprep.subr.mxu0 0.0
    %3942 = vmatpush1.msra.mxu0 0.0
    %3943 = vmatprep.subr.mxu0 0.0
    %3944 = vmatpush1.msra.mxu0 0.0
    %3945 = vmatprep.subr.mxu0 0.0
    %3946 = vmatpush1.msra.mxu0 0.0
    %3947 = vmatprep.subr.mxu0 0.0
    %3948 = vmatpush1.msra.mxu0 0.0
    %3949 = vmatprep.subr.mxu0 0.0
    %3950 = vmatpush1.msra.mxu0 0.0
    %3951 = vmatprep.subr.mxu0 0.0
    %3952 = vmatpush1.msra.mxu0 0.0
    %3953 = vmatprep.subr.mxu0 0.0
    %3954 = vmatpush1.msra.mxu0 0.0
    %3955 = vmatprep.subr.mxu0 0.0
    %3956 = vmatpush1.msra.mxu0 0.0
    %3957 = vmatprep.subr.mxu0 0.0
    %3958 = vmatpush1.msra.mxu0 0.0
    %3959 = vmatprep.mubr.f32.mxu0 0.0
    %3960 = vmatmul.mubr.f32.gmra.mrb[0].mxu0 %v3887
    %v3961 = vpop.f32.mrb[0].mxu0
    %v3962 = vadd.f32 %v3884, %v3961
    %v3963 = vpop.f32.mrb[0].mxu0
    %3964 = vmatprep.mubr.f32.mxu0 0.0
    %3965 = vmatmul.mubr.f32.gmra.mrb[0].mxu0 %v3890
    %v3966 = vpop.f32.mrb[0].mxu0
    %v3967 = vadd.f32 %v3884, %v3966
    %v3968 = vpop.f32.mrb[0].mxu0
    %3969 = vdwg.mxu0
    %v3970 = vadd.f32 %v3962, %v3368
    %v3971 = vadd.f32 %v3967, %v3369
    %v3972 = vld [vmem:[%s59] sm:$0x1]
    %s3973 = scalar_lea.vmem %s59, 1
    %v3974 = vld [vmem:[%s3973] sm:$0x1]
    %v3975 = vsel %vm147, %v3970, 0.0
    %3976 = vadd.xlane.f32.xlu0 %v3975
    %v3977 = vpop.xlane.xlu0 %3976
    %v3978 = vsel %vm3745, %v3971, 0.0
    %3979 = vadd.xlane.f32.xlu0 %v3978
    %v3980 = vpop.xlane.xlu0 %3979
    %v3981 = vmul.f32 %v3977, %v742
    %v3982 = vmul.f32 %v3980, %v742
    %v3983 = vsub.f32 %v3970, %v3981
    %v3984 = vsub.f32 %v3971, %v3982
    %v3985 = vmul.f32 %v3983, %v3983
    %v3986 = vmul.f32 %v3984, %v3984
    %v3987 = vsel %vm147, %v3985, 0.0
    %3988 = vadd.xlane.f32.xlu0 %v3987
    %v3989 = vpop.xlane.xlu0 %3988
    %v3990 = vsel %vm3745, %v3986, 0.0
    %3991 = vadd.xlane.f32.xlu0 %v3990
    %v3992 = vpop.xlane.xlu0 %3991
    %v3993 = vmul.f32 %v3989, %v742
    %v3994 = vmul.f32 %v3992, %v742
    %v3995 = vadd.f32 %v3993, 1e-05
    %v3996 = vadd.f32 %v3994, 1e-05
    %v3997 = vrsqrt.pop %v3995
    %v3998 = vrsqrt.pop %v3996
    %v3999 = vmul.f32 %v3983, %v3997
    %v4000 = vmul.f32 %v3984, %v3998
    %v4002 = vlaneseq
    %v4003 = vshrl.u32 %v4002, 7
    %v4004 = vsub.s32 0, %v4003
    %v4005 = vrot.slane %v3972, %v4004
    %v4007 = vmul.f32 %v3999, %v4005
    %v4008 = vmul.f32 %v4000, %v4005
    %v4010 = vlaneseq
    %v4011 = vshrl.u32 %v4010, 7
    %v4012 = vsub.s32 0, %v4011
    %v4013 = vrot.slane %v3974, %v4012
    %v4015 = vadd.f32 %v4007, %v4013
    %v4016 = vadd.f32 %v4008, %v4013
    %v4017 = vld [vmem:[%s45] sm:$0x7f]
    %v4018 = vld [vmem:[%s47] sm:$0x1]
    %v4020 = vlaneseq
    %v4021 = vshrl.u32 %v4020, 7
    %v4022 = vsub.s32 0, %v4021
    %v4023 = vrot.slane %v4018, %v4022
    %v4026 = vsel %vm147, %v4015, 0
    %v4029 = vsel %vm147, %v4016, 0
    %v4032 = vsel %vm154, %v4017, 0
    %4034 = vmatprep.subr.mxu0 0.0
    %4035 = vmatpush1.msra.mxu0 %v4032
    %4036 = vmatprep.subr.mxu0 0.0
    %4037 = vmatpush1.msra.mxu0 0.0
    %4038 = vmatprep.subr.mxu0 0.0
    %4039 = vmatpush1.msra.mxu0 0.0
    %4040 = vmatprep.subr.mxu0 0.0
    %4041 = vmatpush1.msra.mxu0 0.0
    %4042 = vmatprep.subr.mxu0 0.0
    %4043 = vmatpush1.msra.mxu0 0.0
    %4044 = vmatprep.subr.mxu0 0.0
    %4045 = vmatpush1.msra.mxu0 0.0
    %4046 = vmatprep.subr.mxu0 0.0
    %4047 = vmatpush1.msra.mxu0 0.0
    %4048 = vmatprep.subr.mxu0 0.0
    %4049 = vmatpush1.msra.mxu0 0.0
    %4050 = vmatprep.subr.mxu0 0.0
    %4051 = vmatpush1.msra.mxu0 0.0
    %4052 = vmatprep.subr.mxu0 0.0
    %4053 = vmatpush1.msra.mxu0 0.0
    %4054 = vmatprep.subr.mxu0 0.0
    %4055 = vmatpush1.msra.mxu0 0.0
    %4056 = vmatprep.subr.mxu0 0.0
    %4057 = vmatpush1.msra.mxu0 0.0
    %4058 = vmatprep.subr.mxu0 0.0
    %4059 = vmatpush1.msra.mxu0 0.0
    %4060 = vmatprep.subr.mxu0 0.0
    %4061 = vmatpush1.msra.mxu0 0.0
    %4062 = vmatprep.subr.mxu0 0.0
    %4063 = vmatpush1.msra.mxu0 0.0
    %4064 = vmatprep.subr.mxu0 0.0
    %4065 = vmatpush1.msra.mxu0 0.0
    %4066 = vmatprep.subr.mxu0 0.0
    %4067 = vmatpush1.msra.mxu0 0.0
    %4068 = vmatprep.subr.mxu0 0.0
    %4069 = vmatpush1.msra.mxu0 0.0
    %4070 = vmatprep.subr.mxu0 0.0
    %4071 = vmatpush1.msra.mxu0 0.0
    %4072 = vmatprep.subr.mxu0 0.0
    %4073 = vmatpush1.msra.mxu0 0.0
    %4074 = vmatprep.subr.mxu0 0.0
    %4075 = vmatpush1.msra.mxu0 0.0
    %4076 = vmatprep.subr.mxu0 0.0
    %4077 = vmatpush1.msra.mxu0 0.0
    %4078 = vmatprep.subr.mxu0 0.0
    %4079 = vmatpush1.msra.mxu0 0.0
    %4080 = vmatprep.subr.mxu0 0.0
    %4081 = vmatpush1.msra.mxu0 0.0
    %4082 = vmatprep.subr.mxu0 0.0
    %4083 = vmatpush1.msra.mxu0 0.0
    %4084 = vmatprep.subr.mxu0 0.0
    %4085 = vmatpush1.msra.mxu0 0.0
    %4086 = vmatprep.subr.mxu0 0.0
    %4087 = vmatpush1.msra.mxu0 0.0
    %4088 = vmatprep.subr.mxu0 0.0
    %4089 = vmatpush1.msra.mxu0 0.0
    %4090 = vmatprep.subr.mxu0 0.0
    %4091 = vmatpush1.msra.mxu0 0.0
    %4092 = vmatprep.subr.mxu0 0.0
    %4093 = vmatpush1.msra.mxu0 0.0
    %4094 = vmatprep.subr.mxu0 0.0
    %4095 = vmatpush1.msra.mxu0 0.0
    %4096 = vmatprep.subr.mxu0 0.0
    %4097 = vmatpush1.msra.mxu0 0.0
    %4098 = vmatprep.mubr.f32.mxu0 0.0
    %4099 = vmatmul.mubr.f32.gmra.mrb[0].mxu0 %v4026
    %v4100 = vpop.f32.mrb[0].mxu0
    %v4101 = vadd.f32 %v4023, %v4100
    %v4102 = vpop.f32.mrb[0].mxu0
    %4103 = vmatprep.mubr.f32.mxu0 0.0
    %4104 = vmatmul.mubr.f32.gmra.mrb[0].mxu0 %v4029
    %v4105 = vpop.f32.mrb[0].mxu0
    %v4106 = vadd.f32 %v4023, %v4105
    %v4107 = vpop.f32.mrb[0].mxu0
    %4108 = vdwg.mxu0
    %s4109 = scalar_lea.vmem %s45, 8
    %v4110 = vld [vmem:[%s4109] sm:$0x7f]
    %s4111 = scalar_lea.vmem %s47, 1
    %v4112 = vld [vmem:[%s4111] sm:$0x1]
    %v4114 = vlaneseq
    %v4115 = vshrl.u32 %v4114, 7
    %v4116 = vsub.s32 0, %v4115
    %v4117 = vrot.slane %v4112, %v4116
    %v4120 = vsel %vm154, %v4110, 0
    %4122 = vmatprep.subr.mxu0 0.0
    %4123 = vmatpush1.msra.mxu0 %v4120
    %4124 = vmatprep.subr.mxu0 0.0
    %4125 = vmatpush1.msra.mxu0 0.0
    %4126 = vmatprep.subr.mxu0 0.0
    %4127 = vmatpush1.msra.mxu0 0.0
    %4128 = vmatprep.subr.mxu0 0.0
    %4129 = vmatpush1.msra.mxu0 0.0
    %4130 = vmatprep.subr.mxu0 0.0
    %4131 = vmatpush1.msra.mxu0 0.0
    %4132 = vmatprep.subr.mxu0 0.0
    %4133 = vmatpush1.msra.mxu0 0.0
    %4134 = vmatprep.subr.mxu0 0.0
    %4135 = vmatpush1.msra.mxu0 0.0
    %4136 = vmatprep.subr.mxu0 0.0
    %4137 = vmatpush1.msra.mxu0 0.0
    %4138 = vmatprep.subr.mxu0 0.0
    %4139 = vmatpush1.msra.mxu0 0.0
    %4140 = vmatprep.subr.mxu0 0.0
    %4141 = vmatpush1.msra.mxu0 0.0
    %4142 = vmatprep.subr.mxu0 0.0
    %4143 = vmatpush1.msra.mxu0 0.0
    %4144 = vmatprep.subr.mxu0 0.0
    %4145 = vmatpush1.msra.mxu0 0.0
    %4146 = vmatprep.subr.mxu0 0.0
    %4147 = vmatpush1.msra.mxu0 0.0
    %4148 = vmatprep.subr.mxu0 0.0
    %4149 = vmatpush1.msra.mxu0 0.0
    %4150 = vmatprep.subr.mxu0 0.0
    %4151 = vmatpush1.msra.mxu0 0.0
    %4152 = vmatprep.subr.mxu0 0.0
    %4153 = vmatpush1.msra.mxu0 0.0
    %4154 = vmatprep.subr.mxu0 0.0
    %4155 = vmatpush1.msra.mxu0 0.0
    %4156 = vmatprep.subr.mxu0 0.0
    %4157 = vmatpush1.msra.mxu0 0.0
    %4158 = vmatprep.subr.mxu0 0.0
    %4159 = vmatpush1.msra.mxu0 0.0
    %4160 = vmatprep.subr.mxu0 0.0
    %4161 = vmatpush1.msra.mxu0 0.0
    %4162 = vmatprep.subr.mxu0 0.0
    %4163 = vmatpush1.msra.mxu0 0.0
    %4164 = vmatprep.subr.mxu0 0.0
    %4165 = vmatpush1.msra.mxu0 0.0
    %4166 = vmatprep.subr.mxu0 0.0
    %4167 = vmatpush1.msra.mxu0 0.0
    %4168 = vmatprep.subr.mxu0 0.0
    %4169 = vmatpush1.msra.mxu0 0.0
    %4170 = vmatprep.subr.mxu0 0.0
    %4171 = vmatpush1.msra.mxu0 0.0
    %4172 = vmatprep.subr.mxu0 0.0
    %4173 = vmatpush1.msra.mxu0 0.0
    %4174 = vmatprep.subr.mxu0 0.0
    %4175 = vmatpush1.msra.mxu0 0.0
    %4176 = vmatprep.subr.mxu0 0.0
    %4177 = vmatpush1.msra.mxu0 0.0
    %4178 = vmatprep.subr.mxu0 0.0
    %4179 = vmatpush1.msra.mxu0 0.0
    %4180 = vmatprep.subr.mxu0 0.0
    %4181 = vmatpush1.msra.mxu0 0.0
    %4182 = vmatprep.subr.mxu0 0.0
    %4183 = vmatpush1.msra.mxu0 0.0
    %4184 = vmatprep.subr.mxu0 0.0
    %4185 = vmatpush1.msra.mxu0 0.0
    %4186 = vmatprep.mubr.f32.mxu0 0.0
    %4187 = vmatmul.mubr.f32.gmra.mrb[0].mxu0 %v2786
    %v4188 = vpop.f32.mrb[0].mxu0
    %v4189 = vadd.f32 %v4117, %v4188
    %v4190 = vpop.f32.mrb[0].mxu0
    %4191 = vmatprep.mubr.f32.mxu0 0.0
    %4192 = vmatmul.mubr.f32.gmra.mrb[0].mxu0 %v2789
    %v4193 = vpop.f32.mrb[0].mxu0
    %v4194 = vadd.f32 %v4117, %v4193
    %v4195 = vpop.f32.mrb[0].mxu0
    %4196 = vdwg.mxu0
    %s4197 = scalar_lea.vmem %s45, 16
    %v4198 = vld [vmem:[%s4197] sm:$0x7f]
    %s4199 = scalar_lea.vmem %s47, 2
    %v4200 = vld [vmem:[%s4199] sm:$0x1]
    %v4202 = vlaneseq
    %v4203 = vshrl.u32 %v4202, 7
    %v4204 = vsub.s32 0, %v4203
    %v4205 = vrot.slane %v4200, %v4204
    %v4208 = vsel %vm154, %v4198, 0
    %4210 = vmatprep.subr.mxu0 0.0
    %4211 = vmatpush1.msra.mxu0 %v4208
    %4212 = vmatprep.subr.mxu0 0.0
    %4213 = vmatpush1.msra.mxu0 0.0
    %4214 = vmatprep.subr.mxu0 0.0
    %4215 = vmatpush1.msra.mxu0 0.0
    %4216 = vmatprep.subr.mxu0 0.0
    %4217 = vmatpush1.msra.mxu0 0.0
    %4218 = vmatprep.subr.mxu0 0.0
    %4219 = vmatpush1.msra.mxu0 0.0
    %4220 = vmatprep.subr.mxu0 0.0
    %4221 = vmatpush1.msra.mxu0 0.0
    %4222 = vmatprep.subr.mxu0 0.0
    %4223 = vmatpush1.msra.mxu0 0.0
    %4224 = vmatprep.subr.mxu0 0.0
    %4225 = vmatpush1.msra.mxu0 0.0
    %4226 = vmatprep.subr.mxu0 0.0
    %4227 = vmatpush1.msra.mxu0 0.0
    %4228 = vmatprep.subr.mxu0 0.0
    %4229 = vmatpush1.msra.mxu0 0.0
    %4230 = vmatprep.subr.mxu0 0.0
    %4231 = vmatpush1.msra.mxu0 0.0
    %4232 = vmatprep.subr.mxu0 0.0
    %4233 = vmatpush1.msra.mxu0 0.0
    %4234 = vmatprep.subr.mxu0 0.0
    %4235 = vmatpush1.msra.mxu0 0.0
    %4236 = vmatprep.subr.mxu0 0.0
    %4237 = vmatpush1.msra.mxu0 0.0
    %4238 = vmatprep.subr.mxu0 0.0
    %4239 = vmatpush1.msra.mxu0 0.0
    %4240 = vmatprep.subr.mxu0 0.0
    %4241 = vmatpush1.msra.mxu0 0.0
    %4242 = vmatprep.subr.mxu0 0.0
    %4243 = vmatpush1.msra.mxu0 0.0
    %4244 = vmatprep.subr.mxu0 0.0
    %4245 = vmatpush1.msra.mxu0 0.0
    %4246 = vmatprep.subr.mxu0 0.0
    %4247 = vmatpush1.msra.mxu0 0.0
    %4248 = vmatprep.subr.mxu0 0.0
    %4249 = vmatpush1.msra.mxu0 0.0
    %4250 = vmatprep.subr.mxu0 0.0
    %4251 = vmatpush1.msra.mxu0 0.0
    %4252 = vmatprep.subr.mxu0 0.0
    %4253 = vmatpush1.msra.mxu0 0.0
    %4254 = vmatprep.subr.mxu0 0.0
    %4255 = vmatpush1.msra.mxu0 0.0
    %4256 = vmatprep.subr.mxu0 0.0
    %4257 = vmatpush1.msra.mxu0 0.0
    %4258 = vmatprep.subr.mxu0 0.0
    %4259 = vmatpush1.msra.mxu0 0.0
    %4260 = vmatprep.subr.mxu0 0.0
    %4261 = vmatpush1.msra.mxu0 0.0
    %4262 = vmatprep.subr.mxu0 0.0
    %4263 = vmatpush1.msra.mxu0 0.0
    %4264 = vmatprep.subr.mxu0 0.0
    %4265 = vmatpush1.msra.mxu0 0.0
    %4266 = vmatprep.subr.mxu0 0.0
    %4267 = vmatpush1.msra.mxu0 0.0
    %4268 = vmatprep.subr.mxu0 0.0
    %4269 = vmatpush1.msra.mxu0 0.0
    %4270 = vmatprep.subr.mxu0 0.0
    %4271 = vmatpush1.msra.mxu0 0.0
    %4272 = vmatprep.subr.mxu0 0.0
    %4273 = vmatpush1.msra.mxu0 0.0
    %4274 = vmatprep.mubr.f32.mxu0 0.0
    %4275 = vmatmul.mubr.f32.gmra.mrb[0].mxu0 %v2786
    %v4276 = vpop.f32.mrb[0].mxu0
    %v4277 = vadd.f32 %v4205, %v4276
    %v4278 = vpop.f32.mrb[0].mxu0
    %4279 = vmatprep.mubr.f32.mxu0 0.0
    %4280 = vmatmul.mubr.f32.gmra.mrb[0].mxu0 %v2789
    %v4281 = vpop.f32.mrb[0].mxu0
    %v4282 = vadd.f32 %v4205, %v4281
    %v4283 = vpop.f32.mrb[0].mxu0
    %4284 = vdwg.mxu0
    %v4285 = vld [vmem:[%s49] sm:$0x1]
    %s4286 = scalar_lea.vmem %s49, 1
    %v4287 = vld [vmem:[%s4286] sm:$0x1]
    %v4288 = vmul.f32 %v4101, 0.37796447
    %v4289 = vmul.f32 %v4106, 0.37796447
    %v4291 = vsel %vm147, %v4288, 0
    %v4294 = vsel %vm147, %v4289, 0
    %v4297 = vsel %vm147, %v4189, 0
    %v4300 = vsel %vm147, %v4194, 0
    %4302 = vmatprep.subr.mxu0 0.0
    %4303 = vmatpush1.xpose.msra.mxu0 %v4297
    %4304 = vmatprep.subr.mxu0 0.0
    %4305 = vmatpush1.xpose.msra.mxu0 %v4300
    %4306 = vmatprep.subr.mxu0 0.0
    %4307 = vmatpush1.xpose.msra.mxu0 0.0
    %4308 = vmatprep.subr.mxu0 0.0
    %4309 = vmatpush1.xpose.msra.mxu0 0.0
    %4310 = vmatprep.subr.mxu0 0.0
    %4311 = vmatpush1.xpose.msra.mxu0 0.0
    %4312 = vmatprep.subr.mxu0 0.0
    %4313 = vmatpush1.xpose.msra.mxu0 0.0
    %4314 = vmatprep.subr.mxu0 0.0
    %4315 = vmatpush1.xpose.msra.mxu0 0.0
    %4316 = vmatprep.subr.mxu0 0.0
    %4317 = vmatpush1.xpose.msra.mxu0 0.0
    %4318 = vmatprep.subr.mxu0 0.0
    %4319 = vmatpush1.xpose.msra.mxu0 0.0
    %4320 = vmatprep.subr.mxu0 0.0
    %4321 = vmatpush1.xpose.msra.mxu0 0.0
    %4322 = vmatprep.subr.mxu0 0.0
    %4323 = vmatpush1.xpose.msra.mxu0 0.0
    %4324 = vmatprep.subr.mxu0 0.0
    %4325 = vmatpush1.xpose.msra.mxu0 0.0
    %4326 = vmatprep.subr.mxu0 0.0
    %4327 = vmatpush1.xpose.msra.mxu0 0.0
    %4328 = vmatprep.subr.mxu0 0.0
    %4329 = vmatpush1.xpose.msra.mxu0 0.0
    %4330 = vmatprep.subr.mxu0 0.0
    %4331 = vmatpush1.xpose.msra.mxu0 0.0
    %4332 = vmatprep.subr.mxu0 0.0
    %4333 = vmatpush1.xpose.msra.mxu0 0.0
    %4334 = vmatprep.subr.mxu0 0.0
    %4335 = vmatpush1.xpose.msra.mxu0 0.0
    %4336 = vmatprep.subr.mxu0 0.0
    %4337 = vmatpush1.xpose.msra.mxu0 0.0
    %4338 = vmatprep.subr.mxu0 0.0
    %4339 = vmatpush1.xpose.msra.mxu0 0.0
    %4340 = vmatprep.subr.mxu0 0.0
    %4341 = vmatpush1.xpose.msra.mxu0 0.0
    %4342 = vmatprep.subr.mxu0 0.0
    %4343 = vmatpush1.xpose.msra.mxu0 0.0
    %4344 = vmatprep.subr.mxu0 0.0
    %4345 = vmatpush1.xpose.msra.mxu0 0.0
    %4346 = vmatprep.subr.mxu0 0.0
    %4347 = vmatpush1.xpose.msra.mxu0 0.0
    %4348 = vmatprep.subr.mxu0 0.0
    %4349 = vmatpush1.xpose.msra.mxu0 0.0
    %4350 = vmatprep.subr.mxu0 0.0
    %4351 = vmatpush1.xpose.msra.mxu0 0.0
    %4352 = vmatprep.subr.mxu0 0.0
    %4353 = vmatpush1.xpose.msra.mxu0 0.0
    %4354 = vmatprep.subr.mxu0 0.0
    %4355 = vmatpush1.xpose.msra.mxu0 0.0
    %4356 = vmatprep.subr.mxu0 0.0
    %4357 = vmatpush1.xpose.msra.mxu0 0.0
    %4358 = vmatprep.subr.mxu0 0.0
    %4359 = vmatpush1.xpose.msra.mxu0 0.0
    %4360 = vmatprep.subr.mxu0 0.0
    %4361 = vmatpush1.xpose.msra.mxu0 0.0
    %4362 = vmatprep.subr.mxu0 0.0
    %4363 = vmatpush1.xpose.msra.mxu0 0.0
    %4364 = vmatprep.subr.mxu0 0.0
    %4365 = vmatpush1.xpose.msra.mxu0 0.0
    %4366 = vmatprep.mubr.f32.mxu0 0.0
    %4367 = vmatmul.mubr.f32.gmra.mrb[0].mxu0 %v4291
    %v4368 = vpop.f32.mrb[0].mxu0
    %v4369 = vadd.f32 %v3372, %v4368
    %v4370 = vpop.f32.mrb[0].mxu0
    %4371 = vmatprep.mubr.f32.mxu0 0.0
    %4372 = vmatmul.mubr.f32.gmra.mrb[0].mxu0 %v4294
    %v4373 = vpop.f32.mrb[0].mxu0
    %v4374 = vadd.f32 %v3373, %v4373
    %v4375 = vpop.f32.mrb[0].mxu0
    %4376 = vdwg.mxu0
    %v4378 = vlaneseq
    %v4379 = vshrl.u32 %v4378, 7
    %v4380 = vsub.s32 0, %v4379
    %v4381 = vrot.slane %v4285, %v4380
    %v4383 = vmul.f32 %v4288, %v4381
    %v4384 = vmul.f32 %v4289, %v4381
    %v4385 = vsel %vm147, %v4383, 0.0
    %4386 = vadd.xlane.f32.xlu0 %v4385
    %v4387 = vpop.xlane.xlu0 %4386
    %v4388 = vsel %vm3745, %v4384, 0.0
    %4389 = vadd.xlane.f32.xlu0 %v4388
    %v4390 = vpop.xlane.xlu0 %4389
    %v4391 = vsel %vm515, %v4369, -inf
    %4392 = vmax.xlane.f32.xlu0 %v4391
    %v4393 = vpop.xlane.xlu0 %4392
    %vm4394 = vcmask 125952
    %v4395 = vsel %vm4394, %v4374, -inf
    %4396 = vmax.xlane.f32.xlu0 %v4395
    %v4397 = vpop.xlane.xlu0 %4396
    %v4398 = vmax.f32 %v4393, %v4387
    %v4399 = vmax.f32 %v4397, %v4390
    %v4400 = vsub.f32 %v4369, %v4398
    %v4401 = vsub.f32 %v4374, %v4399
    %v4402 = vmul.f32 %v4400, 1.442695
    %v4403 = vpow.pop %v4402
    %v4404 = vmul.f32 %v4401, 1.442695
    %v4405 = vpow.pop %v4404
    %v4406 = vsub.f32 %v4387, %v4398
    %v4407 = vsub.f32 %v4390, %v4399
    %v4408 = vmul.f32 %v4406, 1.442695
    %v4409 = vpow.pop %v4408
    %v4410 = vmul.f32 %v4407, 1.442695
    %v4411 = vpow.pop %v4410
    %v4412 = vsel %vm515, %v4403, 0.0
    %4413 = vadd.xlane.f32.xlu0 %v4412
    %v4414 = vpop.xlane.xlu0 %4413
    %v4415 = vsel %vm4394, %v4405, 0.0
    %4416 = vadd.xlane.f32.xlu0 %v4415
    %v4417 = vpop.xlane.xlu0 %4416
    %v4418 = vadd.f32 %v4414, %v4409
    %v4419 = vadd.f32 %v4417, %v4411
    %v4421 = vlaneseq
    %v4422 = vshrl.u32 %v4421, 7
    %v4423 = vsub.s32 0, %v4422
    %v4424 = vrot.slane %v4287, %v4423
    %v4426 = vmul.f32 %v4409, %v4424
    %v4427 = vmul.f32 %v4411, %v4424
    %v4429 = vsel %vm515, %v4403, 0
    %v4432 = vsel %vm515, %v4405, 0
    %4434 = vmatprep.subr.mxu0 0.0
    %4435 = vmatpush1.msra.mxu0 %v4277
    %4436 = vmatprep.subr.mxu0 0.0
    %4437 = vmatpush1.msra.mxu0 %v4282
    %4438 = vmatprep.subr.mxu0 0.0
    %4439 = vmatpush1.msra.mxu0 0.0
    %4440 = vmatprep.subr.mxu0 0.0
    %4441 = vmatpush1.msra.mxu0 0.0
    %4442 = vmatprep.subr.mxu0 0.0
    %4443 = vmatpush1.msra.mxu0 0.0
    %4444 = vmatprep.subr.mxu0 0.0
    %4445 = vmatpush1.msra.mxu0 0.0
    %4446 = vmatprep.subr.mxu0 0.0
    %4447 = vmatpush1.msra.mxu0 0.0
    %4448 = vmatprep.subr.mxu0 0.0
    %4449 = vmatpush1.msra.mxu0 0.0
    %4450 = vmatprep.subr.mxu0 0.0
    %4451 = vmatpush1.msra.mxu0 0.0
    %4452 = vmatprep.subr.mxu0 0.0
    %4453 = vmatpush1.msra.mxu0 0.0
    %4454 = vmatprep.subr.mxu0 0.0
    %4455 = vmatpush1.msra.mxu0 0.0
    %4456 = vmatprep.subr.mxu0 0.0
    %4457 = vmatpush1.msra.mxu0 0.0
    %4458 = vmatprep.subr.mxu0 0.0
    %4459 = vmatpush1.msra.mxu0 0.0
    %4460 = vmatprep.subr.mxu0 0.0
    %4461 = vmatpush1.msra.mxu0 0.0
    %4462 = vmatprep.subr.mxu0 0.0
    %4463 = vmatpush1.msra.mxu0 0.0
    %4464 = vmatprep.subr.mxu0 0.0
    %4465 = vmatpush1.msra.mxu0 0.0
    %4466 = vmatprep.subr.mxu0 0.0
    %4467 = vmatpush1.msra.mxu0 0.0
    %4468 = vmatprep.subr.mxu0 0.0
    %4469 = vmatpush1.msra.mxu0 0.0
    %4470 = vmatprep.subr.mxu0 0.0
    %4471 = vmatpush1.msra.mxu0 0.0
    %4472 = vmatprep.subr.mxu0 0.0
    %4473 = vmatpush1.msra.mxu0 0.0
    %4474 = vmatprep.subr.mxu0 0.0
    %4475 = vmatpush1.msra.mxu0 0.0
    %4476 = vmatprep.subr.mxu0 0.0
    %4477 = vmatpush1.msra.mxu0 0.0
    %4478 = vmatprep.subr.mxu0 0.0
    %4479 = vmatpush1.msra.mxu0 0.0
    %4480 = vmatprep.subr.mxu0 0.0
    %4481 = vmatpush1.msra.mxu0 0.0
    %4482 = vmatprep.subr.mxu0 0.0
    %4483 = vmatpush1.msra.mxu0 0.0
    %4484 = vmatprep.subr.mxu0 0.0
    %4485 = vmatpush1.msra.mxu0 0.0
    %4486 = vmatprep.subr.mxu0 0.0
    %4487 = vmatpush1.msra.mxu0 0.0
    %4488 = vmatprep.subr.mxu0 0.0
    %4489 = vmatpush1.msra.mxu0 0.0
    %4490 = vmatprep.subr.mxu0 0.0
    %4491 = vmatpush1.msra.mxu0 0.0
    %4492 = vmatprep.subr.mxu0 0.0
    %4493 = vmatpush1.msra.mxu0 0.0
    %4494 = vmatprep.subr.mxu0 0.0
    %4495 = vmatpush1.msra.mxu0 0.0
    %4496 = vmatprep.subr.mxu0 0.0
    %4497 = vmatpush1.msra.mxu0 0.0
    %4498 = vmatprep.mubr.f32.mxu0 0.0
    %4499 = vmatmul.mubr.f32.gmra.mrb[0].mxu0 %v4429
    %v4500 = vpop.f32.mrb[0].mxu0
    %v4501 = vadd.f32 %v4426, %v4500
    %v4502 = vpop.f32.mrb[0].mxu0
    %4503 = vmatprep.mubr.f32.mxu0 0.0
    %4504 = vmatmul.mubr.f32.gmra.mrb[0].mxu0 %v4432
    %v4505 = vpop.f32.mrb[0].mxu0
    %v4506 = vadd.f32 %v4427, %v4505
    %v4507 = vpop.f32.mrb[0].mxu0
    %4508 = vdwg.mxu0
    %v4509 = vrcp.pop %v4418
    %v4510 = vmul.f32 %v4501, %v4509
    %v4511 = vrcp.pop %v4419
    %v4512 = vmul.f32 %v4506, %v4511
    %s4513 = scalar_lea.vmem %s45, 24
    %v4514 = vld [vmem:[%s4513] sm:$0x7f]
    %s4515 = scalar_lea.vmem %s47, 3
    %v4516 = vld [vmem:[%s4515] sm:$0x1]
    %v4518 = vlaneseq
    %v4519 = vshrl.u32 %v4518, 7
    %v4520 = vsub.s32 0, %v4519
    %v4521 = vrot.slane %v4516, %v4520
    %v4524 = vsel %vm147, %v4510, 0
    %v4527 = vsel %vm147, %v4512, 0
    %v4530 = vsel %vm154, %v4514, 0
    %4532 = vmatprep.subr.mxu0 0.0
    %4533 = vmatpush1.msra.mxu0 %v4530
    %4534 = vmatprep.subr.mxu0 0.0
    %4535 = vmatpush1.msra.mxu0 0.0
    %4536 = vmatprep.subr.mxu0 0.0
    %4537 = vmatpush1.msra.mxu0 0.0
    %4538 = vmatprep.subr.mxu0 0.0
    %4539 = vmatpush1.msra.mxu0 0.0
    %4540 = vmatprep.subr.mxu0 0.0
    %4541 = vmatpush1.msra.mxu0 0.0
    %4542 = vmatprep.subr.mxu0 0.0
    %4543 = vmatpush1.msra.mxu0 0.0
    %4544 = vmatprep.subr.mxu0 0.0
    %4545 = vmatpush1.msra.mxu0 0.0
    %4546 = vmatprep.subr.mxu0 0.0
    %4547 = vmatpush1.msra.mxu0 0.0
    %4548 = vmatprep.subr.mxu0 0.0
    %4549 = vmatpush1.msra.mxu0 0.0
    %4550 = vmatprep.subr.mxu0 0.0
    %4551 = vmatpush1.msra.mxu0 0.0
    %4552 = vmatprep.subr.mxu0 0.0
    %4553 = vmatpush1.msra.mxu0 0.0
    %4554 = vmatprep.subr.mxu0 0.0
    %4555 = vmatpush1.msra.mxu0 0.0
    %4556 = vmatprep.subr.mxu0 0.0
    %4557 = vmatpush1.msra.mxu0 0.0
    %4558 = vmatprep.subr.mxu0 0.0
    %4559 = vmatpush1.msra.mxu0 0.0
    %4560 = vmatprep.subr.mxu0 0.0
    %4561 = vmatpush1.msra.mxu0 0.0
    %4562 = vmatprep.subr.mxu0 0.0
    %4563 = vmatpush1.msra.mxu0 0.0
    %4564 = vmatprep.subr.mxu0 0.0
    %4565 = vmatpush1.msra.mxu0 0.0
    %4566 = vmatprep.subr.mxu0 0.0
    %4567 = vmatpush1.msra.mxu0 0.0
    %4568 = vmatprep.subr.mxu0 0.0
    %4569 = vmatpush1.msra.mxu0 0.0
    %4570 = vmatprep.subr.mxu0 0.0
    %4571 = vmatpush1.msra.mxu0 0.0
    %4572 = vmatprep.subr.mxu0 0.0
    %4573 = vmatpush1.msra.mxu0 0.0
    %4574 = vmatprep.subr.mxu0 0.0
    %4575 = vmatpush1.msra.mxu0 0.0
    %4576 = vmatprep.subr.mxu0 0.0
    %4577 = vmatpush1.msra.mxu0 0.0
    %4578 = vmatprep.subr.mxu0 0.0
    %4579 = vmatpush1.msra.mxu0 0.0
    %4580 = vmatprep.subr.mxu0 0.0
    %4581 = vmatpush1.msra.mxu0 0.0
    %4582 = vmatprep.subr.mxu0 0.0
    %4583 = vmatpush1.msra.mxu0 0.0
    %4584 = vmatprep.subr.mxu0 0.0
    %4585 = vmatpush1.msra.mxu0 0.0
    %4586 = vmatprep.subr.mxu0 0.0
    %4587 = vmatpush1.msra.mxu0 0.0
    %4588 = vmatprep.subr.mxu0 0.0
    %4589 = vmatpush1.msra.mxu0 0.0
    %4590 = vmatprep.subr.mxu0 0.0
    %4591 = vmatpush1.msra.mxu0 0.0
    %4592 = vmatprep.subr.mxu0 0.0
    %4593 = vmatpush1.msra.mxu0 0.0
    %4594 = vmatprep.subr.mxu0 0.0
    %4595 = vmatpush1.msra.mxu0 0.0
    %4596 = vmatprep.mubr.f32.mxu0 0.0
    %4597 = vmatmul.mubr.f32.gmra.mrb[0].mxu0 %v4524
    %v4598 = vpop.f32.mrb[0].mxu0
    %v4599 = vadd.f32 %v4521, %v4598
    %v4600 = vpop.f32.mrb[0].mxu0
    %4601 = vmatprep.mubr.f32.mxu0 0.0
    %4602 = vmatmul.mubr.f32.gmra.mrb[0].mxu0 %v4527
    %v4603 = vpop.f32.mrb[0].mxu0
    %v4604 = vadd.f32 %v4521, %v4603
    %v4605 = vpop.f32.mrb[0].mxu0
    %4606 = vdwg.mxu0
    %v4607 = vadd.f32 %v4599, %v4015
    %v4608 = vadd.f32 %v4604, %v4016
    %s4609 = scalar_lea.vmem %s59, 2
    %v4610 = vld [vmem:[%s4609] sm:$0x1]
    %s4611 = scalar_lea.vmem %s59, 3
    %v4612 = vld [vmem:[%s4611] sm:$0x1]
    %v4613 = vsel %vm147, %v4607, 0.0
    %4614 = vadd.xlane.f32.xlu0 %v4613
    %v4615 = vpop.xlane.xlu0 %4614
    %v4616 = vsel %vm3745, %v4608, 0.0
    %4617 = vadd.xlane.f32.xlu0 %v4616
    %v4618 = vpop.xlane.xlu0 %4617
    %v4619 = vmul.f32 %v4615, %v742
    %v4620 = vmul.f32 %v4618, %v742
    %v4621 = vsub.f32 %v4607, %v4619
    %v4622 = vsub.f32 %v4608, %v4620
    %v4623 = vmul.f32 %v4621, %v4621
    %v4624 = vmul.f32 %v4622, %v4622
    %v4625 = vsel %vm147, %v4623, 0.0
    %4626 = vadd.xlane.f32.xlu0 %v4625
    %v4627 = vpop.xlane.xlu0 %4626
    %v4628 = vsel %vm3745, %v4624, 0.0
    %4629 = vadd.xlane.f32.xlu0 %v4628
    %v4630 = vpop.xlane.xlu0 %4629
    %v4631 = vmul.f32 %v4627, %v742
    %v4632 = vmul.f32 %v4630, %v742
    %v4633 = vadd.f32 %v4631, 1e-05
    %v4634 = vadd.f32 %v4632, 1e-05
    %v4635 = vrsqrt.pop %v4633
    %v4636 = vrsqrt.pop %v4634
    %v4637 = vmul.f32 %v4621, %v4635
    %v4638 = vmul.f32 %v4622, %v4636
    %v4640 = vlaneseq
    %v4641 = vshrl.u32 %v4640, 7
    %v4642 = vsub.s32 0, %v4641
    %v4643 = vrot.slane %v4610, %v4642
    %v4645 = vmul.f32 %v4637, %v4643
    %v4646 = vmul.f32 %v4638, %v4643
    %v4648 = vlaneseq
    %v4649 = vshrl.u32 %v4648, 7
    %v4650 = vsub.s32 0, %v4649
    %v4651 = vrot.slane %v4612, %v4650
    %v4653 = vadd.f32 %v4645, %v4651
    %v4654 = vadd.f32 %v4646, %v4651
    %v4655 = vld [vmem:[%s51] sm:$0x7f]
    %v4656 = vld [vmem:[%s53] sm:$0x1]
    %v4658 = vlaneseq
    %v4659 = vshrl.u32 %v4658, 7
    %v4660 = vsub.s32 0, %v4659
    %v4661 = vrot.slane %v4656, %v4660
    %v4664 = vsel %vm147, %v4653, 0
    %v4667 = vsel %vm147, %v4654, 0
    %v4670 = vsel %vm154, %v4655, 0
    %4672 = vmatprep.subr.mxu0 0.0
    %4673 = vmatpush1.msra.mxu0 %v4670
    %4674 = vmatprep.subr.mxu0 0.0
    %4675 = vmatpush1.msra.mxu0 0.0
    %4676 = vmatprep.subr.mxu0 0.0
    %4677 = vmatpush1.msra.mxu0 0.0
    %4678 = vmatprep.subr.mxu0 0.0
    %4679 = vmatpush1.msra.mxu0 0.0
    %4680 = vmatprep.subr.mxu0 0.0
    %4681 = vmatpush1.msra.mxu0 0.0
    %4682 = vmatprep.subr.mxu0 0.0
    %4683 = vmatpush1.msra.mxu0 0.0
    %4684 = vmatprep.subr.mxu0 0.0
    %4685 = vmatpush1.msra.mxu0 0.0
    %4686 = vmatprep.subr.mxu0 0.0
    %4687 = vmatpush1.msra.mxu0 0.0
    %4688 = vmatprep.subr.mxu0 0.0
    %4689 = vmatpush1.msra.mxu0 0.0
    %4690 = vmatprep.subr.mxu0 0.0
    %4691 = vmatpush1.msra.mxu0 0.0
    %4692 = vmatprep.subr.mxu0 0.0
    %4693 = vmatpush1.msra.mxu0 0.0
    %4694 = vmatprep.subr.mxu0 0.0
    %4695 = vmatpush1.msra.mxu0 0.0
    %4696 = vmatprep.subr.mxu0 0.0
    %4697 = vmatpush1.msra.mxu0 0.0
    %4698 = vmatprep.subr.mxu0 0.0
    %4699 = vmatpush1.msra.mxu0 0.0
    %4700 = vmatprep.subr.mxu0 0.0
    %4701 = vmatpush1.msra.mxu0 0.0
    %4702 = vmatprep.subr.mxu0 0.0
    %4703 = vmatpush1.msra.mxu0 0.0
    %4704 = vmatprep.subr.mxu0 0.0
    %4705 = vmatpush1.msra.mxu0 0.0
    %4706 = vmatprep.subr.mxu0 0.0
    %4707 = vmatpush1.msra.mxu0 0.0
    %4708 = vmatprep.subr.mxu0 0.0
    %4709 = vmatpush1.msra.mxu0 0.0
    %4710 = vmatprep.subr.mxu0 0.0
    %4711 = vmatpush1.msra.mxu0 0.0
    %4712 = vmatprep.subr.mxu0 0.0
    %4713 = vmatpush1.msra.mxu0 0.0
    %4714 = vmatprep.subr.mxu0 0.0
    %4715 = vmatpush1.msra.mxu0 0.0
    %4716 = vmatprep.subr.mxu0 0.0
    %4717 = vmatpush1.msra.mxu0 0.0
    %4718 = vmatprep.subr.mxu0 0.0
    %4719 = vmatpush1.msra.mxu0 0.0
    %4720 = vmatprep.subr.mxu0 0.0
    %4721 = vmatpush1.msra.mxu0 0.0
    %4722 = vmatprep.subr.mxu0 0.0
    %4723 = vmatpush1.msra.mxu0 0.0
    %4724 = vmatprep.subr.mxu0 0.0
    %4725 = vmatpush1.msra.mxu0 0.0
    %4726 = vmatprep.subr.mxu0 0.0
    %4727 = vmatpush1.msra.mxu0 0.0
    %4728 = vmatprep.subr.mxu0 0.0
    %4729 = vmatpush1.msra.mxu0 0.0
    %4730 = vmatprep.subr.mxu0 0.0
    %4731 = vmatpush1.msra.mxu0 0.0
    %4732 = vmatprep.subr.mxu0 0.0
    %4733 = vmatpush1.msra.mxu0 0.0
    %4734 = vmatprep.subr.mxu0 0.0
    %4735 = vmatpush1.msra.mxu0 0.0
    %4736 = vmatprep.mubr.f32.mxu0 0.0
    %4737 = vmatmul.mubr.f32.gmra.mrb[0].mxu0 %v4664
    %v4738 = vpop.f32.mrb[0].mxu0
    %v4739 = vadd.f32 %v4661, %v4738
    %v4740 = vpop.f32.mrb[0].mxu0
    %4741 = vmatprep.mubr.f32.mxu0 0.0
    %4742 = vmatmul.mubr.f32.gmra.mrb[0].mxu0 %v4667
    %v4743 = vpop.f32.mrb[0].mxu0
    %v4744 = vadd.f32 %v4661, %v4743
    %v4745 = vpop.f32.mrb[0].mxu0
    %4746 = vdwg.mxu0
    %v4747 = vmax.f32 %v4739, 0.0
    %v4748 = vmax.f32 %v4744, 0.0
    %v4749 = vld [vmem:[%s55] sm:$0x7]
    %v4750 = vld [vmem:[%s57] sm:$0x1]
    %v4752 = vlaneseq
    %v4753 = vshrl.u32 %v4752, 7
    %v4754 = vsub.s32 0, %v4753
    %v4755 = vrot.slane %v4750, %v4754
    %v4758 = vsel %vm881, %v4747, 0
    %v4761 = vsel %vm881, %v4748, 0
    %v4764 = vsel %vm888, %v4749, 0
    %4766 = vmatprep.subr.mxu0 0.0
    %4767 = vmatpush1.msra.mxu0 %v4764
    %4768 = vmatprep.subr.mxu0 0.0
    %4769 = vmatpush1.msra.mxu0 0.0
    %4770 = vmatprep.subr.mxu0 0.0
    %4771 = vmatpush1.msra.mxu0 0.0
    %4772 = vmatprep.subr.mxu0 0.0
    %4773 = vmatpush1.msra.mxu0 0.0
    %4774 = vmatprep.subr.mxu0 0.0
    %4775 = vmatpush1.msra.mxu0 0.0
    %4776 = vmatprep.subr.mxu0 0.0
    %4777 = vmatpush1.msra.mxu0 0.0
    %4778 = vmatprep.subr.mxu0 0.0
    %4779 = vmatpush1.msra.mxu0 0.0
    %4780 = vmatprep.subr.mxu0 0.0
    %4781 = vmatpush1.msra.mxu0 0.0
    %4782 = vmatprep.subr.mxu0 0.0
    %4783 = vmatpush1.msra.mxu0 0.0
    %4784 = vmatprep.subr.mxu0 0.0
    %4785 = vmatpush1.msra.mxu0 0.0
    %4786 = vmatprep.subr.mxu0 0.0
    %4787 = vmatpush1.msra.mxu0 0.0
    %4788 = vmatprep.subr.mxu0 0.0
    %4789 = vmatpush1.msra.mxu0 0.0
    %4790 = vmatprep.subr.mxu0 0.0
    %4791 = vmatpush1.msra.mxu0 0.0
    %4792 = vmatprep.subr.mxu0 0.0
    %4793 = vmatpush1.msra.mxu0 0.0
    %4794 = vmatprep.subr.mxu0 0.0
    %4795 = vmatpush1.msra.mxu0 0.0
    %4796 = vmatprep.subr.mxu0 0.0
    %4797 = vmatpush1.msra.mxu0 0.0
    %4798 = vmatprep.subr.mxu0 0.0
    %4799 = vmatpush1.msra.mxu0 0.0
    %4800 = vmatprep.subr.mxu0 0.0
    %4801 = vmatpush1.msra.mxu0 0.0
    %4802 = vmatprep.subr.mxu0 0.0
    %4803 = vmatpush1.msra.mxu0 0.0
    %4804 = vmatprep.subr.mxu0 0.0
    %4805 = vmatpush1.msra.mxu0 0.0
    %4806 = vmatprep.subr.mxu0 0.0
    %4807 = vmatpush1.msra.mxu0 0.0
    %4808 = vmatprep.subr.mxu0 0.0
    %4809 = vmatpush1.msra.mxu0 0.0
    %4810 = vmatprep.subr.mxu0 0.0
    %4811 = vmatpush1.msra.mxu0 0.0
    %4812 = vmatprep.subr.mxu0 0.0
    %4813 = vmatpush1.msra.mxu0 0.0
    %4814 = vmatprep.subr.mxu0 0.0
    %4815 = vmatpush1.msra.mxu0 0.0
    %4816 = vmatprep.subr.mxu0 0.0
    %4817 = vmatpush1.msra.mxu0 0.0
    %4818 = vmatprep.subr.mxu0 0.0
    %4819 = vmatpush1.msra.mxu0 0.0
    %4820 = vmatprep.subr.mxu0 0.0
    %4821 = vmatpush1.msra.mxu0 0.0
    %4822 = vmatprep.subr.mxu0 0.0
    %4823 = vmatpush1.msra.mxu0 0.0
    %4824 = vmatprep.subr.mxu0 0.0
    %4825 = vmatpush1.msra.mxu0 0.0
    %4826 = vmatprep.subr.mxu0 0.0
    %4827 = vmatpush1.msra.mxu0 0.0
    %4828 = vmatprep.subr.mxu0 0.0
    %4829 = vmatpush1.msra.mxu0 0.0
    %4830 = vmatprep.mubr.f32.mxu0 0.0
    %4831 = vmatmul.mubr.f32.gmra.mrb[0].mxu0 %v4758
    %v4832 = vpop.f32.mrb[0].mxu0
    %v4833 = vadd.f32 %v4755, %v4832
    %v4834 = vpop.f32.mrb[0].mxu0
    %4835 = vmatprep.mubr.f32.mxu0 0.0
    %4836 = vmatmul.mubr.f32.gmra.mrb[0].mxu0 %v4761
    %v4837 = vpop.f32.mrb[0].mxu0
    %v4838 = vadd.f32 %v4755, %v4837
    %v4839 = vpop.f32.mrb[0].mxu0
    %4840 = vdwg.mxu0
    %v4841 = vmax.f32 %v4833, 0.0
    %v4842 = vmax.f32 %v4838, 0.0
    %v4843 = vadd.f32 %v4841, %v4653
    %v4844 = vadd.f32 %v4842, %v4654
    %s4845 = scalar_lea.vmem %s59, 4
    %v4846 = vld [vmem:[%s4845] sm:$0x1]
    %s4847 = scalar_lea.vmem %s59, 5
    %v4848 = vld [vmem:[%s4847] sm:$0x1]
    %v4849 = vsel %vm147, %v4843, 0.0
    %4850 = vadd.xlane.f32.xlu0 %v4849
    %v4851 = vpop.xlane.xlu0 %4850
    %v4852 = vsel %vm3745, %v4844, 0.0
    %4853 = vadd.xlane.f32.xlu0 %v4852
    %v4854 = vpop.xlane.xlu0 %4853
    %v4855 = vmul.f32 %v4851, %v742
    %v4856 = vmul.f32 %v4854, %v742
    %v4857 = vsub.f32 %v4843, %v4855
    %v4858 = vsub.f32 %v4844, %v4856
    %v4859 = vmul.f32 %v4857, %v4857
    %v4860 = vmul.f32 %v4858, %v4858
    %v4861 = vsel %vm147, %v4859, 0.0
    %4862 = vadd.xlane.f32.xlu0 %v4861
    %v4863 = vpop.xlane.xlu0 %4862
    %v4864 = vsel %vm3745, %v4860, 0.0
    %4865 = vadd.xlane.f32.xlu0 %v4864
    %v4866 = vpop.xlane.xlu0 %4865
    %v4867 = vmul.f32 %v4863, %v742
    %v4868 = vmul.f32 %v4866, %v742
    %v4869 = vadd.f32 %v4867, 1e-05
    %v4870 = vadd.f32 %v4868, 1e-05
    %v4871 = vrsqrt.pop %v4869
    %v4872 = vrsqrt.pop %v4870
    %v4873 = vmul.f32 %v4857, %v4871
    %v4874 = vmul.f32 %v4858, %v4872
    %v4876 = vlaneseq
    %v4877 = vshrl.u32 %v4876, 7
    %v4878 = vsub.s32 0, %v4877
    %v4879 = vrot.slane %v4846, %v4878
    %v4881 = vmul.f32 %v4873, %v4879
    %v4882 = vmul.f32 %v4874, %v4879
    %v4884 = vlaneseq
    %v4885 = vshrl.u32 %v4884, 7
    %v4886 = vsub.s32 0, %v4885
    %v4887 = vrot.slane %v4848, %v4886
    %v4889 = vadd.f32 %v4881, %v4887
    %v4890 = vadd.f32 %v4882, %v4887
    %s4891 = scalar_lea.vmem %s39, 32
    %v4892 = vld [vmem:[%s4891] sm:$0x7f]
    %s4893 = scalar_lea.vmem %s41, 4
    %v4894 = vld [vmem:[%s4893] sm:$0x1]
    %v4896 = vlaneseq
    %v4897 = vshrl.u32 %v4896, 7
    %v4898 = vsub.s32 0, %v4897
    %v4899 = vrot.slane %v4894, %v4898
    %v4902 = vsel %vm147, %v4889, 0
    %v4905 = vsel %vm147, %v4890, 0
    %v4908 = vsel %vm154, %v4892, 0
    %4910 = vmatprep.subr.mxu0 0.0
    %4911 = vmatpush1.msra.mxu0 %v4908
    %4912 = vmatprep.subr.mxu0 0.0
    %4913 = vmatpush1.msra.mxu0 0.0
    %4914 = vmatprep.subr.mxu0 0.0
    %4915 = vmatpush1.msra.mxu0 0.0
    %4916 = vmatprep.subr.mxu0 0.0
    %4917 = vmatpush1.msra.mxu0 0.0
    %4918 = vmatprep.subr.mxu0 0.0
    %4919 = vmatpush1.msra.mxu0 0.0
    %4920 = vmatprep.subr.mxu0 0.0
    %4921 = vmatpush1.msra.mxu0 0.0
    %4922 = vmatprep.subr.mxu0 0.0
    %4923 = vmatpush1.msra.mxu0 0.0
    %4924 = vmatprep.subr.mxu0 0.0
    %4925 = vmatpush1.msra.mxu0 0.0
    %4926 = vmatprep.subr.mxu0 0.0
    %4927 = vmatpush1.msra.mxu0 0.0
    %4928 = vmatprep.subr.mxu0 0.0
    %4929 = vmatpush1.msra.mxu0 0.0
    %4930 = vmatprep.subr.mxu0 0.0
    %4931 = vmatpush1.msra.mxu0 0.0
    %4932 = vmatprep.subr.mxu0 0.0
    %4933 = vmatpush1.msra.mxu0 0.0
    %4934 = vmatprep.subr.mxu0 0.0
    %4935 = vmatpush1.msra.mxu0 0.0
    %4936 = vmatprep.subr.mxu0 0.0
    %4937 = vmatpush1.msra.mxu0 0.0
    %4938 = vmatprep.subr.mxu0 0.0
    %4939 = vmatpush1.msra.mxu0 0.0
    %4940 = vmatprep.subr.mxu0 0.0
    %4941 = vmatpush1.msra.mxu0 0.0
    %4942 = vmatprep.subr.mxu0 0.0
    %4943 = vmatpush1.msra.mxu0 0.0
    %4944 = vmatprep.subr.mxu0 0.0
    %4945 = vmatpush1.msra.mxu0 0.0
    %4946 = vmatprep.subr.mxu0 0.0
    %4947 = vmatpush1.msra.mxu0 0.0
    %4948 = vmatprep.subr.mxu0 0.0
    %4949 = vmatpush1.msra.mxu0 0.0
    %4950 = vmatprep.subr.mxu0 0.0
    %4951 = vmatpush1.msra.mxu0 0.0
    %4952 = vmatprep.subr.mxu0 0.0
    %4953 = vmatpush1.msra.mxu0 0.0
    %4954 = vmatprep.subr.mxu0 0.0
    %4955 = vmatpush1.msra.mxu0 0.0
    %4956 = vmatprep.subr.mxu0 0.0
    %4957 = vmatpush1.msra.mxu0 0.0
    %4958 = vmatprep.subr.mxu0 0.0
    %4959 = vmatpush1.msra.mxu0 0.0
    %4960 = vmatprep.subr.mxu0 0.0
    %4961 = vmatpush1.msra.mxu0 0.0
    %4962 = vmatprep.subr.mxu0 0.0
    %4963 = vmatpush1.msra.mxu0 0.0
    %4964 = vmatprep.subr.mxu0 0.0
    %4965 = vmatpush1.msra.mxu0 0.0
    %4966 = vmatprep.subr.mxu0 0.0
    %4967 = vmatpush1.msra.mxu0 0.0
    %4968 = vmatprep.subr.mxu0 0.0
    %4969 = vmatpush1.msra.mxu0 0.0
    %4970 = vmatprep.subr.mxu0 0.0
    %4971 = vmatpush1.msra.mxu0 0.0
    %4972 = vmatprep.subr.mxu0 0.0
    %4973 = vmatpush1.msra.mxu0 0.0
    %4974 = vmatprep.mubr.f32.mxu0 0.0
    %4975 = vmatmul.mubr.f32.gmra.mrb[0].mxu0 %v4902
    %v4976 = vpop.f32.mrb[0].mxu0
    %v4977 = vadd.f32 %v4899, %v4976
    %v4978 = vpop.f32.mrb[0].mxu0
    %4979 = vmatprep.mubr.f32.mxu0 0.0
    %4980 = vmatmul.mubr.f32.gmra.mrb[0].mxu0 %v4905
    %v4981 = vpop.f32.mrb[0].mxu0
    %v4982 = vadd.f32 %v4899, %v4981
    %v4983 = vpop.f32.mrb[0].mxu0
    %4984 = vdwg.mxu0
    %s4985 = scalar_lea.vmem %s39, 40
    %v4986 = vld [vmem:[%s4985] sm:$0x7f]
    %s4987 = scalar_lea.vmem %s41, 5
    %v4988 = vld [vmem:[%s4987] sm:$0x1]
    %v4990 = vlaneseq
    %v4991 = vshrl.u32 %v4990, 7
    %v4992 = vsub.s32 0, %v4991
    %v4993 = vrot.slane %v4988, %v4992
    %v4996 = vsel %vm154, %v4986, 0
    %4998 = vmatprep.subr.mxu0 0.0
    %4999 = vmatpush1.msra.mxu0 %v4996
    %5000 = vmatprep.subr.mxu0 0.0
    %5001 = vmatpush1.msra.mxu0 0.0
    %5002 = vmatprep.subr.mxu0 0.0
    %5003 = vmatpush1.msra.mxu0 0.0
    %5004 = vmatprep.subr.mxu0 0.0
    %5005 = vmatpush1.msra.mxu0 0.0
    %5006 = vmatprep.subr.mxu0 0.0
    %5007 = vmatpush1.msra.mxu0 0.0
    %5008 = vmatprep.subr.mxu0 0.0
    %5009 = vmatpush1.msra.mxu0 0.0
    %5010 = vmatprep.subr.mxu0 0.0
    %5011 = vmatpush1.msra.mxu0 0.0
    %5012 = vmatprep.subr.mxu0 0.0
    %5013 = vmatpush1.msra.mxu0 0.0
    %5014 = vmatprep.subr.mxu0 0.0
    %5015 = vmatpush1.msra.mxu0 0.0
    %5016 = vmatprep.subr.mxu0 0.0
    %5017 = vmatpush1.msra.mxu0 0.0
    %5018 = vmatprep.subr.mxu0 0.0
    %5019 = vmatpush1.msra.mxu0 0.0
    %5020 = vmatprep.subr.mxu0 0.0
    %5021 = vmatpush1.msra.mxu0 0.0
    %5022 = vmatprep.subr.mxu0 0.0
    %5023 = vmatpush1.msra.mxu0 0.0
    %5024 = vmatprep.subr.mxu0 0.0
    %5025 = vmatpush1.msra.mxu0 0.0
    %5026 = vmatprep.subr.mxu0 0.0
    %5027 = vmatpush1.msra.mxu0 0.0
    %5028 = vmatprep.subr.mxu0 0.0
    %5029 = vmatpush1.msra.mxu0 0.0
    %5030 = vmatprep.subr.mxu0 0.0
    %5031 = vmatpush1.msra.mxu0 0.0
    %5032 = vmatprep.subr.mxu0 0.0
    %5033 = vmatpush1.msra.mxu0 0.0
    %5034 = vmatprep.subr.mxu0 0.0
    %5035 = vmatpush1.msra.mxu0 0.0
    %5036 = vmatprep.subr.mxu0 0.0
    %5037 = vmatpush1.msra.mxu0 0.0
    %5038 = vmatprep.subr.mxu0 0.0
    %5039 = vmatpush1.msra.mxu0 0.0
    %5040 = vmatprep.subr.mxu0 0.0
    %5041 = vmatpush1.msra.mxu0 0.0
    %5042 = vmatprep.subr.mxu0 0.0
    %5043 = vmatpush1.msra.mxu0 0.0
    %5044 = vmatprep.subr.mxu0 0.0
    %5045 = vmatpush1.msra.mxu0 0.0
    %5046 = vmatprep.subr.mxu0 0.0
    %5047 = vmatpush1.msra.mxu0 0.0
    %5048 = vmatprep.subr.mxu0 0.0
    %5049 = vmatpush1.msra.mxu0 0.0
    %5050 = vmatprep.subr.mxu0 0.0
    %5051 = vmatpush1.msra.mxu0 0.0
    %5052 = vmatprep.subr.mxu0 0.0
    %5053 = vmatpush1.msra.mxu0 0.0
    %5054 = vmatprep.subr.mxu0 0.0
    %5055 = vmatpush1.msra.mxu0 0.0
    %5056 = vmatprep.subr.mxu0 0.0
    %5057 = vmatpush1.msra.mxu0 0.0
    %5058 = vmatprep.subr.mxu0 0.0
    %5059 = vmatpush1.msra.mxu0 0.0
    %5060 = vmatprep.subr.mxu0 0.0
    %5061 = vmatpush1.msra.mxu0 0.0
    %5062 = vmatprep.mubr.f32.mxu0 0.0
    %5063 = vmatmul.mubr.f32.gmra.mrb[0].mxu0 %v4902
    %v5064 = vpop.f32.mrb[0].mxu0
    %v5065 = vadd.f32 %v4993, %v5064
    %v5066 = vpop.f32.mrb[0].mxu0
    %5067 = vmatprep.mubr.f32.mxu0 0.0
    %5068 = vmatmul.mubr.f32.gmra.mrb[0].mxu0 %v4905
    %v5069 = vpop.f32.mrb[0].mxu0
    %v5070 = vadd.f32 %v4993, %v5069
    %v5071 = vpop.f32.mrb[0].mxu0
    %5072 = vdwg.mxu0
    %s5073 = scalar_lea.vmem %s39, 48
    %v5074 = vld [vmem:[%s5073] sm:$0x7f]
    %s5075 = scalar_lea.vmem %s41, 6
    %v5076 = vld [vmem:[%s5075] sm:$0x1]
    %v5078 = vlaneseq
    %v5079 = vshrl.u32 %v5078, 7
    %v5080 = vsub.s32 0, %v5079
    %v5081 = vrot.slane %v5076, %v5080
    %v5084 = vsel %vm154, %v5074, 0
    %5086 = vmatprep.subr.mxu0 0.0
    %5087 = vmatpush1.msra.mxu0 %v5084
    %5088 = vmatprep.subr.mxu0 0.0
    %5089 = vmatpush1.msra.mxu0 0.0
    %5090 = vmatprep.subr.mxu0 0.0
    %5091 = vmatpush1.msra.mxu0 0.0
    %5092 = vmatprep.subr.mxu0 0.0
    %5093 = vmatpush1.msra.mxu0 0.0
    %5094 = vmatprep.subr.mxu0 0.0
    %5095 = vmatpush1.msra.mxu0 0.0
    %5096 = vmatprep.subr.mxu0 0.0
    %5097 = vmatpush1.msra.mxu0 0.0
    %5098 = vmatprep.subr.mxu0 0.0
    %5099 = vmatpush1.msra.mxu0 0.0
    %5100 = vmatprep.subr.mxu0 0.0
    %5101 = vmatpush1.msra.mxu0 0.0
    %5102 = vmatprep.subr.mxu0 0.0
    %5103 = vmatpush1.msra.mxu0 0.0
    %5104 = vmatprep.subr.mxu0 0.0
    %5105 = vmatpush1.msra.mxu0 0.0
    %5106 = vmatprep.subr.mxu0 0.0
    %5107 = vmatpush1.msra.mxu0 0.0
    %5108 = vmatprep.subr.mxu0 0.0
    %5109 = vmatpush1.msra.mxu0 0.0
    %5110 = vmatprep.subr.mxu0 0.0
    %5111 = vmatpush1.msra.mxu0 0.0
    %5112 = vmatprep.subr.mxu0 0.0
    %5113 = vmatpush1.msra.mxu0 0.0
    %5114 = vmatprep.subr.mxu0 0.0
    %5115 = vmatpush1.msra.mxu0 0.0
    %5116 = vmatprep.subr.mxu0 0.0
    %5117 = vmatpush1.msra.mxu0 0.0
    %5118 = vmatprep.subr.mxu0 0.0
    %5119 = vmatpush1.msra.mxu0 0.0
    %5120 = vmatprep.subr.mxu0 0.0
    %5121 = vmatpush1.msra.mxu0 0.0
    %5122 = vmatprep.subr.mxu0 0.0
    %5123 = vmatpush1.msra.mxu0 0.0
    %5124 = vmatprep.subr.mxu0 0.0
    %5125 = vmatpush1.msra.mxu0 0.0
    %5126 = vmatprep.subr.mxu0 0.0
    %5127 = vmatpush1.msra.mxu0 0.0
    %5128 = vmatprep.subr.mxu0 0.0
    %5129 = vmatpush1.msra.mxu0 0.0
    %5130 = vmatprep.subr.mxu0 0.0
    %5131 = vmatpush1.msra.mxu0 0.0
    %5132 = vmatprep.subr.mxu0 0.0
    %5133 = vmatpush1.msra.mxu0 0.0
    %5134 = vmatprep.subr.mxu0 0.0
    %5135 = vmatpush1.msra.mxu0 0.0
    %5136 = vmatprep.subr.mxu0 0.0
    %5137 = vmatpush1.msra.mxu0 0.0
    %5138 = vmatprep.subr.mxu0 0.0
    %5139 = vmatpush1.msra.mxu0 0.0
    %5140 = vmatprep.subr.mxu0 0.0
    %5141 = vmatpush1.msra.mxu0 0.0
    %5142 = vmatprep.subr.mxu0 0.0
    %5143 = vmatpush1.msra.mxu0 0.0
    %5144 = vmatprep.subr.mxu0 0.0
    %5145 = vmatpush1.msra.mxu0 0.0
    %5146 = vmatprep.subr.mxu0 0.0
    %5147 = vmatpush1.msra.mxu0 0.0
    %5148 = vmatprep.subr.mxu0 0.0
    %5149 = vmatpush1.msra.mxu0 0.0
    %5150 = vmatprep.mubr.f32.mxu0 0.0
    %5151 = vmatmul.mubr.f32.gmra.mrb[0].mxu0 %v4902
    %v5152 = vpop.f32.mrb[0].mxu0
    %v5153 = vadd.f32 %v5081, %v5152
    %v5154 = vpop.f32.mrb[0].mxu0
    %5155 = vmatprep.mubr.f32.mxu0 0.0
    %5156 = vmatmul.mubr.f32.gmra.mrb[0].mxu0 %v4905
    %v5157 = vpop.f32.mrb[0].mxu0
    %v5158 = vadd.f32 %v5081, %v5157
    %v5159 = vpop.f32.mrb[0].mxu0
    %5160 = vdwg.mxu0
    %s5161 = scalar_lea.vmem %s43, 2
    %v5162 = vld [vmem:[%s5161] sm:$0x1]
    %s5163 = scalar_lea.vmem %s43, 3
    %v5164 = vld [vmem:[%s5163] sm:$0x1]
    %v5165 = vmul.f32 %v4977, 0.37796447
    %v5166 = vmul.f32 %v4982, 0.37796447
    %v5168 = vsel %vm147, %v5165, 0
    %v5171 = vsel %vm147, %v5166, 0
    %v5174 = vsel %vm147, %v5065, 0
    %v5177 = vsel %vm147, %v5070, 0
    %5179 = vmatprep.subr.mxu0 0.0
    %5180 = vmatpush1.xpose.msra.mxu0 %v5174
    %5181 = vmatprep.subr.mxu0 0.0
    %5182 = vmatpush1.xpose.msra.mxu0 %v5177
    %5183 = vmatprep.subr.mxu0 0.0
    %5184 = vmatpush1.xpose.msra.mxu0 0.0
    %5185 = vmatprep.subr.mxu0 0.0
    %5186 = vmatpush1.xpose.msra.mxu0 0.0
    %5187 = vmatprep.subr.mxu0 0.0
    %5188 = vmatpush1.xpose.msra.mxu0 0.0
    %5189 = vmatprep.subr.mxu0 0.0
    %5190 = vmatpush1.xpose.msra.mxu0 0.0
    %5191 = vmatprep.subr.mxu0 0.0
    %5192 = vmatpush1.xpose.msra.mxu0 0.0
    %5193 = vmatprep.subr.mxu0 0.0
    %5194 = vmatpush1.xpose.msra.mxu0 0.0
    %5195 = vmatprep.subr.mxu0 0.0
    %5196 = vmatpush1.xpose.msra.mxu0 0.0
    %5197 = vmatprep.subr.mxu0 0.0
    %5198 = vmatpush1.xpose.msra.mxu0 0.0
    %5199 = vmatprep.subr.mxu0 0.0
    %5200 = vmatpush1.xpose.msra.mxu0 0.0
    %5201 = vmatprep.subr.mxu0 0.0
    %5202 = vmatpush1.xpose.msra.mxu0 0.0
    %5203 = vmatprep.subr.mxu0 0.0
    %5204 = vmatpush1.xpose.msra.mxu0 0.0
    %5205 = vmatprep.subr.mxu0 0.0
    %5206 = vmatpush1.xpose.msra.mxu0 0.0
    %5207 = vmatprep.subr.mxu0 0.0
    %5208 = vmatpush1.xpose.msra.mxu0 0.0
    %5209 = vmatprep.subr.mxu0 0.0
    %5210 = vmatpush1.xpose.msra.mxu0 0.0
    %5211 = vmatprep.subr.mxu0 0.0
    %5212 = vmatpush1.xpose.msra.mxu0 0.0
    %5213 = vmatprep.subr.mxu0 0.0
    %5214 = vmatpush1.xpose.msra.mxu0 0.0
    %5215 = vmatprep.subr.mxu0 0.0
    %5216 = vmatpush1.xpose.msra.mxu0 0.0
    %5217 = vmatprep.subr.mxu0 0.0
    %5218 = vmatpush1.xpose.msra.mxu0 0.0
    %5219 = vmatprep.subr.mxu0 0.0
    %5220 = vmatpush1.xpose.msra.mxu0 0.0
    %5221 = vmatprep.subr.mxu0 0.0
    %5222 = vmatpush1.xpose.msra.mxu0 0.0
    %5223 = vmatprep.subr.mxu0 0.0
    %5224 = vmatpush1.xpose.msra.mxu0 0.0
    %5225 = vmatprep.subr.mxu0 0.0
    %5226 = vmatpush1.xpose.msra.mxu0 0.0
    %5227 = vmatprep.subr.mxu0 0.0
    %5228 = vmatpush1.xpose.msra.mxu0 0.0
    %5229 = vmatprep.subr.mxu0 0.0
    %5230 = vmatpush1.xpose.msra.mxu0 0.0
    %5231 = vmatprep.subr.mxu0 0.0
    %5232 = vmatpush1.xpose.msra.mxu0 0.0
    %5233 = vmatprep.subr.mxu0 0.0
    %5234 = vmatpush1.xpose.msra.mxu0 0.0
    %5235 = vmatprep.subr.mxu0 0.0
    %5236 = vmatpush1.xpose.msra.mxu0 0.0
    %5237 = vmatprep.subr.mxu0 0.0
    %5238 = vmatpush1.xpose.msra.mxu0 0.0
    %5239 = vmatprep.subr.mxu0 0.0
    %5240 = vmatpush1.xpose.msra.mxu0 0.0
    %5241 = vmatprep.subr.mxu0 0.0
    %5242 = vmatpush1.xpose.msra.mxu0 0.0
    %5243 = vmatprep.mubr.f32.mxu0 0.0
    %5244 = vmatmul.mubr.f32.gmra.mrb[0].mxu0 %v5168
    %v5245 = vpop.f32.mrb[0].mxu0
    %v5246 = vadd.f32 %v3370, %v5245
    %v5247 = vpop.f32.mrb[0].mxu0
    %5248 = vmatprep.mubr.f32.mxu0 0.0
    %5249 = vmatmul.mubr.f32.gmra.mrb[0].mxu0 %v5171
    %v5250 = vpop.f32.mrb[0].mxu0
    %v5251 = vadd.f32 %v3371, %v5250
    %v5252 = vpop.f32.mrb[0].mxu0
    %5253 = vdwg.mxu0
    %v5255 = vlaneseq
    %v5256 = vshrl.u32 %v5255, 7
    %v5257 = vsub.s32 0, %v5256
    %v5258 = vrot.slane %v5162, %v5257
    %v5260 = vmul.f32 %v5165, %v5258
    %v5261 = vmul.f32 %v5166, %v5258
    %v5262 = vsel %vm147, %v5260, 0.0
    %5263 = vadd.xlane.f32.xlu0 %v5262
    %v5264 = vpop.xlane.xlu0 %5263
    %v5265 = vsel %vm3745, %v5261, 0.0
    %5266 = vadd.xlane.f32.xlu0 %v5265
    %v5267 = vpop.xlane.xlu0 %5266
    %v5268 = vsel %vm3749, %v5246, -inf
    %5269 = vmax.xlane.f32.xlu0 %v5268
    %v5270 = vpop.xlane.xlu0 %5269
    %v5271 = vsel %vm3753, %v5251, -inf
    %5272 = vmax.xlane.f32.xlu0 %v5271
    %v5273 = vpop.xlane.xlu0 %5272
    %v5274 = vmax.f32 %v5270, %v5264
    %v5275 = vmax.f32 %v5273, %v5267
    %v5276 = vsub.f32 %v5246, %v5274
    %v5277 = vsub.f32 %v5251, %v5275
    %v5278 = vmul.f32 %v5276, 1.442695
    %v5279 = vpow.pop %v5278
    %v5280 = vmul.f32 %v5277, 1.442695
    %v5281 = vpow.pop %v5280
    %v5282 = vsub.f32 %v5264, %v5274
    %v5283 = vsub.f32 %v5267, %v5275
    %v5284 = vmul.f32 %v5282, 1.442695
    %v5285 = vpow.pop %v5284
    %v5286 = vmul.f32 %v5283, 1.442695
    %v5287 = vpow.pop %v5286
    %v5288 = vsel %vm3749, %v5279, 0.0
    %5289 = vadd.xlane.f32.xlu0 %v5288
    %v5290 = vpop.xlane.xlu0 %5289
    %v5291 = vsel %vm3753, %v5281, 0.0
    %5292 = vadd.xlane.f32.xlu0 %v5291
    %v5293 = vpop.xlane.xlu0 %5292
    %v5294 = vadd.f32 %v5290, %v5285
    %v5295 = vadd.f32 %v5293, %v5287
    %v5297 = vlaneseq
    %v5298 = vshrl.u32 %v5297, 7
    %v5299 = vsub.s32 0, %v5298
    %v5300 = vrot.slane %v5164, %v5299
    %v5302 = vmul.f32 %v5285, %v5300
    %v5303 = vmul.f32 %v5287, %v5300
    %v5305 = vsel %vm3749, %v5279, 0
    %v5308 = vsel %vm3749, %v5281, 0
    %v5311 = vsel %vm3793, %v5158, 0
    %5313 = vmatprep.subr.mxu0 0.0
    %5314 = vmatpush1.msra.mxu0 %v5153
    %5315 = vmatprep.subr.mxu0 0.0
    %5316 = vmatpush1.msra.mxu0 %v5311
    %5317 = vmatprep.subr.mxu0 0.0
    %5318 = vmatpush1.msra.mxu0 0.0
    %5319 = vmatprep.subr.mxu0 0.0
    %5320 = vmatpush1.msra.mxu0 0.0
    %5321 = vmatprep.subr.mxu0 0.0
    %5322 = vmatpush1.msra.mxu0 0.0
    %5323 = vmatprep.subr.mxu0 0.0
    %5324 = vmatpush1.msra.mxu0 0.0
    %5325 = vmatprep.subr.mxu0 0.0
    %5326 = vmatpush1.msra.mxu0 0.0
    %5327 = vmatprep.subr.mxu0 0.0
    %5328 = vmatpush1.msra.mxu0 0.0
    %5329 = vmatprep.subr.mxu0 0.0
    %5330 = vmatpush1.msra.mxu0 0.0
    %5331 = vmatprep.subr.mxu0 0.0
    %5332 = vmatpush1.msra.mxu0 0.0
    %5333 = vmatprep.subr.mxu0 0.0
    %5334 = vmatpush1.msra.mxu0 0.0
    %5335 = vmatprep.subr.mxu0 0.0
    %5336 = vmatpush1.msra.mxu0 0.0
    %5337 = vmatprep.subr.mxu0 0.0
    %5338 = vmatpush1.msra.mxu0 0.0
    %5339 = vmatprep.subr.mxu0 0.0
    %5340 = vmatpush1.msra.mxu0 0.0
    %5341 = vmatprep.subr.mxu0 0.0
    %5342 = vmatpush1.msra.mxu0 0.0
    %5343 = vmatprep.subr.mxu0 0.0
    %5344 = vmatpush1.msra.mxu0 0.0
    %5345 = vmatprep.subr.mxu0 0.0
    %5346 = vmatpush1.msra.mxu0 0.0
    %5347 = vmatprep.subr.mxu0 0.0
    %5348 = vmatpush1.msra.mxu0 0.0
    %5349 = vmatprep.subr.mxu0 0.0
    %5350 = vmatpush1.msra.mxu0 0.0
    %5351 = vmatprep.subr.mxu0 0.0
    %5352 = vmatpush1.msra.mxu0 0.0
    %5353 = vmatprep.subr.mxu0 0.0
    %5354 = vmatpush1.msra.mxu0 0.0
    %5355 = vmatprep.subr.mxu0 0.0
    %5356 = vmatpush1.msra.mxu0 0.0
    %5357 = vmatprep.subr.mxu0 0.0
    %5358 = vmatpush1.msra.mxu0 0.0
    %5359 = vmatprep.subr.mxu0 0.0
    %5360 = vmatpush1.msra.mxu0 0.0
    %5361 = vmatprep.subr.mxu0 0.0
    %5362 = vmatpush1.msra.mxu0 0.0
    %5363 = vmatprep.subr.mxu0 0.0
    %5364 = vmatpush1.msra.mxu0 0.0
    %5365 = vmatprep.subr.mxu0 0.0
    %5366 = vmatpush1.msra.mxu0 0.0
    %5367 = vmatprep.subr.mxu0 0.0
    %5368 = vmatpush1.msra.mxu0 0.0
    %5369 = vmatprep.subr.mxu0 0.0
    %5370 = vmatpush1.msra.mxu0 0.0
    %5371 = vmatprep.subr.mxu0 0.0
    %5372 = vmatpush1.msra.mxu0 0.0
    %5373 = vmatprep.subr.mxu0 0.0
    %5374 = vmatpush1.msra.mxu0 0.0
    %5375 = vmatprep.subr.mxu0 0.0
    %5376 = vmatpush1.msra.mxu0 0.0
    %5377 = vmatprep.mubr.f32.mxu0 0.0
    %5378 = vmatmul.mubr.f32.gmra.mrb[0].mxu0 %v5305
    %v5379 = vpop.f32.mrb[0].mxu0
    %v5380 = vadd.f32 %v5302, %v5379
    %v5381 = vpop.f32.mrb[0].mxu0
    %5382 = vmatprep.mubr.f32.mxu0 0.0
    %5383 = vmatmul.mubr.f32.gmra.mrb[0].mxu0 %v5308
    %v5384 = vpop.f32.mrb[0].mxu0
    %v5385 = vadd.f32 %v5303, %v5384
    %v5386 = vpop.f32.mrb[0].mxu0
    %5387 = vdwg.mxu0
    %v5388 = vrcp.pop %v5294
    %v5389 = vmul.f32 %v5380, %v5388
    %v5390 = vrcp.pop %v5295
    %v5391 = vmul.f32 %v5385, %v5390
    %s5392 = scalar_lea.vmem %s39, 56
    %v5393 = vld [vmem:[%s5392] sm:$0x7f]
    %s5394 = scalar_lea.vmem %s41, 7
    %v5395 = vld [vmem:[%s5394] sm:$0x1]
    %v5397 = vlaneseq
    %v5398 = vshrl.u32 %v5397, 7
    %v5399 = vsub.s32 0, %v5398
    %v5400 = vrot.slane %v5395, %v5399
    %v5403 = vsel %vm147, %v5389, 0
    %v5406 = vsel %vm147, %v5391, 0
    %v5409 = vsel %vm154, %v5393, 0
    %5411 = vmatprep.subr.mxu0 0.0
    %5412 = vmatpush1.msra.mxu0 %v5409
    %5413 = vmatprep.subr.mxu0 0.0
    %5414 = vmatpush1.msra.mxu0 0.0
    %5415 = vmatprep.subr.mxu0 0.0
    %5416 = vmatpush1.msra.mxu0 0.0
    %5417 = vmatprep.subr.mxu0 0.0
    %5418 = vmatpush1.msra.mxu0 0.0
    %5419 = vmatprep.subr.mxu0 0.0
    %5420 = vmatpush1.msra.mxu0 0.0
    %5421 = vmatprep.subr.mxu0 0.0
    %5422 = vmatpush1.msra.mxu0 0.0
    %5423 = vmatprep.subr.mxu0 0.0
    %5424 = vmatpush1.msra.mxu0 0.0
    %5425 = vmatprep.subr.mxu0 0.0
    %5426 = vmatpush1.msra.mxu0 0.0
    %5427 = vmatprep.subr.mxu0 0.0
    %5428 = vmatpush1.msra.mxu0 0.0
    %5429 = vmatprep.subr.mxu0 0.0
    %5430 = vmatpush1.msra.mxu0 0.0
    %5431 = vmatprep.subr.mxu0 0.0
    %5432 = vmatpush1.msra.mxu0 0.0
    %5433 = vmatprep.subr.mxu0 0.0
    %5434 = vmatpush1.msra.mxu0 0.0
    %5435 = vmatprep.subr.mxu0 0.0
    %5436 = vmatpush1.msra.mxu0 0.0
    %5437 = vmatprep.subr.mxu0 0.0
    %5438 = vmatpush1.msra.mxu0 0.0
    %5439 = vmatprep.subr.mxu0 0.0
    %5440 = vmatpush1.msra.mxu0 0.0
    %5441 = vmatprep.subr.mxu0 0.0
    %5442 = vmatpush1.msra.mxu0 0.0
    %5443 = vmatprep.subr.mxu0 0.0
    %5444 = vmatpush1.msra.mxu0 0.0
    %5445 = vmatprep.subr.mxu0 0.0
    %5446 = vmatpush1.msra.mxu0 0.0
    %5447 = vmatprep.subr.mxu0 0.0
    %5448 = vmatpush1.msra.mxu0 0.0
    %5449 = vmatprep.subr.mxu0 0.0
    %5450 = vmatpush1.msra.mxu0 0.0
    %5451 = vmatprep.subr.mxu0 0.0
    %5452 = vmatpush1.msra.mxu0 0.0
    %5453 = vmatprep.subr.mxu0 0.0
    %5454 = vmatpush1.msra.mxu0 0.0
    %5455 = vmatprep.subr.mxu0 0.0
    %5456 = vmatpush1.msra.mxu0 0.0
    %5457 = vmatprep.subr.mxu0 0.0
    %5458 = vmatpush1.msra.mxu0 0.0
    %5459 = vmatprep.subr.mxu0 0.0
    %5460 = vmatpush1.msra.mxu0 0.0
    %5461 = vmatprep.subr.mxu0 0.0
    %5462 = vmatpush1.msra.mxu0 0.0
    %5463 = vmatprep.subr.mxu0 0.0
    %5464 = vmatpush1.msra.mxu0 0.0
    %5465 = vmatprep.subr.mxu0 0.0
    %5466 = vmatpush1.msra.mxu0 0.0
    %5467 = vmatprep.subr.mxu0 0.0
    %5468 = vmatpush1.msra.mxu0 0.0
    %5469 = vmatprep.subr.mxu0 0.0
    %5470 = vmatpush1.msra.mxu0 0.0
    %5471 = vmatprep.subr.mxu0 0.0
    %5472 = vmatpush1.msra.mxu0 0.0
    %5473 = vmatprep.subr.mxu0 0.0
    %5474 = vmatpush1.msra.mxu0 0.0
    %5475 = vmatprep.mubr.f32.mxu0 0.0
    %5476 = vmatmul.mubr.f32.gmra.mrb[0].mxu0 %v5403
    %v5477 = vpop.f32.mrb[0].mxu0
    %v5478 = vadd.f32 %v5400, %v5477
    %v5479 = vpop.f32.mrb[0].mxu0
    %5480 = vmatprep.mubr.f32.mxu0 0.0
    %5481 = vmatmul.mubr.f32.gmra.mrb[0].mxu0 %v5406
    %v5482 = vpop.f32.mrb[0].mxu0
    %v5483 = vadd.f32 %v5400, %v5482
    %v5484 = vpop.f32.mrb[0].mxu0
    %5485 = vdwg.mxu0
    %v5486 = vadd.f32 %v5478, %v4889
    %v5487 = vadd.f32 %v5483, %v4890
    %s5488 = scalar_lea.vmem %s59, 6
    %v5489 = vld [vmem:[%s5488] sm:$0x1]
    %s5490 = scalar_lea.vmem %s59, 7
    %v5491 = vld [vmem:[%s5490] sm:$0x1]
    %v5492 = vsel %vm147, %v5486, 0.0
    %5493 = vadd.xlane.f32.xlu0 %v5492
    %v5494 = vpop.xlane.xlu0 %5493
    %v5495 = vsel %vm3745, %v5487, 0.0
    %5496 = vadd.xlane.f32.xlu0 %v5495
    %v5497 = vpop.xlane.xlu0 %5496
    %v5498 = vmul.f32 %v5494, %v742
    %v5499 = vmul.f32 %v5497, %v742
    %v5500 = vsub.f32 %v5486, %v5498
    %v5501 = vsub.f32 %v5487, %v5499
    %v5502 = vmul.f32 %v5500, %v5500
    %v5503 = vmul.f32 %v5501, %v5501
    %v5504 = vsel %vm147, %v5502, 0.0
    %5505 = vadd.xlane.f32.xlu0 %v5504
    %v5506 = vpop.xlane.xlu0 %5505
    %v5507 = vsel %vm3745, %v5503, 0.0
    %5508 = vadd.xlane.f32.xlu0 %v5507
    %v5509 = vpop.xlane.xlu0 %5508
    %v5510 = vmul.f32 %v5506, %v742
    %v5511 = vmul.f32 %v5509, %v742
    %v5512 = vadd.f32 %v5510, 1e-05
    %v5513 = vadd.f32 %v5511, 1e-05
    %v5514 = vrsqrt.pop %v5512
    %v5515 = vrsqrt.pop %v5513
    %v5516 = vmul.f32 %v5500, %v5514
    %v5517 = vmul.f32 %v5501, %v5515
    %v5519 = vlaneseq
    %v5520 = vshrl.u32 %v5519, 7
    %v5521 = vsub.s32 0, %v5520
    %v5522 = vrot.slane %v5489, %v5521
    %v5524 = vmul.f32 %v5516, %v5522
    %v5525 = vmul.f32 %v5517, %v5522
    %v5527 = vlaneseq
    %v5528 = vshrl.u32 %v5527, 7
    %v5529 = vsub.s32 0, %v5528
    %v5530 = vrot.slane %v5491, %v5529
    %v5532 = vadd.f32 %v5524, %v5530
    %v5533 = vadd.f32 %v5525, %v5530
    %s5534 = scalar_lea.vmem %s45, 32
    %v5535 = vld [vmem:[%s5534] sm:$0x7f]
    %s5536 = scalar_lea.vmem %s47, 4
    %v5537 = vld [vmem:[%s5536] sm:$0x1]
    %v5539 = vlaneseq
    %v5540 = vshrl.u32 %v5539, 7
    %v5541 = vsub.s32 0, %v5540
    %v5542 = vrot.slane %v5537, %v5541
    %v5545 = vsel %vm147, %v5532, 0
    %v5548 = vsel %vm147, %v5533, 0
    %v5551 = vsel %vm154, %v5535, 0
    %5553 = vmatprep.subr.mxu0 0.0
    %5554 = vmatpush1.msra.mxu0 %v5551
    %5555 = vmatprep.subr.mxu0 0.0
    %5556 = vmatpush1.msra.mxu0 0.0
    %5557 = vmatprep.subr.mxu0 0.0
    %5558 = vmatpush1.msra.mxu0 0.0
    %5559 = vmatprep.subr.mxu0 0.0
    %5560 = vmatpush1.msra.mxu0 0.0
    %5561 = vmatprep.subr.mxu0 0.0
    %5562 = vmatpush1.msra.mxu0 0.0
    %5563 = vmatprep.subr.mxu0 0.0
    %5564 = vmatpush1.msra.mxu0 0.0
    %5565 = vmatprep.subr.mxu0 0.0
    %5566 = vmatpush1.msra.mxu0 0.0
    %5567 = vmatprep.subr.mxu0 0.0
    %5568 = vmatpush1.msra.mxu0 0.0
    %5569 = vmatprep.subr.mxu0 0.0
    %5570 = vmatpush1.msra.mxu0 0.0
    %5571 = vmatprep.subr.mxu0 0.0
    %5572 = vmatpush1.msra.mxu0 0.0
    %5573 = vmatprep.subr.mxu0 0.0
    %5574 = vmatpush1.msra.mxu0 0.0
    %5575 = vmatprep.subr.mxu0 0.0
    %5576 = vmatpush1.msra.mxu0 0.0
    %5577 = vmatprep.subr.mxu0 0.0
    %5578 = vmatpush1.msra.mxu0 0.0
    %5579 = vmatprep.subr.mxu0 0.0
    %5580 = vmatpush1.msra.mxu0 0.0
    %5581 = vmatprep.subr.mxu0 0.0
    %5582 = vmatpush1.msra.mxu0 0.0
    %5583 = vmatprep.subr.mxu0 0.0
    %5584 = vmatpush1.msra.mxu0 0.0
    %5585 = vmatprep.subr.mxu0 0.0
    %5586 = vmatpush1.msra.mxu0 0.0
    %5587 = vmatprep.subr.mxu0 0.0
    %5588 = vmatpush1.msra.mxu0 0.0
    %5589 = vmatprep.subr.mxu0 0.0
    %5590 = vmatpush1.msra.mxu0 0.0
    %5591 = vmatprep.subr.mxu0 0.0
    %5592 = vmatpush1.msra.mxu0 0.0
    %5593 = vmatprep.subr.mxu0 0.0
    %5594 = vmatpush1.msra.mxu0 0.0
    %5595 = vmatprep.subr.mxu0 0.0
    %5596 = vmatpush1.msra.mxu0 0.0
    %5597 = vmatprep.subr.mxu0 0.0
    %5598 = vmatpush1.msra.mxu0 0.0
    %5599 = vmatprep.subr.mxu0 0.0
    %5600 = vmatpush1.msra.mxu0 0.0
    %5601 = vmatprep.subr.mxu0 0.0
    %5602 = vmatpush1.msra.mxu0 0.0
    %5603 = vmatprep.subr.mxu0 0.0
    %5604 = vmatpush1.msra.mxu0 0.0
    %5605 = vmatprep.subr.mxu0 0.0
    %5606 = vmatpush1.msra.mxu0 0.0
    %5607 = vmatprep.subr.mxu0 0.0
    %5608 = vmatpush1.msra.mxu0 0.0
    %5609 = vmatprep.subr.mxu0 0.0
    %5610 = vmatpush1.msra.mxu0 0.0
    %5611 = vmatprep.subr.mxu0 0.0
    %5612 = vmatpush1.msra.mxu0 0.0
    %5613 = vmatprep.subr.mxu0 0.0
    %5614 = vmatpush1.msra.mxu0 0.0
    %5615 = vmatprep.subr.mxu0 0.0
    %5616 = vmatpush1.msra.mxu0 0.0
    %5617 = vmatprep.mubr.f32.mxu0 0.0
    %5618 = vmatmul.mubr.f32.gmra.mrb[0].mxu0 %v5545
    %v5619 = vpop.f32.mrb[0].mxu0
    %v5620 = vadd.f32 %v5542, %v5619
    %v5621 = vpop.f32.mrb[0].mxu0
    %5622 = vmatprep.mubr.f32.mxu0 0.0
    %5623 = vmatmul.mubr.f32.gmra.mrb[0].mxu0 %v5548
    %v5624 = vpop.f32.mrb[0].mxu0
    %v5625 = vadd.f32 %v5542, %v5624
    %v5626 = vpop.f32.mrb[0].mxu0
    %5627 = vdwg.mxu0
    %s5628 = scalar_lea.vmem %s45, 40
    %v5629 = vld [vmem:[%s5628] sm:$0x7f]
    %s5630 = scalar_lea.vmem %s47, 5
    %v5631 = vld [vmem:[%s5630] sm:$0x1]
    %v5633 = vlaneseq
    %v5634 = vshrl.u32 %v5633, 7
    %v5635 = vsub.s32 0, %v5634
    %v5636 = vrot.slane %v5631, %v5635
    %v5639 = vsel %vm154, %v5629, 0
    %5641 = vmatprep.subr.mxu0 0.0
    %5642 = vmatpush1.msra.mxu0 %v5639
    %5643 = vmatprep.subr.mxu0 0.0
    %5644 = vmatpush1.msra.mxu0 0.0
    %5645 = vmatprep.subr.mxu0 0.0
    %5646 = vmatpush1.msra.mxu0 0.0
    %5647 = vmatprep.subr.mxu0 0.0
    %5648 = vmatpush1.msra.mxu0 0.0
    %5649 = vmatprep.subr.mxu0 0.0
    %5650 = vmatpush1.msra.mxu0 0.0
    %5651 = vmatprep.subr.mxu0 0.0
    %5652 = vmatpush1.msra.mxu0 0.0
    %5653 = vmatprep.subr.mxu0 0.0
    %5654 = vmatpush1.msra.mxu0 0.0
    %5655 = vmatprep.subr.mxu0 0.0
    %5656 = vmatpush1.msra.mxu0 0.0
    %5657 = vmatprep.subr.mxu0 0.0
    %5658 = vmatpush1.msra.mxu0 0.0
    %5659 = vmatprep.subr.mxu0 0.0
    %5660 = vmatpush1.msra.mxu0 0.0
    %5661 = vmatprep.subr.mxu0 0.0
    %5662 = vmatpush1.msra.mxu0 0.0
    %5663 = vmatprep.subr.mxu0 0.0
    %5664 = vmatpush1.msra.mxu0 0.0
    %5665 = vmatprep.subr.mxu0 0.0
    %5666 = vmatpush1.msra.mxu0 0.0
    %5667 = vmatprep.subr.mxu0 0.0
    %5668 = vmatpush1.msra.mxu0 0.0
    %5669 = vmatprep.subr.mxu0 0.0
    %5670 = vmatpush1.msra.mxu0 0.0
    %5671 = vmatprep.subr.mxu0 0.0
    %5672 = vmatpush1.msra.mxu0 0.0
    %5673 = vmatprep.subr.mxu0 0.0
    %5674 = vmatpush1.msra.mxu0 0.0
    %5675 = vmatprep.subr.mxu0 0.0
    %5676 = vmatpush1.msra.mxu0 0.0
    %5677 = vmatprep.subr.mxu0 0.0
    %5678 = vmatpush1.msra.mxu0 0.0
    %5679 = vmatprep.subr.mxu0 0.0
    %5680 = vmatpush1.msra.mxu0 0.0
    %5681 = vmatprep.subr.mxu0 0.0
    %5682 = vmatpush1.msra.mxu0 0.0
    %5683 = vmatprep.subr.mxu0 0.0
    %5684 = vmatpush1.msra.mxu0 0.0
    %5685 = vmatprep.subr.mxu0 0.0
    %5686 = vmatpush1.msra.mxu0 0.0
    %5687 = vmatprep.subr.mxu0 0.0
    %5688 = vmatpush1.msra.mxu0 0.0
    %5689 = vmatprep.subr.mxu0 0.0
    %5690 = vmatpush1.msra.mxu0 0.0
    %5691 = vmatprep.subr.mxu0 0.0
    %5692 = vmatpush1.msra.mxu0 0.0
    %5693 = vmatprep.subr.mxu0 0.0
    %5694 = vmatpush1.msra.mxu0 0.0
    %5695 = vmatprep.subr.mxu0 0.0
    %5696 = vmatpush1.msra.mxu0 0.0
    %5697 = vmatprep.subr.mxu0 0.0
    %5698 = vmatpush1.msra.mxu0 0.0
    %5699 = vmatprep.subr.mxu0 0.0
    %5700 = vmatpush1.msra.mxu0 0.0
    %5701 = vmatprep.subr.mxu0 0.0
    %5702 = vmatpush1.msra.mxu0 0.0
    %5703 = vmatprep.subr.mxu0 0.0
    %5704 = vmatpush1.msra.mxu0 0.0
    %5705 = vmatprep.mubr.f32.mxu0 0.0
    %5706 = vmatmul.mubr.f32.gmra.mrb[0].mxu0 %v2786
    %v5707 = vpop.f32.mrb[0].mxu0
    %v5708 = vadd.f32 %v5636, %v5707
    %v5709 = vpop.f32.mrb[0].mxu0
    %5710 = vmatprep.mubr.f32.mxu0 0.0
    %5711 = vmatmul.mubr.f32.gmra.mrb[0].mxu0 %v2789
    %v5712 = vpop.f32.mrb[0].mxu0
    %v5713 = vadd.f32 %v5636, %v5712
    %v5714 = vpop.f32.mrb[0].mxu0
    %5715 = vdwg.mxu0
    %s5716 = scalar_lea.vmem %s45, 48
    %v5717 = vld [vmem:[%s5716] sm:$0x7f]
    %s5718 = scalar_lea.vmem %s47, 6
    %v5719 = vld [vmem:[%s5718] sm:$0x1]
    %v5721 = vlaneseq
    %v5722 = vshrl.u32 %v5721, 7
    %v5723 = vsub.s32 0, %v5722
    %v5724 = vrot.slane %v5719, %v5723
    %v5727 = vsel %vm154, %v5717, 0
    %5729 = vmatprep.subr.mxu0 0.0
    %5730 = vmatpush1.msra.mxu0 %v5727
    %5731 = vmatprep.subr.mxu0 0.0
    %5732 = vmatpush1.msra.mxu0 0.0
    %5733 = vmatprep.subr.mxu0 0.0
    %5734 = vmatpush1.msra.mxu0 0.0
    %5735 = vmatprep.subr.mxu0 0.0
    %5736 = vmatpush1.msra.mxu0 0.0
    %5737 = vmatprep.subr.mxu0 0.0
    %5738 = vmatpush1.msra.mxu0 0.0
    %5739 = vmatprep.subr.mxu0 0.0
    %5740 = vmatpush1.msra.mxu0 0.0
    %5741 = vmatprep.subr.mxu0 0.0
    %5742 = vmatpush1.msra.mxu0 0.0
    %5743 = vmatprep.subr.mxu0 0.0
    %5744 = vmatpush1.msra.mxu0 0.0
    %5745 = vmatprep.subr.mxu0 0.0
    %5746 = vmatpush1.msra.mxu0 0.0
    %5747 = vmatprep.subr.mxu0 0.0
    %5748 = vmatpush1.msra.mxu0 0.0
    %5749 = vmatprep.subr.mxu0 0.0
    %5750 = vmatpush1.msra.mxu0 0.0
    %5751 = vmatprep.subr.mxu0 0.0
    %5752 = vmatpush1.msra.mxu0 0.0
    %5753 = vmatprep.subr.mxu0 0.0
    %5754 = vmatpush1.msra.mxu0 0.0
    %5755 = vmatprep.subr.mxu0 0.0
    %5756 = vmatpush1.msra.mxu0 0.0
    %5757 = vmatprep.subr.mxu0 0.0
    %5758 = vmatpush1.msra.mxu0 0.0
    %5759 = vmatprep.subr.mxu0 0.0
    %5760 = vmatpush1.msra.mxu0 0.0
    %5761 = vmatprep.subr.mxu0 0.0
    %5762 = vmatpush1.msra.mxu0 0.0
    %5763 = vmatprep.subr.mxu0 0.0
    %5764 = vmatpush1.msra.mxu0 0.0
    %5765 = vmatprep.subr.mxu0 0.0
    %5766 = vmatpush1.msra.mxu0 0.0
    %5767 = vmatprep.subr.mxu0 0.0
    %5768 = vmatpush1.msra.mxu0 0.0
    %5769 = vmatprep.subr.mxu0 0.0
    %5770 = vmatpush1.msra.mxu0 0.0
    %5771 = vmatprep.subr.mxu0 0.0
    %5772 = vmatpush1.msra.mxu0 0.0
    %5773 = vmatprep.subr.mxu0 0.0
    %5774 = vmatpush1.msra.mxu0 0.0
    %5775 = vmatprep.subr.mxu0 0.0
    %5776 = vmatpush1.msra.mxu0 0.0
    %5777 = vmatprep.subr.mxu0 0.0
    %5778 = vmatpush1.msra.mxu0 0.0
    %5779 = vmatprep.subr.mxu0 0.0
    %5780 = vmatpush1.msra.mxu0 0.0
    %5781 = vmatprep.subr.mxu0 0.0
    %5782 = vmatpush1.msra.mxu0 0.0
    %5783 = vmatprep.subr.mxu0 0.0
    %5784 = vmatpush1.msra.mxu0 0.0
    %5785 = vmatprep.subr.mxu0 0.0
    %5786 = vmatpush1.msra.mxu0 0.0
    %5787 = vmatprep.subr.mxu0 0.0
    %5788 = vmatpush1.msra.mxu0 0.0
    %5789 = vmatprep.subr.mxu0 0.0
    %5790 = vmatpush1.msra.mxu0 0.0
    %5791 = vmatprep.subr.mxu0 0.0
    %5792 = vmatpush1.msra.mxu0 0.0
    %5793 = vmatprep.mubr.f32.mxu0 0.0
    %5794 = vmatmul.mubr.f32.gmra.mrb[0].mxu0 %v2786
    %v5795 = vpop.f32.mrb[0].mxu0
    %v5796 = vadd.f32 %v5724, %v5795
    %v5797 = vpop.f32.mrb[0].mxu0
    %5798 = vmatprep.mubr.f32.mxu0 0.0
    %5799 = vmatmul.mubr.f32.gmra.mrb[0].mxu0 %v2789
    %v5800 = vpop.f32.mrb[0].mxu0
    %v5801 = vadd.f32 %v5724, %v5800
    %v5802 = vpop.f32.mrb[0].mxu0
    %5803 = vdwg.mxu0
    %s5804 = scalar_lea.vmem %s49, 2
    %v5805 = vld [vmem:[%s5804] sm:$0x1]
    %s5806 = scalar_lea.vmem %s49, 3
    %v5807 = vld [vmem:[%s5806] sm:$0x1]
    %v5808 = vmul.f32 %v5620, 0.37796447
    %v5809 = vmul.f32 %v5625, 0.37796447
    %v5811 = vsel %vm147, %v5808, 0
    %v5814 = vsel %vm147, %v5809, 0
    %v5817 = vsel %vm147, %v5708, 0
    %v5820 = vsel %vm147, %v5713, 0
    %5822 = vmatprep.subr.mxu0 0.0
    %5823 = vmatpush1.xpose.msra.mxu0 %v5817
    %5824 = vmatprep.subr.mxu0 0.0
    %5825 = vmatpush1.xpose.msra.mxu0 %v5820
    %5826 = vmatprep.subr.mxu0 0.0
    %5827 = vmatpush1.xpose.msra.mxu0 0.0
    %5828 = vmatprep.subr.mxu0 0.0
    %5829 = vmatpush1.xpose.msra.mxu0 0.0
    %5830 = vmatprep.subr.mxu0 0.0
    %5831 = vmatpush1.xpose.msra.mxu0 0.0
    %5832 = vmatprep.subr.mxu0 0.0
    %5833 = vmatpush1.xpose.msra.mxu0 0.0
    %5834 = vmatprep.subr.mxu0 0.0
    %5835 = vmatpush1.xpose.msra.mxu0 0.0
    %5836 = vmatprep.subr.mxu0 0.0
    %5837 = vmatpush1.xpose.msra.mxu0 0.0
    %5838 = vmatprep.subr.mxu0 0.0
    %5839 = vmatpush1.xpose.msra.mxu0 0.0
    %5840 = vmatprep.subr.mxu0 0.0
    %5841 = vmatpush1.xpose.msra.mxu0 0.0
    %5842 = vmatprep.subr.mxu0 0.0
    %5843 = vmatpush1.xpose.msra.mxu0 0.0
    %5844 = vmatprep.subr.mxu0 0.0
    %5845 = vmatpush1.xpose.msra.mxu0 0.0
    %5846 = vmatprep.subr.mxu0 0.0
    %5847 = vmatpush1.xpose.msra.mxu0 0.0
    %5848 = vmatprep.subr.mxu0 0.0
    %5849 = vmatpush1.xpose.msra.mxu0 0.0
    %5850 = vmatprep.subr.mxu0 0.0
    %5851 = vmatpush1.xpose.msra.mxu0 0.0
    %5852 = vmatprep.subr.mxu0 0.0
    %5853 = vmatpush1.xpose.msra.mxu0 0.0
    %5854 = vmatprep.subr.mxu0 0.0
    %5855 = vmatpush1.xpose.msra.mxu0 0.0
    %5856 = vmatprep.subr.mxu0 0.0
    %5857 = vmatpush1.xpose.msra.mxu0 0.0
    %5858 = vmatprep.subr.mxu0 0.0
    %5859 = vmatpush1.xpose.msra.mxu0 0.0
    %5860 = vmatprep.subr.mxu0 0.0
    %5861 = vmatpush1.xpose.msra.mxu0 0.0
    %5862 = vmatprep.subr.mxu0 0.0
    %5863 = vmatpush1.xpose.msra.mxu0 0.0
    %5864 = vmatprep.subr.mxu0 0.0
    %5865 = vmatpush1.xpose.msra.mxu0 0.0
    %5866 = vmatprep.subr.mxu0 0.0
    %5867 = vmatpush1.xpose.msra.mxu0 0.0
    %5868 = vmatprep.subr.mxu0 0.0
    %5869 = vmatpush1.xpose.msra.mxu0 0.0
    %5870 = vmatprep.subr.mxu0 0.0
    %5871 = vmatpush1.xpose.msra.mxu0 0.0
    %5872 = vmatprep.subr.mxu0 0.0
    %5873 = vmatpush1.xpose.msra.mxu0 0.0
    %5874 = vmatprep.subr.mxu0 0.0
    %5875 = vmatpush1.xpose.msra.mxu0 0.0
    %5876 = vmatprep.subr.mxu0 0.0
    %5877 = vmatpush1.xpose.msra.mxu0 0.0
    %5878 = vmatprep.subr.mxu0 0.0
    %5879 = vmatpush1.xpose.msra.mxu0 0.0
    %5880 = vmatprep.subr.mxu0 0.0
    %5881 = vmatpush1.xpose.msra.mxu0 0.0
    %5882 = vmatprep.subr.mxu0 0.0
    %5883 = vmatpush1.xpose.msra.mxu0 0.0
    %5884 = vmatprep.subr.mxu0 0.0
    %5885 = vmatpush1.xpose.msra.mxu0 0.0
    %5886 = vmatprep.mubr.f32.mxu0 0.0
    %5887 = vmatmul.mubr.f32.gmra.mrb[0].mxu0 %v5811
    %v5888 = vpop.f32.mrb[0].mxu0
    %v5889 = vadd.f32 %v3372, %v5888
    %v5890 = vpop.f32.mrb[0].mxu0
    %5891 = vmatprep.mubr.f32.mxu0 0.0
    %5892 = vmatmul.mubr.f32.gmra.mrb[0].mxu0 %v5814
    %v5893 = vpop.f32.mrb[0].mxu0
    %v5894 = vadd.f32 %v3373, %v5893
    %v5895 = vpop.f32.mrb[0].mxu0
    %5896 = vdwg.mxu0
    %v5898 = vlaneseq
    %v5899 = vshrl.u32 %v5898, 7
    %v5900 = vsub.s32 0, %v5899
    %v5901 = vrot.slane %v5805, %v5900
    %v5903 = vmul.f32 %v5808, %v5901
    %v5904 = vmul.f32 %v5809, %v5901
    %v5905 = vsel %vm147, %v5903, 0.0
    %5906 = vadd.xlane.f32.xlu0 %v5905
    %v5907 = vpop.xlane.xlu0 %5906
    %v5908 = vsel %vm3745, %v5904, 0.0
    %5909 = vadd.xlane.f32.xlu0 %v5908
    %v5910 = vpop.xlane.xlu0 %5909
    %v5911 = vsel %vm515, %v5889, -inf
    %5912 = vmax.xlane.f32.xlu0 %v5911
    %v5913 = vpop.xlane.xlu0 %5912
    %v5914 = vsel %vm4394, %v5894, -inf
    %5915 = vmax.xlane.f32.xlu0 %v5914
    %v5916 = vpop.xlane.xlu0 %5915
    %v5917 = vmax.f32 %v5913, %v5907
    %v5918 = vmax.f32 %v5916, %v5910
    %v5919 = vsub.f32 %v5889, %v5917
    %v5920 = vsub.f32 %v5894, %v5918
    %v5921 = vmul.f32 %v5919, 1.442695
    %v5922 = vpow.pop %v5921
    %v5923 = vmul.f32 %v5920, 1.442695
    %v5924 = vpow.pop %v5923
    %v5925 = vsub.f32 %v5907, %v5917
    %v5926 = vsub.f32 %v5910, %v5918
    %v5927 = vmul.f32 %v5925, 1.442695
    %v5928 = vpow.pop %v5927
    %v5929 = vmul.f32 %v5926, 1.442695
    %v5930 = vpow.pop %v5929
    %v5931 = vsel %vm515, %v5922, 0.0
    %5932 = vadd.xlane.f32.xlu0 %v5931
    %v5933 = vpop.xlane.xlu0 %5932
    %v5934 = vsel %vm4394, %v5924, 0.0
    %5935 = vadd.xlane.f32.xlu0 %v5934
    %v5936 = vpop.xlane.xlu0 %5935
    %v5937 = vadd.f32 %v5933, %v5928
    %v5938 = vadd.f32 %v5936, %v5930
    %v5940 = vlaneseq
    %v5941 = vshrl.u32 %v5940, 7
    %v5942 = vsub.s32 0, %v5941
    %v5943 = vrot.slane %v5807, %v5942
    %v5945 = vmul.f32 %v5928, %v5943
    %v5946 = vmul.f32 %v5930, %v5943
    %v5948 = vsel %vm515, %v5922, 0
    %v5951 = vsel %vm515, %v5924, 0
    %5953 = vmatprep.subr.mxu0 0.0
    %5954 = vmatpush1.msra.mxu0 %v5796
    %5955 = vmatprep.subr.mxu0 0.0
    %5956 = vmatpush1.msra.mxu0 %v5801
    %5957 = vmatprep.subr.mxu0 0.0
    %5958 = vmatpush1.msra.mxu0 0.0
    %5959 = vmatprep.subr.mxu0 0.0
    %5960 = vmatpush1.msra.mxu0 0.0
    %5961 = vmatprep.subr.mxu0 0.0
    %5962 = vmatpush1.msra.mxu0 0.0
    %5963 = vmatprep.subr.mxu0 0.0
    %5964 = vmatpush1.msra.mxu0 0.0
    %5965 = vmatprep.subr.mxu0 0.0
    %5966 = vmatpush1.msra.mxu0 0.0
    %5967 = vmatprep.subr.mxu0 0.0
    %5968 = vmatpush1.msra.mxu0 0.0
    %5969 = vmatprep.subr.mxu0 0.0
    %5970 = vmatpush1.msra.mxu0 0.0
    %5971 = vmatprep.subr.mxu0 0.0
    %5972 = vmatpush1.msra.mxu0 0.0
    %5973 = vmatprep.subr.mxu0 0.0
    %5974 = vmatpush1.msra.mxu0 0.0
    %5975 = vmatprep.subr.mxu0 0.0
    %5976 = vmatpush1.msra.mxu0 0.0
    %5977 = vmatprep.subr.mxu0 0.0
    %5978 = vmatpush1.msra.mxu0 0.0
    %5979 = vmatprep.subr.mxu0 0.0
    %5980 = vmatpush1.msra.mxu0 0.0
    %5981 = vmatprep.subr.mxu0 0.0
    %5982 = vmatpush1.msra.mxu0 0.0
    %5983 = vmatprep.subr.mxu0 0.0
    %5984 = vmatpush1.msra.mxu0 0.0
    %5985 = vmatprep.subr.mxu0 0.0
    %5986 = vmatpush1.msra.mxu0 0.0
    %5987 = vmatprep.subr.mxu0 0.0
    %5988 = vmatpush1.msra.mxu0 0.0
    %5989 = vmatprep.subr.mxu0 0.0
    %5990 = vmatpush1.msra.mxu0 0.0
    %5991 = vmatprep.subr.mxu0 0.0
    %5992 = vmatpush1.msra.mxu0 0.0
    %5993 = vmatprep.subr.mxu0 0.0
    %5994 = vmatpush1.msra.mxu0 0.0
    %5995 = vmatprep.subr.mxu0 0.0
    %5996 = vmatpush1.msra.mxu0 0.0
    %5997 = vmatprep.subr.mxu0 0.0
    %5998 = vmatpush1.msra.mxu0 0.0
    %5999 = vmatprep.subr.mxu0 0.0
    %6000 = vmatpush1.msra.mxu0 0.0
    %6001 = vmatprep.subr.mxu0 0.0
    %6002 = vmatpush1.msra.mxu0 0.0
    %6003 = vmatprep.subr.mxu0 0.0
    %6004 = vmatpush1.msra.mxu0 0.0
    %6005 = vmatprep.subr.mxu0 0.0
    %6006 = vmatpush1.msra.mxu0 0.0
    %6007 = vmatprep.subr.mxu0 0.0
    %6008 = vmatpush1.msra.mxu0 0.0
    %6009 = vmatprep.subr.mxu0 0.0
    %6010 = vmatpush1.msra.mxu0 0.0
    %6011 = vmatprep.subr.mxu0 0.0
    %6012 = vmatpush1.msra.mxu0 0.0
    %6013 = vmatprep.subr.mxu0 0.0
    %6014 = vmatpush1.msra.mxu0 0.0
    %6015 = vmatprep.subr.mxu0 0.0
    %6016 = vmatpush1.msra.mxu0 0.0
    %6017 = vmatprep.mubr.f32.mxu0 0.0
    %6018 = vmatmul.mubr.f32.gmra.mrb[0].mxu0 %v5948
    %v6019 = vpop.f32.mrb[0].mxu0
    %v6020 = vadd.f32 %v5945, %v6019
    %v6021 = vpop.f32.mrb[0].mxu0
    %6022 = vmatprep.mubr.f32.mxu0 0.0
    %6023 = vmatmul.mubr.f32.gmra.mrb[0].mxu0 %v5951
    %v6024 = vpop.f32.mrb[0].mxu0
    %v6025 = vadd.f32 %v5946, %v6024
    %v6026 = vpop.f32.mrb[0].mxu0
    %6027 = vdwg.mxu0
    %v6028 = vrcp.pop %v5937
    %v6029 = vmul.f32 %v6020, %v6028
    %v6030 = vrcp.pop %v5938
    %v6031 = vmul.f32 %v6025, %v6030
    %s6032 = scalar_lea.vmem %s45, 56
    %v6033 = vld [vmem:[%s6032] sm:$0x7f]
    %s6034 = scalar_lea.vmem %s47, 7
    %v6035 = vld [vmem:[%s6034] sm:$0x1]
    %v6037 = vlaneseq
    %v6038 = vshrl.u32 %v6037, 7
    %v6039 = vsub.s32 0, %v6038
    %v6040 = vrot.slane %v6035, %v6039
    %v6043 = vsel %vm147, %v6029, 0
    %v6046 = vsel %vm147, %v6031, 0
    %v6049 = vsel %vm154, %v6033, 0
    %6051 = vmatprep.subr.mxu0 0.0
    %6052 = vmatpush1.msra.mxu0 %v6049
    %6053 = vmatprep.subr.mxu0 0.0
    %6054 = vmatpush1.msra.mxu0 0.0
    %6055 = vmatprep.subr.mxu0 0.0
    %6056 = vmatpush1.msra.mxu0 0.0
    %6057 = vmatprep.subr.mxu0 0.0
    %6058 = vmatpush1.msra.mxu0 0.0
    %6059 = vmatprep.subr.mxu0 0.0
    %6060 = vmatpush1.msra.mxu0 0.0
    %6061 = vmatprep.subr.mxu0 0.0
    %6062 = vmatpush1.msra.mxu0 0.0
    %6063 = vmatprep.subr.mxu0 0.0
    %6064 = vmatpush1.msra.mxu0 0.0
    %6065 = vmatprep.subr.mxu0 0.0
    %6066 = vmatpush1.msra.mxu0 0.0
    %6067 = vmatprep.subr.mxu0 0.0
    %6068 = vmatpush1.msra.mxu0 0.0
    %6069 = vmatprep.subr.mxu0 0.0
    %6070 = vmatpush1.msra.mxu0 0.0
    %6071 = vmatprep.subr.mxu0 0.0
    %6072 = vmatpush1.msra.mxu0 0.0
    %6073 = vmatprep.subr.mxu0 0.0
    %6074 = vmatpush1.msra.mxu0 0.0
    %6075 = vmatprep.subr.mxu0 0.0
    %6076 = vmatpush1.msra.mxu0 0.0
    %6077 = vmatprep.subr.mxu0 0.0
    %6078 = vmatpush1.msra.mxu0 0.0
    %6079 = vmatprep.subr.mxu0 0.0
    %6080 = vmatpush1.msra.mxu0 0.0
    %6081 = vmatprep.subr.mxu0 0.0
    %6082 = vmatpush1.msra.mxu0 0.0
    %6083 = vmatprep.subr.mxu0 0.0
    %6084 = vmatpush1.msra.mxu0 0.0
    %6085 = vmatprep.subr.mxu0 0.0
    %6086 = vmatpush1.msra.mxu0 0.0
    %6087 = vmatprep.subr.mxu0 0.0
    %6088 = vmatpush1.msra.mxu0 0.0
    %6089 = vmatprep.subr.mxu0 0.0
    %6090 = vmatpush1.msra.mxu0 0.0
    %6091 = vmatprep.subr.mxu0 0.0
    %6092 = vmatpush1.msra.mxu0 0.0
    %6093 = vmatprep.subr.mxu0 0.0
    %6094 = vmatpush1.msra.mxu0 0.0
    %6095 = vmatprep.subr.mxu0 0.0
    %6096 = vmatpush1.msra.mxu0 0.0
    %6097 = vmatprep.subr.mxu0 0.0
    %6098 = vmatpush1.msra.mxu0 0.0
    %6099 = vmatprep.subr.mxu0 0.0
    %6100 = vmatpush1.msra.mxu0 0.0
    %6101 = vmatprep.subr.mxu0 0.0
    %6102 = vmatpush1.msra.mxu0 0.0
    %6103 = vmatprep.subr.mxu0 0.0
    %6104 = vmatpush1.msra.mxu0 0.0
    %6105 = vmatprep.subr.mxu0 0.0
    %6106 = vmatpush1.msra.mxu0 0.0
    %6107 = vmatprep.subr.mxu0 0.0
    %6108 = vmatpush1.msra.mxu0 0.0
    %6109 = vmatprep.subr.mxu0 0.0
    %6110 = vmatpush1.msra.mxu0 0.0
    %6111 = vmatprep.subr.mxu0 0.0
    %6112 = vmatpush1.msra.mxu0 0.0
    %6113 = vmatprep.subr.mxu0 0.0
    %6114 = vmatpush1.msra.mxu0 0.0
    %6115 = vmatprep.mubr.f32.mxu0 0.0
    %6116 = vmatmul.mubr.f32.gmra.mrb[0].mxu0 %v6043
    %v6117 = vpop.f32.mrb[0].mxu0
    %v6118 = vadd.f32 %v6040, %v6117
    %v6119 = vpop.f32.mrb[0].mxu0
    %6120 = vmatprep.mubr.f32.mxu0 0.0
    %6121 = vmatmul.mubr.f32.gmra.mrb[0].mxu0 %v6046
    %v6122 = vpop.f32.mrb[0].mxu0
    %v6123 = vadd.f32 %v6040, %v6122
    %v6124 = vpop.f32.mrb[0].mxu0
    %6125 = vdwg.mxu0
    %v6126 = vadd.f32 %v6118, %v5532
    %v6127 = vadd.f32 %v6123, %v5533
    %s6128 = scalar_lea.vmem %s59, 8
    %v6129 = vld [vmem:[%s6128] sm:$0x1]
    %s6130 = scalar_lea.vmem %s59, 9
    %v6131 = vld [vmem:[%s6130] sm:$0x1]
    %v6132 = vsel %vm147, %v6126, 0.0
    %6133 = vadd.xlane.f32.xlu0 %v6132
    %v6134 = vpop.xlane.xlu0 %6133
    %v6135 = vsel %vm3745, %v6127, 0.0
    %6136 = vadd.xlane.f32.xlu0 %v6135
    %v6137 = vpop.xlane.xlu0 %6136
    %v6138 = vmul.f32 %v6134, %v742
    %v6139 = vmul.f32 %v6137, %v742
    %v6140 = vsub.f32 %v6126, %v6138
    %v6141 = vsub.f32 %v6127, %v6139
    %v6142 = vmul.f32 %v6140, %v6140
    %v6143 = vmul.f32 %v6141, %v6141
    %v6144 = vsel %vm147, %v6142, 0.0
    %6145 = vadd.xlane.f32.xlu0 %v6144
    %v6146 = vpop.xlane.xlu0 %6145
    %v6147 = vsel %vm3745, %v6143, 0.0
    %6148 = vadd.xlane.f32.xlu0 %v6147
    %v6149 = vpop.xlane.xlu0 %6148
    %v6150 = vmul.f32 %v6146, %v742
    %v6151 = vmul.f32 %v6149, %v742
    %v6152 = vadd.f32 %v6150, 1e-05
    %v6153 = vadd.f32 %v6151, 1e-05
    %v6154 = vrsqrt.pop %v6152
    %v6155 = vrsqrt.pop %v6153
    %v6156 = vmul.f32 %v6140, %v6154
    %v6157 = vmul.f32 %v6141, %v6155
    %v6159 = vlaneseq
    %v6160 = vshrl.u32 %v6159, 7
    %v6161 = vsub.s32 0, %v6160
    %v6162 = vrot.slane %v6129, %v6161
    %v6164 = vmul.f32 %v6156, %v6162
    %v6165 = vmul.f32 %v6157, %v6162
    %v6167 = vlaneseq
    %v6168 = vshrl.u32 %v6167, 7
    %v6169 = vsub.s32 0, %v6168
    %v6170 = vrot.slane %v6131, %v6169
    %v6172 = vadd.f32 %v6164, %v6170
    %v6173 = vadd.f32 %v6165, %v6170
    %s6174 = scalar_lea.vmem %s51, 8
    %v6175 = vld [vmem:[%s6174] sm:$0x7f]
    %s6176 = scalar_lea.vmem %s53, 1
    %v6177 = vld [vmem:[%s6176] sm:$0x1]
    %v6179 = vlaneseq
    %v6180 = vshrl.u32 %v6179, 7
    %v6181 = vsub.s32 0, %v6180
    %v6182 = vrot.slane %v6177, %v6181
    %v6185 = vsel %vm147, %v6172, 0
    %v6188 = vsel %vm147, %v6173, 0
    %v6191 = vsel %vm154, %v6175, 0
    %6193 = vmatprep.subr.mxu0 0.0
    %6194 = vmatpush1.msra.mxu0 %v6191
    %6195 = vmatprep.subr.mxu0 0.0
    %6196 = vmatpush1.msra.mxu0 0.0
    %6197 = vmatprep.subr.mxu0 0.0
    %6198 = vmatpush1.msra.mxu0 0.0
    %6199 = vmatprep.subr.mxu0 0.0
    %6200 = vmatpush1.msra.mxu0 0.0
    %6201 = vmatprep.subr.mxu0 0.0
    %6202 = vmatpush1.msra.mxu0 0.0
    %6203 = vmatprep.subr.mxu0 0.0
    %6204 = vmatpush1.msra.mxu0 0.0
    %6205 = vmatprep.subr.mxu0 0.0
    %6206 = vmatpush1.msra.mxu0 0.0
    %6207 = vmatprep.subr.mxu0 0.0
    %6208 = vmatpush1.msra.mxu0 0.0
    %6209 = vmatprep.subr.mxu0 0.0
    %6210 = vmatpush1.msra.mxu0 0.0
    %6211 = vmatprep.subr.mxu0 0.0
    %6212 = vmatpush1.msra.mxu0 0.0
    %6213 = vmatprep.subr.mxu0 0.0
    %6214 = vmatpush1.msra.mxu0 0.0
    %6215 = vmatprep.subr.mxu0 0.0
    %6216 = vmatpush1.msra.mxu0 0.0
    %6217 = vmatprep.subr.mxu0 0.0
    %6218 = vmatpush1.msra.mxu0 0.0
    %6219 = vmatprep.subr.mxu0 0.0
    %6220 = vmatpush1.msra.mxu0 0.0
    %6221 = vmatprep.subr.mxu0 0.0
    %6222 = vmatpush1.msra.mxu0 0.0
    %6223 = vmatprep.subr.mxu0 0.0
    %6224 = vmatpush1.msra.mxu0 0.0
    %6225 = vmatprep.subr.mxu0 0.0
    %6226 = vmatpush1.msra.mxu0 0.0
    %6227 = vmatprep.subr.mxu0 0.0
    %6228 = vmatpush1.msra.mxu0 0.0
    %6229 = vmatprep.subr.mxu0 0.0
    %6230 = vmatpush1.msra.mxu0 0.0
    %6231 = vmatprep.subr.mxu0 0.0
    %6232 = vmatpush1.msra.mxu0 0.0
    %6233 = vmatprep.subr.mxu0 0.0
    %6234 = vmatpush1.msra.mxu0 0.0
    %6235 = vmatprep.subr.mxu0 0.0
    %6236 = vmatpush1.msra.mxu0 0.0
    %6237 = vmatprep.subr.mxu0 0.0
    %6238 = vmatpush1.msra.mxu0 0.0
    %6239 = vmatprep.subr.mxu0 0.0
    %6240 = vmatpush1.msra.mxu0 0.0
    %6241 = vmatprep.subr.mxu0 0.0
    %6242 = vmatpush1.msra.mxu0 0.0
    %6243 = vmatprep.subr.mxu0 0.0
    %6244 = vmatpush1.msra.mxu0 0.0
    %6245 = vmatprep.subr.mxu0 0.0
    %6246 = vmatpush1.msra.mxu0 0.0
    %6247 = vmatprep.subr.mxu0 0.0
    %6248 = vmatpush1.msra.mxu0 0.0
    %6249 = vmatprep.subr.mxu0 0.0
    %6250 = vmatpush1.msra.mxu0 0.0
    %6251 = vmatprep.subr.mxu0 0.0
    %6252 = vmatpush1.msra.mxu0 0.0
    %6253 = vmatprep.subr.mxu0 0.0
    %6254 = vmatpush1.msra.mxu0 0.0
    %6255 = vmatprep.subr.mxu0 0.0
    %6256 = vmatpush1.msra.mxu0 0.0
    %6257 = vmatprep.mubr.f32.mxu0 0.0
    %6258 = vmatmul.mubr.f32.gmra.mrb[0].mxu0 %v6185
    %v6259 = vpop.f32.mrb[0].mxu0
    %v6260 = vadd.f32 %v6182, %v6259
    %v6261 = vpop.f32.mrb[0].mxu0
    %6262 = vmatprep.mubr.f32.mxu0 0.0
    %6263 = vmatmul.mubr.f32.gmra.mrb[0].mxu0 %v6188
    %v6264 = vpop.f32.mrb[0].mxu0
    %v6265 = vadd.f32 %v6182, %v6264
    %v6266 = vpop.f32.mrb[0].mxu0
    %6267 = vdwg.mxu0
    %v6268 = vmax.f32 %v6260, 0.0
    %v6269 = vmax.f32 %v6265, 0.0
    %s6270 = scalar_lea.vmem %s55, 4
    %v6271 = vld [vmem:[%s6270] sm:$0x7]
    %s6272 = scalar_lea.vmem %s57, 1
    %v6273 = vld [vmem:[%s6272] sm:$0x1]
    %v6275 = vlaneseq
    %v6276 = vshrl.u32 %v6275, 7
    %v6277 = vsub.s32 0, %v6276
    %v6278 = vrot.slane %v6273, %v6277
    %v6281 = vsel %vm881, %v6268, 0
    %v6284 = vsel %vm881, %v6269, 0
    %v6287 = vsel %vm888, %v6271, 0
    %6289 = vmatprep.subr.mxu0 0.0
    %6290 = vmatpush1.msra.mxu0 %v6287
    %6291 = vmatprep.subr.mxu0 0.0
    %6292 = vmatpush1.msra.mxu0 0.0
    %6293 = vmatprep.subr.mxu0 0.0
    %6294 = vmatpush1.msra.mxu0 0.0
    %6295 = vmatprep.subr.mxu0 0.0
    %6296 = vmatpush1.msra.mxu0 0.0
    %6297 = vmatprep.subr.mxu0 0.0
    %6298 = vmatpush1.msra.mxu0 0.0
    %6299 = vmatprep.subr.mxu0 0.0
    %6300 = vmatpush1.msra.mxu0 0.0
    %6301 = vmatprep.subr.mxu0 0.0
    %6302 = vmatpush1.msra.mxu0 0.0
    %6303 = vmatprep.subr.mxu0 0.0
    %6304 = vmatpush1.msra.mxu0 0.0
    %6305 = vmatprep.subr.mxu0 0.0
    %6306 = vmatpush1.msra.mxu0 0.0
    %6307 = vmatprep.subr.mxu0 0.0
    %6308 = vmatpush1.msra.mxu0 0.0
    %6309 = vmatprep.subr.mxu0 0.0
    %6310 = vmatpush1.msra.mxu0 0.0
    %6311 = vmatprep.subr.mxu0 0.0
    %6312 = vmatpush1.msra.mxu0 0.0
    %6313 = vmatprep.subr.mxu0 0.0
    %6314 = vmatpush1.msra.mxu0 0.0
    %6315 = vmatprep.subr.mxu0 0.0
    %6316 = vmatpush1.msra.mxu0 0.0
    %6317 = vmatprep.subr.mxu0 0.0
    %6318 = vmatpush1.msra.mxu0 0.0
    %6319 = vmatprep.subr.mxu0 0.0
    %6320 = vmatpush1.msra.mxu0 0.0
    %6321 = vmatprep.subr.mxu0 0.0
    %6322 = vmatpush1.msra.mxu0 0.0
    %6323 = vmatprep.subr.mxu0 0.0
    %6324 = vmatpush1.msra.mxu0 0.0
    %6325 = vmatprep.subr.mxu0 0.0
    %6326 = vmatpush1.msra.mxu0 0.0
    %6327 = vmatprep.subr.mxu0 0.0
    %6328 = vmatpush1.msra.mxu0 0.0
    %6329 = vmatprep.subr.mxu0 0.0
    %6330 = vmatpush1.msra.mxu0 0.0
    %6331 = vmatprep.subr.mxu0 0.0
    %6332 = vmatpush1.msra.mxu0 0.0
    %6333 = vmatprep.subr.mxu0 0.0
    %6334 = vmatpush1.msra.mxu0 0.0
    %6335 = vmatprep.subr.mxu0 0.0
    %6336 = vmatpush1.msra.mxu0 0.0
    %6337 = vmatprep.subr.mxu0 0.0
    %6338 = vmatpush1.msra.mxu0 0.0
    %6339 = vmatprep.subr.mxu0 0.0
    %6340 = vmatpush1.msra.mxu0 0.0
    %6341 = vmatprep.subr.mxu0 0.0
    %6342 = vmatpush1.msra.mxu0 0.0
    %6343 = vmatprep.subr.mxu0 0.0
    %6344 = vmatpush1.msra.mxu0 0.0
    %6345 = vmatprep.subr.mxu0 0.0
    %6346 = vmatpush1.msra.mxu0 0.0
    %6347 = vmatprep.subr.mxu0 0.0
    %6348 = vmatpush1.msra.mxu0 0.0
    %6349 = vmatprep.subr.mxu0 0.0
    %6350 = vmatpush1.msra.mxu0 0.0
    %6351 = vmatprep.subr.mxu0 0.0
    %6352 = vmatpush1.msra.mxu0 0.0
    %6353 = vmatprep.mubr.f32.mxu0 0.0
    %6354 = vmatmul.mubr.f32.gmra.mrb[0].mxu0 %v6281
    %v6355 = vpop.f32.mrb[0].mxu0
    %v6356 = vadd.f32 %v6278, %v6355
    %v6357 = vpop.f32.mrb[0].mxu0
    %6358 = vmatprep.mubr.f32.mxu0 0.0
    %6359 = vmatmul.mubr.f32.gmra.mrb[0].mxu0 %v6284
    %v6360 = vpop.f32.mrb[0].mxu0
    %v6361 = vadd.f32 %v6278, %v6360
    %v6362 = vpop.f32.mrb[0].mxu0
    %6363 = vdwg.mxu0
    %v6364 = vmax.f32 %v6356, 0.0
    %v6365 = vmax.f32 %v6361, 0.0
    %v6366 = vadd.f32 %v6364, %v6172
    %v6367 = vadd.f32 %v6365, %v6173
    %s6368 = scalar_lea.vmem %s59, 10
    %v6369 = vld [vmem:[%s6368] sm:$0x1]
    %s6370 = scalar_lea.vmem %s59, 11
    %v6371 = vld [vmem:[%s6370] sm:$0x1]
    %v6372 = vsel %vm147, %v6366, 0.0
    %6373 = vadd.xlane.f32.xlu0 %v6372
    %v6374 = vpop.xlane.xlu0 %6373
    %v6375 = vsel %vm3745, %v6367, 0.0
    %6376 = vadd.xlane.f32.xlu0 %v6375
    %v6377 = vpop.xlane.xlu0 %6376
    %v6378 = vmul.f32 %v6374, %v742
    %v6379 = vmul.f32 %v6377, %v742
    %v6380 = vsub.f32 %v6366, %v6378
    %v6381 = vsub.f32 %v6367, %v6379
    %v6382 = vmul.f32 %v6380, %v6380
    %v6383 = vmul.f32 %v6381, %v6381
    %v6384 = vsel %vm147, %v6382, 0.0
    %6385 = vadd.xlane.f32.xlu0 %v6384
    %v6386 = vpop.xlane.xlu0 %6385
    %v6387 = vsel %vm3745, %v6383, 0.0
    %6388 = vadd.xlane.f32.xlu0 %v6387
    %v6389 = vpop.xlane.xlu0 %6388
    %v6390 = vmul.f32 %v6386, %v742
    %v6391 = vmul.f32 %v6389, %v742
    %v6392 = vadd.f32 %v6390, 1e-05
    %v6393 = vadd.f32 %v6391, 1e-05
    %v6394 = vrsqrt.pop %v6392
    %v6395 = vrsqrt.pop %v6393
    %v6396 = vmul.f32 %v6380, %v6394
    %v6397 = vmul.f32 %v6381, %v6395
    %v6399 = vlaneseq
    %v6400 = vshrl.u32 %v6399, 7
    %v6401 = vsub.s32 0, %v6400
    %v6402 = vrot.slane %v6369, %v6401
    %v6404 = vmul.f32 %v6396, %v6402
    %v6405 = vmul.f32 %v6397, %v6402
    %v6407 = vlaneseq
    %v6408 = vshrl.u32 %v6407, 7
    %v6409 = vsub.s32 0, %v6408
    %v6410 = vrot.slane %v6371, %v6409
    %v6412 = vadd.f32 %v6404, %v6410
    %v6413 = vadd.f32 %v6405, %v6410
    %s6414 = scalar_lea.vmem %s39, 64
    %v6415 = vld [vmem:[%s6414] sm:$0x7f]
    %s6416 = scalar_lea.vmem %s41, 8
    %v6417 = vld [vmem:[%s6416] sm:$0x1]
    %v6419 = vlaneseq
    %v6420 = vshrl.u32 %v6419, 7
    %v6421 = vsub.s32 0, %v6420
    %v6422 = vrot.slane %v6417, %v6421
    %v6425 = vsel %vm147, %v6412, 0
    %v6428 = vsel %vm147, %v6413, 0
    %v6431 = vsel %vm154, %v6415, 0
    %6433 = vmatprep.subr.mxu0 0.0
    %6434 = vmatpush1.msra.mxu0 %v6431
    %6435 = vmatprep.subr.mxu0 0.0
    %6436 = vmatpush1.msra.mxu0 0.0
    %6437 = vmatprep.subr.mxu0 0.0
    %6438 = vmatpush1.msra.mxu0 0.0
    %6439 = vmatprep.subr.mxu0 0.0
    %6440 = vmatpush1.msra.mxu0 0.0
    %6441 = vmatprep.subr.mxu0 0.0
    %6442 = vmatpush1.msra.mxu0 0.0
    %6443 = vmatprep.subr.mxu0 0.0
    %6444 = vmatpush1.msra.mxu0 0.0
    %6445 = vmatprep.subr.mxu0 0.0
    %6446 = vmatpush1.msra.mxu0 0.0
    %6447 = vmatprep.subr.mxu0 0.0
    %6448 = vmatpush1.msra.mxu0 0.0
    %6449 = vmatprep.subr.mxu0 0.0
    %6450 = vmatpush1.msra.mxu0 0.0
    %6451 = vmatprep.subr.mxu0 0.0
    %6452 = vmatpush1.msra.mxu0 0.0
    %6453 = vmatprep.subr.mxu0 0.0
    %6454 = vmatpush1.msra.mxu0 0.0
    %6455 = vmatprep.subr.mxu0 0.0
    %6456 = vmatpush1.msra.mxu0 0.0
    %6457 = vmatprep.subr.mxu0 0.0
    %6458 = vmatpush1.msra.mxu0 0.0
    %6459 = vmatprep.subr.mxu0 0.0
    %6460 = vmatpush1.msra.mxu0 0.0
    %6461 = vmatprep.subr.mxu0 0.0
    %6462 = vmatpush1.msra.mxu0 0.0
    %6463 = vmatprep.subr.mxu0 0.0
    %6464 = vmatpush1.msra.mxu0 0.0
    %6465 = vmatprep.subr.mxu0 0.0
    %6466 = vmatpush1.msra.mxu0 0.0
    %6467 = vmatprep.subr.mxu0 0.0
    %6468 = vmatpush1.msra.mxu0 0.0
    %6469 = vmatprep.subr.mxu0 0.0
    %6470 = vmatpush1.msra.mxu0 0.0
    %6471 = vmatprep.subr.mxu0 0.0
    %6472 = vmatpush1.msra.mxu0 0.0
    %6473 = vmatprep.subr.mxu0 0.0
    %6474 = vmatpush1.msra.mxu0 0.0
    %6475 = vmatprep.subr.mxu0 0.0
    %6476 = vmatpush1.msra.mxu0 0.0
    %6477 = vmatprep.subr.mxu0 0.0
    %6478 = vmatpush1.msra.mxu0 0.0
    %6479 = vmatprep.subr.mxu0 0.0
    %6480 = vmatpush1.msra.mxu0 0.0
    %6481 = vmatprep.subr.mxu0 0.0
    %6482 = vmatpush1.msra.mxu0 0.0
    %6483 = vmatprep.subr.mxu0 0.0
    %6484 = vmatpush1.msra.mxu0 0.0
    %6485 = vmatprep.subr.mxu0 0.0
    %6486 = vmatpush1.msra.mxu0 0.0
    %6487 = vmatprep.subr.mxu0 0.0
    %6488 = vmatpush1.msra.mxu0 0.0
    %6489 = vmatprep.subr.mxu0 0.0
    %6490 = vmatpush1.msra.mxu0 0.0
    %6491 = vmatprep.subr.mxu0 0.0
    %6492 = vmatpush1.msra.mxu0 0.0
    %6493 = vmatprep.subr.mxu0 0.0
    %6494 = vmatpush1.msra.mxu0 0.0
    %6495 = vmatprep.subr.mxu0 0.0
    %6496 = vmatpush1.msra.mxu0 0.0
    %6497 = vmatprep.mubr.f32.mxu0 0.0
    %6498 = vmatmul.mubr.f32.gmra.mrb[0].mxu0 %v6425
    %v6499 = vpop.f32.mrb[0].mxu0
    %v6500 = vadd.f32 %v6422, %v6499
    %v6501 = vpop.f32.mrb[0].mxu0
    %6502 = vmatprep.mubr.f32.mxu0 0.0
    %6503 = vmatmul.mubr.f32.gmra.mrb[0].mxu0 %v6428
    %v6504 = vpop.f32.mrb[0].mxu0
    %v6505 = vadd.f32 %v6422, %v6504
    %v6506 = vpop.f32.mrb[0].mxu0
    %6507 = vdwg.mxu0
    %s6508 = scalar_lea.vmem %s39, 72
    %v6509 = vld [vmem:[%s6508] sm:$0x7f]
    %s6510 = scalar_lea.vmem %s41, 9
    %v6511 = vld [vmem:[%s6510] sm:$0x1]
    %v6513 = vlaneseq
    %v6514 = vshrl.u32 %v6513, 7
    %v6515 = vsub.s32 0, %v6514
    %v6516 = vrot.slane %v6511, %v6515
    %v6519 = vsel %vm154, %v6509, 0
    %6521 = vmatprep.subr.mxu0 0.0
    %6522 = vmatpush1.msra.mxu0 %v6519
    %6523 = vmatprep.subr.mxu0 0.0
    %6524 = vmatpush1.msra.mxu0 0.0
    %6525 = vmatprep.subr.mxu0 0.0
    %6526 = vmatpush1.msra.mxu0 0.0
    %6527 = vmatprep.subr.mxu0 0.0
    %6528 = vmatpush1.msra.mxu0 0.0
    %6529 = vmatprep.subr.mxu0 0.0
    %6530 = vmatpush1.msra.mxu0 0.0
    %6531 = vmatprep.subr.mxu0 0.0
    %6532 = vmatpush1.msra.mxu0 0.0
    %6533 = vmatprep.subr.mxu0 0.0
    %6534 = vmatpush1.msra.mxu0 0.0
    %6535 = vmatprep.subr.mxu0 0.0
    %6536 = vmatpush1.msra.mxu0 0.0
    %6537 = vmatprep.subr.mxu0 0.0
    %6538 = vmatpush1.msra.mxu0 0.0
    %6539 = vmatprep.subr.mxu0 0.0
    %6540 = vmatpush1.msra.mxu0 0.0
    %6541 = vmatprep.subr.mxu0 0.0
    %6542 = vmatpush1.msra.mxu0 0.0
    %6543 = vmatprep.subr.mxu0 0.0
    %6544 = vmatpush1.msra.mxu0 0.0
    %6545 = vmatprep.subr.mxu0 0.0
    %6546 = vmatpush1.msra.mxu0 0.0
    %6547 = vmatprep.subr.mxu0 0.0
    %6548 = vmatpush1.msra.mxu0 0.0
    %6549 = vmatprep.subr.mxu0 0.0
    %6550 = vmatpush1.msra.mxu0 0.0
    %6551 = vmatprep.subr.mxu0 0.0
    %6552 = vmatpush1.msra.mxu0 0.0
    %6553 = vmatprep.subr.mxu0 0.0
    %6554 = vmatpush1.msra.mxu0 0.0
    %6555 = vmatprep.subr.mxu0 0.0
    %6556 = vmatpush1.msra.mxu0 0.0
    %6557 = vmatprep.subr.mxu0 0.0
    %6558 = vmatpush1.msra.mxu0 0.0
    %6559 = vmatprep.subr.mxu0 0.0
    %6560 = vmatpush1.msra.mxu0 0.0
    %6561 = vmatprep.subr.mxu0 0.0
    %6562 = vmatpush1.msra.mxu0 0.0
    %6563 = vmatprep.subr.mxu0 0.0
    %6564 = vmatpush1.msra.mxu0 0.0
    %6565 = vmatprep.subr.mxu0 0.0
    %6566 = vmatpush1.msra.mxu0 0.0
    %6567 = vmatprep.subr.mxu0 0.0
    %6568 = vmatpush1.msra.mxu0 0.0
    %6569 = vmatprep.subr.mxu0 0.0
    %6570 = vmatpush1.msra.mxu0 0.0
    %6571 = vmatprep.subr.mxu0 0.0
    %6572 = vmatpush1.msra.mxu0 0.0
    %6573 = vmatprep.subr.mxu0 0.0
    %6574 = vmatpush1.msra.mxu0 0.0
    %6575 = vmatprep.subr.mxu0 0.0
    %6576 = vmatpush1.msra.mxu0 0.0
    %6577 = vmatprep.subr.mxu0 0.0
    %6578 = vmatpush1.msra.mxu0 0.0
    %6579 = vmatprep.subr.mxu0 0.0
    %6580 = vmatpush1.msra.mxu0 0.0
    %6581 = vmatprep.subr.mxu0 0.0
    %6582 = vmatpush1.msra.mxu0 0.0
    %6583 = vmatprep.subr.mxu0 0.0
    %6584 = vmatpush1.msra.mxu0 0.0
    %6585 = vmatprep.mubr.f32.mxu0 0.0
    %6586 = vmatmul.mubr.f32.gmra.mrb[0].mxu0 %v6425
    %v6587 = vpop.f32.mrb[0].mxu0
    %v6588 = vadd.f32 %v6516, %v6587
    %v6589 = vpop.f32.mrb[0].mxu0
    %6590 = vmatprep.mubr.f32.mxu0 0.0
    %6591 = vmatmul.mubr.f32.gmra.mrb[0].mxu0 %v6428
    %v6592 = vpop.f32.mrb[0].mxu0
    %v6593 = vadd.f32 %v6516, %v6592
    %v6594 = vpop.f32.mrb[0].mxu0
    %6595 = vdwg.mxu0
    %s6596 = scalar_lea.vmem %s39, 80
    %v6597 = vld [vmem:[%s6596] sm:$0x7f]
    %s6598 = scalar_lea.vmem %s41, 10
    %v6599 = vld [vmem:[%s6598] sm:$0x1]
    %v6601 = vlaneseq
    %v6602 = vshrl.u32 %v6601, 7
    %v6603 = vsub.s32 0, %v6602
    %v6604 = vrot.slane %v6599, %v6603
    %v6607 = vsel %vm154, %v6597, 0
    %6609 = vmatprep.subr.mxu0 0.0
    %6610 = vmatpush1.msra.mxu0 %v6607
    %6611 = vmatprep.subr.mxu0 0.0
    %6612 = vmatpush1.msra.mxu0 0.0
    %6613 = vmatprep.subr.mxu0 0.0
    %6614 = vmatpush1.msra.mxu0 0.0
    %6615 = vmatprep.subr.mxu0 0.0
    %6616 = vmatpush1.msra.mxu0 0.0
    %6617 = vmatprep.subr.mxu0 0.0
    %6618 = vmatpush1.msra.mxu0 0.0
    %6619 = vmatprep.subr.mxu0 0.0
    %6620 = vmatpush1.msra.mxu0 0.0
    %6621 = vmatprep.subr.mxu0 0.0
    %6622 = vmatpush1.msra.mxu0 0.0
    %6623 = vmatprep.subr.mxu0 0.0
    %6624 = vmatpush1.msra.mxu0 0.0
    %6625 = vmatprep.subr.mxu0 0.0
    %6626 = vmatpush1.msra.mxu0 0.0
    %6627 = vmatprep.subr.mxu0 0.0
    %6628 = vmatpush1.msra.mxu0 0.0
    %6629 = vmatprep.subr.mxu0 0.0
    %6630 = vmatpush1.msra.mxu0 0.0
    %6631 = vmatprep.subr.mxu0 0.0
    %6632 = vmatpush1.msra.mxu0 0.0
    %6633 = vmatprep.subr.mxu0 0.0
    %6634 = vmatpush1.msra.mxu0 0.0
    %6635 = vmatprep.subr.mxu0 0.0
    %6636 = vmatpush1.msra.mxu0 0.0
    %6637 = vmatprep.subr.mxu0 0.0
    %6638 = vmatpush1.msra.mxu0 0.0
    %6639 = vmatprep.subr.mxu0 0.0
    %6640 = vmatpush1.msra.mxu0 0.0
    %6641 = vmatprep.subr.mxu0 0.0
    %6642 = vmatpush1.msra.mxu0 0.0
    %6643 = vmatprep.subr.mxu0 0.0
    %6644 = vmatpush1.msra.mxu0 0.0
    %6645 = vmatprep.subr.mxu0 0.0
    %6646 = vmatpush1.msra.mxu0 0.0
    %6647 = vmatprep.subr.mxu0 0.0
    %6648 = vmatpush1.msra.mxu0 0.0
    %6649 = vmatprep.subr.mxu0 0.0
    %6650 = vmatpush1.msra.mxu0 0.0
    %6651 = vmatprep.subr.mxu0 0.0
    %6652 = vmatpush1.msra.mxu0 0.0
    %6653 = vmatprep.subr.mxu0 0.0
    %6654 = vmatpush1.msra.mxu0 0.0
    %6655 = vmatprep.subr.mxu0 0.0
    %6656 = vmatpush1.msra.mxu0 0.0
    %6657 = vmatprep.subr.mxu0 0.0
    %6658 = vmatpush1.msra.mxu0 0.0
    %6659 = vmatprep.subr.mxu0 0.0
    %6660 = vmatpush1.msra.mxu0 0.0
    %6661 = vmatprep.subr.mxu0 0.0
    %6662 = vmatpush1.msra.mxu0 0.0
    %6663 = vmatprep.subr.mxu0 0.0
    %6664 = vmatpush1.msra.mxu0 0.0
    %6665 = vmatprep.subr.mxu0 0.0
    %6666 = vmatpush1.msra.mxu0 0.0
    %6667 = vmatprep.subr.mxu0 0.0
    %6668 = vmatpush1.msra.mxu0 0.0
    %6669 = vmatprep.subr.mxu0 0.0
    %6670 = vmatpush1.msra.mxu0 0.0
    %6671 = vmatprep.subr.mxu0 0.0
    %6672 = vmatpush1.msra.mxu0 0.0
    %6673 = vmatprep.mubr.f32.mxu0 0.0
    %6674 = vmatmul.mubr.f32.gmra.mrb[0].mxu0 %v6425
    %v6675 = vpop.f32.mrb[0].mxu0
    %v6676 = vadd.f32 %v6604, %v6675
    %v6677 = vpop.f32.mrb[0].mxu0
    %6678 = vmatprep.mubr.f32.mxu0 0.0
    %6679 = vmatmul.mubr.f32.gmra.mrb[0].mxu0 %v6428
    %v6680 = vpop.f32.mrb[0].mxu0
    %v6681 = vadd.f32 %v6604, %v6680
    %v6682 = vpop.f32.mrb[0].mxu0
    %6683 = vdwg.mxu0
    %s6684 = scalar_lea.vmem %s43, 4
    %v6685 = vld [vmem:[%s6684] sm:$0x1]
    %s6686 = scalar_lea.vmem %s43, 5
    %v6687 = vld [vmem:[%s6686] sm:$0x1]
    %v6688 = vmul.f32 %v6500, 0.37796447
    %v6689 = vmul.f32 %v6505, 0.37796447
    %v6691 = vsel %vm147, %v6688, 0
    %v6694 = vsel %vm147, %v6689, 0
    %v6697 = vsel %vm147, %v6588, 0
    %v6700 = vsel %vm147, %v6593, 0
    %6702 = vmatprep.subr.mxu0 0.0
    %6703 = vmatpush1.xpose.msra.mxu0 %v6697
    %6704 = vmatprep.subr.mxu0 0.0
    %6705 = vmatpush1.xpose.msra.mxu0 %v6700
    %6706 = vmatprep.subr.mxu0 0.0
    %6707 = vmatpush1.xpose.msra.mxu0 0.0
    %6708 = vmatprep.subr.mxu0 0.0
    %6709 = vmatpush1.xpose.msra.mxu0 0.0
    %6710 = vmatprep.subr.mxu0 0.0
    %6711 = vmatpush1.xpose.msra.mxu0 0.0
    %6712 = vmatprep.subr.mxu0 0.0
    %6713 = vmatpush1.xpose.msra.mxu0 0.0
    %6714 = vmatprep.subr.mxu0 0.0
    %6715 = vmatpush1.xpose.msra.mxu0 0.0
    %6716 = vmatprep.subr.mxu0 0.0
    %6717 = vmatpush1.xpose.msra.mxu0 0.0
    %6718 = vmatprep.subr.mxu0 0.0
    %6719 = vmatpush1.xpose.msra.mxu0 0.0
    %6720 = vmatprep.subr.mxu0 0.0
    %6721 = vmatpush1.xpose.msra.mxu0 0.0
    %6722 = vmatprep.subr.mxu0 0.0
    %6723 = vmatpush1.xpose.msra.mxu0 0.0
    %6724 = vmatprep.subr.mxu0 0.0
    %6725 = vmatpush1.xpose.msra.mxu0 0.0
    %6726 = vmatprep.subr.mxu0 0.0
    %6727 = vmatpush1.xpose.msra.mxu0 0.0
    %6728 = vmatprep.subr.mxu0 0.0
    %6729 = vmatpush1.xpose.msra.mxu0 0.0
    %6730 = vmatprep.subr.mxu0 0.0
    %6731 = vmatpush1.xpose.msra.mxu0 0.0
    %6732 = vmatprep.subr.mxu0 0.0
    %6733 = vmatpush1.xpose.msra.mxu0 0.0
    %6734 = vmatprep.subr.mxu0 0.0
    %6735 = vmatpush1.xpose.msra.mxu0 0.0
    %6736 = vmatprep.subr.mxu0 0.0
    %6737 = vmatpush1.xpose.msra.mxu0 0.0
    %6738 = vmatprep.subr.mxu0 0.0
    %6739 = vmatpush1.xpose.msra.mxu0 0.0
    %6740 = vmatprep.subr.mxu0 0.0
    %6741 = vmatpush1.xpose.msra.mxu0 0.0
    %6742 = vmatprep.subr.mxu0 0.0
    %6743 = vmatpush1.xpose.msra.mxu0 0.0
    %6744 = vmatprep.subr.mxu0 0.0
    %6745 = vmatpush1.xpose.msra.mxu0 0.0
    %6746 = vmatprep.subr.mxu0 0.0
    %6747 = vmatpush1.xpose.msra.mxu0 0.0
    %6748 = vmatprep.subr.mxu0 0.0
    %6749 = vmatpush1.xpose.msra.mxu0 0.0
    %6750 = vmatprep.subr.mxu0 0.0
    %6751 = vmatpush1.xpose.msra.mxu0 0.0
    %6752 = vmatprep.subr.mxu0 0.0
    %6753 = vmatpush1.xpose.msra.mxu0 0.0
    %6754 = vmatprep.subr.mxu0 0.0
    %6755 = vmatpush1.xpose.msra.mxu0 0.0
    %6756 = vmatprep.subr.mxu0 0.0
    %6757 = vmatpush1.xpose.msra.mxu0 0.0
    %6758 = vmatprep.subr.mxu0 0.0
    %6759 = vmatpush1.xpose.msra.mxu0 0.0
    %6760 = vmatprep.subr.mxu0 0.0
    %6761 = vmatpush1.xpose.msra.mxu0 0.0
    %6762 = vmatprep.subr.mxu0 0.0
    %6763 = vmatpush1.xpose.msra.mxu0 0.0
    %6764 = vmatprep.subr.mxu0 0.0
    %6765 = vmatpush1.xpose.msra.mxu0 0.0
    %6766 = vmatprep.mubr.f32.mxu0 0.0
    %6767 = vmatmul.mubr.f32.gmra.mrb[0].mxu0 %v6691
    %v6768 = vpop.f32.mrb[0].mxu0
    %v6769 = vadd.f32 %v3370, %v6768
    %v6770 = vpop.f32.mrb[0].mxu0
    %6771 = vmatprep.mubr.f32.mxu0 0.0
    %6772 = vmatmul.mubr.f32.gmra.mrb[0].mxu0 %v6694
    %v6773 = vpop.f32.mrb[0].mxu0
    %v6774 = vadd.f32 %v3371, %v6773
    %v6775 = vpop.f32.mrb[0].mxu0
    %6776 = vdwg.mxu0
    %v6778 = vlaneseq
    %v6779 = vshrl.u32 %v6778, 7
    %v6780 = vsub.s32 0, %v6779
    %v6781 = vrot.slane %v6685, %v6780
    %v6783 = vmul.f32 %v6688, %v6781
    %v6784 = vmul.f32 %v6689, %v6781
    %v6785 = vsel %vm147, %v6783, 0.0
    %6786 = vadd.xlane.f32.xlu0 %v6785
    %v6787 = vpop.xlane.xlu0 %6786
    %v6788 = vsel %vm3745, %v6784, 0.0
    %6789 = vadd.xlane.f32.xlu0 %v6788
    %v6790 = vpop.xlane.xlu0 %6789
    %v6791 = vsel %vm3749, %v6769, -inf
    %6792 = vmax.xlane.f32.xlu0 %v6791
    %v6793 = vpop.xlane.xlu0 %6792
    %v6794 = vsel %vm3753, %v6774, -inf
    %6795 = vmax.xlane.f32.xlu0 %v6794
    %v6796 = vpop.xlane.xlu0 %6795
    %v6797 = vmax.f32 %v6793, %v6787
    %v6798 = vmax.f32 %v6796, %v6790
    %v6799 = vsub.f32 %v6769, %v6797
    %v6800 = vsub.f32 %v6774, %v6798
    %v6801 = vmul.f32 %v6799, 1.442695
    %v6802 = vpow.pop %v6801
    %v6803 = vmul.f32 %v6800, 1.442695
    %v6804 = vpow.pop %v6803
    %v6805 = vsub.f32 %v6787, %v6797
    %v6806 = vsub.f32 %v6790, %v6798
    %v6807 = vmul.f32 %v6805, 1.442695
    %v6808 = vpow.pop %v6807
    %v6809 = vmul.f32 %v6806, 1.442695
    %v6810 = vpow.pop %v6809
    %v6811 = vsel %vm3749, %v6802, 0.0
    %6812 = vadd.xlane.f32.xlu0 %v6811
    %v6813 = vpop.xlane.xlu0 %6812
    %v6814 = vsel %vm3753, %v6804, 0.0
    %6815 = vadd.xlane.f32.xlu0 %v6814
    %v6816 = vpop.xlane.xlu0 %6815
    %v6817 = vadd.f32 %v6813, %v6808
    %v6818 = vadd.f32 %v6816, %v6810
    %v6820 = vlaneseq
    %v6821 = vshrl.u32 %v6820, 7
    %v6822 = vsub.s32 0, %v6821
    %v6823 = vrot.slane %v6687, %v6822
    %v6825 = vmul.f32 %v6808, %v6823
    %v6826 = vmul.f32 %v6810, %v6823
    %v6828 = vsel %vm3749, %v6802, 0
    %v6831 = vsel %vm3749, %v6804, 0
    %v6834 = vsel %vm3793, %v6681, 0
    %6836 = vmatprep.subr.mxu0 0.0
    %6837 = vmatpush1.msra.mxu0 %v6676
    %6838 = vmatprep.subr.mxu0 0.0
    %6839 = vmatpush1.msra.mxu0 %v6834
    %6840 = vmatprep.subr.mxu0 0.0
    %6841 = vmatpush1.msra.mxu0 0.0
    %6842 = vmatprep.subr.mxu0 0.0
    %6843 = vmatpush1.msra.mxu0 0.0
    %6844 = vmatprep.subr.mxu0 0.0
    %6845 = vmatpush1.msra.mxu0 0.0
    %6846 = vmatprep.subr.mxu0 0.0
    %6847 = vmatpush1.msra.mxu0 0.0
    %6848 = vmatprep.subr.mxu0 0.0
    %6849 = vmatpush1.msra.mxu0 0.0
    %6850 = vmatprep.subr.mxu0 0.0
    %6851 = vmatpush1.msra.mxu0 0.0
    %6852 = vmatprep.subr.mxu0 0.0
    %6853 = vmatpush1.msra.mxu0 0.0
    %6854 = vmatprep.subr.mxu0 0.0
    %6855 = vmatpush1.msra.mxu0 0.0
    %6856 = vmatprep.subr.mxu0 0.0
    %6857 = vmatpush1.msra.mxu0 0.0
    %6858 = vmatprep.subr.mxu0 0.0
    %6859 = vmatpush1.msra.mxu0 0.0
    %6860 = vmatprep.subr.mxu0 0.0
    %6861 = vmatpush1.msra.mxu0 0.0
    %6862 = vmatprep.subr.mxu0 0.0
    %6863 = vmatpush1.msra.mxu0 0.0
    %6864 = vmatprep.subr.mxu0 0.0
    %6865 = vmatpush1.msra.mxu0 0.0
    %6866 = vmatprep.subr.mxu0 0.0
    %6867 = vmatpush1.msra.mxu0 0.0
    %6868 = vmatprep.subr.mxu0 0.0
    %6869 = vmatpush1.msra.mxu0 0.0
    %6870 = vmatprep.subr.mxu0 0.0
    %6871 = vmatpush1.msra.mxu0 0.0
    %6872 = vmatprep.subr.mxu0 0.0
    %6873 = vmatpush1.msra.mxu0 0.0
    %6874 = vmatprep.subr.mxu0 0.0
    %6875 = vmatpush1.msra.mxu0 0.0
    %6876 = vmatprep.subr.mxu0 0.0
    %6877 = vmatpush1.msra.mxu0 0.0
    %6878 = vmatprep.subr.mxu0 0.0
    %6879 = vmatpush1.msra.mxu0 0.0
    %6880 = vmatprep.subr.mxu0 0.0
    %6881 = vmatpush1.msra.mxu0 0.0
    %6882 = vmatprep.subr.mxu0 0.0
    %6883 = vmatpush1.msra.mxu0 0.0
    %6884 = vmatprep.subr.mxu0 0.0
    %6885 = vmatpush1.msra.mxu0 0.0
    %6886 = vmatprep.subr.mxu0 0.0
    %6887 = vmatpush1.msra.mxu0 0.0
    %6888 = vmatprep.subr.mxu0 0.0
    %6889 = vmatpush1.msra.mxu0 0.0
    %6890 = vmatprep.subr.mxu0 0.0
    %6891 = vmatpush1.msra.mxu0 0.0
    %6892 = vmatprep.subr.mxu0 0.0
    %6893 = vmatpush1.msra.mxu0 0.0
    %6894 = vmatprep.subr.mxu0 0.0
    %6895 = vmatpush1.msra.mxu0 0.0
    %6896 = vmatprep.subr.mxu0 0.0
    %6897 = vmatpush1.msra.mxu0 0.0
    %6898 = vmatprep.subr.mxu0 0.0
    %6899 = vmatpush1.msra.mxu0 0.0
    %6900 = vmatprep.mubr.f32.mxu0 0.0
    %6901 = vmatmul.mubr.f32.gmra.mrb[0].mxu0 %v6828
    %v6902 = vpop.f32.mrb[0].mxu0
    %v6903 = vadd.f32 %v6825, %v6902
    %v6904 = vpop.f32.mrb[0].mxu0
    %6905 = vmatprep.mubr.f32.mxu0 0.0
    %6906 = vmatmul.mubr.f32.gmra.mrb[0].mxu0 %v6831
    %v6907 = vpop.f32.mrb[0].mxu0
    %v6908 = vadd.f32 %v6826, %v6907
    %v6909 = vpop.f32.mrb[0].mxu0
    %6910 = vdwg.mxu0
    %v6911 = vrcp.pop %v6817
    %v6912 = vmul.f32 %v6903, %v6911
    %v6913 = vrcp.pop %v6818
    %v6914 = vmul.f32 %v6908, %v6913
    %s6915 = scalar_lea.vmem %s39, 88
    %v6916 = vld [vmem:[%s6915] sm:$0x7f]
    %s6917 = scalar_lea.vmem %s41, 11
    %v6918 = vld [vmem:[%s6917] sm:$0x1]
    %v6920 = vlaneseq
    %v6921 = vshrl.u32 %v6920, 7
    %v6922 = vsub.s32 0, %v6921
    %v6923 = vrot.slane %v6918, %v6922
    %v6926 = vsel %vm147, %v6912, 0
    %v6929 = vsel %vm147, %v6914, 0
    %v6932 = vsel %vm154, %v6916, 0
    %6934 = vmatprep.subr.mxu0 0.0
    %6935 = vmatpush1.msra.mxu0 %v6932
    %6936 = vmatprep.subr.mxu0 0.0
    %6937 = vmatpush1.msra.mxu0 0.0
    %6938 = vmatprep.subr.mxu0 0.0
    %6939 = vmatpush1.msra.mxu0 0.0
    %6940 = vmatprep.subr.mxu0 0.0
    %6941 = vmatpush1.msra.mxu0 0.0
    %6942 = vmatprep.subr.mxu0 0.0
    %6943 = vmatpush1.msra.mxu0 0.0
    %6944 = vmatprep.subr.mxu0 0.0
    %6945 = vmatpush1.msra.mxu0 0.0
    %6946 = vmatprep.subr.mxu0 0.0
    %6947 = vmatpush1.msra.mxu0 0.0
    %6948 = vmatprep.subr.mxu0 0.0
    %6949 = vmatpush1.msra.mxu0 0.0
    %6950 = vmatprep.subr.mxu0 0.0
    %6951 = vmatpush1.msra.mxu0 0.0
    %6952 = vmatprep.subr.mxu0 0.0
    %6953 = vmatpush1.msra.mxu0 0.0
    %6954 = vmatprep.subr.mxu0 0.0
    %6955 = vmatpush1.msra.mxu0 0.0
    %6956 = vmatprep.subr.mxu0 0.0
    %6957 = vmatpush1.msra.mxu0 0.0
    %6958 = vmatprep.subr.mxu0 0.0
    %6959 = vmatpush1.msra.mxu0 0.0
    %6960 = vmatprep.subr.mxu0 0.0
    %6961 = vmatpush1.msra.mxu0 0.0
    %6962 = vmatprep.subr.mxu0 0.0
    %6963 = vmatpush1.msra.mxu0 0.0
    %6964 = vmatprep.subr.mxu0 0.0
    %6965 = vmatpush1.msra.mxu0 0.0
    %6966 = vmatprep.subr.mxu0 0.0
    %6967 = vmatpush1.msra.mxu0 0.0
    %6968 = vmatprep.subr.mxu0 0.0
    %6969 = vmatpush1.msra.mxu0 0.0
    %6970 = vmatprep.subr.mxu0 0.0
    %6971 = vmatpush1.msra.mxu0 0.0
    %6972 = vmatprep.subr.mxu0 0.0
    %6973 = vmatpush1.msra.mxu0 0.0
    %6974 = vmatprep.subr.mxu0 0.0
    %6975 = vmatpush1.msra.mxu0 0.0
    %6976 = vmatprep.subr.mxu0 0.0
    %6977 = vmatpush1.msra.mxu0 0.0
    %6978 = vmatprep.subr.mxu0 0.0
    %6979 = vmatpush1.msra.mxu0 0.0
    %6980 = vmatprep.subr.mxu0 0.0
    %6981 = vmatpush1.msra.mxu0 0.0
    %6982 = vmatprep.subr.mxu0 0.0
    %6983 = vmatpush1.msra.mxu0 0.0
    %6984 = vmatprep.subr.mxu0 0.0
    %6985 = vmatpush1.msra.mxu0 0.0
    %6986 = vmatprep.subr.mxu0 0.0
    %6987 = vmatpush1.msra.mxu0 0.0
    %6988 = vmatprep.subr.mxu0 0.0
    %6989 = vmatpush1.msra.mxu0 0.0
    %6990 = vmatprep.subr.mxu0 0.0
    %6991 = vmatpush1.msra.mxu0 0.0
    %6992 = vmatprep.subr.mxu0 0.0
    %6993 = vmatpush1.msra.mxu0 0.0
    %6994 = vmatprep.subr.mxu0 0.0
    %6995 = vmatpush1.msra.mxu0 0.0
    %6996 = vmatprep.subr.mxu0 0.0
    %6997 = vmatpush1.msra.mxu0 0.0
    %6998 = vmatprep.mubr.f32.mxu0 0.0
    %6999 = vmatmul.mubr.f32.gmra.mrb[0].mxu0 %v6926
    %v7000 = vpop.f32.mrb[0].mxu0
    %v7001 = vadd.f32 %v6923, %v7000
    %v7002 = vpop.f32.mrb[0].mxu0
    %7003 = vmatprep.mubr.f32.mxu0 0.0
    %7004 = vmatmul.mubr.f32.gmra.mrb[0].mxu0 %v6929
    %v7005 = vpop.f32.mrb[0].mxu0
    %v7006 = vadd.f32 %v6923, %v7005
    %v7007 = vpop.f32.mrb[0].mxu0
    %7008 = vdwg.mxu0
    %v7009 = vadd.f32 %v7001, %v6412
    %v7010 = vadd.f32 %v7006, %v6413
    %s7011 = scalar_lea.vmem %s59, 12
    %v7012 = vld [vmem:[%s7011] sm:$0x1]
    %s7013 = scalar_lea.vmem %s59, 13
    %v7014 = vld [vmem:[%s7013] sm:$0x1]
    %v7015 = vsel %vm147, %v7009, 0.0
    %7016 = vadd.xlane.f32.xlu0 %v7015
    %v7017 = vpop.xlane.xlu0 %7016
    %v7018 = vsel %vm3745, %v7010, 0.0
    %7019 = vadd.xlane.f32.xlu0 %v7018
    %v7020 = vpop.xlane.xlu0 %7019
    %v7021 = vmul.f32 %v7017, %v742
    %v7022 = vmul.f32 %v7020, %v742
    %v7023 = vsub.f32 %v7009, %v7021
    %v7024 = vsub.f32 %v7010, %v7022
    %v7025 = vmul.f32 %v7023, %v7023
    %v7026 = vmul.f32 %v7024, %v7024
    %v7027 = vsel %vm147, %v7025, 0.0
    %7028 = vadd.xlane.f32.xlu0 %v7027
    %v7029 = vpop.xlane.xlu0 %7028
    %v7030 = vsel %vm3745, %v7026, 0.0
    %7031 = vadd.xlane.f32.xlu0 %v7030
    %v7032 = vpop.xlane.xlu0 %7031
    %v7033 = vmul.f32 %v7029, %v742
    %v7034 = vmul.f32 %v7032, %v742
    %v7035 = vadd.f32 %v7033, 1e-05
    %v7036 = vadd.f32 %v7034, 1e-05
    %v7037 = vrsqrt.pop %v7035
    %v7038 = vrsqrt.pop %v7036
    %v7039 = vmul.f32 %v7023, %v7037
    %v7040 = vmul.f32 %v7024, %v7038
    %v7042 = vlaneseq
    %v7043 = vshrl.u32 %v7042, 7
    %v7044 = vsub.s32 0, %v7043
    %v7045 = vrot.slane %v7012, %v7044
    %v7047 = vmul.f32 %v7039, %v7045
    %v7048 = vmul.f32 %v7040, %v7045
    %v7050 = vlaneseq
    %v7051 = vshrl.u32 %v7050, 7
    %v7052 = vsub.s32 0, %v7051
    %v7053 = vrot.slane %v7014, %v7052
    %v7055 = vadd.f32 %v7047, %v7053
    %v7056 = vadd.f32 %v7048, %v7053
    %s7057 = scalar_lea.vmem %s45, 64
    %v7058 = vld [vmem:[%s7057] sm:$0x7f]
    %s7059 = scalar_lea.vmem %s47, 8
    %v7060 = vld [vmem:[%s7059] sm:$0x1]
    %v7062 = vlaneseq
    %v7063 = vshrl.u32 %v7062, 7
    %v7064 = vsub.s32 0, %v7063
    %v7065 = vrot.slane %v7060, %v7064
    %v7068 = vsel %vm147, %v7055, 0
    %v7071 = vsel %vm147, %v7056, 0
    %v7074 = vsel %vm154, %v7058, 0
    %7076 = vmatprep.subr.mxu0 0.0
    %7077 = vmatpush1.msra.mxu0 %v7074
    %7078 = vmatprep.subr.mxu0 0.0
    %7079 = vmatpush1.msra.mxu0 0.0
    %7080 = vmatprep.subr.mxu0 0.0
    %7081 = vmatpush1.msra.mxu0 0.0
    %7082 = vmatprep.subr.mxu0 0.0
    %7083 = vmatpush1.msra.mxu0 0.0
    %7084 = vmatprep.subr.mxu0 0.0
    %7085 = vmatpush1.msra.mxu0 0.0
    %7086 = vmatprep.subr.mxu0 0.0
    %7087 = vmatpush1.msra.mxu0 0.0
    %7088 = vmatprep.subr.mxu0 0.0
    %7089 = vmatpush1.msra.mxu0 0.0
    %7090 = vmatprep.subr.mxu0 0.0
    %7091 = vmatpush1.msra.mxu0 0.0
    %7092 = vmatprep.subr.mxu0 0.0
    %7093 = vmatpush1.msra.mxu0 0.0
    %7094 = vmatprep.subr.mxu0 0.0
    %7095 = vmatpush1.msra.mxu0 0.0
    %7096 = vmatprep.subr.mxu0 0.0
    %7097 = vmatpush1.msra.mxu0 0.0
    %7098 = vmatprep.subr.mxu0 0.0
    %7099 = vmatpush1.msra.mxu0 0.0
    %7100 = vmatprep.subr.mxu0 0.0
    %7101 = vmatpush1.msra.mxu0 0.0
    %7102 = vmatprep.subr.mxu0 0.0
    %7103 = vmatpush1.msra.mxu0 0.0
    %7104 = vmatprep.subr.mxu0 0.0
    %7105 = vmatpush1.msra.mxu0 0.0
    %7106 = vmatprep.subr.mxu0 0.0
    %7107 = vmatpush1.msra.mxu0 0.0
    %7108 = vmatprep.subr.mxu0 0.0
    %7109 = vmatpush1.msra.mxu0 0.0
    %7110 = vmatprep.subr.mxu0 0.0
    %7111 = vmatpush1.msra.mxu0 0.0
    %7112 = vmatprep.subr.mxu0 0.0
    %7113 = vmatpush1.msra.mxu0 0.0
    %7114 = vmatprep.subr.mxu0 0.0
    %7115 = vmatpush1.msra.mxu0 0.0
    %7116 = vmatprep.subr.mxu0 0.0
    %7117 = vmatpush1.msra.mxu0 0.0
    %7118 = vmatprep.subr.mxu0 0.0
    %7119 = vmatpush1.msra.mxu0 0.0
    %7120 = vmatprep.subr.mxu0 0.0
    %7121 = vmatpush1.msra.mxu0 0.0
    %7122 = vmatprep.subr.mxu0 0.0
    %7123 = vmatpush1.msra.mxu0 0.0
    %7124 = vmatprep.subr.mxu0 0.0
    %7125 = vmatpush1.msra.mxu0 0.0
    %7126 = vmatprep.subr.mxu0 0.0
    %7127 = vmatpush1.msra.mxu0 0.0
    %7128 = vmatprep.subr.mxu0 0.0
    %7129 = vmatpush1.msra.mxu0 0.0
    %7130 = vmatprep.subr.mxu0 0.0
    %7131 = vmatpush1.msra.mxu0 0.0
    %7132 = vmatprep.subr.mxu0 0.0
    %7133 = vmatpush1.msra.mxu0 0.0
    %7134 = vmatprep.subr.mxu0 0.0
    %7135 = vmatpush1.msra.mxu0 0.0
    %7136 = vmatprep.subr.mxu0 0.0
    %7137 = vmatpush1.msra.mxu0 0.0
    %7138 = vmatprep.subr.mxu0 0.0
    %7139 = vmatpush1.msra.mxu0 0.0
    %7140 = vmatprep.mubr.f32.mxu0 0.0
    %7141 = vmatmul.mubr.f32.gmra.mrb[0].mxu0 %v7068
    %v7142 = vpop.f32.mrb[0].mxu0
    %v7143 = vadd.f32 %v7065, %v7142
    %v7144 = vpop.f32.mrb[0].mxu0
    %7145 = vmatprep.mubr.f32.mxu0 0.0
    %7146 = vmatmul.mubr.f32.gmra.mrb[0].mxu0 %v7071
    %v7147 = vpop.f32.mrb[0].mxu0
    %v7148 = vadd.f32 %v7065, %v7147
    %v7149 = vpop.f32.mrb[0].mxu0
    %7150 = vdwg.mxu0
    %s7151 = scalar_lea.vmem %s45, 72
    %v7152 = vld [vmem:[%s7151] sm:$0x7f]
    %s7153 = scalar_lea.vmem %s47, 9
    %v7154 = vld [vmem:[%s7153] sm:$0x1]
    %v7156 = vlaneseq
    %v7157 = vshrl.u32 %v7156, 7
    %v7158 = vsub.s32 0, %v7157
    %v7159 = vrot.slane %v7154, %v7158
    %v7162 = vsel %vm154, %v7152, 0
    %7164 = vmatprep.subr.mxu0 0.0
    %7165 = vmatpush1.msra.mxu0 %v7162
    %7166 = vmatprep.subr.mxu0 0.0
    %7167 = vmatpush1.msra.mxu0 0.0
    %7168 = vmatprep.subr.mxu0 0.0
    %7169 = vmatpush1.msra.mxu0 0.0
    %7170 = vmatprep.subr.mxu0 0.0
    %7171 = vmatpush1.msra.mxu0 0.0
    %7172 = vmatprep.subr.mxu0 0.0
    %7173 = vmatpush1.msra.mxu0 0.0
    %7174 = vmatprep.subr.mxu0 0.0
    %7175 = vmatpush1.msra.mxu0 0.0
    %7176 = vmatprep.subr.mxu0 0.0
    %7177 = vmatpush1.msra.mxu0 0.0
    %7178 = vmatprep.subr.mxu0 0.0
    %7179 = vmatpush1.msra.mxu0 0.0
    %7180 = vmatprep.subr.mxu0 0.0
    %7181 = vmatpush1.msra.mxu0 0.0
    %7182 = vmatprep.subr.mxu0 0.0
    %7183 = vmatpush1.msra.mxu0 0.0
    %7184 = vmatprep.subr.mxu0 0.0
    %7185 = vmatpush1.msra.mxu0 0.0
    %7186 = vmatprep.subr.mxu0 0.0
    %7187 = vmatpush1.msra.mxu0 0.0
    %7188 = vmatprep.subr.mxu0 0.0
    %7189 = vmatpush1.msra.mxu0 0.0
    %7190 = vmatprep.subr.mxu0 0.0
    %7191 = vmatpush1.msra.mxu0 0.0
    %7192 = vmatprep.subr.mxu0 0.0
    %7193 = vmatpush1.msra.mxu0 0.0
    %7194 = vmatprep.subr.mxu0 0.0
    %7195 = vmatpush1.msra.mxu0 0.0
    %7196 = vmatprep.subr.mxu0 0.0
    %7197 = vmatpush1.msra.mxu0 0.0
    %7198 = vmatprep.subr.mxu0 0.0
    %7199 = vmatpush1.msra.mxu0 0.0
    %7200 = vmatprep.subr.mxu0 0.0
    %7201 = vmatpush1.msra.mxu0 0.0
    %7202 = vmatprep.subr.mxu0 0.0
    %7203 = vmatpush1.msra.mxu0 0.0
    %7204 = vmatprep.subr.mxu0 0.0
    %7205 = vmatpush1.msra.mxu0 0.0
    %7206 = vmatprep.subr.mxu0 0.0
    %7207 = vmatpush1.msra.mxu0 0.0
    %7208 = vmatprep.subr.mxu0 0.0
    %7209 = vmatpush1.msra.mxu0 0.0
    %7210 = vmatprep.subr.mxu0 0.0
    %7211 = vmatpush1.msra.mxu0 0.0
    %7212 = vmatprep.subr.mxu0 0.0
    %7213 = vmatpush1.msra.mxu0 0.0
    %7214 = vmatprep.subr.mxu0 0.0
    %7215 = vmatpush1.msra.mxu0 0.0
    %7216 = vmatprep.subr.mxu0 0.0
    %7217 = vmatpush1.msra.mxu0 0.0
    %7218 = vmatprep.subr.mxu0 0.0
    %7219 = vmatpush1.msra.mxu0 0.0
    %7220 = vmatprep.subr.mxu0 0.0
    %7221 = vmatpush1.msra.mxu0 0.0
    %7222 = vmatprep.subr.mxu0 0.0
    %7223 = vmatpush1.msra.mxu0 0.0
    %7224 = vmatprep.subr.mxu0 0.0
    %7225 = vmatpush1.msra.mxu0 0.0
    %7226 = vmatprep.subr.mxu0 0.0
    %7227 = vmatpush1.msra.mxu0 0.0
    %7228 = vmatprep.mubr.f32.mxu0 0.0
    %7229 = vmatmul.mubr.f32.gmra.mrb[0].mxu0 %v2786
    %v7230 = vpop.f32.mrb[0].mxu0
    %v7231 = vadd.f32 %v7159, %v7230
    %v7232 = vpop.f32.mrb[0].mxu0
    %7233 = vmatprep.mubr.f32.mxu0 0.0
    %7234 = vmatmul.mubr.f32.gmra.mrb[0].mxu0 %v2789
    %v7235 = vpop.f32.mrb[0].mxu0
    %v7236 = vadd.f32 %v7159, %v7235
    %v7237 = vpop.f32.mrb[0].mxu0
    %7238 = vdwg.mxu0
    %s7239 = scalar_lea.vmem %s45, 80
    %v7240 = vld [vmem:[%s7239] sm:$0x7f]
    %s7241 = scalar_lea.vmem %s47, 10
    %v7242 = vld [vmem:[%s7241] sm:$0x1]
    %v7244 = vlaneseq
    %v7245 = vshrl.u32 %v7244, 7
    %v7246 = vsub.s32 0, %v7245
    %v7247 = vrot.slane %v7242, %v7246
    %v7250 = vsel %vm154, %v7240, 0
    %7252 = vmatprep.subr.mxu0 0.0
    %7253 = vmatpush1.msra.mxu0 %v7250
    %7254 = vmatprep.subr.mxu0 0.0
    %7255 = vmatpush1.msra.mxu0 0.0
    %7256 = vmatprep.subr.mxu0 0.0
    %7257 = vmatpush1.msra.mxu0 0.0
    %7258 = vmatprep.subr.mxu0 0.0
    %7259 = vmatpush1.msra.mxu0 0.0
    %7260 = vmatprep.subr.mxu0 0.0
    %7261 = vmatpush1.msra.mxu0 0.0
    %7262 = vmatprep.subr.mxu0 0.0
    %7263 = vmatpush1.msra.mxu0 0.0
    %7264 = vmatprep.subr.mxu0 0.0
    %7265 = vmatpush1.msra.mxu0 0.0
    %7266 = vmatprep.subr.mxu0 0.0
    %7267 = vmatpush1.msra.mxu0 0.0
    %7268 = vmatprep.subr.mxu0 0.0
    %7269 = vmatpush1.msra.mxu0 0.0
    %7270 = vmatprep.subr.mxu0 0.0
    %7271 = vmatpush1.msra.mxu0 0.0
    %7272 = vmatprep.subr.mxu0 0.0
    %7273 = vmatpush1.msra.mxu0 0.0
    %7274 = vmatprep.subr.mxu0 0.0
    %7275 = vmatpush1.msra.mxu0 0.0
    %7276 = vmatprep.subr.mxu0 0.0
    %7277 = vmatpush1.msra.mxu0 0.0
    %7278 = vmatprep.subr.mxu0 0.0
    %7279 = vmatpush1.msra.mxu0 0.0
    %7280 = vmatprep.subr.mxu0 0.0
    %7281 = vmatpush1.msra.mxu0 0.0
    %7282 = vmatprep.subr.mxu0 0.0
    %7283 = vmatpush1.msra.mxu0 0.0
    %7284 = vmatprep.subr.mxu0 0.0
    %7285 = vmatpush1.msra.mxu0 0.0
    %7286 = vmatprep.subr.mxu0 0.0
    %7287 = vmatpush1.msra.mxu0 0.0
    %7288 = vmatprep.subr.mxu0 0.0
    %7289 = vmatpush1.msra.mxu0 0.0
    %7290 = vmatprep.subr.mxu0 0.0
    %7291 = vmatpush1.msra.mxu0 0.0
    %7292 = vmatprep.subr.mxu0 0.0
    %7293 = vmatpush1.msra.mxu0 0.0
    %7294 = vmatprep.subr.mxu0 0.0
    %7295 = vmatpush1.msra.mxu0 0.0
    %7296 = vmatprep.subr.mxu0 0.0
    %7297 = vmatpush1.msra.mxu0 0.0
    %7298 = vmatprep.subr.mxu0 0.0
    %7299 = vmatpush1.msra.mxu0 0.0
    %7300 = vmatprep.subr.mxu0 0.0
    %7301 = vmatpush1.msra.mxu0 0.0
    %7302 = vmatprep.subr.mxu0 0.0
    %7303 = vmatpush1.msra.mxu0 0.0
    %7304 = vmatprep.subr.mxu0 0.0
    %7305 = vmatpush1.msra.mxu0 0.0
    %7306 = vmatprep.subr.mxu0 0.0
    %7307 = vmatpush1.msra.mxu0 0.0
    %7308 = vmatprep.subr.mxu0 0.0
    %7309 = vmatpush1.msra.mxu0 0.0
    %7310 = vmatprep.subr.mxu0 0.0
    %7311 = vmatpush1.msra.mxu0 0.0
    %7312 = vmatprep.subr.mxu0 0.0
    %7313 = vmatpush1.msra.mxu0 0.0
    %7314 = vmatprep.subr.mxu0 0.0
    %7315 = vmatpush1.msra.mxu0 0.0
    %7316 = vmatprep.mubr.f32.mxu0 0.0
    %7317 = vmatmul.mubr.f32.gmra.mrb[0].mxu0 %v2786
    %v7318 = vpop.f32.mrb[0].mxu0
    %v7319 = vadd.f32 %v7247, %v7318
    %v7320 = vpop.f32.mrb[0].mxu0
    %7321 = vmatprep.mubr.f32.mxu0 0.0
    %7322 = vmatmul.mubr.f32.gmra.mrb[0].mxu0 %v2789
    %v7323 = vpop.f32.mrb[0].mxu0
    %v7324 = vadd.f32 %v7247, %v7323
    %v7325 = vpop.f32.mrb[0].mxu0
    %7326 = vdwg.mxu0
    %s7327 = scalar_lea.vmem %s49, 4
    %v7328 = vld [vmem:[%s7327] sm:$0x1]
    %s7329 = scalar_lea.vmem %s49, 5
    %v7330 = vld [vmem:[%s7329] sm:$0x1]
    %v7331 = vmul.f32 %v7143, 0.37796447
    %v7332 = vmul.f32 %v7148, 0.37796447
    %v7334 = vsel %vm147, %v7331, 0
    %v7337 = vsel %vm147, %v7332, 0
    %v7340 = vsel %vm147, %v7231, 0
    %v7343 = vsel %vm147, %v7236, 0
    %7345 = vmatprep.subr.mxu0 0.0
    %7346 = vmatpush1.xpose.msra.mxu0 %v7340
    %7347 = vmatprep.subr.mxu0 0.0
    %7348 = vmatpush1.xpose.msra.mxu0 %v7343
    %7349 = vmatprep.subr.mxu0 0.0
    %7350 = vmatpush1.xpose.msra.mxu0 0.0
    %7351 = vmatprep.subr.mxu0 0.0
    %7352 = vmatpush1.xpose.msra.mxu0 0.0
    %7353 = vmatprep.subr.mxu0 0.0
    %7354 = vmatpush1.xpose.msra.mxu0 0.0
    %7355 = vmatprep.subr.mxu0 0.0
    %7356 = vmatpush1.xpose.msra.mxu0 0.0
    %7357 = vmatprep.subr.mxu0 0.0
    %7358 = vmatpush1.xpose.msra.mxu0 0.0
    %7359 = vmatprep.subr.mxu0 0.0
    %7360 = vmatpush1.xpose.msra.mxu0 0.0
    %7361 = vmatprep.subr.mxu0 0.0
    %7362 = vmatpush1.xpose.msra.mxu0 0.0
    %7363 = vmatprep.subr.mxu0 0.0
    %7364 = vmatpush1.xpose.msra.mxu0 0.0
    %7365 = vmatprep.subr.mxu0 0.0
    %7366 = vmatpush1.xpose.msra.mxu0 0.0
    %7367 = vmatprep.subr.mxu0 0.0
    %7368 = vmatpush1.xpose.msra.mxu0 0.0
    %7369 = vmatprep.subr.mxu0 0.0
    %7370 = vmatpush1.xpose.msra.mxu0 0.0
    %7371 = vmatprep.subr.mxu0 0.0
    %7372 = vmatpush1.xpose.msra.mxu0 0.0
    %7373 = vmatprep.subr.mxu0 0.0
    %7374 = vmatpush1.xpose.msra.mxu0 0.0
    %7375 = vmatprep.subr.mxu0 0.0
    %7376 = vmatpush1.xpose.msra.mxu0 0.0
    %7377 = vmatprep.subr.mxu0 0.0
    %7378 = vmatpush1.xpose.msra.mxu0 0.0
    %7379 = vmatprep.subr.mxu0 0.0
    %7380 = vmatpush1.xpose.msra.mxu0 0.0
    %7381 = vmatprep.subr.mxu0 0.0
    %7382 = vmatpush1.xpose.msra.mxu0 0.0
    %7383 = vmatprep.subr.mxu0 0.0
    %7384 = vmatpush1.xpose.msra.mxu0 0.0
    %7385 = vmatprep.subr.mxu0 0.0
    %7386 = vmatpush1.xpose.msra.mxu0 0.0
    %7387 = vmatprep.subr.mxu0 0.0
    %7388 = vmatpush1.xpose.msra.mxu0 0.0
    %7389 = vmatprep.subr.mxu0 0.0
    %7390 = vmatpush1.xpose.msra.mxu0 0.0
    %7391 = vmatprep.subr.mxu0 0.0
    %7392 = vmatpush1.xpose.msra.mxu0 0.0
    %7393 = vmatprep.subr.mxu0 0.0
    %7394 = vmatpush1.xpose.msra.mxu0 0.0
    %7395 = vmatprep.subr.mxu0 0.0
    %7396 = vmatpush1.xpose.msra.mxu0 0.0
    %7397 = vmatprep.subr.mxu0 0.0
    %7398 = vmatpush1.xpose.msra.mxu0 0.0
    %7399 = vmatprep.subr.mxu0 0.0
    %7400 = vmatpush1.xpose.msra.mxu0 0.0
    %7401 = vmatprep.subr.mxu0 0.0
    %7402 = vmatpush1.xpose.msra.mxu0 0.0
    %7403 = vmatprep.subr.mxu0 0.0
    %7404 = vmatpush1.xpose.msra.mxu0 0.0
    %7405 = vmatprep.subr.mxu0 0.0
    %7406 = vmatpush1.xpose.msra.mxu0 0.0
    %7407 = vmatprep.subr.mxu0 0.0
    %7408 = vmatpush1.xpose.msra.mxu0 0.0
    %7409 = vmatprep.mubr.f32.mxu0 0.0
    %7410 = vmatmul.mubr.f32.gmra.mrb[0].mxu0 %v7334
    %v7411 = vpop.f32.mrb[0].mxu0
    %v7412 = vadd.f32 %v3372, %v7411
    %v7413 = vpop.f32.mrb[0].mxu0
    %7414 = vmatprep.mubr.f32.mxu0 0.0
    %7415 = vmatmul.mubr.f32.gmra.mrb[0].mxu0 %v7337
    %v7416 = vpop.f32.mrb[0].mxu0
    %v7417 = vadd.f32 %v3373, %v7416
    %v7418 = vpop.f32.mrb[0].mxu0
    %7419 = vdwg.mxu0
    %v7421 = vlaneseq
    %v7422 = vshrl.u32 %v7421, 7
    %v7423 = vsub.s32 0, %v7422
    %v7424 = vrot.slane %v7328, %v7423
    %v7426 = vmul.f32 %v7331, %v7424
    %v7427 = vmul.f32 %v7332, %v7424
    %v7428 = vsel %vm147, %v7426, 0.0
    %7429 = vadd.xlane.f32.xlu0 %v7428
    %v7430 = vpop.xlane.xlu0 %7429
    %v7431 = vsel %vm3745, %v7427, 0.0
    %7432 = vadd.xlane.f32.xlu0 %v7431
    %v7433 = vpop.xlane.xlu0 %7432
    %v7434 = vsel %vm515, %v7412, -inf
    %7435 = vmax.xlane.f32.xlu0 %v7434
    %v7436 = vpop.xlane.xlu0 %7435
    %v7437 = vsel %vm4394, %v7417, -inf
    %7438 = vmax.xlane.f32.xlu0 %v7437
    %v7439 = vpop.xlane.xlu0 %7438
    %v7440 = vmax.f32 %v7436, %v7430
    %v7441 = vmax.f32 %v7439, %v7433
    %v7442 = vsub.f32 %v7412, %v7440
    %v7443 = vsub.f32 %v7417, %v7441
    %v7444 = vmul.f32 %v7442, 1.442695
    %v7445 = vpow.pop %v7444
    %v7446 = vmul.f32 %v7443, 1.442695
    %v7447 = vpow.pop %v7446
    %v7448 = vsub.f32 %v7430, %v7440
    %v7449 = vsub.f32 %v7433, %v7441
    %v7450 = vmul.f32 %v7448, 1.442695
    %v7451 = vpow.pop %v7450
    %v7452 = vmul.f32 %v7449, 1.442695
    %v7453 = vpow.pop %v7452
    %v7454 = vsel %vm515, %v7445, 0.0
    %7455 = vadd.xlane.f32.xlu0 %v7454
    %v7456 = vpop.xlane.xlu0 %7455
    %v7457 = vsel %vm4394, %v7447, 0.0
    %7458 = vadd.xlane.f32.xlu0 %v7457
    %v7459 = vpop.xlane.xlu0 %7458
    %v7460 = vadd.f32 %v7456, %v7451
    %v7461 = vadd.f32 %v7459, %v7453
    %v7463 = vlaneseq
    %v7464 = vshrl.u32 %v7463, 7
    %v7465 = vsub.s32 0, %v7464
    %v7466 = vrot.slane %v7330, %v7465
    %v7468 = vmul.f32 %v7451, %v7466
    %v7469 = vmul.f32 %v7453, %v7466
    %v7471 = vsel %vm515, %v7445, 0
    %v7474 = vsel %vm515, %v7447, 0
    %7476 = vmatprep.subr.mxu0 0.0
    %7477 = vmatpush1.msra.mxu0 %v7319
    %7478 = vmatprep.subr.mxu0 0.0
    %7479 = vmatpush1.msra.mxu0 %v7324
    %7480 = vmatprep.subr.mxu0 0.0
    %7481 = vmatpush1.msra.mxu0 0.0
    %7482 = vmatprep.subr.mxu0 0.0
    %7483 = vmatpush1.msra.mxu0 0.0
    %7484 = vmatprep.subr.mxu0 0.0
    %7485 = vmatpush1.msra.mxu0 0.0
    %7486 = vmatprep.subr.mxu0 0.0
    %7487 = vmatpush1.msra.mxu0 0.0
    %7488 = vmatprep.subr.mxu0 0.0
    %7489 = vmatpush1.msra.mxu0 0.0
    %7490 = vmatprep.subr.mxu0 0.0
    %7491 = vmatpush1.msra.mxu0 0.0
    %7492 = vmatprep.subr.mxu0 0.0
    %7493 = vmatpush1.msra.mxu0 0.0
    %7494 = vmatprep.subr.mxu0 0.0
    %7495 = vmatpush1.msra.mxu0 0.0
    %7496 = vmatprep.subr.mxu0 0.0
    %7497 = vmatpush1.msra.mxu0 0.0
    %7498 = vmatprep.subr.mxu0 0.0
    %7499 = vmatpush1.msra.mxu0 0.0
    %7500 = vmatprep.subr.mxu0 0.0
    %7501 = vmatpush1.msra.mxu0 0.0
    %7502 = vmatprep.subr.mxu0 0.0
    %7503 = vmatpush1.msra.mxu0 0.0
    %7504 = vmatprep.subr.mxu0 0.0
    %7505 = vmatpush1.msra.mxu0 0.0
    %7506 = vmatprep.subr.mxu0 0.0
    %7507 = vmatpush1.msra.mxu0 0.0
    %7508 = vmatprep.subr.mxu0 0.0
    %7509 = vmatpush1.msra.mxu0 0.0
    %7510 = vmatprep.subr.mxu0 0.0
    %7511 = vmatpush1.msra.mxu0 0.0
    %7512 = vmatprep.subr.mxu0 0.0
    %7513 = vmatpush1.msra.mxu0 0.0
    %7514 = vmatprep.subr.mxu0 0.0
    %7515 = vmatpush1.msra.mxu0 0.0
    %7516 = vmatprep.subr.mxu0 0.0
    %7517 = vmatpush1.msra.mxu0 0.0
    %7518 = vmatprep.subr.mxu0 0.0
    %7519 = vmatpush1.msra.mxu0 0.0
    %7520 = vmatprep.subr.mxu0 0.0
    %7521 = vmatpush1.msra.mxu0 0.0
    %7522 = vmatprep.subr.mxu0 0.0
    %7523 = vmatpush1.msra.mxu0 0.0
    %7524 = vmatprep.subr.mxu0 0.0
    %7525 = vmatpush1.msra.mxu0 0.0
    %7526 = vmatprep.subr.mxu0 0.0
    %7527 = vmatpush1.msra.mxu0 0.0
    %7528 = vmatprep.subr.mxu0 0.0
    %7529 = vmatpush1.msra.mxu0 0.0
    %7530 = vmatprep.subr.mxu0 0.0
    %7531 = vmatpush1.msra.mxu0 0.0
    %7532 = vmatprep.subr.mxu0 0.0
    %7533 = vmatpush1.msra.mxu0 0.0
    %7534 = vmatprep.subr.mxu0 0.0
    %7535 = vmatpush1.msra.mxu0 0.0
    %7536 = vmatprep.subr.mxu0 0.0
    %7537 = vmatpush1.msra.mxu0 0.0
    %7538 = vmatprep.subr.mxu0 0.0
    %7539 = vmatpush1.msra.mxu0 0.0
    %7540 = vmatprep.mubr.f32.mxu0 0.0
    %7541 = vmatmul.mubr.f32.gmra.mrb[0].mxu0 %v7471
    %v7542 = vpop.f32.mrb[0].mxu0
    %v7543 = vadd.f32 %v7468, %v7542
    %v7544 = vpop.f32.mrb[0].mxu0
    %7545 = vmatprep.mubr.f32.mxu0 0.0
    %7546 = vmatmul.mubr.f32.gmra.mrb[0].mxu0 %v7474
    %v7547 = vpop.f32.mrb[0].mxu0
    %v7548 = vadd.f32 %v7469, %v7547
    %v7549 = vpop.f32.mrb[0].mxu0
    %7550 = vdwg.mxu0
    %v7551 = vrcp.pop %v7460
    %v7552 = vmul.f32 %v7543, %v7551
    %v7553 = vrcp.pop %v7461
    %v7554 = vmul.f32 %v7548, %v7553
    %s7555 = scalar_lea.vmem %s45, 88
    %v7556 = vld [vmem:[%s7555] sm:$0x7f]
    %s7557 = scalar_lea.vmem %s47, 11
    %v7558 = vld [vmem:[%s7557] sm:$0x1]
    %v7560 = vlaneseq
    %v7561 = vshrl.u32 %v7560, 7
    %v7562 = vsub.s32 0, %v7561
    %v7563 = vrot.slane %v7558, %v7562
    %v7566 = vsel %vm147, %v7552, 0
    %v7569 = vsel %vm147, %v7554, 0
    %v7572 = vsel %vm154, %v7556, 0
    %7574 = vmatprep.subr.mxu0 0.0
    %7575 = vmatpush1.msra.mxu0 %v7572
    %7576 = vmatprep.subr.mxu0 0.0
    %7577 = vmatpush1.msra.mxu0 0.0
    %7578 = vmatprep.subr.mxu0 0.0
    %7579 = vmatpush1.msra.mxu0 0.0
    %7580 = vmatprep.subr.mxu0 0.0
    %7581 = vmatpush1.msra.mxu0 0.0
    %7582 = vmatprep.subr.mxu0 0.0
    %7583 = vmatpush1.msra.mxu0 0.0
    %7584 = vmatprep.subr.mxu0 0.0
    %7585 = vmatpush1.msra.mxu0 0.0
    %7586 = vmatprep.subr.mxu0 0.0
    %7587 = vmatpush1.msra.mxu0 0.0
    %7588 = vmatprep.subr.mxu0 0.0
    %7589 = vmatpush1.msra.mxu0 0.0
    %7590 = vmatprep.subr.mxu0 0.0
    %7591 = vmatpush1.msra.mxu0 0.0
    %7592 = vmatprep.subr.mxu0 0.0
    %7593 = vmatpush1.msra.mxu0 0.0
    %7594 = vmatprep.subr.mxu0 0.0
    %7595 = vmatpush1.msra.mxu0 0.0
    %7596 = vmatprep.subr.mxu0 0.0
    %7597 = vmatpush1.msra.mxu0 0.0
    %7598 = vmatprep.subr.mxu0 0.0
    %7599 = vmatpush1.msra.mxu0 0.0
    %7600 = vmatprep.subr.mxu0 0.0
    %7601 = vmatpush1.msra.mxu0 0.0
    %7602 = vmatprep.subr.mxu0 0.0
    %7603 = vmatpush1.msra.mxu0 0.0
    %7604 = vmatprep.subr.mxu0 0.0
    %7605 = vmatpush1.msra.mxu0 0.0
    %7606 = vmatprep.subr.mxu0 0.0
    %7607 = vmatpush1.msra.mxu0 0.0
    %7608 = vmatprep.subr.mxu0 0.0
    %7609 = vmatpush1.msra.mxu0 0.0
    %7610 = vmatprep.subr.mxu0 0.0
    %7611 = vmatpush1.msra.mxu0 0.0
    %7612 = vmatprep.subr.mxu0 0.0
    %7613 = vmatpush1.msra.mxu0 0.0
    %7614 = vmatprep.subr.mxu0 0.0
    %7615 = vmatpush1.msra.mxu0 0.0
    %7616 = vmatprep.subr.mxu0 0.0
    %7617 = vmatpush1.msra.mxu0 0.0
    %7618 = vmatprep.subr.mxu0 0.0
    %7619 = vmatpush1.msra.mxu0 0.0
    %7620 = vmatprep.subr.mxu0 0.0
    %7621 = vmatpush1.msra.mxu0 0.0
    %7622 = vmatprep.subr.mxu0 0.0
    %7623 = vmatpush1.msra.mxu0 0.0
    %7624 = vmatprep.subr.mxu0 0.0
    %7625 = vmatpush1.msra.mxu0 0.0
    %7626 = vmatprep.subr.mxu0 0.0
    %7627 = vmatpush1.msra.mxu0 0.0
    %7628 = vmatprep.subr.mxu0 0.0
    %7629 = vmatpush1.msra.mxu0 0.0
    %7630 = vmatprep.subr.mxu0 0.0
    %7631 = vmatpush1.msra.mxu0 0.0
    %7632 = vmatprep.subr.mxu0 0.0
    %7633 = vmatpush1.msra.mxu0 0.0
    %7634 = vmatprep.subr.mxu0 0.0
    %7635 = vmatpush1.msra.mxu0 0.0
    %7636 = vmatprep.subr.mxu0 0.0
    %7637 = vmatpush1.msra.mxu0 0.0
    %7638 = vmatprep.mubr.f32.mxu0 0.0
    %7639 = vmatmul.mubr.f32.gmra.mrb[0].mxu0 %v7566
    %v7640 = vpop.f32.mrb[0].mxu0
    %v7641 = vadd.f32 %v7563, %v7640
    %v7642 = vpop.f32.mrb[0].mxu0
    %7643 = vmatprep.mubr.f32.mxu0 0.0
    %7644 = vmatmul.mubr.f32.gmra.mrb[0].mxu0 %v7569
    %v7645 = vpop.f32.mrb[0].mxu0
    %v7646 = vadd.f32 %v7563, %v7645
    %v7647 = vpop.f32.mrb[0].mxu0
    %7648 = vdwg.mxu0
    %v7649 = vadd.f32 %v7641, %v7055
    %v7650 = vadd.f32 %v7646, %v7056
    %s7651 = scalar_lea.vmem %s59, 14
    %v7652 = vld [vmem:[%s7651] sm:$0x1]
    %s7653 = scalar_lea.vmem %s59, 15
    %v7654 = vld [vmem:[%s7653] sm:$0x1]
    %v7655 = vsel %vm147, %v7649, 0.0
    %7656 = vadd.xlane.f32.xlu0 %v7655
    %v7657 = vpop.xlane.xlu0 %7656
    %v7658 = vsel %vm3745, %v7650, 0.0
    %7659 = vadd.xlane.f32.xlu0 %v7658
    %v7660 = vpop.xlane.xlu0 %7659
    %v7661 = vmul.f32 %v7657, %v742
    %v7662 = vmul.f32 %v7660, %v742
    %v7663 = vsub.f32 %v7649, %v7661
    %v7664 = vsub.f32 %v7650, %v7662
    %v7665 = vmul.f32 %v7663, %v7663
    %v7666 = vmul.f32 %v7664, %v7664
    %v7667 = vsel %vm147, %v7665, 0.0
    %7668 = vadd.xlane.f32.xlu0 %v7667
    %v7669 = vpop.xlane.xlu0 %7668
    %v7670 = vsel %vm3745, %v7666, 0.0
    %7671 = vadd.xlane.f32.xlu0 %v7670
    %v7672 = vpop.xlane.xlu0 %7671
    %v7673 = vmul.f32 %v7669, %v742
    %v7674 = vmul.f32 %v7672, %v742
    %v7675 = vadd.f32 %v7673, 1e-05
    %v7676 = vadd.f32 %v7674, 1e-05
    %v7677 = vrsqrt.pop %v7675
    %v7678 = vrsqrt.pop %v7676
    %v7679 = vmul.f32 %v7663, %v7677
    %v7680 = vmul.f32 %v7664, %v7678
    %v7682 = vlaneseq
    %v7683 = vshrl.u32 %v7682, 7
    %v7684 = vsub.s32 0, %v7683
    %v7685 = vrot.slane %v7652, %v7684
    %v7687 = vmul.f32 %v7679, %v7685
    %v7688 = vmul.f32 %v7680, %v7685
    %v7690 = vlaneseq
    %v7691 = vshrl.u32 %v7690, 7
    %v7692 = vsub.s32 0, %v7691
    %v7693 = vrot.slane %v7654, %v7692
    %v7695 = vadd.f32 %v7687, %v7693
    %v7696 = vadd.f32 %v7688, %v7693
    %s7697 = scalar_lea.vmem %s51, 16
    %v7698 = vld [vmem:[%s7697] sm:$0x7f]
    %s7699 = scalar_lea.vmem %s53, 2
    %v7700 = vld [vmem:[%s7699] sm:$0x1]
    %v7702 = vlaneseq
    %v7703 = vshrl.u32 %v7702, 7
    %v7704 = vsub.s32 0, %v7703
    %v7705 = vrot.slane %v7700, %v7704
    %v7708 = vsel %vm147, %v7695, 0
    %v7711 = vsel %vm147, %v7696, 0
    %v7714 = vsel %vm154, %v7698, 0
    %7716 = vmatprep.subr.mxu0 0.0
    %7717 = vmatpush1.msra.mxu0 %v7714
    %7718 = vmatprep.subr.mxu0 0.0
    %7719 = vmatpush1.msra.mxu0 0.0
    %7720 = vmatprep.subr.mxu0 0.0
    %7721 = vmatpush1.msra.mxu0 0.0
    %7722 = vmatprep.subr.mxu0 0.0
    %7723 = vmatpush1.msra.mxu0 0.0
    %7724 = vmatprep.subr.mxu0 0.0
    %7725 = vmatpush1.msra.mxu0 0.0
    %7726 = vmatprep.subr.mxu0 0.0
    %7727 = vmatpush1.msra.mxu0 0.0
    %7728 = vmatprep.subr.mxu0 0.0
    %7729 = vmatpush1.msra.mxu0 0.0
    %7730 = vmatprep.subr.mxu0 0.0
    %7731 = vmatpush1.msra.mxu0 0.0
    %7732 = vmatprep.subr.mxu0 0.0
    %7733 = vmatpush1.msra.mxu0 0.0
    %7734 = vmatprep.subr.mxu0 0.0
    %7735 = vmatpush1.msra.mxu0 0.0
    %7736 = vmatprep.subr.mxu0 0.0
    %7737 = vmatpush1.msra.mxu0 0.0
    %7738 = vmatprep.subr.mxu0 0.0
    %7739 = vmatpush1.msra.mxu0 0.0
    %7740 = vmatprep.subr.mxu0 0.0
    %7741 = vmatpush1.msra.mxu0 0.0
    %7742 = vmatprep.subr.mxu0 0.0
    %7743 = vmatpush1.msra.mxu0 0.0
    %7744 = vmatprep.subr.mxu0 0.0
    %7745 = vmatpush1.msra.mxu0 0.0
    %7746 = vmatprep.subr.mxu0 0.0
    %7747 = vmatpush1.msra.mxu0 0.0
    %7748 = vmatprep.subr.mxu0 0.0
    %7749 = vmatpush1.msra.mxu0 0.0
    %7750 = vmatprep.subr.mxu0 0.0
    %7751 = vmatpush1.msra.mxu0 0.0
    %7752 = vmatprep.subr.mxu0 0.0
    %7753 = vmatpush1.msra.mxu0 0.0
    %7754 = vmatprep.subr.mxu0 0.0
    %7755 = vmatpush1.msra.mxu0 0.0
    %7756 = vmatprep.subr.mxu0 0.0
    %7757 = vmatpush1.msra.mxu0 0.0
    %7758 = vmatprep.subr.mxu0 0.0
    %7759 = vmatpush1.msra.mxu0 0.0
    %7760 = vmatprep.subr.mxu0 0.0
    %7761 = vmatpush1.msra.mxu0 0.0
    %7762 = vmatprep.subr.mxu0 0.0
    %7763 = vmatpush1.msra.mxu0 0.0
    %7764 = vmatprep.subr.mxu0 0.0
    %7765 = vmatpush1.msra.mxu0 0.0
    %7766 = vmatprep.subr.mxu0 0.0
    %7767 = vmatpush1.msra.mxu0 0.0
    %7768 = vmatprep.subr.mxu0 0.0
    %7769 = vmatpush1.msra.mxu0 0.0
    %7770 = vmatprep.subr.mxu0 0.0
    %7771 = vmatpush1.msra.mxu0 0.0
    %7772 = vmatprep.subr.mxu0 0.0
    %7773 = vmatpush1.msra.mxu0 0.0
    %7774 = vmatprep.subr.mxu0 0.0
    %7775 = vmatpush1.msra.mxu0 0.0
    %7776 = vmatprep.subr.mxu0 0.0
    %7777 = vmatpush1.msra.mxu0 0.0
    %7778 = vmatprep.subr.mxu0 0.0
    %7779 = vmatpush1.msra.mxu0 0.0
    %7780 = vmatprep.mubr.f32.mxu0 0.0
    %7781 = vmatmul.mubr.f32.gmra.mrb[0].mxu0 %v7708
    %v7782 = vpop.f32.mrb[0].mxu0
    %v7783 = vadd.f32 %v7705, %v7782
    %v7784 = vpop.f32.mrb[0].mxu0
    %7785 = vmatprep.mubr.f32.mxu0 0.0
    %7786 = vmatmul.mubr.f32.gmra.mrb[0].mxu0 %v7711
    %v7787 = vpop.f32.mrb[0].mxu0
    %v7788 = vadd.f32 %v7705, %v7787
    %v7789 = vpop.f32.mrb[0].mxu0
    %7790 = vdwg.mxu0
    %v7791 = vmax.f32 %v7783, 0.0
    %v7792 = vmax.f32 %v7788, 0.0
    %s7793 = scalar_lea.vmem %s55, 8
    %v7794 = vld [vmem:[%s7793] sm:$0x7]
    %s7795 = scalar_lea.vmem %s57, 2
    %v7796 = vld [vmem:[%s7795] sm:$0x1]
    %v7798 = vlaneseq
    %v7799 = vshrl.u32 %v7798, 7
    %v7800 = vsub.s32 0, %v7799
    %v7801 = vrot.slane %v7796, %v7800
    %v7804 = vsel %vm881, %v7791, 0
    %v7807 = vsel %vm881, %v7792, 0
    %v7810 = vsel %vm888, %v7794, 0
    %7812 = vmatprep.subr.mxu0 0.0
    %7813 = vmatpush1.msra.mxu0 %v7810
    %7814 = vmatprep.subr.mxu0 0.0
    %7815 = vmatpush1.msra.mxu0 0.0
    %7816 = vmatprep.subr.mxu0 0.0
    %7817 = vmatpush1.msra.mxu0 0.0
    %7818 = vmatprep.subr.mxu0 0.0
    %7819 = vmatpush1.msra.mxu0 0.0
    %7820 = vmatprep.subr.mxu0 0.0
    %7821 = vmatpush1.msra.mxu0 0.0
    %7822 = vmatprep.subr.mxu0 0.0
    %7823 = vmatpush1.msra.mxu0 0.0
    %7824 = vmatprep.subr.mxu0 0.0
    %7825 = vmatpush1.msra.mxu0 0.0
    %7826 = vmatprep.subr.mxu0 0.0
    %7827 = vmatpush1.msra.mxu0 0.0
    %7828 = vmatprep.subr.mxu0 0.0
    %7829 = vmatpush1.msra.mxu0 0.0
    %7830 = vmatprep.subr.mxu0 0.0
    %7831 = vmatpush1.msra.mxu0 0.0
    %7832 = vmatprep.subr.mxu0 0.0
    %7833 = vmatpush1.msra.mxu0 0.0
    %7834 = vmatprep.subr.mxu0 0.0
    %7835 = vmatpush1.msra.mxu0 0.0
    %7836 = vmatprep.subr.mxu0 0.0
    %7837 = vmatpush1.msra.mxu0 0.0
    %7838 = vmatprep.subr.mxu0 0.0
    %7839 = vmatpush1.msra.mxu0 0.0
    %7840 = vmatprep.subr.mxu0 0.0
    %7841 = vmatpush1.msra.mxu0 0.0
    %7842 = vmatprep.subr.mxu0 0.0
    %7843 = vmatpush1.msra.mxu0 0.0
    %7844 = vmatprep.subr.mxu0 0.0
    %7845 = vmatpush1.msra.mxu0 0.0
    %7846 = vmatprep.subr.mxu0 0.0
    %7847 = vmatpush1.msra.mxu0 0.0
    %7848 = vmatprep.subr.mxu0 0.0
    %7849 = vmatpush1.msra.mxu0 0.0
    %7850 = vmatprep.subr.mxu0 0.0
    %7851 = vmatpush1.msra.mxu0 0.0
    %7852 = vmatprep.subr.mxu0 0.0
    %7853 = vmatpush1.msra.mxu0 0.0
    %7854 = vmatprep.subr.mxu0 0.0
    %7855 = vmatpush1.msra.mxu0 0.0
    %7856 = vmatprep.subr.mxu0 0.0
    %7857 = vmatpush1.msra.mxu0 0.0
    %7858 = vmatprep.subr.mxu0 0.0
    %7859 = vmatpush1.msra.mxu0 0.0
    %7860 = vmatprep.subr.mxu0 0.0
    %7861 = vmatpush1.msra.mxu0 0.0
    %7862 = vmatprep.subr.mxu0 0.0
    %7863 = vmatpush1.msra.mxu0 0.0
    %7864 = vmatprep.subr.mxu0 0.0
    %7865 = vmatpush1.msra.mxu0 0.0
    %7866 = vmatprep.subr.mxu0 0.0
    %7867 = vmatpush1.msra.mxu0 0.0
    %7868 = vmatprep.subr.mxu0 0.0
    %7869 = vmatpush1.msra.mxu0 0.0
    %7870 = vmatprep.subr.mxu0 0.0
    %7871 = vmatpush1.msra.mxu0 0.0
    %7872 = vmatprep.subr.mxu0 0.0
    %7873 = vmatpush1.msra.mxu0 0.0
    %7874 = vmatprep.subr.mxu0 0.0
    %7875 = vmatpush1.msra.mxu0 0.0
    %7876 = vmatprep.mubr.f32.mxu0 0.0
    %7877 = vmatmul.mubr.f32.gmra.mrb[0].mxu0 %v7804
    %v7878 = vpop.f32.mrb[0].mxu0
    %v7879 = vadd.f32 %v7801, %v7878
    %v7880 = vpop.f32.mrb[0].mxu0
    %7881 = vmatprep.mubr.f32.mxu0 0.0
    %7882 = vmatmul.mubr.f32.gmra.mrb[0].mxu0 %v7807
    %v7883 = vpop.f32.mrb[0].mxu0
    %v7884 = vadd.f32 %v7801, %v7883
    %v7885 = vpop.f32.mrb[0].mxu0
    %7886 = vdwg.mxu0
    %v7887 = vmax.f32 %v7879, 0.0
    %v7888 = vmax.f32 %v7884, 0.0
    %v7889 = vadd.f32 %v7887, %v7695
    %v7890 = vadd.f32 %v7888, %v7696
    %s7891 = scalar_lea.vmem %s59, 16
    %v7892 = vld [vmem:[%s7891] sm:$0x1]
    %s7893 = scalar_lea.vmem %s59, 17
    %v7894 = vld [vmem:[%s7893] sm:$0x1]
    %v7895 = vsel %vm147, %v7889, 0.0
    %7896 = vadd.xlane.f32.xlu0 %v7895
    %v7897 = vpop.xlane.xlu0 %7896
    %v7898 = vsel %vm3745, %v7890, 0.0
    %7899 = vadd.xlane.f32.xlu0 %v7898
    %v7900 = vpop.xlane.xlu0 %7899
    %v7901 = vmul.f32 %v7897, %v742
    %v7902 = vmul.f32 %v7900, %v742
    %v7903 = vsub.f32 %v7889, %v7901
    %v7904 = vsub.f32 %v7890, %v7902
    %v7905 = vmul.f32 %v7903, %v7903
    %v7906 = vmul.f32 %v7904, %v7904
    %v7907 = vsel %vm147, %v7905, 0.0
    %7908 = vadd.xlane.f32.xlu0 %v7907
    %v7909 = vpop.xlane.xlu0 %7908
    %v7910 = vsel %vm3745, %v7906, 0.0
    %7911 = vadd.xlane.f32.xlu0 %v7910
    %v7912 = vpop.xlane.xlu0 %7911
    %v7913 = vmul.f32 %v7909, %v742
    %v7914 = vmul.f32 %v7912, %v742
    %v7915 = vadd.f32 %v7913, 1e-05
    %v7916 = vadd.f32 %v7914, 1e-05
    %v7917 = vrsqrt.pop %v7915
    %v7918 = vrsqrt.pop %v7916
    %v7919 = vmul.f32 %v7903, %v7917
    %v7920 = vmul.f32 %v7904, %v7918
    %v7922 = vlaneseq
    %v7923 = vshrl.u32 %v7922, 7
    %v7924 = vsub.s32 0, %v7923
    %v7925 = vrot.slane %v7892, %v7924
    %v7927 = vmul.f32 %v7919, %v7925
    %v7928 = vmul.f32 %v7920, %v7925
    %v7930 = vlaneseq
    %v7931 = vshrl.u32 %v7930, 7
    %v7932 = vsub.s32 0, %v7931
    %v7933 = vrot.slane %v7894, %v7932
    %v7935 = vadd.f32 %v7927, %v7933
    %v7936 = vadd.f32 %v7928, %v7933
    %v7937 = vld [vmem:[%s61] sm:$0x7f]
    %v7938 = vld [vmem:[%s63] sm:$0x1]
    %v7940 = vlaneseq
    %v7941 = vshrl.u32 %v7940, 7
    %v7942 = vsub.s32 0, %v7941
    %v7943 = vrot.slane %v7938, %v7942
    %v7946 = vsel %vm147, %v7935, 0
    %v7949 = vsel %vm147, %v7936, 0
    %v7952 = vsel %vm154, %v7937, 0
    %7954 = vmatprep.subr.mxu0 0.0
    %7955 = vmatpush1.msra.mxu0 %v7952
    %7956 = vmatprep.subr.mxu0 0.0
    %7957 = vmatpush1.msra.mxu0 0.0
    %7958 = vmatprep.subr.mxu0 0.0
    %7959 = vmatpush1.msra.mxu0 0.0
    %7960 = vmatprep.subr.mxu0 0.0
    %7961 = vmatpush1.msra.mxu0 0.0
    %7962 = vmatprep.subr.mxu0 0.0
    %7963 = vmatpush1.msra.mxu0 0.0
    %7964 = vmatprep.subr.mxu0 0.0
    %7965 = vmatpush1.msra.mxu0 0.0
    %7966 = vmatprep.subr.mxu0 0.0
    %7967 = vmatpush1.msra.mxu0 0.0
    %7968 = vmatprep.subr.mxu0 0.0
    %7969 = vmatpush1.msra.mxu0 0.0
    %7970 = vmatprep.subr.mxu0 0.0
    %7971 = vmatpush1.msra.mxu0 0.0
    %7972 = vmatprep.subr.mxu0 0.0
    %7973 = vmatpush1.msra.mxu0 0.0
    %7974 = vmatprep.subr.mxu0 0.0
    %7975 = vmatpush1.msra.mxu0 0.0
    %7976 = vmatprep.subr.mxu0 0.0
    %7977 = vmatpush1.msra.mxu0 0.0
    %7978 = vmatprep.subr.mxu0 0.0
    %7979 = vmatpush1.msra.mxu0 0.0
    %7980 = vmatprep.subr.mxu0 0.0
    %7981 = vmatpush1.msra.mxu0 0.0
    %7982 = vmatprep.subr.mxu0 0.0
    %7983 = vmatpush1.msra.mxu0 0.0
    %7984 = vmatprep.subr.mxu0 0.0
    %7985 = vmatpush1.msra.mxu0 0.0
    %7986 = vmatprep.subr.mxu0 0.0
    %7987 = vmatpush1.msra.mxu0 0.0
    %7988 = vmatprep.subr.mxu0 0.0
    %7989 = vmatpush1.msra.mxu0 0.0
    %7990 = vmatprep.subr.mxu0 0.0
    %7991 = vmatpush1.msra.mxu0 0.0
    %7992 = vmatprep.subr.mxu0 0.0
    %7993 = vmatpush1.msra.mxu0 0.0
    %7994 = vmatprep.subr.mxu0 0.0
    %7995 = vmatpush1.msra.mxu0 0.0
    %7996 = vmatprep.subr.mxu0 0.0
    %7997 = vmatpush1.msra.mxu0 0.0
    %7998 = vmatprep.subr.mxu0 0.0
    %7999 = vmatpush1.msra.mxu0 0.0
    %8000 = vmatprep.subr.mxu0 0.0
    %8001 = vmatpush1.msra.mxu0 0.0
    %8002 = vmatprep.subr.mxu0 0.0
    %8003 = vmatpush1.msra.mxu0 0.0
    %8004 = vmatprep.subr.mxu0 0.0
    %8005 = vmatpush1.msra.mxu0 0.0
    %8006 = vmatprep.subr.mxu0 0.0
    %8007 = vmatpush1.msra.mxu0 0.0
    %8008 = vmatprep.subr.mxu0 0.0
    %8009 = vmatpush1.msra.mxu0 0.0
    %8010 = vmatprep.subr.mxu0 0.0
    %8011 = vmatpush1.msra.mxu0 0.0
    %8012 = vmatprep.subr.mxu0 0.0
    %8013 = vmatpush1.msra.mxu0 0.0
    %8014 = vmatprep.subr.mxu0 0.0
    %8015 = vmatpush1.msra.mxu0 0.0
    %8016 = vmatprep.subr.mxu0 0.0
    %8017 = vmatpush1.msra.mxu0 0.0
    %8018 = vmatprep.mubr.f32.mxu0 0.0
    %8019 = vmatmul.mubr.f32.gmra.mrb[0].mxu0 %v7946
    %v8020 = vpop.f32.mrb[0].mxu0
    %v8021 = vadd.f32 %v7943, %v8020
    %v8022 = vpop.f32.mrb[0].mxu0
    %8023 = vmatprep.mubr.f32.mxu0 0.0
    %8024 = vmatmul.mubr.f32.gmra.mrb[0].mxu0 %v7949
    %v8025 = vpop.f32.mrb[0].mxu0
    %v8026 = vadd.f32 %v7943, %v8025
    %v8027 = vpop.f32.mrb[0].mxu0
    %8028 = vdwg.mxu0
    %v8030 = vsel %vm881, %v8021, 0
    %v8033 = vsel %vm881, %v8026, 0
    %v8036 = vsel %vm881, %v2861, 0
    %v8039 = vsel %vm881, %v2866, 0
    %8041 = vmatprep.subr.mxu0 0.0
    %8042 = vmatpush1.xpose.msra.mxu0 %v8036
    %8043 = vmatprep.subr.mxu0 0.0
    %8044 = vmatpush1.xpose.msra.mxu0 %v8039
    %8045 = vmatprep.subr.mxu0 0.0
    %8046 = vmatpush1.xpose.msra.mxu0 0.0
    %8047 = vmatprep.subr.mxu0 0.0
    %8048 = vmatpush1.xpose.msra.mxu0 0.0
    %8049 = vmatprep.subr.mxu0 0.0
    %8050 = vmatpush1.xpose.msra.mxu0 0.0
    %8051 = vmatprep.subr.mxu0 0.0
    %8052 = vmatpush1.xpose.msra.mxu0 0.0
    %8053 = vmatprep.subr.mxu0 0.0
    %8054 = vmatpush1.xpose.msra.mxu0 0.0
    %8055 = vmatprep.subr.mxu0 0.0
    %8056 = vmatpush1.xpose.msra.mxu0 0.0
    %8057 = vmatprep.subr.mxu0 0.0
    %8058 = vmatpush1.xpose.msra.mxu0 0.0
    %8059 = vmatprep.subr.mxu0 0.0
    %8060 = vmatpush1.xpose.msra.mxu0 0.0
    %8061 = vmatprep.subr.mxu0 0.0
    %8062 = vmatpush1.xpose.msra.mxu0 0.0
    %8063 = vmatprep.subr.mxu0 0.0
    %8064 = vmatpush1.xpose.msra.mxu0 0.0
    %8065 = vmatprep.subr.mxu0 0.0
    %8066 = vmatpush1.xpose.msra.mxu0 0.0
    %8067 = vmatprep.subr.mxu0 0.0
    %8068 = vmatpush1.xpose.msra.mxu0 0.0
    %8069 = vmatprep.subr.mxu0 0.0
    %8070 = vmatpush1.xpose.msra.mxu0 0.0
    %8071 = vmatprep.subr.mxu0 0.0
    %8072 = vmatpush1.xpose.msra.mxu0 0.0
    %8073 = vmatprep.subr.mxu0 0.0
    %8074 = vmatpush1.xpose.msra.mxu0 0.0
    %8075 = vmatprep.subr.mxu0 0.0
    %8076 = vmatpush1.xpose.msra.mxu0 0.0
    %8077 = vmatprep.subr.mxu0 0.0
    %8078 = vmatpush1.xpose.msra.mxu0 0.0
    %8079 = vmatprep.subr.mxu0 0.0
    %8080 = vmatpush1.xpose.msra.mxu0 0.0
    %8081 = vmatprep.subr.mxu0 0.0
    %8082 = vmatpush1.xpose.msra.mxu0 0.0
    %8083 = vmatprep.subr.mxu0 0.0
    %8084 = vmatpush1.xpose.msra.mxu0 0.0
    %8085 = vmatprep.subr.mxu0 0.0
    %8086 = vmatpush1.xpose.msra.mxu0 0.0
    %8087 = vmatprep.subr.mxu0 0.0
    %8088 = vmatpush1.xpose.msra.mxu0 0.0
    %8089 = vmatprep.subr.mxu0 0.0
    %8090 = vmatpush1.xpose.msra.mxu0 0.0
    %8091 = vmatprep.subr.mxu0 0.0
    %8092 = vmatpush1.xpose.msra.mxu0 0.0
    %8093 = vmatprep.subr.mxu0 0.0
    %8094 = vmatpush1.xpose.msra.mxu0 0.0
    %8095 = vmatprep.subr.mxu0 0.0
    %8096 = vmatpush1.xpose.msra.mxu0 0.0
    %8097 = vmatprep.subr.mxu0 0.0
    %8098 = vmatpush1.xpose.msra.mxu0 0.0
    %8099 = vmatprep.subr.mxu0 0.0
    %8100 = vmatpush1.xpose.msra.mxu0 0.0
    %8101 = vmatprep.subr.mxu0 0.0
    %8102 = vmatpush1.xpose.msra.mxu0 0.0
    %8103 = vmatprep.subr.mxu0 0.0
    %8104 = vmatpush1.xpose.msra.mxu0 0.0
    %8105 = vmatprep.mubr.f32.mxu0 0.0
    %8106 = vmatmul.mubr.f32.gmra.mrb[0].mxu0 %v8030
    %v8107 = vpop.f32.mrb[0].mxu0
    %v8108 = vadd.f32 0.0, %v8107
    %v8109 = vpop.f32.mrb[0].mxu0
    %8110 = vmatprep.mubr.f32.mxu0 0.0
    %8111 = vmatmul.mubr.f32.gmra.mrb[0].mxu0 %v8033
    %v8112 = vpop.f32.mrb[0].mxu0
    %v8113 = vadd.f32 0.0, %v8112
    %v8114 = vpop.f32.mrb[0].mxu0
    %8115 = vdwg.mxu0
    %v8116 = vmul.f32 %v8108, 5.773503
    %v8117 = vmul.f32 %v8113, 5.773503
    %v8118 = vsel %vm515, %v8116, -inf
    %8119 = vmax.xlane.f32.xlu0 %v8118
    %v8120 = vpop.xlane.xlu0 %8119
    %v8121 = vsel %vm4394, %v8117, -inf
    %8122 = vmax.xlane.f32.xlu0 %v8121
    %v8123 = vpop.xlane.xlu0 %8122
    %v8124 = vsub.f32 %v8116, %v8120
    %v8125 = vsub.f32 %v8117, %v8123
    %v8126 = vmul.f32 %v8124, 1.442695
    %v8127 = vpow.pop %v8126
    %v8128 = vmul.f32 %v8125, 1.442695
    %v8129 = vpow.pop %v8128
    %v8130 = vsel %vm515, %v8127, 0.0
    %8131 = vadd.xlane.f32.xlu0 %v8130
    %v8132 = vpop.xlane.xlu0 %8131
    %v8133 = vsel %vm4394, %v8129, 0.0
    %8134 = vadd.xlane.f32.xlu0 %v8133
    %v8135 = vpop.xlane.xlu0 %8134
    %v8136 = vrcp.pop %v8132
    %v8137 = vmul.f32 %v8127, %v8136
    %v8138 = vrcp.pop %v8135
    %v8139 = vmul.f32 %v8129, %v8138
    %8140 = vst.msk [vmem:[#allocation2] sm:$0xff] %vm515, %v8137
    %8141 = vst.msk [vmem:[#allocation2 + $0x8] sm:$0xf] %vm4394, %v8139
    // Predicated region
    $region130: #{opt1_noisy_forward.1} parent=1 // pred_check
      _
    $region131: #{opt1_noisy_forward.1} parent=1 // pred_check_branch
      %8143 = sbr.rel (0) target = $region133
    $region132: #{opt1_noisy_forward.1} parent=1 // pred_region
      %s8145 = ssub.s32 256, 256
      %8146 = vsyncadd [#allocation3], %s8145
      %s8147 = sshll.u32 [#allocation2], 4
      %s8148 = int_to_ptr.vmem [resolvable:$true] %s8147
      %8153 = dma.vmem_to_hbm [thread:$0]  %s8148, 256, %s65, [#allocation3], 128, 128, 8
    $region133: #{opt1_noisy_forward.1} parent=1 // pred_fallthru
      _
    // Predicated region
    $region134: #{opt1_noisy_forward.1} parent=1 // pred_check
      _
    $region135: #{opt1_noisy_forward.1} parent=1 // pred_check_branch
      %8155 = sbr.rel (0) target = $region137
    $region136: #{opt1_noisy_forward.1} parent=1 // pred_region
      %8156 = dma.done [#allocation3], 256
    $region137: #{opt1_noisy_forward.1} parent=1 // pred_fallthru
      _
    %8157 = vsyncpa [#allocation3], 1

</llo_original>
